<compile_context>
chip_gen: v6e
topology: v6e:2x2x1
jax: 0.10.0
libtpu: 0.0.40
codegen_flags: <defaults>
</compile_context>

<pallas_src>
import jax
import jax.numpy as jnp
from jax import lax
from jax.experimental import pallas as pl
from jax.experimental.pallas import tpu as pltpu


def _ceil_to(n, m):
    return ((n + m - 1) // m) * m


def _nbytes(shape, dtype):
    n = 1
    for s in shape:
        n *= int(s)
    return n * jnp.dtype(dtype).itemsize


def _pad_gate_cols(w, H, Hp):
    """(R, 4H) -> (R, 4Hp): gate block g moved to columns [g*Hp, g*Hp+H)."""
    R = w.shape[0]
    out = jnp.zeros((R, 4 * Hp), jnp.float32)
    for g in range(4):
        out = out.at[:, g * Hp:g * Hp + H].set(w[:, g * H:(g + 1) * H])
    return out


def _pad_whh(w, H, Hp):
    """(H, 4H) -> (Hp, 4Hp): gate-aligned columns, zero rows for padded channels."""
    return jnp.pad(_pad_gate_cols(w, H, Hp), ((0, Hp - H), (0, 0)))


def bilstm_kernel(lens_ref,        # (Bt, Hp)  int32 : seq_len broadcast over lanes
                  x_ref,           # (T, Bt, D_in) bf16 : time-major inputs, this batch tile
                  wih_ref,         # (D_in, 8Hp) bf16 : fused fwd|bwd input projection
                  bih_ref,         # (1, 8Hp)  f32  : fused biases (b_ih + b_hh)
                  whh_ref,         # (2Hp, 8Hp) bf16 : block-diag(whh_f, whh_b)
                  wout_ref,        # (2Hp, Lp) bf16 : stacked hidden2tag weight
                  bout_ref,        # (1, Lp)   f32
                  o_ref,           # (T, Bt, Lp) f32
                  xp_ref,          # (T, Bt, 8Hp) bf16 scratch : per-step input projections
                  h_ref):          # (T, Bt, 2Hp) bf16 scratch : merged fwd|bwd hidden seq
    T, Bt, D_in = x_ref.shape
    Hp = h_ref.shape[-1] // 2
    G = 4 * Hp
    Lp = o_ref.shape[-1]

    lens = lens_ref[...]                                   # (Bt, Hp) int32

    # Fused input projection for both directions: one bf16 MXU GEMM over all (t, b)
    # rows of this batch tile (f32 accumulation), stored as bf16 scratch.
    x2d = x_ref[...].reshape(T * Bt, D_in)
    xp = jnp.dot(x2d, wih_ref[...], preferred_element_type=jnp.float32) + bih_ref[...]
    xp_ref[...] = xp.astype(jnp.bfloat16).reshape(T, Bt, 8 * Hp)

    def gate_update(gates, h, c, valid):
        # PyTorch LSTM gate order i|f|g|o; each block is a full lane-aligned Hp slice.
        ig = jax.nn.sigmoid(gates[:, 0:Hp])
        fg = jax.nn.sigmoid(gates[:, Hp:2 * Hp])
        gg = jnp.tanh(gates[:, 2 * Hp:3 * Hp])
        og = jax.nn.sigmoid(gates[:, 3 * Hp:4 * Hp])
        c_new = fg * c + ig * gg
        h_new = og * jnp.tanh(c_new)
        h = jnp.where(valid, h_new, h)
        c = jnp.where(valid, c_new, c)
        return h, c

    def step(i, carry):
        h_f, c_f, h_b, c_b = carry
        t_f = i
        t_b = T - 1 - i

        # One block-diagonal recurrent GEMM per step: K = 2*Hp (good MXU depth on
        # v6e/v7x; on v5e two separate (Bt,Hp)@(Hp,4Hp) dots would be equivalent).
        h_cat = jnp.concatenate([h_f, h_b], axis=1).astype(jnp.bfloat16)
        rec = jnp.dot(h_cat, whh_ref[...], preferred_element_type=jnp.float32)

        # Per-step slabs are indexed on the leading T axis -> 8-aligned full tiles.
        gates_f = xp_ref[t_f, :, 0:G].astype(jnp.float32) + rec[:, 0:G]
        gates_b = xp_ref[t_b, :, G:2 * G].astype(jnp.float32) + rec[:, G:2 * G]

        valid_f = t_f < lens
        valid_b = t_b < lens
        h_f, c_f = gate_update(gates_f, h_f, c_f, valid_f)
        h_b, c_b = gate_update(gates_b, h_b, c_b, valid_b)

        # packed-sequence semantics: padded time positions emit zeros.
        h_ref[t_f, :, 0:Hp] = jnp.where(valid_f, h_f, 0.0).astype(jnp.bfloat16)
        h_ref[t_b, :, Hp:2 * Hp] = jnp.where(valid_b, h_b, 0.0).astype(jnp.bfloat16)
        return h_f, c_f, h_b, c_b

    z = jnp.zeros((Bt, Hp), jnp.float32)
    lax.fori_loop(0, T, step, (z, z, z, z),
                  unroll=True if T <= 16 else 4)

    # hidden2tag: one K = 2*Hp GEMM over the merged hidden sequence; lane-dense store.
    feats = h_ref[...].reshape(T * Bt, 2 * Hp)
    out = jnp.dot(feats, wout_ref[...], preferred_element_type=jnp.float32) + bout_ref[...]
    o_ref[...] = out.reshape(T, Bt, Lp)


def bilstm_encoder_forward(sent_emb, type_ids, seq_lens, params, *, batch_tile=8):
    # --- JAX glue: type embedding lookup + concat (dropout = identity in eval) ---
    type_emb = params["type_table"][type_ids]                        # (B, T, 100)
    x = jnp.concatenate([sent_emb, type_emb], axis=-1).astype(jnp.float32)

    B, T, D_in = x.shape
    H = params["whh_f"].shape[0]
    L = params["b_out"].shape[-1]
    Hp = _ceil_to(max(H, 1), 128)                 # per-direction hidden, lane padded
    Lp = _ceil_to(max(L, 1), 128)                 # label dim, lane padded
    Bt = _ceil_to(min(batch_tile, _ceil_to(B, 8)), 8)   # batch tile, multiple of 8
    Bpad = _ceil_to(B, Bt)

    # Time-major (T, Bpad, D_in) bf16 MXU feed; padded batch rows are zero, len 0.
    x_tm = jnp.transpose(x, (1, 0, 2))
    x_tm = jnp.pad(x_tm, ((0, 0), (0, Bpad - B), (0, 0))).astype(jnp.bfloat16)
    lens = jnp.pad(seq_lens.astype(jnp.int32), (0, Bpad - B))
    lens_bc = jnp.broadcast_to(lens[:, None], (Bpad, Hp))

    # Weight prep: gate-aligned padding, fwd/bwd fusion, bf16 MXU operands.
    # (If production H >= 128 this padding is free; for H << 128 see review note on
    #  packing gates into 4H lanes — kept padded here to preserve full-vreg gate slices.)
    wih = jnp.concatenate([_pad_gate_cols(params["wih_f"], H, Hp),
                           _pad_gate_cols(params["wih_b"], H, Hp)],
                          axis=1).astype(jnp.bfloat16)               # (D_in, 8Hp)
    bih = jnp.concatenate([_pad_gate_cols(params["b_f"], H, Hp),
                           _pad_gate_cols(params["b_b"], H, Hp)], axis=1)  # (1, 8Hp) f32
    whh = jnp.zeros((2 * Hp, 8 * Hp), jnp.float32)
    whh = whh.at[0:Hp, 0:4 * Hp].set(_pad_whh(params["whh_f"], H, Hp))
    whh = whh.at[Hp:2 * Hp, 4 * Hp:8 * Hp].set(_pad_whh(params["whh_b"], H, Hp))
    whh = whh.astype(jnp.bfloat16)                                    # (2Hp, 8Hp) blkdiag
    wout = jnp.zeros((2 * Hp, Lp), jnp.float32)
    wout = wout.at[0:H, 0:L].set(params["w_out"][:H])
    wout = wout.at[Hp:Hp + H, 0:L].set(params["w_out"][H:])
    wout = wout.astype(jnp.bfloat16)                                  # (2Hp, Lp) stacked
    bout = jnp.zeros((1, Lp), jnp.float32).at[:, :L].set(params["b_out"])

    # Explicit VMEM budget (review: v5e 16 MiB / v7x 32 MiB default scoped limits).
    # 2x blocks for double buffering, 4x scratch for f32 temporaries, + headroom;
    # capped at 64 MiB so the same configuration also fits v7x physical VMEM.
    block_bytes = (_nbytes((Bt, Hp), jnp.int32)
                   + _nbytes((T, Bt, D_in), jnp.bfloat16)
                   + _nbytes((T, Bt, Lp), jnp.float32)
                   + _nbytes(wih.shape, jnp.bfloat16)
                   + _nbytes(bih.shape, jnp.float32)
                   + _nbytes(whh.shape, jnp.bfloat16)
                   + _nbytes(wout.shape, jnp.bfloat16)
                   + _nbytes(bout.shape, jnp.float32))
    scratch_bytes = (_nbytes((T, Bt, 8 * Hp), jnp.bfloat16)
                     + _nbytes((T, Bt, 2 * Hp), jnp.bfloat16))
    vmem_limit = int(min(64 * 1024 * 1024,
                         2 * block_bytes + 4 * scratch_bytes + (4 << 20)))

    const2d = lambda i: (0, 0)
    out3 = pl.pallas_call(
        bilstm_kernel,
        grid=(Bpad // Bt,),
        out_shape=jax.ShapeDtypeStruct((T, Bpad, Lp), jnp.float32),
        in_specs=[
            pl.BlockSpec((Bt, Hp), lambda i: (i, 0)),            # lens
            pl.BlockSpec((T, Bt, D_in), lambda i: (0, i, 0)),    # x (time-major)
            pl.BlockSpec(wih.shape, const2d),                    # weights: constant index
            pl.BlockSpec(bih.shape, const2d),
            pl.BlockSpec(whh.shape, const2d),
            pl.BlockSpec(wout.shape, const2d),
            pl.BlockSpec(bout.shape, const2d),
        ],
        out_specs=pl.BlockSpec((T, Bt, Lp), lambda i: (0, i, 0)),
        scratch_shapes=[
            pltpu.VMEM((T, Bt, 8 * Hp), jnp.bfloat16),   # fused per-step input projections
            pltpu.VMEM((T, Bt, 2 * Hp), jnp.bfloat16),   # merged fwd|bwd hidden sequence
        ],
        compiler_params=pltpu.CompilerParams(
            dimension_semantics=("parallel",),
            vmem_limit_bytes=vmem_limit),
    )(lens_bc, x_tm, wih, bih, whh, wout, bout)

    # NOTE: assumes max(seq_lens) == T (matches pad_packed_sequence output length).
    out = jnp.transpose(out3, (1, 0, 2))[:B, :, :L]              # (B, T, L)
    return out


def ref_forward(sent_emb, type_ids, seq_lens, params):
    """Pure-JAX f32 reference (matches packed BiLSTM + Linear semantics)."""
    type_emb = params["type_table"][type_ids]
    x = jnp.concatenate([sent_emb, type_emb], axis=-1).astype(jnp.float32)
    B, T, _ = x.shape
    H = params["whh_f"].shape[0]

    def run_dir(wih, whh, bias, reverse):
        def cell(carry, inp):
            h, c = carry
            xt, valid = inp
            gates = xt @ wih + h @ whh + bias
            i = jax.nn.sigmoid(gates[:, 0:H])
            f = jax.nn.sigmoid(gates[:, H:2 * H])
            g = jnp.tanh(gates[:, 2 * H:3 * H])
            o = jax.nn.sigmoid(gates[:, 3 * H:4 * H])
            c_new = f * c + i * g
            h_new = o * jnp.tanh(c_new)
            v = valid[:, None]
            h = jnp.where(v, h_new, h)
            c = jnp.where(v, c_new, c)
            return (h, c), jnp.where(v, h, 0.0)

        valid = (jnp.arange(T)[None, :] < seq_lens[:, None])   # (B, T)
        xs = jnp.moveaxis(x, 1, 0)                              # (T, B, D)
        vs = valid.T                                            # (T, B)
        if reverse:
            xs, vs = xs[::-1], vs[::-1]
        h0 = jnp.zeros((B, H), jnp.float32)
        c0 = jnp.zeros((B, H), jnp.float32)
        _, outs = lax.scan(cell, (h0, c0), (xs, vs))
        if reverse:
            outs = outs[::-1]
        return jnp.moveaxis(outs, 0, 1)                         # (B, T, H)

    hf = run_dir(params["wih_f"], params["whh_f"], params["b_f"], False)
    hb = run_dir(params["wih_b"], params["whh_b"], params["b_b"], True)
    feats = jnp.concatenate([hf, hb], axis=-1)
    return feats @ params["w_out"] + params["b_out"]


def make_params(key, emb_dim, type_dim, hidden_dim, label_size):
    D_in = emb_dim + type_dim
    H = hidden_dim // 2
    ks = jax.random.split(key, 12)

    def u(k, shape):
        return jax.random.uniform(k, shape, jnp.float32, -0.1, 0.1)

    return {
        "type_table": u(ks[0], (2, type_dim)),
        # LSTM weights stored transposed: x @ W, gate order i|f|g|o
        "wih_f": u(ks[1], (D_in, 4 * H)),
        "whh_f": u(ks[2], (H, 4 * H)),
        "b_f": u(ks[3], (1, 4 * H)),        # b_ih + b_hh folded into one bias
        "wih_b": u(ks[4], (D_in, 4 * H)),
        "whh_b": u(ks[5], (H, 4 * H)),
        "b_b": u(ks[6], (1, 4 * H)),
        "w_out": u(ks[7], (2 * H, label_size)),
        "b_out": u(ks[8], (1, label_size)),
    }


if __name__ == "__main__":
    B, T = 2, 8
    emb_dim, type_dim = 28, 100     # input_size to LSTM = 128
    hidden_dim = 64                 # H per direction = 32
    label_size = 16

    key = jax.random.PRNGKey(0)
    k_emb, k_type, k_par = jax.random.split(key, 3)

    sent_emb = jax.random.normal(k_emb, (B, T, emb_dim), jnp.float32)
    type_ids = jax.random.randint(k_type, (B, T), 0, 2, jnp.int32)
    seq_lens = jnp.array([T, 5], dtype=jnp.int32)   # max(seq_lens) == T
    params = make_params(k_par, emb_dim, type_dim, hidden_dim, label_size)

    fwd = jax.jit(bilstm_encoder_forward)
    out = jax.block_until_ready(fwd(sent_emb, type_ids, seq_lens, params))

    ref = jax.block_until_ready(ref_forward(sent_emb, type_ids, seq_lens, params))
    assert out.shape == (B, T, label_size)
    # bf16 MXU operands + bf16 xp / hidden scratch => looser tolerance vs f32 reference.
    assert jnp.allclose(out, ref, atol=2e-2, rtol=2e-2), "mismatch vs JAX reference"

    print("KERNEL_OK")
</pallas_src>

<mosaic_0001>
module attributes {stable_mosaic.version = 11 : i64} {
  func.func @bilstm_kernel(%arg0: i32, %arg1: memref<8x128xi32, #tpu.memory_space<vmem>>, %arg2: memref<8x8x128xbf16, #tpu.memory_space<vmem>>, %arg3: memref<128x1024xbf16, #tpu.memory_space<vmem>>, %arg4: memref<1x1024xf32, #tpu.memory_space<vmem>>, %arg5: memref<256x1024xbf16, #tpu.memory_space<vmem>>, %arg6: memref<256x128xbf16, #tpu.memory_space<vmem>>, %arg7: memref<1x128xf32, #tpu.memory_space<vmem>>, %arg8: memref<8x8x128xf32, #tpu.memory_space<vmem>>, %arg9: memref<8x8x1024xbf16, #tpu.memory_space<vmem>>, %arg10: memref<8x8x256xbf16, #tpu.memory_space<vmem>>) attributes {dimension_semantics = [#tpu.dimension_semantics<parallel>], iteration_bounds = array<i64: 1>, scalar_prefetch = 0 : i64, scratch_operands = 2 : i64, tpu.core_type = #tpu.core_type<tc>, window_params = [{transform_indices = @transform_0, window_bounds = array<i64: 8, 128>}, {transform_indices = @transform_1, window_bounds = array<i64: 8, 8, 128>}, {pipeline_mode = #tpu.pipeline_mode<synchronous>, transform_indices = @transform_2, window_bounds = array<i64: 128, 1024>}, {pipeline_mode = #tpu.pipeline_mode<synchronous>, transform_indices = @transform_3, window_bounds = array<i64: 1, 1024>}, {pipeline_mode = #tpu.pipeline_mode<synchronous>, transform_indices = @transform_4, window_bounds = array<i64: 256, 1024>}, {pipeline_mode = #tpu.pipeline_mode<synchronous>, transform_indices = @transform_5, window_bounds = array<i64: 256, 128>}, {pipeline_mode = #tpu.pipeline_mode<synchronous>, transform_indices = @transform_6, window_bounds = array<i64: 1, 128>}, {transform_indices = @transform_7, window_bounds = array<i64: 8, 8, 128>}]} {
    %c0 = arith.constant 0 : index
    %c0_0 = arith.constant 0 : index
    %0 = vector.load %arg1[%c0, %c0_0] : memref<8x128xi32, #tpu.memory_space<vmem>>, vector<8x128xi32>
    %c0_1 = arith.constant 0 : index
    %c0_2 = arith.constant 0 : index
    %c0_3 = arith.constant 0 : index
    %1 = vector.load %arg2[%c0_1, %c0_2, %c0_3] : memref<8x8x128xbf16, #tpu.memory_space<vmem>>, vector<8x8x128xbf16>
    %2 = vector.shape_cast %1 : vector<8x8x128xbf16> to vector<64x128xbf16>
    %c0_4 = arith.constant 0 : index
    %c0_5 = arith.constant 0 : index
    %3 = vector.load %arg3[%c0_4, %c0_5] : memref<128x1024xbf16, #tpu.memory_space<vmem>>, vector<128x1024xbf16>
    %cst = arith.constant dense<0.000000e+00> : vector<64x1024xf32>
    %4 = tpu.matmul %2, %3, %cst {dimension_numbers = #tpu.dot_dimension_numbers<[1], [0], [0], [1], [0, 0, 1, 1], [], []>} : vector<64x128xbf16>, vector<128x1024xbf16>, vector<64x1024xf32> -> vector<64x1024xf32>
    %c0_6 = arith.constant 0 : index
    %c0_7 = arith.constant 0 : index
    %5 = vector.load %arg4[%c0_6, %c0_7] : memref<1x1024xf32, #tpu.memory_space<vmem>>, vector<1x1024xf32>
    %6 = vector.broadcast %5 : vector<1x1024xf32> to vector<64x1024xf32>
    %7 = arith.addf %4, %6 : vector<64x1024xf32>
    %8 = arith.truncf %7 : vector<64x1024xf32> to vector<64x1024xbf16>
    %9 = vector.shape_cast %8 : vector<64x1024xbf16> to vector<8x8x1024xbf16>
    %c0_8 = arith.constant 0 : index
    %c0_9 = arith.constant 0 : index
    %c0_10 = arith.constant 0 : index
    %10 = vector.load %arg9[%c0_8, %c0_9, %c0_10] : memref<8x8x1024xbf16, #tpu.memory_space<vmem>>, vector<8x8x1024xbf16>
    tpu.vector_store %arg9[%c0_8, %c0_9, %c0_10], %9 {strides = array<i32>} : memref<8x8x1024xbf16, #tpu.memory_space<vmem>>, vector<8x8x1024xbf16>,
    %cst_11 = arith.constant 0.000000e+00 : f32
    %11 = vector.broadcast %cst_11 : f32 to vector<8x128xf32>
    %c0_i32 = arith.constant 0 : i32
    %c7_i32 = arith.constant 7 : i32
    %12 = arith.subi %c7_i32, %c0_i32 : i32
    %13 = tpu.concatenate %11, %11 in 1 : vector<8x128xf32>, vector<8x128xf32> -> vector<8x256xf32>
    %14 = arith.truncf %13 : vector<8x256xf32> to vector<8x256xbf16>
    %c0_12 = arith.constant 0 : index
    %c0_13 = arith.constant 0 : index
    %15 = vector.load %arg5[%c0_12, %c0_13] : memref<256x1024xbf16, #tpu.memory_space<vmem>>, vector<256x1024xbf16>
    %cst_14 = arith.constant dense<0.000000e+00> : vector<8x1024xf32>
    %16 = tpu.matmul %14, %15, %cst_14 {dimension_numbers = #tpu.dot_dimension_numbers<[1], [0], [0], [1], [0, 0, 1, 1], [], []>} : vector<8x256xbf16>, vector<256x1024xbf16>, vector<8x1024xf32> -> vector<8x1024xf32>
    %17 = arith.index_cast %c0_i32 : i32 to index
    %c0_15 = arith.constant 0 : index
    %c0_16 = arith.constant 0 : index
    %18 = vector.load %arg9[%17, %c0_15, %c0_16] : memref<8x8x1024xbf16, #tpu.memory_space<vmem>>, vector<1x8x512xbf16>
    %19 = vector.shape_cast %18 : vector<1x8x512xbf16> to vector<8x512xbf16>
    %20 = arith.extf %19 : vector<8x512xbf16> to vector<8x512xf32>
    %21 = vector.extract_strided_slice %16 {offsets = [0, 0], sizes = [8, 512], strides = [1, 1]} : vector<8x1024xf32> to vector<8x512xf32>
    %22 = arith.addf %20, %21 : vector<8x512xf32>
    %23 = arith.index_cast %12 : i32 to index
    %c0_17 = arith.constant 0 : index
    %c512 = arith.constant 512 : index
    %24 = vector.load %arg9[%23, %c0_17, %c512] : memref<8x8x1024xbf16, #tpu.memory_space<vmem>>, vector<1x8x512xbf16>
    %25 = vector.shape_cast %24 : vector<1x8x512xbf16> to vector<8x512xbf16>
    %26 = arith.extf %25 : vector<8x512xbf16> to vector<8x512xf32>
    %27 = vector.extract_strided_slice %16 {offsets = [0, 512], sizes = [8, 512], strides = [1, 1]} : vector<8x1024xf32> to vector<8x512xf32>
    %28 = arith.addf %26, %27 : vector<8x512xf32>
    %29 = vector.broadcast %c0_i32 : i32 to vector<8x128xi32>
    %30 = arith.cmpi slt, %29, %0 : vector<8x128xi32>
    %31 = vector.broadcast %12 : i32 to vector<8x128xi32>
    %32 = arith.cmpi slt, %31, %0 : vector<8x128xi32>
    %33 = vector.extract_strided_slice %22 {offsets = [0, 0], sizes = [8, 128], strides = [1, 1]} : vector<8x512xf32> to vector<8x128xf32>
    %34 = arith.negf %33 : vector<8x128xf32>
    %35 = math.exp %34 : vector<8x128xf32>
    %cst_18 = arith.constant 1.000000e+00 : f32
    %36 = vector.broadcast %cst_18 : f32 to vector<8x128xf32>
    %37 = arith.addf %36, %35 : vector<8x128xf32>
    %38 = arith.divf %36, %37 : vector<8x128xf32>
    %39 = vector.extract_strided_slice %22 {offsets = [0, 128], sizes = [8, 128], strides = [1, 1]} : vector<8x512xf32> to vector<8x128xf32>
    %40 = arith.negf %39 : vector<8x128xf32>
    %41 = math.exp %40 : vector<8x128xf32>
    %cst_19 = arith.constant 1.000000e+00 : f32
    %42 = vector.broadcast %cst_19 : f32 to vector<8x128xf32>
    %43 = arith.addf %42, %41 : vector<8x128xf32>
    %44 = arith.divf %42, %43 : vector<8x128xf32>
    %45 = vector.extract_strided_slice %22 {offsets = [0, 256], sizes = [8, 128], strides = [1, 1]} : vector<8x512xf32> to vector<8x128xf32>
    %46 = math.tanh %45 : vector<8x128xf32>
    %47 = vector.extract_strided_slice %22 {offsets = [0, 384], sizes = [8, 128], strides = [1, 1]} : vector<8x512xf32> to vector<8x128xf32>
    %48 = arith.negf %47 : vector<8x128xf32>
    %49 = math.exp %48 : vector<8x128xf32>
    %cst_20 = arith.constant 1.000000e+00 : f32
    %50 = vector.broadcast %cst_20 : f32 to vector<8x128xf32>
    %51 = arith.addf %50, %49 : vector<8x128xf32>
    %52 = arith.divf %50, %51 : vector<8x128xf32>
    %53 = arith.mulf %44, %11 : vector<8x128xf32>
    %54 = arith.mulf %38, %46 : vector<8x128xf32>
    %55 = arith.addf %53, %54 : vector<8x128xf32>
    %56 = math.tanh %55 : vector<8x128xf32>
    %57 = arith.mulf %52, %56 : vector<8x128xf32>
    %58 = arith.select %30, %57, %11 : vector<8x128xi1>, vector<8x128xf32>
    %59 = arith.select %30, %55, %11 : vector<8x128xi1>, vector<8x128xf32>
    %60 = vector.extract_strided_slice %28 {offsets = [0, 0], sizes = [8, 128], strides = [1, 1]} : vector<8x512xf32> to vector<8x128xf32>
    %61 = arith.negf %60 : vector<8x128xf32>
    %62 = math.exp %61 : vector<8x128xf32>
    %cst_21 = arith.constant 1.000000e+00 : f32
    %63 = vector.broadcast %cst_21 : f32 to vector<8x128xf32>
    %64 = arith.addf %63, %62 : vector<8x128xf32>
    %65 = arith.divf %63, %64 : vector<8x128xf32>
    %66 = vector.extract_strided_slice %28 {offsets = [0, 128], sizes = [8, 128], strides = [1, 1]} : vector<8x512xf32> to vector<8x128xf32>
    %67 = arith.negf %66 : vector<8x128xf32>
    %68 = math.exp %67 : vector<8x128xf32>
    %cst_22 = arith.constant 1.000000e+00 : f32
    %69 = vector.broadcast %cst_22 : f32 to vector<8x128xf32>
    %70 = arith.addf %69, %68 : vector<8x128xf32>
    %71 = arith.divf %69, %70 : vector<8x128xf32>
    %72 = vector.extract_strided_slice %28 {offsets = [0, 256], sizes = [8, 128], strides = [1, 1]} : vector<8x512xf32> to vector<8x128xf32>
    %73 = math.tanh %72 : vector<8x128xf32>
    %74 = vector.extract_strided_slice %28 {offsets = [0, 384], sizes = [8, 128], strides = [1, 1]} : vector<8x512xf32> to vector<8x128xf32>
    %75 = arith.negf %74 : vector<8x128xf32>
    %76 = math.exp %75 : vector<8x128xf32>
    %cst_23 = arith.constant 1.000000e+00 : f32
    %77 = vector.broadcast %cst_23 : f32 to vector<8x128xf32>
    %78 = arith.addf %77, %76 : vector<8x128xf32>
    %79 = arith.divf %77, %78 : vector<8x128xf32>
    %80 = arith.mulf %71, %11 : vector<8x128xf32>
    %81 = arith.mulf %65, %73 : vector<8x128xf32>
    %82 = arith.addf %80, %81 : vector<8x128xf32>
    %83 = math.tanh %82 : vector<8x128xf32>
    %84 = arith.mulf %79, %83 : vector<8x128xf32>
    %85 = arith.select %32, %84, %11 : vector<8x128xi1>, vector<8x128xf32>
    %86 = arith.select %32, %82, %11 : vector<8x128xi1>, vector<8x128xf32>
    %cst_24 = arith.constant 0.000000e+00 : f32
    %87 = vector.broadcast %cst_24 : f32 to vector<8x128xf32>
    %88 = arith.select %30, %58, %87 : vector<8x128xi1>, vector<8x128xf32>
    %89 = arith.truncf %88 : vector<8x128xf32> to vector<8x128xbf16>
    %90 = arith.index_cast %c0_i32 : i32 to index
    %c0_25 = arith.constant 0 : index
    %c0_26 = arith.constant 0 : index
    %91 = vector.load %arg10[%90, %c0_25, %c0_26] : memref<8x8x256xbf16, #tpu.memory_space<vmem>>, vector<1x8x128xbf16>
    %92 = vector.shape_cast %91 : vector<1x8x128xbf16> to vector<8x128xbf16>
    %93 = vector.shape_cast %89 : vector<8x128xbf16> to vector<1x8x128xbf16>
    tpu.vector_store %arg10[%90, %c0_25, %c0_26], %93 {strides = array<i32>} : memref<8x8x256xbf16, #tpu.memory_space<vmem>>, vector<1x8x128xbf16>,
    %cst_27 = arith.constant 0.000000e+00 : f32
    %94 = vector.broadcast %cst_27 : f32 to vector<8x128xf32>
    %95 = arith.select %32, %85, %94 : vector<8x128xi1>, vector<8x128xf32>
    %96 = arith.truncf %95 : vector<8x128xf32> to vector<8x128xbf16>
    %97 = arith.index_cast %12 : i32 to index
    %c0_28 = arith.constant 0 : index
    %c128 = arith.constant 128 : index
    %98 = vector.load %arg10[%97, %c0_28, %c128] : memref<8x8x256xbf16, #tpu.memory_space<vmem>>, vector<1x8x128xbf16>
    %99 = vector.shape_cast %98 : vector<1x8x128xbf16> to vector<8x128xbf16>
    %100 = vector.shape_cast %96 : vector<8x128xbf16> to vector<1x8x128xbf16>
    tpu.vector_store %arg10[%97, %c0_28, %c128], %100 {strides = array<i32>} : memref<8x8x256xbf16, #tpu.memory_space<vmem>>, vector<1x8x128xbf16>,
    %c1_i32 = arith.constant 1 : i32
    %c7_i32_29 = arith.constant 7 : i32
    %101 = arith.subi %c7_i32_29, %c1_i32 : i32
    %102 = tpu.concatenate %58, %85 in 1 : vector<8x128xf32>, vector<8x128xf32> -> vector<8x256xf32>
    %103 = arith.truncf %102 : vector<8x256xf32> to vector<8x256xbf16>
    %c0_30 = arith.constant 0 : index
    %c0_31 = arith.constant 0 : index
    %104 = vector.load %arg5[%c0_30, %c0_31] : memref<256x1024xbf16, #tpu.memory_space<vmem>>, vector<256x1024xbf16>
    %cst_32 = arith.constant dense<0.000000e+00> : vector<8x1024xf32>
    %105 = tpu.matmul %103, %104, %cst_32 {dimension_numbers = #tpu.dot_dimension_numbers<[1], [0], [0], [1], [0, 0, 1, 1], [], []>} : vector<8x256xbf16>, vector<256x1024xbf16>, vector<8x1024xf32> -> vector<8x1024xf32>
    %106 = arith.index_cast %c1_i32 : i32 to index
    %c0_33 = arith.constant 0 : index
    %c0_34 = arith.constant 0 : index
    %107 = vector.load %arg9[%106, %c0_33, %c0_34] : memref<8x8x1024xbf16, #tpu.memory_space<vmem>>, vector<1x8x512xbf16>
    %108 = vector.shape_cast %107 : vector<1x8x512xbf16> to vector<8x512xbf16>
    %109 = arith.extf %108 : vector<8x512xbf16> to vector<8x512xf32>
    %110 = vector.extract_strided_slice %105 {offsets = [0, 0], sizes = [8, 512], strides = [1, 1]} : vector<8x1024xf32> to vector<8x512xf32>
    %111 = arith.addf %109, %110 : vector<8x512xf32>
    %112 = arith.index_cast %101 : i32 to index
    %c0_35 = arith.constant 0 : index
    %c512_36 = arith.constant 512 : index
    %113 = vector.load %arg9[%112, %c0_35, %c512_36] : memref<8x8x1024xbf16, #tpu.memory_space<vmem>>, vector<1x8x512xbf16>
    %114 = vector.shape_cast %113 : vector<1x8x512xbf16> to vector<8x512xbf16>
    %115 = arith.extf %114 : vector<8x512xbf16> to vector<8x512xf32>
    %116 = vector.extract_strided_slice %105 {offsets = [0, 512], sizes = [8, 512], strides = [1, 1]} : vector<8x1024xf32> to vector<8x512xf32>
    %117 = arith.addf %115, %116 : vector<8x512xf32>
    %118 = vector.broadcast %c1_i32 : i32 to vector<8x128xi32>
    %119 = arith.cmpi slt, %118, %0 : vector<8x128xi32>
    %120 = vector.broadcast %101 : i32 to vector<8x128xi32>
    %121 = arith.cmpi slt, %120, %0 : vector<8x128xi32>
    %122 = vector.extract_strided_slice %111 {offsets = [0, 0], sizes = [8, 128], strides = [1, 1]} : vector<8x512xf32> to vector<8x128xf32>
    %123 = arith.negf %122 : vector<8x128xf32>
    %124 = math.exp %123 : vector<8x128xf32>
    %cst_37 = arith.constant 1.000000e+00 : f32
    %125 = vector.broadcast %cst_37 : f32 to vector<8x128xf32>
    %126 = arith.addf %125, %124 : vector<8x128xf32>
    %127 = arith.divf %125, %126 : vector<8x128xf32>
    %128 = vector.extract_strided_slice %111 {offsets = [0, 128], sizes = [8, 128], strides = [1, 1]} : vector<8x512xf32> to vector<8x128xf32>
    %129 = arith.negf %128 : vector<8x128xf32>
    %130 = math.exp %129 : vector<8x128xf32>
    %cst_38 = arith.constant 1.000000e+00 : f32
    %131 = vector.broadcast %cst_38 : f32 to vector<8x128xf32>
    %132 = arith.addf %131, %130 : vector<8x128xf32>
    %133 = arith.divf %131, %132 : vector<8x128xf32>
    %134 = vector.extract_strided_slice %111 {offsets = [0, 256], sizes = [8, 128], strides = [1, 1]} : vector<8x512xf32> to vector<8x128xf32>
    %135 = math.tanh %134 : vector<8x128xf32>
    %136 = vector.extract_strided_slice %111 {offsets = [0, 384], sizes = [8, 128], strides = [1, 1]} : vector<8x512xf32> to vector<8x128xf32>
    %137 = arith.negf %136 : vector<8x128xf32>
    %138 = math.exp %137 : vector<8x128xf32>
    %cst_39 = arith.constant 1.000000e+00 : f32
    %139 = vector.broadcast %cst_39 : f32 to vector<8x128xf32>
    %140 = arith.addf %139, %138 : vector<8x128xf32>
    %141 = arith.divf %139, %140 : vector<8x128xf32>
    %142 = arith.mulf %133, %59 : vector<8x128xf32>
    %143 = arith.mulf %127, %135 : vector<8x128xf32>
    %144 = arith.addf %142, %143 : vector<8x128xf32>
    %145 = math.tanh %144 : vector<8x128xf32>
    %146 = arith.mulf %141, %145 : vector<8x128xf32>
    %147 = arith.select %119, %146, %58 : vector<8x128xi1>, vector<8x128xf32>
    %148 = arith.select %119, %144, %59 : vector<8x128xi1>, vector<8x128xf32>
    %149 = vector.extract_strided_slice %117 {offsets = [0, 0], sizes = [8, 128], strides = [1, 1]} : vector<8x512xf32> to vector<8x128xf32>
    %150 = arith.negf %149 : vector<8x128xf32>
    %151 = math.exp %150 : vector<8x128xf32>
    %cst_40 = arith.constant 1.000000e+00 : f32
    %152 = vector.broadcast %cst_40 : f32 to vector<8x128xf32>
    %153 = arith.addf %152, %151 : vector<8x128xf32>
    %154 = arith.divf %152, %153 : vector<8x128xf32>
    %155 = vector.extract_strided_slice %117 {offsets = [0, 128], sizes = [8, 128], strides = [1, 1]} : vector<8x512xf32> to vector<8x128xf32>
    %156 = arith.negf %155 : vector<8x128xf32>
    %157 = math.exp %156 : vector<8x128xf32>
    %cst_41 = arith.constant 1.000000e+00 : f32
    %158 = vector.broadcast %cst_41 : f32 to vector<8x128xf32>
    %159 = arith.addf %158, %157 : vector<8x128xf32>
    %160 = arith.divf %158, %159 : vector<8x128xf32>
    %161 = vector.extract_strided_slice %117 {offsets = [0, 256], sizes = [8, 128], strides = [1, 1]} : vector<8x512xf32> to vector<8x128xf32>
    %162 = math.tanh %161 : vector<8x128xf32>
    %163 = vector.extract_strided_slice %117 {offsets = [0, 384], sizes = [8, 128], strides = [1, 1]} : vector<8x512xf32> to vector<8x128xf32>
    %164 = arith.negf %163 : vector<8x128xf32>
    %165 = math.exp %164 : vector<8x128xf32>
    %cst_42 = arith.constant 1.000000e+00 : f32
    %166 = vector.broadcast %cst_42 : f32 to vector<8x128xf32>
    %167 = arith.addf %166, %165 : vector<8x128xf32>
    %168 = arith.divf %166, %167 : vector<8x128xf32>
    %169 = arith.mulf %160, %86 : vector<8x128xf32>
    %170 = arith.mulf %154, %162 : vector<8x128xf32>
    %171 = arith.addf %169, %170 : vector<8x128xf32>
    %172 = math.tanh %171 : vector<8x128xf32>
    %173 = arith.mulf %168, %172 : vector<8x128xf32>
    %174 = arith.select %121, %173, %85 : vector<8x128xi1>, vector<8x128xf32>
    %175 = arith.select %121, %171, %86 : vector<8x128xi1>, vector<8x128xf32>
    %cst_43 = arith.constant 0.000000e+00 : f32
    %176 = vector.broadcast %cst_43 : f32 to vector<8x128xf32>
    %177 = arith.select %119, %147, %176 : vector<8x128xi1>, vector<8x128xf32>
    %178 = arith.truncf %177 : vector<8x128xf32> to vector<8x128xbf16>
    %179 = arith.index_cast %c1_i32 : i32 to index
    %c0_44 = arith.constant 0 : index
    %c0_45 = arith.constant 0 : index
    %180 = vector.load %arg10[%179, %c0_44, %c0_45] : memref<8x8x256xbf16, #tpu.memory_space<vmem>>, vector<1x8x128xbf16>
    %181 = vector.shape_cast %180 : vector<1x8x128xbf16> to vector<8x128xbf16>
    %182 = vector.shape_cast %178 : vector<8x128xbf16> to vector<1x8x128xbf16>
    tpu.vector_store %arg10[%179, %c0_44, %c0_45], %182 {strides = array<i32>} : memref<8x8x256xbf16, #tpu.memory_space<vmem>>, vector<1x8x128xbf16>,
    %cst_46 = arith.constant 0.000000e+00 : f32
    %183 = vector.broadcast %cst_46 : f32 to vector<8x128xf32>
    %184 = arith.select %121, %174, %183 : vector<8x128xi1>, vector<8x128xf32>
    %185 = arith.truncf %184 : vector<8x128xf32> to vector<8x128xbf16>
    %186 = arith.index_cast %101 : i32 to index
    %c0_47 = arith.constant 0 : index
    %c128_48 = arith.constant 128 : index
    %187 = vector.load %arg10[%186, %c0_47, %c128_48] : memref<8x8x256xbf16, #tpu.memory_space<vmem>>, vector<1x8x128xbf16>
    %188 = vector.shape_cast %187 : vector<1x8x128xbf16> to vector<8x128xbf16>
    %189 = vector.shape_cast %185 : vector<8x128xbf16> to vector<1x8x128xbf16>
    tpu.vector_store %arg10[%186, %c0_47, %c128_48], %189 {strides = array<i32>} : memref<8x8x256xbf16, #tpu.memory_space<vmem>>, vector<1x8x128xbf16>,
    %c2_i32 = arith.constant 2 : i32
    %c7_i32_49 = arith.constant 7 : i32
    %190 = arith.subi %c7_i32_49, %c2_i32 : i32
    %191 = tpu.concatenate %147, %174 in 1 : vector<8x128xf32>, vector<8x128xf32> -> vector<8x256xf32>
    %192 = arith.truncf %191 : vector<8x256xf32> to vector<8x256xbf16>
    %c0_50 = arith.constant 0 : index
    %c0_51 = arith.constant 0 : index
    %193 = vector.load %arg5[%c0_50, %c0_51] : memref<256x1024xbf16, #tpu.memory_space<vmem>>, vector<256x1024xbf16>
    %cst_52 = arith.constant dense<0.000000e+00> : vector<8x1024xf32>
    %194 = tpu.matmul %192, %193, %cst_52 {dimension_numbers = #tpu.dot_dimension_numbers<[1], [0], [0], [1], [0, 0, 1, 1], [], []>} : vector<8x256xbf16>, vector<256x1024xbf16>, vector<8x1024xf32> -> vector<8x1024xf32>
    %195 = arith.index_cast %c2_i32 : i32 to index
    %c0_53 = arith.constant 0 : index
    %c0_54 = arith.constant 0 : index
    %196 = vector.load %arg9[%195, %c0_53, %c0_54] : memref<8x8x1024xbf16, #tpu.memory_space<vmem>>, vector<1x8x512xbf16>
    %197 = vector.shape_cast %196 : vector<1x8x512xbf16> to vector<8x512xbf16>
    %198 = arith.extf %197 : vector<8x512xbf16> to vector<8x512xf32>
    %199 = vector.extract_strided_slice %194 {offsets = [0, 0], sizes = [8, 512], strides = [1, 1]} : vector<8x1024xf32> to vector<8x512xf32>
    %200 = arith.addf %198, %199 : vector<8x512xf32>
    %201 = arith.index_cast %190 : i32 to index
    %c0_55 = arith.constant 0 : index
    %c512_56 = arith.constant 512 : index
    %202 = vector.load %arg9[%201, %c0_55, %c512_56] : memref<8x8x1024xbf16, #tpu.memory_space<vmem>>, vector<1x8x512xbf16>
    %203 = vector.shape_cast %202 : vector<1x8x512xbf16> to vector<8x512xbf16>
    %204 = arith.extf %203 : vector<8x512xbf16> to vector<8x512xf32>
    %205 = vector.extract_strided_slice %194 {offsets = [0, 512], sizes = [8, 512], strides = [1, 1]} : vector<8x1024xf32> to vector<8x512xf32>
    %206 = arith.addf %204, %205 : vector<8x512xf32>
    %207 = vector.broadcast %c2_i32 : i32 to vector<8x128xi32>
    %208 = arith.cmpi slt, %207, %0 : vector<8x128xi32>
    %209 = vector.broadcast %190 : i32 to vector<8x128xi32>
    %210 = arith.cmpi slt, %209, %0 : vector<8x128xi32>
    %211 = vector.extract_strided_slice %200 {offsets = [0, 0], sizes = [8, 128], strides = [1, 1]} : vector<8x512xf32> to vector<8x128xf32>
    %212 = arith.negf %211 : vector<8x128xf32>
    %213 = math.exp %212 : vector<8x128xf32>
    %cst_57 = arith.constant 1.000000e+00 : f32
    %214 = vector.broadcast %cst_57 : f32 to vector<8x128xf32>
    %215 = arith.addf %214, %213 : vector<8x128xf32>
    %216 = arith.divf %214, %215 : vector<8x128xf32>
    %217 = vector.extract_strided_slice %200 {offsets = [0, 128], sizes = [8, 128], strides = [1, 1]} : vector<8x512xf32> to vector<8x128xf32>
    %218 = arith.negf %217 : vector<8x128xf32>
    %219 = math.exp %218 : vector<8x128xf32>
    %cst_58 = arith.constant 1.000000e+00 : f32
    %220 = vector.broadcast %cst_58 : f32 to vector<8x128xf32>
    %221 = arith.addf %220, %219 : vector<8x128xf32>
    %222 = arith.divf %220, %221 : vector<8x128xf32>
    %223 = vector.extract_strided_slice %200 {offsets = [0, 256], sizes = [8, 128], strides = [1, 1]} : vector<8x512xf32> to vector<8x128xf32>
    %224 = math.tanh %223 : vector<8x128xf32>
    %225 = vector.extract_strided_slice %200 {offsets = [0, 384], sizes = [8, 128], strides = [1, 1]} : vector<8x512xf32> to vector<8x128xf32>
    %226 = arith.negf %225 : vector<8x128xf32>
    %227 = math.exp %226 : vector<8x128xf32>
    %cst_59 = arith.constant 1.000000e+00 : f32
    %228 = vector.broadcast %cst_59 : f32 to vector<8x128xf32>
    %229 = arith.addf %228, %227 : vector<8x128xf32>
    %230 = arith.divf %228, %229 : vector<8x128xf32>
    %231 = arith.mulf %222, %148 : vector<8x128xf32>
    %232 = arith.mulf %216, %224 : vector<8x128xf32>
    %233 = arith.addf %231, %232 : vector<8x128xf32>
    %234 = math.tanh %233 : vector<8x128xf32>
    %235 = arith.mulf %230, %234 : vector<8x128xf32>
    %236 = arith.select %208, %235, %147 : vector<8x128xi1>, vector<8x128xf32>
    %237 = arith.select %208, %233, %148 : vector<8x128xi1>, vector<8x128xf32>
    %238 = vector.extract_strided_slice %206 {offsets = [0, 0], sizes = [8, 128], strides = [1, 1]} : vector<8x512xf32> to vector<8x128xf32>
    %239 = arith.negf %238 : vector<8x128xf32>
    %240 = math.exp %239 : vector<8x128xf32>
    %cst_60 = arith.constant 1.000000e+00 : f32
    %241 = vector.broadcast %cst_60 : f32 to vector<8x128xf32>
    %242 = arith.addf %241, %240 : vector<8x128xf32>
    %243 = arith.divf %241, %242 : vector<8x128xf32>
    %244 = vector.extract_strided_slice %206 {offsets = [0, 128], sizes = [8, 128], strides = [1, 1]} : vector<8x512xf32> to vector<8x128xf32>
    %245 = arith.negf %244 : vector<8x128xf32>
    %246 = math.exp %245 : vector<8x128xf32>
    %cst_61 = arith.constant 1.000000e+00 : f32
    %247 = vector.broadcast %cst_61 : f32 to vector<8x128xf32>
    %248 = arith.addf %247, %246 : vector<8x128xf32>
    %249 = arith.divf %247, %248 : vector<8x128xf32>
    %250 = vector.extract_strided_slice %206 {offsets = [0, 256], sizes = [8, 128], strides = [1, 1]} : vector<8x512xf32> to vector<8x128xf32>
    %251 = math.tanh %250 : vector<8x128xf32>
    %252 = vector.extract_strided_slice %206 {offsets = [0, 384], sizes = [8, 128], strides = [1, 1]} : vector<8x512xf32> to vector<8x128xf32>
    %253 = arith.negf %252 : vector<8x128xf32>
    %254 = math.exp %253 : vector<8x128xf32>
    %cst_62 = arith.constant 1.000000e+00 : f32
    %255 = vector.broadcast %cst_62 : f32 to vector<8x128xf32>
    %256 = arith.addf %255, %254 : vector<8x128xf32>
    %257 = arith.divf %255, %256 : vector<8x128xf32>
    %258 = arith.mulf %249, %175 : vector<8x128xf32>
    %259 = arith.mulf %243, %251 : vector<8x128xf32>
    %260 = arith.addf %258, %259 : vector<8x128xf32>
    %261 = math.tanh %260 : vector<8x128xf32>
    %262 = arith.mulf %257, %261 : vector<8x128xf32>
    %263 = arith.select %210, %262, %174 : vector<8x128xi1>, vector<8x128xf32>
    %264 = arith.select %210, %260, %175 : vector<8x128xi1>, vector<8x128xf32>
    %cst_63 = arith.constant 0.000000e+00 : f32
    %265 = vector.broadcast %cst_63 : f32 to vector<8x128xf32>
    %266 = arith.select %208, %236, %265 : vector<8x128xi1>, vector<8x128xf32>
    %267 = arith.truncf %266 : vector<8x128xf32> to vector<8x128xbf16>
    %268 = arith.index_cast %c2_i32 : i32 to index
    %c0_64 = arith.constant 0 : index
    %c0_65 = arith.constant 0 : index
    %269 = vector.load %arg10[%268, %c0_64, %c0_65] : memref<8x8x256xbf16, #tpu.memory_space<vmem>>, vector<1x8x128xbf16>
    %270 = vector.shape_cast %269 : vector<1x8x128xbf16> to vector<8x128xbf16>
    %271 = vector.shape_cast %267 : vector<8x128xbf16> to vector<1x8x128xbf16>
    tpu.vector_store %arg10[%268, %c0_64, %c0_65], %271 {strides = array<i32>} : memref<8x8x256xbf16, #tpu.memory_space<vmem>>, vector<1x8x128xbf16>,
    %cst_66 = arith.constant 0.000000e+00 : f32
    %272 = vector.broadcast %cst_66 : f32 to vector<8x128xf32>
    %273 = arith.select %210, %263, %272 : vector<8x128xi1>, vector<8x128xf32>
    %274 = arith.truncf %273 : vector<8x128xf32> to vector<8x128xbf16>
    %275 = arith.index_cast %190 : i32 to index
    %c0_67 = arith.constant 0 : index
    %c128_68 = arith.constant 128 : index
    %276 = vector.load %arg10[%275, %c0_67, %c128_68] : memref<8x8x256xbf16, #tpu.memory_space<vmem>>, vector<1x8x128xbf16>
    %277 = vector.shape_cast %276 : vector<1x8x128xbf16> to vector<8x128xbf16>
    %278 = vector.shape_cast %274 : vector<8x128xbf16> to vector<1x8x128xbf16>
    tpu.vector_store %arg10[%275, %c0_67, %c128_68], %278 {strides = array<i32>} : memref<8x8x256xbf16, #tpu.memory_space<vmem>>, vector<1x8x128xbf16>,
    %c3_i32 = arith.constant 3 : i32
    %c7_i32_69 = arith.constant 7 : i32
    %279 = arith.subi %c7_i32_69, %c3_i32 : i32
    %280 = tpu.concatenate %236, %263 in 1 : vector<8x128xf32>, vector<8x128xf32> -> vector<8x256xf32>
    %281 = arith.truncf %280 : vector<8x256xf32> to vector<8x256xbf16>
    %c0_70 = arith.constant 0 : index
    %c0_71 = arith.constant 0 : index
    %282 = vector.load %arg5[%c0_70, %c0_71] : memref<256x1024xbf16, #tpu.memory_space<vmem>>, vector<256x1024xbf16>
    %cst_72 = arith.constant dense<0.000000e+00> : vector<8x1024xf32>
    %283 = tpu.matmul %281, %282, %cst_72 {dimension_numbers = #tpu.dot_dimension_numbers<[1], [0], [0], [1], [0, 0, 1, 1], [], []>} : vector<8x256xbf16>, vector<256x1024xbf16>, vector<8x1024xf32> -> vector<8x1024xf32>
    %284 = arith.index_cast %c3_i32 : i32 to index
    %c0_73 = arith.constant 0 : index
    %c0_74 = arith.constant 0 : index
    %285 = vector.load %arg9[%284, %c0_73, %c0_74] : memref<8x8x1024xbf16, #tpu.memory_space<vmem>>, vector<1x8x512xbf16>
    %286 = vector.shape_cast %285 : vector<1x8x512xbf16> to vector<8x512xbf16>
    %287 = arith.extf %286 : vector<8x512xbf16> to vector<8x512xf32>
    %288 = vector.extract_strided_slice %283 {offsets = [0, 0], sizes = [8, 512], strides = [1, 1]} : vector<8x1024xf32> to vector<8x512xf32>
    %289 = arith.addf %287, %288 : vector<8x512xf32>
    %290 = arith.index_cast %279 : i32 to index
    %c0_75 = arith.constant 0 : index
    %c512_76 = arith.constant 512 : index
    %291 = vector.load %arg9[%290, %c0_75, %c512_76] : memref<8x8x1024xbf16, #tpu.memory_space<vmem>>, vector<1x8x512xbf16>
    %292 = vector.shape_cast %291 : vector<1x8x512xbf16> to vector<8x512xbf16>
    %293 = arith.extf %292 : vector<8x512xbf16> to vector<8x512xf32>
    %294 = vector.extract_strided_slice %283 {offsets = [0, 512], sizes = [8, 512], strides = [1, 1]} : vector<8x1024xf32> to vector<8x512xf32>
    %295 = arith.addf %293, %294 : vector<8x512xf32>
    %296 = vector.broadcast %c3_i32 : i32 to vector<8x128xi32>
    %297 = arith.cmpi slt, %296, %0 : vector<8x128xi32>
    %298 = vector.broadcast %279 : i32 to vector<8x128xi32>
    %299 = arith.cmpi slt, %298, %0 : vector<8x128xi32>
    %300 = vector.extract_strided_slice %289 {offsets = [0, 0], sizes = [8, 128], strides = [1, 1]} : vector<8x512xf32> to vector<8x128xf32>
    %301 = arith.negf %300 : vector<8x128xf32>
    %302 = math.exp %301 : vector<8x128xf32>
    %cst_77 = arith.constant 1.000000e+00 : f32
    %303 = vector.broadcast %cst_77 : f32 to vector<8x128xf32>
    %304 = arith.addf %303, %302 : vector<8x128xf32>
    %305 = arith.divf %303, %304 : vector<8x128xf32>
    %306 = vector.extract_strided_slice %289 {offsets = [0, 128], sizes = [8, 128], strides = [1, 1]} : vector<8x512xf32> to vector<8x128xf32>
    %307 = arith.negf %306 : vector<8x128xf32>
    %308 = math.exp %307 : vector<8x128xf32>
    %cst_78 = arith.constant 1.000000e+00 : f32
    %309 = vector.broadcast %cst_78 : f32 to vector<8x128xf32>
    %310 = arith.addf %309, %308 : vector<8x128xf32>
    %311 = arith.divf %309, %310 : vector<8x128xf32>
    %312 = vector.extract_strided_slice %289 {offsets = [0, 256], sizes = [8, 128], strides = [1, 1]} : vector<8x512xf32> to vector<8x128xf32>
    %313 = math.tanh %312 : vector<8x128xf32>
    %314 = vector.extract_strided_slice %289 {offsets = [0, 384], sizes = [8, 128], strides = [1, 1]} : vector<8x512xf32> to vector<8x128xf32>
    %315 = arith.negf %314 : vector<8x128xf32>
    %316 = math.exp %315 : vector<8x128xf32>
    %cst_79 = arith.constant 1.000000e+00 : f32
    %317 = vector.broadcast %cst_79 : f32 to vector<8x128xf32>
    %318 = arith.addf %317, %316 : vector<8x128xf32>
    %319 = arith.divf %317, %318 : vector<8x128xf32>
    %320 = arith.mulf %311, %237 : vector<8x128xf32>
    %321 = arith.mulf %305, %313 : vector<8x128xf32>
    %322 = arith.addf %320, %321 : vector<8x128xf32>
    %323 = math.tanh %322 : vector<8x128xf32>
    %324 = arith.mulf %319, %323 : vector<8x128xf32>
    %325 = arith.select %297, %324, %236 : vector<8x128xi1>, vector<8x128xf32>
    %326 = arith.select %297, %322, %237 : vector<8x128xi1>, vector<8x128xf32>
    %327 = vector.extract_strided_slice %295 {offsets = [0, 0], sizes = [8, 128], strides = [1, 1]} : vector<8x512xf32> to vector<8x128xf32>
    %328 = arith.negf %327 : vector<8x128xf32>
    %329 = math.exp %328 : vector<8x128xf32>
    %cst_80 = arith.constant 1.000000e+00 : f32
    %330 = vector.broadcast %cst_80 : f32 to vector<8x128xf32>
    %331 = arith.addf %330, %329 : vector<8x128xf32>
    %332 = arith.divf %330, %331 : vector<8x128xf32>
    %333 = vector.extract_strided_slice %295 {offsets = [0, 128], sizes = [8, 128], strides = [1, 1]} : vector<8x512xf32> to vector<8x128xf32>
    %334 = arith.negf %333 : vector<8x128xf32>
    %335 = math.exp %334 : vector<8x128xf32>
    %cst_81 = arith.constant 1.000000e+00 : f32
    %336 = vector.broadcast %cst_81 : f32 to vector<8x128xf32>
    %337 = arith.addf %336, %335 : vector<8x128xf32>
    %338 = arith.divf %336, %337 : vector<8x128xf32>
    %339 = vector.extract_strided_slice %295 {offsets = [0, 256], sizes = [8, 128], strides = [1, 1]} : vector<8x512xf32> to vector<8x128xf32>
    %340 = math.tanh %339 : vector<8x128xf32>
    %341 = vector.extract_strided_slice %295 {offsets = [0, 384], sizes = [8, 128], strides = [1, 1]} : vector<8x512xf32> to vector<8x128xf32>
    %342 = arith.negf %341 : vector<8x128xf32>
    %343 = math.exp %342 : vector<8x128xf32>
    %cst_82 = arith.constant 1.000000e+00 : f32
    %344 = vector.broadcast %cst_82 : f32 to vector<8x128xf32>
    %345 = arith.addf %344, %343 : vector<8x128xf32>
    %346 = arith.divf %344, %345 : vector<8x128xf32>
    %347 = arith.mulf %338, %264 : vector<8x128xf32>
    %348 = arith.mulf %332, %340 : vector<8x128xf32>
    %349 = arith.addf %347, %348 : vector<8x128xf32>
    %350 = math.tanh %349 : vector<8x128xf32>
    %351 = arith.mulf %346, %350 : vector<8x128xf32>
    %352 = arith.select %299, %351, %263 : vector<8x128xi1>, vector<8x128xf32>
    %353 = arith.select %299, %349, %264 : vector<8x128xi1>, vector<8x128xf32>
    %cst_83 = arith.constant 0.000000e+00 : f32
    %354 = vector.broadcast %cst_83 : f32 to vector<8x128xf32>
    %355 = arith.select %297, %325, %354 : vector<8x128xi1>, vector<8x128xf32>
    %356 = arith.truncf %355 : vector<8x128xf32> to vector<8x128xbf16>
    %357 = arith.index_cast %c3_i32 : i32 to index
    %c0_84 = arith.constant 0 : index
    %c0_85 = arith.constant 0 : index
    %358 = vector.load %arg10[%357, %c0_84, %c0_85] : memref<8x8x256xbf16, #tpu.memory_space<vmem>>, vector<1x8x128xbf16>
    %359 = vector.shape_cast %358 : vector<1x8x128xbf16> to vector<8x128xbf16>
    %360 = vector.shape_cast %356 : vector<8x128xbf16> to vector<1x8x128xbf16>
    tpu.vector_store %arg10[%357, %c0_84, %c0_85], %360 {strides = array<i32>} : memref<8x8x256xbf16, #tpu.memory_space<vmem>>, vector<1x8x128xbf16>,
    %cst_86 = arith.constant 0.000000e+00 : f32
    %361 = vector.broadcast %cst_86 : f32 to vector<8x128xf32>
    %362 = arith.select %299, %352, %361 : vector<8x128xi1>, vector<8x128xf32>
    %363 = arith.truncf %362 : vector<8x128xf32> to vector<8x128xbf16>
    %364 = arith.index_cast %279 : i32 to index
    %c0_87 = arith.constant 0 : index
    %c128_88 = arith.constant 128 : index
    %365 = vector.load %arg10[%364, %c0_87, %c128_88] : memref<8x8x256xbf16, #tpu.memory_space<vmem>>, vector<1x8x128xbf16>
    %366 = vector.shape_cast %365 : vector<1x8x128xbf16> to vector<8x128xbf16>
    %367 = vector.shape_cast %363 : vector<8x128xbf16> to vector<1x8x128xbf16>
    tpu.vector_store %arg10[%364, %c0_87, %c128_88], %367 {strides = array<i32>} : memref<8x8x256xbf16, #tpu.memory_space<vmem>>, vector<1x8x128xbf16>,
    %c4_i32 = arith.constant 4 : i32
    %c7_i32_89 = arith.constant 7 : i32
    %368 = arith.subi %c7_i32_89, %c4_i32 : i32
    %369 = tpu.concatenate %325, %352 in 1 : vector<8x128xf32>, vector<8x128xf32> -> vector<8x256xf32>
    %370 = arith.truncf %369 : vector<8x256xf32> to vector<8x256xbf16>
    %c0_90 = arith.constant 0 : index
    %c0_91 = arith.constant 0 : index
    %371 = vector.load %arg5[%c0_90, %c0_91] : memref<256x1024xbf16, #tpu.memory_space<vmem>>, vector<256x1024xbf16>
    %cst_92 = arith.constant dense<0.000000e+00> : vector<8x1024xf32>
    %372 = tpu.matmul %370, %371, %cst_92 {dimension_numbers = #tpu.dot_dimension_numbers<[1], [0], [0], [1], [0, 0, 1, 1], [], []>} : vector<8x256xbf16>, vector<256x1024xbf16>, vector<8x1024xf32> -> vector<8x1024xf32>
    %373 = arith.index_cast %c4_i32 : i32 to index
    %c0_93 = arith.constant 0 : index
    %c0_94 = arith.constant 0 : index
    %374 = vector.load %arg9[%373, %c0_93, %c0_94] : memref<8x8x1024xbf16, #tpu.memory_space<vmem>>, vector<1x8x512xbf16>
    %375 = vector.shape_cast %374 : vector<1x8x512xbf16> to vector<8x512xbf16>
    %376 = arith.extf %375 : vector<8x512xbf16> to vector<8x512xf32>
    %377 = vector.extract_strided_slice %372 {offsets = [0, 0], sizes = [8, 512], strides = [1, 1]} : vector<8x1024xf32> to vector<8x512xf32>
    %378 = arith.addf %376, %377 : vector<8x512xf32>
    %379 = arith.index_cast %368 : i32 to index
    %c0_95 = arith.constant 0 : index
    %c512_96 = arith.constant 512 : index
    %380 = vector.load %arg9[%379, %c0_95, %c512_96] : memref<8x8x1024xbf16, #tpu.memory_space<vmem>>, vector<1x8x512xbf16>
    %381 = vector.shape_cast %380 : vector<1x8x512xbf16> to vector<8x512xbf16>
    %382 = arith.extf %381 : vector<8x512xbf16> to vector<8x512xf32>
    %383 = vector.extract_strided_slice %372 {offsets = [0, 512], sizes = [8, 512], strides = [1, 1]} : vector<8x1024xf32> to vector<8x512xf32>
    %384 = arith.addf %382, %383 : vector<8x512xf32>
    %385 = vector.broadcast %c4_i32 : i32 to vector<8x128xi32>
    %386 = arith.cmpi slt, %385, %0 : vector<8x128xi32>
    %387 = vector.broadcast %368 : i32 to vector<8x128xi32>
    %388 = arith.cmpi slt, %387, %0 : vector<8x128xi32>
    %389 = vector.extract_strided_slice %378 {offsets = [0, 0], sizes = [8, 128], strides = [1, 1]} : vector<8x512xf32> to vector<8x128xf32>
    %390 = arith.negf %389 : vector<8x128xf32>
    %391 = math.exp %390 : vector<8x128xf32>
    %cst_97 = arith.constant 1.000000e+00 : f32
    %392 = vector.broadcast %cst_97 : f32 to vector<8x128xf32>
    %393 = arith.addf %392, %391 : vector<8x128xf32>
    %394 = arith.divf %392, %393 : vector<8x128xf32>
    %395 = vector.extract_strided_slice %378 {offsets = [0, 128], sizes = [8, 128], strides = [1, 1]} : vector<8x512xf32> to vector<8x128xf32>
    %396 = arith.negf %395 : vector<8x128xf32>
    %397 = math.exp %396 : vector<8x128xf32>
    %cst_98 = arith.constant 1.000000e+00 : f32
    %398 = vector.broadcast %cst_98 : f32 to vector<8x128xf32>
    %399 = arith.addf %398, %397 : vector<8x128xf32>
    %400 = arith.divf %398, %399 : vector<8x128xf32>
    %401 = vector.extract_strided_slice %378 {offsets = [0, 256], sizes = [8, 128], strides = [1, 1]} : vector<8x512xf32> to vector<8x128xf32>
    %402 = math.tanh %401 : vector<8x128xf32>
    %403 = vector.extract_strided_slice %378 {offsets = [0, 384], sizes = [8, 128], strides = [1, 1]} : vector<8x512xf32> to vector<8x128xf32>
    %404 = arith.negf %403 : vector<8x128xf32>
    %405 = math.exp %404 : vector<8x128xf32>
    %cst_99 = arith.constant 1.000000e+00 : f32
    %406 = vector.broadcast %cst_99 : f32 to vector<8x128xf32>
    %407 = arith.addf %406, %405 : vector<8x128xf32>
    %408 = arith.divf %406, %407 : vector<8x128xf32>
    %409 = arith.mulf %400, %326 : vector<8x128xf32>
    %410 = arith.mulf %394, %402 : vector<8x128xf32>
    %411 = arith.addf %409, %410 : vector<8x128xf32>
    %412 = math.tanh %411 : vector<8x128xf32>
    %413 = arith.mulf %408, %412 : vector<8x128xf32>
    %414 = arith.select %386, %413, %325 : vector<8x128xi1>, vector<8x128xf32>
    %415 = arith.select %386, %411, %326 : vector<8x128xi1>, vector<8x128xf32>
    %416 = vector.extract_strided_slice %384 {offsets = [0, 0], sizes = [8, 128], strides = [1, 1]} : vector<8x512xf32> to vector<8x128xf32>
    %417 = arith.negf %416 : vector<8x128xf32>
    %418 = math.exp %417 : vector<8x128xf32>
    %cst_100 = arith.constant 1.000000e+00 : f32
    %419 = vector.broadcast %cst_100 : f32 to vector<8x128xf32>
    %420 = arith.addf %419, %418 : vector<8x128xf32>
    %421 = arith.divf %419, %420 : vector<8x128xf32>
    %422 = vector.extract_strided_slice %384 {offsets = [0, 128], sizes = [8, 128], strides = [1, 1]} : vector<8x512xf32> to vector<8x128xf32>
    %423 = arith.negf %422 : vector<8x128xf32>
    %424 = math.exp %423 : vector<8x128xf32>
    %cst_101 = arith.constant 1.000000e+00 : f32
    %425 = vector.broadcast %cst_101 : f32 to vector<8x128xf32>
    %426 = arith.addf %425, %424 : vector<8x128xf32>
    %427 = arith.divf %425, %426 : vector<8x128xf32>
    %428 = vector.extract_strided_slice %384 {offsets = [0, 256], sizes = [8, 128], strides = [1, 1]} : vector<8x512xf32> to vector<8x128xf32>
    %429 = math.tanh %428 : vector<8x128xf32>
    %430 = vector.extract_strided_slice %384 {offsets = [0, 384], sizes = [8, 128], strides = [1, 1]} : vector<8x512xf32> to vector<8x128xf32>
    %431 = arith.negf %430 : vector<8x128xf32>
    %432 = math.exp %431 : vector<8x128xf32>
    %cst_102 = arith.constant 1.000000e+00 : f32
    %433 = vector.broadcast %cst_102 : f32 to vector<8x128xf32>
    %434 = arith.addf %433, %432 : vector<8x128xf32>
    %435 = arith.divf %433, %434 : vector<8x128xf32>
    %436 = arith.mulf %427, %353 : vector<8x128xf32>
    %437 = arith.mulf %421, %429 : vector<8x128xf32>
    %438 = arith.addf %436, %437 : vector<8x128xf32>
    %439 = math.tanh %438 : vector<8x128xf32>
    %440 = arith.mulf %435, %439 : vector<8x128xf32>
    %441 = arith.select %388, %440, %352 : vector<8x128xi1>, vector<8x128xf32>
    %442 = arith.select %388, %438, %353 : vector<8x128xi1>, vector<8x128xf32>
    %cst_103 = arith.constant 0.000000e+00 : f32
    %443 = vector.broadcast %cst_103 : f32 to vector<8x128xf32>
    %444 = arith.select %386, %414, %443 : vector<8x128xi1>, vector<8x128xf32>
    %445 = arith.truncf %444 : vector<8x128xf32> to vector<8x128xbf16>
    %446 = arith.index_cast %c4_i32 : i32 to index
    %c0_104 = arith.constant 0 : index
    %c0_105 = arith.constant 0 : index
    %447 = vector.load %arg10[%446, %c0_104, %c0_105] : memref<8x8x256xbf16, #tpu.memory_space<vmem>>, vector<1x8x128xbf16>
    %448 = vector.shape_cast %447 : vector<1x8x128xbf16> to vector<8x128xbf16>
    %449 = vector.shape_cast %445 : vector<8x128xbf16> to vector<1x8x128xbf16>
    tpu.vector_store %arg10[%446, %c0_104, %c0_105], %449 {strides = array<i32>} : memref<8x8x256xbf16, #tpu.memory_space<vmem>>, vector<1x8x128xbf16>,
    %cst_106 = arith.constant 0.000000e+00 : f32
    %450 = vector.broadcast %cst_106 : f32 to vector<8x128xf32>
    %451 = arith.select %388, %441, %450 : vector<8x128xi1>, vector<8x128xf32>
    %452 = arith.truncf %451 : vector<8x128xf32> to vector<8x128xbf16>
    %453 = arith.index_cast %368 : i32 to index
    %c0_107 = arith.constant 0 : index
    %c128_108 = arith.constant 128 : index
    %454 = vector.load %arg10[%453, %c0_107, %c128_108] : memref<8x8x256xbf16, #tpu.memory_space<vmem>>, vector<1x8x128xbf16>
    %455 = vector.shape_cast %454 : vector<1x8x128xbf16> to vector<8x128xbf16>
    %456 = vector.shape_cast %452 : vector<8x128xbf16> to vector<1x8x128xbf16>
    tpu.vector_store %arg10[%453, %c0_107, %c128_108], %456 {strides = array<i32>} : memref<8x8x256xbf16, #tpu.memory_space<vmem>>, vector<1x8x128xbf16>,
    %c5_i32 = arith.constant 5 : i32
    %c7_i32_109 = arith.constant 7 : i32
    %457 = arith.subi %c7_i32_109, %c5_i32 : i32
    %458 = tpu.concatenate %414, %441 in 1 : vector<8x128xf32>, vector<8x128xf32> -> vector<8x256xf32>
    %459 = arith.truncf %458 : vector<8x256xf32> to vector<8x256xbf16>
    %c0_110 = arith.constant 0 : index
    %c0_111 = arith.constant 0 : index
    %460 = vector.load %arg5[%c0_110, %c0_111] : memref<256x1024xbf16, #tpu.memory_space<vmem>>, vector<256x1024xbf16>
    %cst_112 = arith.constant dense<0.000000e+00> : vector<8x1024xf32>
    %461 = tpu.matmul %459, %460, %cst_112 {dimension_numbers = #tpu.dot_dimension_numbers<[1], [0], [0], [1], [0, 0, 1, 1], [], []>} : vector<8x256xbf16>, vector<256x1024xbf16>, vector<8x1024xf32> -> vector<8x1024xf32>
    %462 = arith.index_cast %c5_i32 : i32 to index
    %c0_113 = arith.constant 0 : index
    %c0_114 = arith.constant 0 : index
    %463 = vector.load %arg9[%462, %c0_113, %c0_114] : memref<8x8x1024xbf16, #tpu.memory_space<vmem>>, vector<1x8x512xbf16>
    %464 = vector.shape_cast %463 : vector<1x8x512xbf16> to vector<8x512xbf16>
    %465 = arith.extf %464 : vector<8x512xbf16> to vector<8x512xf32>
    %466 = vector.extract_strided_slice %461 {offsets = [0, 0], sizes = [8, 512], strides = [1, 1]} : vector<8x1024xf32> to vector<8x512xf32>
    %467 = arith.addf %465, %466 : vector<8x512xf32>
    %468 = arith.index_cast %457 : i32 to index
    %c0_115 = arith.constant 0 : index
    %c512_116 = arith.constant 512 : index
    %469 = vector.load %arg9[%468, %c0_115, %c512_116] : memref<8x8x1024xbf16, #tpu.memory_space<vmem>>, vector<1x8x512xbf16>
    %470 = vector.shape_cast %469 : vector<1x8x512xbf16> to vector<8x512xbf16>
    %471 = arith.extf %470 : vector<8x512xbf16> to vector<8x512xf32>
    %472 = vector.extract_strided_slice %461 {offsets = [0, 512], sizes = [8, 512], strides = [1, 1]} : vector<8x1024xf32> to vector<8x512xf32>
    %473 = arith.addf %471, %472 : vector<8x512xf32>
    %474 = vector.broadcast %c5_i32 : i32 to vector<8x128xi32>
    %475 = arith.cmpi slt, %474, %0 : vector<8x128xi32>
    %476 = vector.broadcast %457 : i32 to vector<8x128xi32>
    %477 = arith.cmpi slt, %476, %0 : vector<8x128xi32>
    %478 = vector.extract_strided_slice %467 {offsets = [0, 0], sizes = [8, 128], strides = [1, 1]} : vector<8x512xf32> to vector<8x128xf32>
    %479 = arith.negf %478 : vector<8x128xf32>
    %480 = math.exp %479 : vector<8x128xf32>
    %cst_117 = arith.constant 1.000000e+00 : f32
    %481 = vector.broadcast %cst_117 : f32 to vector<8x128xf32>
    %482 = arith.addf %481, %480 : vector<8x128xf32>
    %483 = arith.divf %481, %482 : vector<8x128xf32>
    %484 = vector.extract_strided_slice %467 {offsets = [0, 128], sizes = [8, 128], strides = [1, 1]} : vector<8x512xf32> to vector<8x128xf32>
    %485 = arith.negf %484 : vector<8x128xf32>
    %486 = math.exp %485 : vector<8x128xf32>
    %cst_118 = arith.constant 1.000000e+00 : f32
    %487 = vector.broadcast %cst_118 : f32 to vector<8x128xf32>
    %488 = arith.addf %487, %486 : vector<8x128xf32>
    %489 = arith.divf %487, %488 : vector<8x128xf32>
    %490 = vector.extract_strided_slice %467 {offsets = [0, 256], sizes = [8, 128], strides = [1, 1]} : vector<8x512xf32> to vector<8x128xf32>
    %491 = math.tanh %490 : vector<8x128xf32>
    %492 = vector.extract_strided_slice %467 {offsets = [0, 384], sizes = [8, 128], strides = [1, 1]} : vector<8x512xf32> to vector<8x128xf32>
    %493 = arith.negf %492 : vector<8x128xf32>
    %494 = math.exp %493 : vector<8x128xf32>
    %cst_119 = arith.constant 1.000000e+00 : f32
    %495 = vector.broadcast %cst_119 : f32 to vector<8x128xf32>
    %496 = arith.addf %495, %494 : vector<8x128xf32>
    %497 = arith.divf %495, %496 : vector<8x128xf32>
    %498 = arith.mulf %489, %415 : vector<8x128xf32>
    %499 = arith.mulf %483, %491 : vector<8x128xf32>
    %500 = arith.addf %498, %499 : vector<8x128xf32>
    %501 = math.tanh %500 : vector<8x128xf32>
    %502 = arith.mulf %497, %501 : vector<8x128xf32>
    %503 = arith.select %475, %502, %414 : vector<8x128xi1>, vector<8x128xf32>
    %504 = arith.select %475, %500, %415 : vector<8x128xi1>, vector<8x128xf32>
    %505 = vector.extract_strided_slice %473 {offsets = [0, 0], sizes = [8, 128], strides = [1, 1]} : vector<8x512xf32> to vector<8x128xf32>
    %506 = arith.negf %505 : vector<8x128xf32>
    %507 = math.exp %506 : vector<8x128xf32>
    %cst_120 = arith.constant 1.000000e+00 : f32
    %508 = vector.broadcast %cst_120 : f32 to vector<8x128xf32>
    %509 = arith.addf %508, %507 : vector<8x128xf32>
    %510 = arith.divf %508, %509 : vector<8x128xf32>
    %511 = vector.extract_strided_slice %473 {offsets = [0, 128], sizes = [8, 128], strides = [1, 1]} : vector<8x512xf32> to vector<8x128xf32>
    %512 = arith.negf %511 : vector<8x128xf32>
    %513 = math.exp %512 : vector<8x128xf32>
    %cst_121 = arith.constant 1.000000e+00 : f32
    %514 = vector.broadcast %cst_121 : f32 to vector<8x128xf32>
    %515 = arith.addf %514, %513 : vector<8x128xf32>
    %516 = arith.divf %514, %515 : vector<8x128xf32>
    %517 = vector.extract_strided_slice %473 {offsets = [0, 256], sizes = [8, 128], strides = [1, 1]} : vector<8x512xf32> to vector<8x128xf32>
    %518 = math.tanh %517 : vector<8x128xf32>
    %519 = vector.extract_strided_slice %473 {offsets = [0, 384], sizes = [8, 128], strides = [1, 1]} : vector<8x512xf32> to vector<8x128xf32>
    %520 = arith.negf %519 : vector<8x128xf32>
    %521 = math.exp %520 : vector<8x128xf32>
    %cst_122 = arith.constant 1.000000e+00 : f32
    %522 = vector.broadcast %cst_122 : f32 to vector<8x128xf32>
    %523 = arith.addf %522, %521 : vector<8x128xf32>
    %524 = arith.divf %522, %523 : vector<8x128xf32>
    %525 = arith.mulf %516, %442 : vector<8x128xf32>
    %526 = arith.mulf %510, %518 : vector<8x128xf32>
    %527 = arith.addf %525, %526 : vector<8x128xf32>
    %528 = math.tanh %527 : vector<8x128xf32>
    %529 = arith.mulf %524, %528 : vector<8x128xf32>
    %530 = arith.select %477, %529, %441 : vector<8x128xi1>, vector<8x128xf32>
    %531 = arith.select %477, %527, %442 : vector<8x128xi1>, vector<8x128xf32>
    %cst_123 = arith.constant 0.000000e+00 : f32
    %532 = vector.broadcast %cst_123 : f32 to vector<8x128xf32>
    %533 = arith.select %475, %503, %532 : vector<8x128xi1>, vector<8x128xf32>
    %534 = arith.truncf %533 : vector<8x128xf32> to vector<8x128xbf16>
    %535 = arith.index_cast %c5_i32 : i32 to index
    %c0_124 = arith.constant 0 : index
    %c0_125 = arith.constant 0 : index
    %536 = vector.load %arg10[%535, %c0_124, %c0_125] : memref<8x8x256xbf16, #tpu.memory_space<vmem>>, vector<1x8x128xbf16>
    %537 = vector.shape_cast %536 : vector<1x8x128xbf16> to vector<8x128xbf16>
    %538 = vector.shape_cast %534 : vector<8x128xbf16> to vector<1x8x128xbf16>
    tpu.vector_store %arg10[%535, %c0_124, %c0_125], %538 {strides = array<i32>} : memref<8x8x256xbf16, #tpu.memory_space<vmem>>, vector<1x8x128xbf16>,
    %cst_126 = arith.constant 0.000000e+00 : f32
    %539 = vector.broadcast %cst_126 : f32 to vector<8x128xf32>
    %540 = arith.select %477, %530, %539 : vector<8x128xi1>, vector<8x128xf32>
    %541 = arith.truncf %540 : vector<8x128xf32> to vector<8x128xbf16>
    %542 = arith.index_cast %457 : i32 to index
    %c0_127 = arith.constant 0 : index
    %c128_128 = arith.constant 128 : index
    %543 = vector.load %arg10[%542, %c0_127, %c128_128] : memref<8x8x256xbf16, #tpu.memory_space<vmem>>, vector<1x8x128xbf16>
    %544 = vector.shape_cast %543 : vector<1x8x128xbf16> to vector<8x128xbf16>
    %545 = vector.shape_cast %541 : vector<8x128xbf16> to vector<1x8x128xbf16>
    tpu.vector_store %arg10[%542, %c0_127, %c128_128], %545 {strides = array<i32>} : memref<8x8x256xbf16, #tpu.memory_space<vmem>>, vector<1x8x128xbf16>,
    %c6_i32 = arith.constant 6 : i32
    %c7_i32_129 = arith.constant 7 : i32
    %546 = arith.subi %c7_i32_129, %c6_i32 : i32
    %547 = tpu.concatenate %503, %530 in 1 : vector<8x128xf32>, vector<8x128xf32> -> vector<8x256xf32>
    %548 = arith.truncf %547 : vector<8x256xf32> to vector<8x256xbf16>
    %c0_130 = arith.constant 0 : index
    %c0_131 = arith.constant 0 : index
    %549 = vector.load %arg5[%c0_130, %c0_131] : memref<256x1024xbf16, #tpu.memory_space<vmem>>, vector<256x1024xbf16>
    %cst_132 = arith.constant dense<0.000000e+00> : vector<8x1024xf32>
    %550 = tpu.matmul %548, %549, %cst_132 {dimension_numbers = #tpu.dot_dimension_numbers<[1], [0], [0], [1], [0, 0, 1, 1], [], []>} : vector<8x256xbf16>, vector<256x1024xbf16>, vector<8x1024xf32> -> vector<8x1024xf32>
    %551 = arith.index_cast %c6_i32 : i32 to index
    %c0_133 = arith.constant 0 : index
    %c0_134 = arith.constant 0 : index
    %552 = vector.load %arg9[%551, %c0_133, %c0_134] : memref<8x8x1024xbf16, #tpu.memory_space<vmem>>, vector<1x8x512xbf16>
    %553 = vector.shape_cast %552 : vector<1x8x512xbf16> to vector<8x512xbf16>
    %554 = arith.extf %553 : vector<8x512xbf16> to vector<8x512xf32>
    %555 = vector.extract_strided_slice %550 {offsets = [0, 0], sizes = [8, 512], strides = [1, 1]} : vector<8x1024xf32> to vector<8x512xf32>
    %556 = arith.addf %554, %555 : vector<8x512xf32>
    %557 = arith.index_cast %546 : i32 to index
    %c0_135 = arith.constant 0 : index
    %c512_136 = arith.constant 512 : index
    %558 = vector.load %arg9[%557, %c0_135, %c512_136] : memref<8x8x1024xbf16, #tpu.memory_space<vmem>>, vector<1x8x512xbf16>
    %559 = vector.shape_cast %558 : vector<1x8x512xbf16> to vector<8x512xbf16>
    %560 = arith.extf %559 : vector<8x512xbf16> to vector<8x512xf32>
    %561 = vector.extract_strided_slice %550 {offsets = [0, 512], sizes = [8, 512], strides = [1, 1]} : vector<8x1024xf32> to vector<8x512xf32>
    %562 = arith.addf %560, %561 : vector<8x512xf32>
    %563 = vector.broadcast %c6_i32 : i32 to vector<8x128xi32>
    %564 = arith.cmpi slt, %563, %0 : vector<8x128xi32>
    %565 = vector.broadcast %546 : i32 to vector<8x128xi32>
    %566 = arith.cmpi slt, %565, %0 : vector<8x128xi32>
    %567 = vector.extract_strided_slice %556 {offsets = [0, 0], sizes = [8, 128], strides = [1, 1]} : vector<8x512xf32> to vector<8x128xf32>
    %568 = arith.negf %567 : vector<8x128xf32>
    %569 = math.exp %568 : vector<8x128xf32>
    %cst_137 = arith.constant 1.000000e+00 : f32
    %570 = vector.broadcast %cst_137 : f32 to vector<8x128xf32>
    %571 = arith.addf %570, %569 : vector<8x128xf32>
    %572 = arith.divf %570, %571 : vector<8x128xf32>
    %573 = vector.extract_strided_slice %556 {offsets = [0, 128], sizes = [8, 128], strides = [1, 1]} : vector<8x512xf32> to vector<8x128xf32>
    %574 = arith.negf %573 : vector<8x128xf32>
    %575 = math.exp %574 : vector<8x128xf32>
    %cst_138 = arith.constant 1.000000e+00 : f32
    %576 = vector.broadcast %cst_138 : f32 to vector<8x128xf32>
    %577 = arith.addf %576, %575 : vector<8x128xf32>
    %578 = arith.divf %576, %577 : vector<8x128xf32>
    %579 = vector.extract_strided_slice %556 {offsets = [0, 256], sizes = [8, 128], strides = [1, 1]} : vector<8x512xf32> to vector<8x128xf32>
    %580 = math.tanh %579 : vector<8x128xf32>
    %581 = vector.extract_strided_slice %556 {offsets = [0, 384], sizes = [8, 128], strides = [1, 1]} : vector<8x512xf32> to vector<8x128xf32>
    %582 = arith.negf %581 : vector<8x128xf32>
    %583 = math.exp %582 : vector<8x128xf32>
    %cst_139 = arith.constant 1.000000e+00 : f32
    %584 = vector.broadcast %cst_139 : f32 to vector<8x128xf32>
    %585 = arith.addf %584, %583 : vector<8x128xf32>
    %586 = arith.divf %584, %585 : vector<8x128xf32>
    %587 = arith.mulf %578, %504 : vector<8x128xf32>
    %588 = arith.mulf %572, %580 : vector<8x128xf32>
    %589 = arith.addf %587, %588 : vector<8x128xf32>
    %590 = math.tanh %589 : vector<8x128xf32>
    %591 = arith.mulf %586, %590 : vector<8x128xf32>
    %592 = arith.select %564, %591, %503 : vector<8x128xi1>, vector<8x128xf32>
    %593 = arith.select %564, %589, %504 : vector<8x128xi1>, vector<8x128xf32>
    %594 = vector.extract_strided_slice %562 {offsets = [0, 0], sizes = [8, 128], strides = [1, 1]} : vector<8x512xf32> to vector<8x128xf32>
    %595 = arith.negf %594 : vector<8x128xf32>
    %596 = math.exp %595 : vector<8x128xf32>
    %cst_140 = arith.constant 1.000000e+00 : f32
    %597 = vector.broadcast %cst_140 : f32 to vector<8x128xf32>
    %598 = arith.addf %597, %596 : vector<8x128xf32>
    %599 = arith.divf %597, %598 : vector<8x128xf32>
    %600 = vector.extract_strided_slice %562 {offsets = [0, 128], sizes = [8, 128], strides = [1, 1]} : vector<8x512xf32> to vector<8x128xf32>
    %601 = arith.negf %600 : vector<8x128xf32>
    %602 = math.exp %601 : vector<8x128xf32>
    %cst_141 = arith.constant 1.000000e+00 : f32
    %603 = vector.broadcast %cst_141 : f32 to vector<8x128xf32>
    %604 = arith.addf %603, %602 : vector<8x128xf32>
    %605 = arith.divf %603, %604 : vector<8x128xf32>
    %606 = vector.extract_strided_slice %562 {offsets = [0, 256], sizes = [8, 128], strides = [1, 1]} : vector<8x512xf32> to vector<8x128xf32>
    %607 = math.tanh %606 : vector<8x128xf32>
    %608 = vector.extract_strided_slice %562 {offsets = [0, 384], sizes = [8, 128], strides = [1, 1]} : vector<8x512xf32> to vector<8x128xf32>
    %609 = arith.negf %608 : vector<8x128xf32>
    %610 = math.exp %609 : vector<8x128xf32>
    %cst_142 = arith.constant 1.000000e+00 : f32
    %611 = vector.broadcast %cst_142 : f32 to vector<8x128xf32>
    %612 = arith.addf %611, %610 : vector<8x128xf32>
    %613 = arith.divf %611, %612 : vector<8x128xf32>
    %614 = arith.mulf %605, %531 : vector<8x128xf32>
    %615 = arith.mulf %599, %607 : vector<8x128xf32>
    %616 = arith.addf %614, %615 : vector<8x128xf32>
    %617 = math.tanh %616 : vector<8x128xf32>
    %618 = arith.mulf %613, %617 : vector<8x128xf32>
    %619 = arith.select %566, %618, %530 : vector<8x128xi1>, vector<8x128xf32>
    %620 = arith.select %566, %616, %531 : vector<8x128xi1>, vector<8x128xf32>
    %cst_143 = arith.constant 0.000000e+00 : f32
    %621 = vector.broadcast %cst_143 : f32 to vector<8x128xf32>
    %622 = arith.select %564, %592, %621 : vector<8x128xi1>, vector<8x128xf32>
    %623 = arith.truncf %622 : vector<8x128xf32> to vector<8x128xbf16>
    %624 = arith.index_cast %c6_i32 : i32 to index
    %c0_144 = arith.constant 0 : index
    %c0_145 = arith.constant 0 : index
    %625 = vector.load %arg10[%624, %c0_144, %c0_145] : memref<8x8x256xbf16, #tpu.memory_space<vmem>>, vector<1x8x128xbf16>
    %626 = vector.shape_cast %625 : vector<1x8x128xbf16> to vector<8x128xbf16>
    %627 = vector.shape_cast %623 : vector<8x128xbf16> to vector<1x8x128xbf16>
    tpu.vector_store %arg10[%624, %c0_144, %c0_145], %627 {strides = array<i32>} : memref<8x8x256xbf16, #tpu.memory_space<vmem>>, vector<1x8x128xbf16>,
    %cst_146 = arith.constant 0.000000e+00 : f32
    %628 = vector.broadcast %cst_146 : f32 to vector<8x128xf32>
    %629 = arith.select %566, %619, %628 : vector<8x128xi1>, vector<8x128xf32>
    %630 = arith.truncf %629 : vector<8x128xf32> to vector<8x128xbf16>
    %631 = arith.index_cast %546 : i32 to index
    %c0_147 = arith.constant 0 : index
    %c128_148 = arith.constant 128 : index
    %632 = vector.load %arg10[%631, %c0_147, %c128_148] : memref<8x8x256xbf16, #tpu.memory_space<vmem>>, vector<1x8x128xbf16>
    %633 = vector.shape_cast %632 : vector<1x8x128xbf16> to vector<8x128xbf16>
    %634 = vector.shape_cast %630 : vector<8x128xbf16> to vector<1x8x128xbf16>
    tpu.vector_store %arg10[%631, %c0_147, %c128_148], %634 {strides = array<i32>} : memref<8x8x256xbf16, #tpu.memory_space<vmem>>, vector<1x8x128xbf16>,
    %c7_i32_149 = arith.constant 7 : i32
    %c7_i32_150 = arith.constant 7 : i32
    %635 = arith.subi %c7_i32_150, %c7_i32_149 : i32
    %636 = tpu.concatenate %592, %619 in 1 : vector<8x128xf32>, vector<8x128xf32> -> vector<8x256xf32>
    %637 = arith.truncf %636 : vector<8x256xf32> to vector<8x256xbf16>
    %c0_151 = arith.constant 0 : index
    %c0_152 = arith.constant 0 : index
    %638 = vector.load %arg5[%c0_151, %c0_152] : memref<256x1024xbf16, #tpu.memory_space<vmem>>, vector<256x1024xbf16>
    %cst_153 = arith.constant dense<0.000000e+00> : vector<8x1024xf32>
    %639 = tpu.matmul %637, %638, %cst_153 {dimension_numbers = #tpu.dot_dimension_numbers<[1], [0], [0], [1], [0, 0, 1, 1], [], []>} : vector<8x256xbf16>, vector<256x1024xbf16>, vector<8x1024xf32> -> vector<8x1024xf32>
    %640 = arith.index_cast %c7_i32_149 : i32 to index
    %c0_154 = arith.constant 0 : index
    %c0_155 = arith.constant 0 : index
    %641 = vector.load %arg9[%640, %c0_154, %c0_155] : memref<8x8x1024xbf16, #tpu.memory_space<vmem>>, vector<1x8x512xbf16>
    %642 = vector.shape_cast %641 : vector<1x8x512xbf16> to vector<8x512xbf16>
    %643 = arith.extf %642 : vector<8x512xbf16> to vector<8x512xf32>
    %644 = vector.extract_strided_slice %639 {offsets = [0, 0], sizes = [8, 512], strides = [1, 1]} : vector<8x1024xf32> to vector<8x512xf32>
    %645 = arith.addf %643, %644 : vector<8x512xf32>
    %646 = arith.index_cast %635 : i32 to index
    %c0_156 = arith.constant 0 : index
    %c512_157 = arith.constant 512 : index
    %647 = vector.load %arg9[%646, %c0_156, %c512_157] : memref<8x8x1024xbf16, #tpu.memory_space<vmem>>, vector<1x8x512xbf16>
    %648 = vector.shape_cast %647 : vector<1x8x512xbf16> to vector<8x512xbf16>
    %649 = arith.extf %648 : vector<8x512xbf16> to vector<8x512xf32>
    %650 = vector.extract_strided_slice %639 {offsets = [0, 512], sizes = [8, 512], strides = [1, 1]} : vector<8x1024xf32> to vector<8x512xf32>
    %651 = arith.addf %649, %650 : vector<8x512xf32>
    %652 = vector.broadcast %c7_i32_149 : i32 to vector<8x128xi32>
    %653 = arith.cmpi slt, %652, %0 : vector<8x128xi32>
    %654 = vector.broadcast %635 : i32 to vector<8x128xi32>
    %655 = arith.cmpi slt, %654, %0 : vector<8x128xi32>
    %656 = vector.extract_strided_slice %645 {offsets = [0, 0], sizes = [8, 128], strides = [1, 1]} : vector<8x512xf32> to vector<8x128xf32>
    %657 = arith.negf %656 : vector<8x128xf32>
    %658 = math.exp %657 : vector<8x128xf32>
    %cst_158 = arith.constant 1.000000e+00 : f32
    %659 = vector.broadcast %cst_158 : f32 to vector<8x128xf32>
    %660 = arith.addf %659, %658 : vector<8x128xf32>
    %661 = arith.divf %659, %660 : vector<8x128xf32>
    %662 = vector.extract_strided_slice %645 {offsets = [0, 128], sizes = [8, 128], strides = [1, 1]} : vector<8x512xf32> to vector<8x128xf32>
    %663 = arith.negf %662 : vector<8x128xf32>
    %664 = math.exp %663 : vector<8x128xf32>
    %cst_159 = arith.constant 1.000000e+00 : f32
    %665 = vector.broadcast %cst_159 : f32 to vector<8x128xf32>
    %666 = arith.addf %665, %664 : vector<8x128xf32>
    %667 = arith.divf %665, %666 : vector<8x128xf32>
    %668 = vector.extract_strided_slice %645 {offsets = [0, 256], sizes = [8, 128], strides = [1, 1]} : vector<8x512xf32> to vector<8x128xf32>
    %669 = math.tanh %668 : vector<8x128xf32>
    %670 = vector.extract_strided_slice %645 {offsets = [0, 384], sizes = [8, 128], strides = [1, 1]} : vector<8x512xf32> to vector<8x128xf32>
    %671 = arith.negf %670 : vector<8x128xf32>
    %672 = math.exp %671 : vector<8x128xf32>
    %cst_160 = arith.constant 1.000000e+00 : f32
    %673 = vector.broadcast %cst_160 : f32 to vector<8x128xf32>
    %674 = arith.addf %673, %672 : vector<8x128xf32>
    %675 = arith.divf %673, %674 : vector<8x128xf32>
    %676 = arith.mulf %667, %593 : vector<8x128xf32>
    %677 = arith.mulf %661, %669 : vector<8x128xf32>
    %678 = arith.addf %676, %677 : vector<8x128xf32>
    %679 = math.tanh %678 : vector<8x128xf32>
    %680 = arith.mulf %675, %679 : vector<8x128xf32>
    %681 = arith.select %653, %680, %592 : vector<8x128xi1>, vector<8x128xf32>
    %682 = arith.select %653, %678, %593 : vector<8x128xi1>, vector<8x128xf32>
    %683 = vector.extract_strided_slice %651 {offsets = [0, 0], sizes = [8, 128], strides = [1, 1]} : vector<8x512xf32> to vector<8x128xf32>
    %684 = arith.negf %683 : vector<8x128xf32>
    %685 = math.exp %684 : vector<8x128xf32>
    %cst_161 = arith.constant 1.000000e+00 : f32
    %686 = vector.broadcast %cst_161 : f32 to vector<8x128xf32>
    %687 = arith.addf %686, %685 : vector<8x128xf32>
    %688 = arith.divf %686, %687 : vector<8x128xf32>
    %689 = vector.extract_strided_slice %651 {offsets = [0, 128], sizes = [8, 128], strides = [1, 1]} : vector<8x512xf32> to vector<8x128xf32>
    %690 = arith.negf %689 : vector<8x128xf32>
    %691 = math.exp %690 : vector<8x128xf32>
    %cst_162 = arith.constant 1.000000e+00 : f32
    %692 = vector.broadcast %cst_162 : f32 to vector<8x128xf32>
    %693 = arith.addf %692, %691 : vector<8x128xf32>
    %694 = arith.divf %692, %693 : vector<8x128xf32>
    %695 = vector.extract_strided_slice %651 {offsets = [0, 256], sizes = [8, 128], strides = [1, 1]} : vector<8x512xf32> to vector<8x128xf32>
    %696 = math.tanh %695 : vector<8x128xf32>
    %697 = vector.extract_strided_slice %651 {offsets = [0, 384], sizes = [8, 128], strides = [1, 1]} : vector<8x512xf32> to vector<8x128xf32>
    %698 = arith.negf %697 : vector<8x128xf32>
    %699 = math.exp %698 : vector<8x128xf32>
    %cst_163 = arith.constant 1.000000e+00 : f32
    %700 = vector.broadcast %cst_163 : f32 to vector<8x128xf32>
    %701 = arith.addf %700, %699 : vector<8x128xf32>
    %702 = arith.divf %700, %701 : vector<8x128xf32>
    %703 = arith.mulf %694, %620 : vector<8x128xf32>
    %704 = arith.mulf %688, %696 : vector<8x128xf32>
    %705 = arith.addf %703, %704 : vector<8x128xf32>
    %706 = math.tanh %705 : vector<8x128xf32>
    %707 = arith.mulf %702, %706 : vector<8x128xf32>
    %708 = arith.select %655, %707, %619 : vector<8x128xi1>, vector<8x128xf32>
    %709 = arith.select %655, %705, %620 : vector<8x128xi1>, vector<8x128xf32>
    %cst_164 = arith.constant 0.000000e+00 : f32
    %710 = vector.broadcast %cst_164 : f32 to vector<8x128xf32>
    %711 = arith.select %653, %681, %710 : vector<8x128xi1>, vector<8x128xf32>
    %712 = arith.truncf %711 : vector<8x128xf32> to vector<8x128xbf16>
    %713 = arith.index_cast %c7_i32_149 : i32 to index
    %c0_165 = arith.constant 0 : index
    %c0_166 = arith.constant 0 : index
    %714 = vector.load %arg10[%713, %c0_165, %c0_166] : memref<8x8x256xbf16, #tpu.memory_space<vmem>>, vector<1x8x128xbf16>
    %715 = vector.shape_cast %714 : vector<1x8x128xbf16> to vector<8x128xbf16>
    %716 = vector.shape_cast %712 : vector<8x128xbf16> to vector<1x8x128xbf16>
    tpu.vector_store %arg10[%713, %c0_165, %c0_166], %716 {strides = array<i32>} : memref<8x8x256xbf16, #tpu.memory_space<vmem>>, vector<1x8x128xbf16>,
    %cst_167 = arith.constant 0.000000e+00 : f32
    %717 = vector.broadcast %cst_167 : f32 to vector<8x128xf32>
    %718 = arith.select %655, %708, %717 : vector<8x128xi1>, vector<8x128xf32>
    %719 = arith.truncf %718 : vector<8x128xf32> to vector<8x128xbf16>
    %720 = arith.index_cast %635 : i32 to index
    %c0_168 = arith.constant 0 : index
    %c128_169 = arith.constant 128 : index
    %721 = vector.load %arg10[%720, %c0_168, %c128_169] : memref<8x8x256xbf16, #tpu.memory_space<vmem>>, vector<1x8x128xbf16>
    %722 = vector.shape_cast %721 : vector<1x8x128xbf16> to vector<8x128xbf16>
    %723 = vector.shape_cast %719 : vector<8x128xbf16> to vector<1x8x128xbf16>
    tpu.vector_store %arg10[%720, %c0_168, %c128_169], %723 {strides = array<i32>} : memref<8x8x256xbf16, #tpu.memory_space<vmem>>, vector<1x8x128xbf16>,
    %c8_i32 = arith.constant 8 : i32
    %c0_170 = arith.constant 0 : index
    %c0_171 = arith.constant 0 : index
    %c0_172 = arith.constant 0 : index
    %724 = vector.load %arg10[%c0_170, %c0_171, %c0_172] : memref<8x8x256xbf16, #tpu.memory_space<vmem>>, vector<8x8x256xbf16>
    %725 = vector.shape_cast %724 : vector<8x8x256xbf16> to vector<64x256xbf16>
    %c0_173 = arith.constant 0 : index
    %c0_174 = arith.constant 0 : index
    %726 = vector.load %arg6[%c0_173, %c0_174] : memref<256x128xbf16, #tpu.memory_space<vmem>>, vector<256x128xbf16>
    %cst_175 = arith.constant dense<0.000000e+00> : vector<64x128xf32>
    %727 = tpu.matmul %725, %726, %cst_175 {dimension_numbers = #tpu.dot_dimension_numbers<[1], [0], [0], [1], [0, 0, 1, 1], [], []>} : vector<64x256xbf16>, vector<256x128xbf16>, vector<64x128xf32> -> vector<64x128xf32>
    %c0_176 = arith.constant 0 : index
    %c0_177 = arith.constant 0 : index
    %728 = vector.load %arg7[%c0_176, %c0_177] : memref<1x128xf32, #tpu.memory_space<vmem>>, vector<1x128xf32>
    %729 = vector.broadcast %728 : vector<1x128xf32> to vector<64x128xf32>
    %730 = arith.addf %727, %729 : vector<64x128xf32>
    %731 = vector.shape_cast %730 : vector<64x128xf32> to vector<8x8x128xf32>
    %c0_178 = arith.constant 0 : index
    %c0_179 = arith.constant 0 : index
    %c0_180 = arith.constant 0 : index
    %732 = vector.load %arg8[%c0_178, %c0_179, %c0_180] : memref<8x8x128xf32, #tpu.memory_space<vmem>>, vector<8x8x128xf32>
    tpu.vector_store %arg8[%c0_178, %c0_179, %c0_180], %731 {strides = array<i32>} : memref<8x8x128xf32, #tpu.memory_space<vmem>>, vector<8x8x128xf32>,
    return
  }
  func.func @transform_0(%arg0: i32) -> (i32, i32) {
    %c0_i32 = arith.constant 0 : i32
    %c0_i32_0 = arith.constant 0 : i32
    return %arg0, %c0_i32 : i32, i32
  }
  func.func @transform_1(%arg0: i32) -> (i32, i32, i32) {
    %c0_i32 = arith.constant 0 : i32
    %c0_i32_0 = arith.constant 0 : i32
    %c0_i32_1 = arith.constant 0 : i32
    return %c0_i32, %arg0, %c0_i32_0 : i32, i32, i32
  }
  func.func @transform_2(%arg0: i32) -> (i32, i32) {
    %c0_i32 = arith.constant 0 : i32
    %c0_i32_0 = arith.constant 0 : i32
    %c0_i32_1 = arith.constant 0 : i32
    return %c0_i32, %c0_i32_0 : i32, i32
  }
  func.func @transform_3(%arg0: i32) -> (i32, i32) {
    %c0_i32 = arith.constant 0 : i32
    %c0_i32_0 = arith.constant 0 : i32
    %c0_i32_1 = arith.constant 0 : i32
    return %c0_i32, %c0_i32_0 : i32, i32
  }
  func.func @transform_4(%arg0: i32) -> (i32, i32) {
    %c0_i32 = arith.constant 0 : i32
    %c0_i32_0 = arith.constant 0 : i32
    %c0_i32_1 = arith.constant 0 : i32
    return %c0_i32, %c0_i32_0 : i32, i32
  }
  func.func @transform_5(%arg0: i32) -> (i32, i32) {
    %c0_i32 = arith.constant 0 : i32
    %c0_i32_0 = arith.constant 0 : i32
    %c0_i32_1 = arith.constant 0 : i32
    return %c0_i32, %c0_i32_0 : i32, i32
  }
  func.func @transform_6(%arg0: i32) -> (i32, i32) {
    %c0_i32 = arith.constant 0 : i32
    %c0_i32_0 = arith.constant 0 : i32
    %c0_i32_1 = arith.constant 0 : i32
    return %c0_i32, %c0_i32_0 : i32, i32
  }
  func.func @transform_7(%arg0: i32) -> (i32, i32, i32) {
    %c0_i32 = arith.constant 0 : i32
    %c0_i32_0 = arith.constant 0 : i32
    %c0_i32_1 = arith.constant 0 : i32
    return %c0_i32, %arg0, %c0_i32_0 : i32, i32, i32
  }
}

</mosaic_0001>

<llo_original>
// kernel: bilstm_encoder_forward.1
$region0: #{bilstm_encoder_forward.1}
  #allocation0 [shape = 'u32[]', space=smem, size = 0x4, offset = 0x4, fixed_abs, tag = 'smem constant byte address 0x4 - core index']
  #allocation1 [shape = 'u32[144,128]{1,0:T(1,128)}', space=vmem, size = 0x12000, scoped, tag = 'internal scratch']
  #allocation2 [shape = 'bf16[8,8,1024]{2,1,0:T(8,128)(2,1)}', space=vmem, size = 0x20000, scoped, tag = 'scratch operand']
  #allocation3 [shape = 'bf16[8,8,256]{2,1,0:T(8,128)(2,1)}', space=vmem, size = 0x8000, scoped, tag = 'scratch operand']
  %s0 = inlined_call_operand.vmem [shape: s32[8,128], index: 0, kind: input, shape index: {}]
  %s1 = inlined_call_operand.vmem [shape: bf16[8,8,128], index: 1, kind: input, shape index: {}]
  %s2 = inlined_call_operand.vmem [shape: bf16[128,1024], index: 2, kind: input, shape index: {}]
  %s3 = inlined_call_operand.vmem [shape: f32[1,1024], index: 3, kind: input, shape index: {}]
  %s4 = inlined_call_operand.vmem [shape: bf16[256,1024], index: 4, kind: input, shape index: {}]
  %s5 = inlined_call_operand.vmem [shape: bf16[256,128], index: 5, kind: input, shape index: {}]
  %s6 = inlined_call_operand.vmem [shape: f32[1,128], index: 6, kind: input, shape index: {}]
  %s7 = inlined_call_operand.vmem [shape: f32[8,8,128], index: 7, kind: output, shape index: {}]
  %s8 = sld [smem:[#allocation0]]
  $region38: #{bilstm_encoder_forward.1} parent=0
    _
  %s10 = ssub.s32 1, %s8
  %s11 = scalar_select 0, %s10, %s8
  // Predicated region
  $region2: #{bilstm_encoder_forward.1} parent=0 // pred_check
    _
  $region3: #{bilstm_encoder_forward.1} parent=0 // pred_check_branch
    %13 = sbr.rel (0) target = $region5
  $region4: #{bilstm_encoder_forward.1} parent=0 // pred_region
    _
  $region5: #{bilstm_encoder_forward.1} parent=0 // pred_fallthru
    _
  // Predicated region
  $region6: #{bilstm_encoder_forward.1} parent=0 // pred_check
    _
  $region7: #{bilstm_encoder_forward.1} parent=0 // pred_check_branch
    %15 = sbr.rel (0) target = $region9
  $region8: #{bilstm_encoder_forward.1} parent=0 // pred_region
    _
  $region9: #{bilstm_encoder_forward.1} parent=0 // pred_fallthru
    _
  // Predicated region
  $region10: #{bilstm_encoder_forward.1} parent=0 // pred_check
    _
  $region11: #{bilstm_encoder_forward.1} parent=0 // pred_check_branch
    %17 = sbr.rel (0) target = $region13
  $region12: #{bilstm_encoder_forward.1} parent=0 // pred_region
    _
  $region13: #{bilstm_encoder_forward.1} parent=0 // pred_fallthru
    _
  // Predicated region
  $region14: #{bilstm_encoder_forward.1} parent=0 // pred_check
    _
  $region15: #{bilstm_encoder_forward.1} parent=0 // pred_check_branch
    %19 = sbr.rel (0) target = $region17
  $region16: #{bilstm_encoder_forward.1} parent=0 // pred_region
    _
  $region17: #{bilstm_encoder_forward.1} parent=0 // pred_fallthru
    _
  // Predicated region
  $region18: #{bilstm_encoder_forward.1} parent=0 // pred_check
    _
  $region19: #{bilstm_encoder_forward.1} parent=0 // pred_check_branch
    %21 = sbr.rel (0) target = $region21
  $region20: #{bilstm_encoder_forward.1} parent=0 // pred_region
    _
  $region21: #{bilstm_encoder_forward.1} parent=0 // pred_fallthru
    _
  // Predicated region
  $region22: #{bilstm_encoder_forward.1} parent=0 // pred_check
    _
  $region23: #{bilstm_encoder_forward.1} parent=0 // pred_check_branch
    %23 = sbr.rel (0) target = $region25
  $region24: #{bilstm_encoder_forward.1} parent=0 // pred_region
    _
  $region25: #{bilstm_encoder_forward.1} parent=0 // pred_fallthru
    _
  // Predicated region
  $region26: #{bilstm_encoder_forward.1} parent=0 // pred_check
    _
  $region27: #{bilstm_encoder_forward.1} parent=0 // pred_check_branch
    %25 = sbr.rel (0) target = $region29
  $region28: #{bilstm_encoder_forward.1} parent=0 // pred_region
    _
  $region29: #{bilstm_encoder_forward.1} parent=0 // pred_fallthru
    _
  %v27 = vld [vmem:[%s0] sm:$0xff]
  %v28 = vld [vmem:[%s1] sm:$0xf]
  %v29 = vld [vmem:[%s1 + $0x4] sm:$0xf]
  %v30 = vld [vmem:[%s1 + $0x8] sm:$0xf]
  %v31 = vld [vmem:[%s1 + $0xc] sm:$0xf]
  %v32 = vld [vmem:[%s1 + $0x10] sm:$0xf]
  %v33 = vld [vmem:[%s1 + $0x14] sm:$0xf]
  %v34 = vld [vmem:[%s1 + $0x18] sm:$0xf]
  %v35 = vld [vmem:[%s1 + $0x1c] sm:$0xf]
  %v36 = vld [vmem:[%s2] sm:$0xff]
  %v37 = vld [vmem:[%s2 + $0x8] sm:$0xff]
  %v38 = vld [vmem:[%s2 + $0x10] sm:$0xff]
  %v39 = vld [vmem:[%s2 + $0x18] sm:$0xff]
  %v40 = vld [vmem:[%s2 + $0x20] sm:$0xff]
  %v41 = vld [vmem:[%s2 + $0x28] sm:$0xff]
  %v42 = vld [vmem:[%s2 + $0x30] sm:$0xff]
  %v43 = vld [vmem:[%s2 + $0x38] sm:$0xff]
  %v44 = vld [vmem:[%s2 + $0x40] sm:$0xff]
  %v45 = vld [vmem:[%s2 + $0x48] sm:$0xff]
  %v46 = vld [vmem:[%s2 + $0x50] sm:$0xff]
  %v47 = vld [vmem:[%s2 + $0x58] sm:$0xff]
  %v48 = vld [vmem:[%s2 + $0x60] sm:$0xff]
  %v49 = vld [vmem:[%s2 + $0x68] sm:$0xff]
  %v50 = vld [vmem:[%s2 + $0x70] sm:$0xff]
  %v51 = vld [vmem:[%s2 + $0x78] sm:$0xff]
  %v52 = vld [vmem:[%s2 + $0x80] sm:$0xff]
  %v53 = vld [vmem:[%s2 + $0x88] sm:$0xff]
  %v54 = vld [vmem:[%s2 + $0x90] sm:$0xff]
  %v55 = vld [vmem:[%s2 + $0x98] sm:$0xff]
  %v56 = vld [vmem:[%s2 + $0xa0] sm:$0xff]
  %v57 = vld [vmem:[%s2 + $0xa8] sm:$0xff]
  %v58 = vld [vmem:[%s2 + $0xb0] sm:$0xff]
  %v59 = vld [vmem:[%s2 + $0xb8] sm:$0xff]
  %v60 = vld [vmem:[%s2 + $0xc0] sm:$0xff]
  %v61 = vld [vmem:[%s2 + $0xc8] sm:$0xff]
  %v62 = vld [vmem:[%s2 + $0xd0] sm:$0xff]
  %v63 = vld [vmem:[%s2 + $0xd8] sm:$0xff]
  %v64 = vld [vmem:[%s2 + $0xe0] sm:$0xff]
  %v65 = vld [vmem:[%s2 + $0xe8] sm:$0xff]
  %v66 = vld [vmem:[%s2 + $0xf0] sm:$0xff]
  %v67 = vld [vmem:[%s2 + $0xf8] sm:$0xff]
  %v68 = vld [vmem:[%s2 + $0x100] sm:$0xff]
  %v69 = vld [vmem:[%s2 + $0x108] sm:$0xff]
  %v70 = vld [vmem:[%s2 + $0x110] sm:$0xff]
  %v71 = vld [vmem:[%s2 + $0x118] sm:$0xff]
  %v72 = vld [vmem:[%s2 + $0x120] sm:$0xff]
  %v73 = vld [vmem:[%s2 + $0x128] sm:$0xff]
  %v74 = vld [vmem:[%s2 + $0x130] sm:$0xff]
  %v75 = vld [vmem:[%s2 + $0x138] sm:$0xff]
  %v76 = vld [vmem:[%s2 + $0x140] sm:$0xff]
  %v77 = vld [vmem:[%s2 + $0x148] sm:$0xff]
  %v78 = vld [vmem:[%s2 + $0x150] sm:$0xff]
  %v79 = vld [vmem:[%s2 + $0x158] sm:$0xff]
  %v80 = vld [vmem:[%s2 + $0x160] sm:$0xff]
  %v81 = vld [vmem:[%s2 + $0x168] sm:$0xff]
  %v82 = vld [vmem:[%s2 + $0x170] sm:$0xff]
  %v83 = vld [vmem:[%s2 + $0x178] sm:$0xff]
  %v84 = vld [vmem:[%s2 + $0x180] sm:$0xff]
  %v85 = vld [vmem:[%s2 + $0x188] sm:$0xff]
  %v86 = vld [vmem:[%s2 + $0x190] sm:$0xff]
  %v87 = vld [vmem:[%s2 + $0x198] sm:$0xff]
  %v88 = vld [vmem:[%s2 + $0x1a0] sm:$0xff]
  %v89 = vld [vmem:[%s2 + $0x1a8] sm:$0xff]
  %v90 = vld [vmem:[%s2 + $0x1b0] sm:$0xff]
  %v91 = vld [vmem:[%s2 + $0x1b8] sm:$0xff]
  %v92 = vld [vmem:[%s2 + $0x1c0] sm:$0xff]
  %v93 = vld [vmem:[%s2 + $0x1c8] sm:$0xff]
  %v94 = vld [vmem:[%s2 + $0x1d0] sm:$0xff]
  %v95 = vld [vmem:[%s2 + $0x1d8] sm:$0xff]
  %v96 = vld [vmem:[%s2 + $0x1e0] sm:$0xff]
  %v97 = vld [vmem:[%s2 + $0x1e8] sm:$0xff]
  %v98 = vld [vmem:[%s2 + $0x1f0] sm:$0xff]
  %v99 = vld [vmem:[%s2 + $0x1f8] sm:$0xff]
  %v100 = vld [vmem:[%s3] sm:$0xff]
  %v102 = vlaneseq
  %v103 = vshrl.u32 %v102, 7
  %v104 = vsub.s32 0, %v103
  %v105 = vrot.slane %v100, %v104
  %v106 = vlaneseq
  %v107 = vshrl.u32 %v106, 7
  %v108 = vsub.s32 1, %v107
  %v109 = vrot.slane %v100, %v108
  %v110 = vlaneseq
  %v111 = vshrl.u32 %v110, 7
  %v112 = vsub.s32 2, %v111
  %v113 = vrot.slane %v100, %v112
  %v114 = vlaneseq
  %v115 = vshrl.u32 %v114, 7
  %v116 = vsub.s32 3, %v115
  %v117 = vrot.slane %v100, %v116
  %v118 = vlaneseq
  %v119 = vshrl.u32 %v118, 7
  %v120 = vsub.s32 4, %v119
  %v121 = vrot.slane %v100, %v120
  %v122 = vlaneseq
  %v123 = vshrl.u32 %v122, 7
  %v124 = vsub.s32 5, %v123
  %v125 = vrot.slane %v100, %v124
  %v126 = vlaneseq
  %v127 = vshrl.u32 %v126, 7
  %v128 = vsub.s32 6, %v127
  %v129 = vrot.slane %v100, %v128
  %v130 = vlaneseq
  %v131 = vshrl.u32 %v130, 7
  %v132 = vsub.s32 7, %v131
  %v133 = vrot.slane %v100, %v132
  %v150 = vunpack.c.l.b16 %v28
  %v151 = vunpack.c.l.b16 %v29
  %v152 = vunpack.c.l.b16 %v30
  %v153 = vunpack.c.l.b16 %v31
  %v154 = vunpack.c.l.b16 %v32
  %v155 = vunpack.c.l.b16 %v33
  %v156 = vunpack.c.l.b16 %v34
  %v157 = vunpack.c.l.b16 %v35
  %v158 = vpack.c.b16 %v151, %v150
  %v159 = vpack.c.b16 %v153, %v152
  %v160 = vpack.c.b16 %v155, %v154
  %v161 = vpack.c.b16 %v157, %v156
  %v230 = vunpack.c.l.b16 %v36
  %v231 = vunpack.c.h.b16 %v36
  %v232 = vunpack.c.l.b16 %v37
  %v233 = vunpack.c.h.b16 %v37
  %v234 = vunpack.c.l.b16 %v38
  %v235 = vunpack.c.h.b16 %v38
  %v236 = vunpack.c.l.b16 %v39
  %v237 = vunpack.c.h.b16 %v39
  %v238 = vunpack.c.l.b16 %v40
  %v239 = vunpack.c.h.b16 %v40
  %v240 = vunpack.c.l.b16 %v41
  %v241 = vunpack.c.h.b16 %v41
  %v242 = vunpack.c.l.b16 %v42
  %v243 = vunpack.c.h.b16 %v42
  %v244 = vunpack.c.l.b16 %v43
  %v245 = vunpack.c.h.b16 %v43
  %v246 = vunpack.c.l.b16 %v44
  %v247 = vunpack.c.h.b16 %v44
  %v248 = vunpack.c.l.b16 %v45
  %v249 = vunpack.c.h.b16 %v45
  %v250 = vunpack.c.l.b16 %v46
  %v251 = vunpack.c.h.b16 %v46
  %v252 = vunpack.c.l.b16 %v47
  %v253 = vunpack.c.h.b16 %v47
  %v254 = vunpack.c.l.b16 %v48
  %v255 = vunpack.c.h.b16 %v48
  %v256 = vunpack.c.l.b16 %v49
  %v257 = vunpack.c.h.b16 %v49
  %v258 = vunpack.c.l.b16 %v50
  %v259 = vunpack.c.h.b16 %v50
  %v260 = vunpack.c.l.b16 %v51
  %v261 = vunpack.c.h.b16 %v51
  %v262 = vunpack.c.l.b16 %v52
  %v263 = vunpack.c.h.b16 %v52
  %v264 = vunpack.c.l.b16 %v53
  %v265 = vunpack.c.h.b16 %v53
  %v266 = vunpack.c.l.b16 %v54
  %v267 = vunpack.c.h.b16 %v54
  %v268 = vunpack.c.l.b16 %v55
  %v269 = vunpack.c.h.b16 %v55
  %v270 = vunpack.c.l.b16 %v56
  %v271 = vunpack.c.h.b16 %v56
  %v272 = vunpack.c.l.b16 %v57
  %v273 = vunpack.c.h.b16 %v57
  %v274 = vunpack.c.l.b16 %v58
  %v275 = vunpack.c.h.b16 %v58
  %v276 = vunpack.c.l.b16 %v59
  %v277 = vunpack.c.h.b16 %v59
  %v278 = vunpack.c.l.b16 %v60
  %v279 = vunpack.c.h.b16 %v60
  %v280 = vunpack.c.l.b16 %v61
  %v281 = vunpack.c.h.b16 %v61
  %v282 = vunpack.c.l.b16 %v62
  %v283 = vunpack.c.h.b16 %v62
  %v284 = vunpack.c.l.b16 %v63
  %v285 = vunpack.c.h.b16 %v63
  %v286 = vunpack.c.l.b16 %v64
  %v287 = vunpack.c.h.b16 %v64
  %v288 = vunpack.c.l.b16 %v65
  %v289 = vunpack.c.h.b16 %v65
  %v290 = vunpack.c.l.b16 %v66
  %v291 = vunpack.c.h.b16 %v66
  %v292 = vunpack.c.l.b16 %v67
  %v293 = vunpack.c.h.b16 %v67
  %v294 = vunpack.c.l.b16 %v68
  %v295 = vunpack.c.h.b16 %v68
  %v296 = vunpack.c.l.b16 %v69
  %v297 = vunpack.c.h.b16 %v69
  %v298 = vunpack.c.l.b16 %v70
  %v299 = vunpack.c.h.b16 %v70
  %v300 = vunpack.c.l.b16 %v71
  %v301 = vunpack.c.h.b16 %v71
  %v302 = vunpack.c.l.b16 %v72
  %v303 = vunpack.c.h.b16 %v72
  %v304 = vunpack.c.l.b16 %v73
  %v305 = vunpack.c.h.b16 %v73
  %v306 = vunpack.c.l.b16 %v74
  %v307 = vunpack.c.h.b16 %v74
  %v308 = vunpack.c.l.b16 %v75
  %v309 = vunpack.c.h.b16 %v75
  %v310 = vunpack.c.l.b16 %v76
  %v311 = vunpack.c.h.b16 %v76
  %v312 = vunpack.c.l.b16 %v77
  %v313 = vunpack.c.h.b16 %v77
  %v314 = vunpack.c.l.b16 %v78
  %v315 = vunpack.c.h.b16 %v78
  %v316 = vunpack.c.l.b16 %v79
  %v317 = vunpack.c.h.b16 %v79
  %v318 = vunpack.c.l.b16 %v80
  %v319 = vunpack.c.h.b16 %v80
  %v320 = vunpack.c.l.b16 %v81
  %v321 = vunpack.c.h.b16 %v81
  %v322 = vunpack.c.l.b16 %v82
  %v323 = vunpack.c.h.b16 %v82
  %v324 = vunpack.c.l.b16 %v83
  %v325 = vunpack.c.h.b16 %v83
  %v326 = vunpack.c.l.b16 %v84
  %v327 = vunpack.c.h.b16 %v84
  %v328 = vunpack.c.l.b16 %v85
  %v329 = vunpack.c.h.b16 %v85
  %v330 = vunpack.c.l.b16 %v86
  %v331 = vunpack.c.h.b16 %v86
  %v332 = vunpack.c.l.b16 %v87
  %v333 = vunpack.c.h.b16 %v87
  %v334 = vunpack.c.l.b16 %v88
  %v335 = vunpack.c.h.b16 %v88
  %v336 = vunpack.c.l.b16 %v89
  %v337 = vunpack.c.h.b16 %v89
  %v338 = vunpack.c.l.b16 %v90
  %v339 = vunpack.c.h.b16 %v90
  %v340 = vunpack.c.l.b16 %v91
  %v341 = vunpack.c.h.b16 %v91
  %v342 = vunpack.c.l.b16 %v92
  %v343 = vunpack.c.h.b16 %v92
  %v344 = vunpack.c.l.b16 %v93
  %v345 = vunpack.c.h.b16 %v93
  %v346 = vunpack.c.l.b16 %v94
  %v347 = vunpack.c.h.b16 %v94
  %v348 = vunpack.c.l.b16 %v95
  %v349 = vunpack.c.h.b16 %v95
  %v350 = vunpack.c.l.b16 %v96
  %v351 = vunpack.c.h.b16 %v96
  %v352 = vunpack.c.l.b16 %v97
  %v353 = vunpack.c.h.b16 %v97
  %v354 = vunpack.c.l.b16 %v98
  %v355 = vunpack.c.h.b16 %v98
  %v356 = vunpack.c.l.b16 %v99
  %v357 = vunpack.c.h.b16 %v99
  %v358 = vpack.c.b16 %v238, %v230
  %v359 = vpack.c.b16 %v239, %v231
  %v360 = vpack.c.b16 %v240, %v232
  %v361 = vpack.c.b16 %v241, %v233
  %v362 = vpack.c.b16 %v242, %v234
  %v363 = vpack.c.b16 %v243, %v235
  %v364 = vpack.c.b16 %v244, %v236
  %v365 = vpack.c.b16 %v245, %v237
  %v366 = vpack.c.b16 %v254, %v246
  %v367 = vpack.c.b16 %v255, %v247
  %v368 = vpack.c.b16 %v256, %v248
  %v369 = vpack.c.b16 %v257, %v249
  %v370 = vpack.c.b16 %v258, %v250
  %v371 = vpack.c.b16 %v259, %v251
  %v372 = vpack.c.b16 %v260, %v252
  %v373 = vpack.c.b16 %v261, %v253
  %v374 = vpack.c.b16 %v270, %v262
  %v375 = vpack.c.b16 %v271, %v263
  %v376 = vpack.c.b16 %v272, %v264
  %v377 = vpack.c.b16 %v273, %v265
  %v378 = vpack.c.b16 %v274, %v266
  %v379 = vpack.c.b16 %v275, %v267
  %v380 = vpack.c.b16 %v276, %v268
  %v381 = vpack.c.b16 %v277, %v269
  %v382 = vpack.c.b16 %v286, %v278
  %v383 = vpack.c.b16 %v287, %v279
  %v384 = vpack.c.b16 %v288, %v280
  %v385 = vpack.c.b16 %v289, %v281
  %v386 = vpack.c.b16 %v290, %v282
  %v387 = vpack.c.b16 %v291, %v283
  %v388 = vpack.c.b16 %v292, %v284
  %v389 = vpack.c.b16 %v293, %v285
  %v390 = vpack.c.b16 %v302, %v294
  %v391 = vpack.c.b16 %v303, %v295
  %v392 = vpack.c.b16 %v304, %v296
  %v393 = vpack.c.b16 %v305, %v297
  %v394 = vpack.c.b16 %v306, %v298
  %v395 = vpack.c.b16 %v307, %v299
  %v396 = vpack.c.b16 %v308, %v300
  %v397 = vpack.c.b16 %v309, %v301
  %v398 = vpack.c.b16 %v318, %v310
  %v399 = vpack.c.b16 %v319, %v311
  %v400 = vpack.c.b16 %v320, %v312
  %v401 = vpack.c.b16 %v321, %v313
  %v402 = vpack.c.b16 %v322, %v314
  %v403 = vpack.c.b16 %v323, %v315
  %v404 = vpack.c.b16 %v324, %v316
  %v405 = vpack.c.b16 %v325, %v317
  %v406 = vpack.c.b16 %v334, %v326
  %v407 = vpack.c.b16 %v335, %v327
  %v408 = vpack.c.b16 %v336, %v328
  %v409 = vpack.c.b16 %v337, %v329
  %v410 = vpack.c.b16 %v338, %v330
  %v411 = vpack.c.b16 %v339, %v331
  %v412 = vpack.c.b16 %v340, %v332
  %v413 = vpack.c.b16 %v341, %v333
  %v414 = vpack.c.b16 %v350, %v342
  %v415 = vpack.c.b16 %v351, %v343
  %v416 = vpack.c.b16 %v352, %v344
  %v417 = vpack.c.b16 %v353, %v345
  %v418 = vpack.c.b16 %v354, %v346
  %v419 = vpack.c.b16 %v355, %v347
  %v420 = vpack.c.b16 %v356, %v348
  %v421 = vpack.c.b16 %v357, %v349
  %486 = vmatprep.subr.bf16.mxu0 %v415
  %487 = vmatpush1.bf16.msra.mxu0 %v414
  %488 = vmatprep.subr.bf16.mxu0 %v407
  %489 = vmatpush1.bf16.msra.mxu0 %v406
  %490 = vmatprep.subr.bf16.mxu0 %v399
  %491 = vmatpush1.bf16.msra.mxu0 %v398
  %492 = vmatprep.subr.bf16.mxu0 %v391
  %493 = vmatpush1.bf16.msra.mxu0 %v390
  %494 = vmatprep.subr.bf16.mxu0 %v383
  %495 = vmatpush1.bf16.msra.mxu0 %v382
  %496 = vmatprep.subr.bf16.mxu0 %v375
  %497 = vmatpush1.bf16.msra.mxu0 %v374
  %498 = vmatprep.subr.bf16.mxu0 %v367
  %499 = vmatpush1.bf16.msra.mxu0 %v366
  %500 = vmatprep.subr.bf16.mxu0 %v359
  %501 = vmatpush1.bf16.msra.mxu0 %v358
  %502 = vmatprep.subr.bf16.mxu0 0
  %503 = vmatpush2.bf16.msra.mxu0 0
  %504 = vmatprep.subr.bf16.mxu0 0
  %505 = vmatpush2.bf16.msra.mxu0 0
  %506 = vmatprep.subr.bf16.mxu0 0
  %507 = vmatpush2.bf16.msra.mxu0 0
  %508 = vmatprep.subr.bf16.mxu0 0
  %509 = vmatpush2.bf16.msra.mxu0 0
  %510 = vmatprep.subr.bf16.mxu0 0
  %511 = vmatpush2.bf16.msra.mxu0 0
  %512 = vmatprep.subr.bf16.mxu0 0
  %513 = vmatpush2.bf16.msra.mxu0 0
  %514 = vmatprep.subr.bf16.mxu0 0
  %515 = vmatpush2.bf16.msra.mxu0 0
  %516 = vmatprep.subr.bf16.mxu0 0
  %517 = vmatpush2.bf16.msra.mxu0 0
  %518 = vmatprep.mubr.bf16.mxu0 0
  %519 = vmatmul.mubr.bf16.gmra.mxu0 %v158
  %v520 = vpop.f32.mrf.mxu0
  %v521 = vadd.f32 %v105, %v520
  %v522 = vpop.f32.mrf.mxu0
  %v523 = vadd.f32 %v109, %v522
  %v524 = vpop.f32.mrf.mxu0
  %v525 = vadd.f32 %v105, %v524
  %v526 = vpop.f32.mrf.mxu0
  %v527 = vadd.f32 %v109, %v526
  %528 = vmatprep.mubr.bf16.mxu0 0
  %529 = vmatmul.mubr.bf16.gmra.mxu0 %v159
  %v530 = vpop.f32.mrf.mxu0
  %v531 = vadd.f32 %v105, %v530
  %v532 = vpop.f32.mrf.mxu0
  %v533 = vadd.f32 %v109, %v532
  %v534 = vpop.f32.mrf.mxu0
  %v535 = vadd.f32 %v105, %v534
  %v536 = vpop.f32.mrf.mxu0
  %v537 = vadd.f32 %v109, %v536
  %538 = vmatprep.mubr.bf16.mxu0 0
  %539 = vmatmul.mubr.bf16.gmra.mxu0 %v160
  %v540 = vpop.f32.mrf.mxu0
  %v541 = vadd.f32 %v105, %v540
  %v542 = vpop.f32.mrf.mxu0
  %v543 = vadd.f32 %v109, %v542
  %v544 = vpop.f32.mrf.mxu0
  %v545 = vadd.f32 %v105, %v544
  %v546 = vpop.f32.mrf.mxu0
  %v547 = vadd.f32 %v109, %v546
  %548 = vmatprep.mubr.bf16.mxu0 0
  %549 = vmatmul.mubr.bf16.gmra.mxu0 %v161
  %v550 = vpop.f32.mrf.mxu0
  %v551 = vadd.f32 %v105, %v550
  %v552 = vpop.f32.mrf.mxu0
  %v553 = vadd.f32 %v109, %v552
  %v554 = vpop.f32.mrf.mxu0
  %v555 = vadd.f32 %v105, %v554
  %v556 = vpop.f32.mrf.mxu0
  %v557 = vadd.f32 %v109, %v556
  %558 = vdwg.mxu0
  %559 = vmatprep.subr.bf16.mxu0 %v417
  %560 = vmatpush1.bf16.msra.mxu0 %v416
  %561 = vmatprep.subr.bf16.mxu0 %v409
  %562 = vmatpush1.bf16.msra.mxu0 %v408
  %563 = vmatprep.subr.bf16.mxu0 %v401
  %564 = vmatpush1.bf16.msra.mxu0 %v400
  %565 = vmatprep.subr.bf16.mxu0 %v393
  %566 = vmatpush1.bf16.msra.mxu0 %v392
  %567 = vmatprep.subr.bf16.mxu0 %v385
  %568 = vmatpush1.bf16.msra.mxu0 %v384
  %569 = vmatprep.subr.bf16.mxu0 %v377
  %570 = vmatpush1.bf16.msra.mxu0 %v376
  %571 = vmatprep.subr.bf16.mxu0 %v369
  %572 = vmatpush1.bf16.msra.mxu0 %v368
  %573 = vmatprep.subr.bf16.mxu0 %v361
  %574 = vmatpush1.bf16.msra.mxu0 %v360
  %575 = vmatprep.subr.bf16.mxu0 0
  %576 = vmatpush2.bf16.msra.mxu0 0
  %577 = vmatprep.subr.bf16.mxu0 0
  %578 = vmatpush2.bf16.msra.mxu0 0
  %579 = vmatprep.subr.bf16.mxu0 0
  %580 = vmatpush2.bf16.msra.mxu0 0
  %581 = vmatprep.subr.bf16.mxu0 0
  %582 = vmatpush2.bf16.msra.mxu0 0
  %583 = vmatprep.subr.bf16.mxu0 0
  %584 = vmatpush2.bf16.msra.mxu0 0
  %585 = vmatprep.subr.bf16.mxu0 0
  %586 = vmatpush2.bf16.msra.mxu0 0
  %587 = vmatprep.subr.bf16.mxu0 0
  %588 = vmatpush2.bf16.msra.mxu0 0
  %589 = vmatprep.subr.bf16.mxu0 0
  %590 = vmatpush2.bf16.msra.mxu0 0
  %591 = vmatprep.mubr.bf16.mxu0 0
  %592 = vmatmul.mubr.bf16.gmra.mxu0 %v158
  %v593 = vpop.f32.mrf.mxu0
  %v594 = vadd.f32 %v113, %v593
  %v595 = vpop.f32.mrf.mxu0
  %v596 = vadd.f32 %v117, %v595
  %v597 = vpop.f32.mrf.mxu0
  %v598 = vadd.f32 %v113, %v597
  %v599 = vpop.f32.mrf.mxu0
  %v600 = vadd.f32 %v117, %v599
  %601 = vmatprep.mubr.bf16.mxu0 0
  %602 = vmatmul.mubr.bf16.gmra.mxu0 %v159
  %v603 = vpop.f32.mrf.mxu0
  %v604 = vadd.f32 %v113, %v603
  %v605 = vpop.f32.mrf.mxu0
  %v606 = vadd.f32 %v117, %v605
  %v607 = vpop.f32.mrf.mxu0
  %v608 = vadd.f32 %v113, %v607
  %v609 = vpop.f32.mrf.mxu0
  %v610 = vadd.f32 %v117, %v609
  %611 = vmatprep.mubr.bf16.mxu0 0
  %612 = vmatmul.mubr.bf16.gmra.mxu0 %v160
  %v613 = vpop.f32.mrf.mxu0
  %v614 = vadd.f32 %v113, %v613
  %v615 = vpop.f32.mrf.mxu0
  %v616 = vadd.f32 %v117, %v615
  %v617 = vpop.f32.mrf.mxu0
  %v618 = vadd.f32 %v113, %v617
  %v619 = vpop.f32.mrf.mxu0
  %v620 = vadd.f32 %v117, %v619
  %621 = vmatprep.mubr.bf16.mxu0 0
  %622 = vmatmul.mubr.bf16.gmra.mxu0 %v161
  %v623 = vpop.f32.mrf.mxu0
  %v624 = vadd.f32 %v113, %v623
  %v625 = vpop.f32.mrf.mxu0
  %v626 = vadd.f32 %v117, %v625
  %v627 = vpop.f32.mrf.mxu0
  %v628 = vadd.f32 %v113, %v627
  %v629 = vpop.f32.mrf.mxu0
  %v630 = vadd.f32 %v117, %v629
  %631 = vdwg.mxu0
  %632 = vmatprep.subr.bf16.mxu0 %v419
  %633 = vmatpush1.bf16.msra.mxu0 %v418
  %634 = vmatprep.subr.bf16.mxu0 %v411
  %635 = vmatpush1.bf16.msra.mxu0 %v410
  %636 = vmatprep.subr.bf16.mxu0 %v403
  %637 = vmatpush1.bf16.msra.mxu0 %v402
  %638 = vmatprep.subr.bf16.mxu0 %v395
  %639 = vmatpush1.bf16.msra.mxu0 %v394
  %640 = vmatprep.subr.bf16.mxu0 %v387
  %641 = vmatpush1.bf16.msra.mxu0 %v386
  %642 = vmatprep.subr.bf16.mxu0 %v379
  %643 = vmatpush1.bf16.msra.mxu0 %v378
  %644 = vmatprep.subr.bf16.mxu0 %v371
  %645 = vmatpush1.bf16.msra.mxu0 %v370
  %646 = vmatprep.subr.bf16.mxu0 %v363
  %647 = vmatpush1.bf16.msra.mxu0 %v362
  %648 = vmatprep.subr.bf16.mxu0 0
  %649 = vmatpush2.bf16.msra.mxu0 0
  %650 = vmatprep.subr.bf16.mxu0 0
  %651 = vmatpush2.bf16.msra.mxu0 0
  %652 = vmatprep.subr.bf16.mxu0 0
  %653 = vmatpush2.bf16.msra.mxu0 0
  %654 = vmatprep.subr.bf16.mxu0 0
  %655 = vmatpush2.bf16.msra.mxu0 0
  %656 = vmatprep.subr.bf16.mxu0 0
  %657 = vmatpush2.bf16.msra.mxu0 0
  %658 = vmatprep.subr.bf16.mxu0 0
  %659 = vmatpush2.bf16.msra.mxu0 0
  %660 = vmatprep.subr.bf16.mxu0 0
  %661 = vmatpush2.bf16.msra.mxu0 0
  %662 = vmatprep.subr.bf16.mxu0 0
  %663 = vmatpush2.bf16.msra.mxu0 0
  %664 = vmatprep.mubr.bf16.mxu0 0
  %665 = vmatmul.mubr.bf16.gmra.mxu0 %v158
  %v666 = vpop.f32.mrf.mxu0
  %v667 = vadd.f32 %v121, %v666
  %v668 = vpop.f32.mrf.mxu0
  %v669 = vadd.f32 %v125, %v668
  %v670 = vpop.f32.mrf.mxu0
  %v671 = vadd.f32 %v121, %v670
  %v672 = vpop.f32.mrf.mxu0
  %v673 = vadd.f32 %v125, %v672
  %674 = vmatprep.mubr.bf16.mxu0 0
  %675 = vmatmul.mubr.bf16.gmra.mxu0 %v159
  %v676 = vpop.f32.mrf.mxu0
  %v677 = vadd.f32 %v121, %v676
  %v678 = vpop.f32.mrf.mxu0
  %v679 = vadd.f32 %v125, %v678
  %v680 = vpop.f32.mrf.mxu0
  %v681 = vadd.f32 %v121, %v680
  %v682 = vpop.f32.mrf.mxu0
  %v683 = vadd.f32 %v125, %v682
  %684 = vmatprep.mubr.bf16.mxu0 0
  %685 = vmatmul.mubr.bf16.gmra.mxu0 %v160
  %v686 = vpop.f32.mrf.mxu0
  %v687 = vadd.f32 %v121, %v686
  %v688 = vpop.f32.mrf.mxu0
  %v689 = vadd.f32 %v125, %v688
  %v690 = vpop.f32.mrf.mxu0
  %v691 = vadd.f32 %v121, %v690
  %v692 = vpop.f32.mrf.mxu0
  %v693 = vadd.f32 %v125, %v692
  %694 = vmatprep.mubr.bf16.mxu0 0
  %695 = vmatmul.mubr.bf16.gmra.mxu0 %v161
  %v696 = vpop.f32.mrf.mxu0
  %v697 = vadd.f32 %v121, %v696
  %v698 = vpop.f32.mrf.mxu0
  %v699 = vadd.f32 %v125, %v698
  %v700 = vpop.f32.mrf.mxu0
  %v701 = vadd.f32 %v121, %v700
  %v702 = vpop.f32.mrf.mxu0
  %v703 = vadd.f32 %v125, %v702
  %704 = vdwg.mxu0
  %705 = vmatprep.subr.bf16.mxu0 %v421
  %706 = vmatpush1.bf16.msra.mxu0 %v420
  %707 = vmatprep.subr.bf16.mxu0 %v413
  %708 = vmatpush1.bf16.msra.mxu0 %v412
  %709 = vmatprep.subr.bf16.mxu0 %v405
  %710 = vmatpush1.bf16.msra.mxu0 %v404
  %711 = vmatprep.subr.bf16.mxu0 %v397
  %712 = vmatpush1.bf16.msra.mxu0 %v396
  %713 = vmatprep.subr.bf16.mxu0 %v389
  %714 = vmatpush1.bf16.msra.mxu0 %v388
  %715 = vmatprep.subr.bf16.mxu0 %v381
  %716 = vmatpush1.bf16.msra.mxu0 %v380
  %717 = vmatprep.subr.bf16.mxu0 %v373
  %718 = vmatpush1.bf16.msra.mxu0 %v372
  %719 = vmatprep.subr.bf16.mxu0 %v365
  %720 = vmatpush1.bf16.msra.mxu0 %v364
  %721 = vmatprep.subr.bf16.mxu0 0
  %722 = vmatpush2.bf16.msra.mxu0 0
  %723 = vmatprep.subr.bf16.mxu0 0
  %724 = vmatpush2.bf16.msra.mxu0 0
  %725 = vmatprep.subr.bf16.mxu0 0
  %726 = vmatpush2.bf16.msra.mxu0 0
  %727 = vmatprep.subr.bf16.mxu0 0
  %728 = vmatpush2.bf16.msra.mxu0 0
  %729 = vmatprep.subr.bf16.mxu0 0
  %730 = vmatpush2.bf16.msra.mxu0 0
  %731 = vmatprep.subr.bf16.mxu0 0
  %732 = vmatpush2.bf16.msra.mxu0 0
  %733 = vmatprep.subr.bf16.mxu0 0
  %734 = vmatpush2.bf16.msra.mxu0 0
  %735 = vmatprep.subr.bf16.mxu0 0
  %736 = vmatpush2.bf16.msra.mxu0 0
  %737 = vmatprep.mubr.bf16.mxu0 0
  %738 = vmatmul.mubr.bf16.gmra.mxu0 %v158
  %v739 = vpop.f32.mrf.mxu0
  %v740 = vadd.f32 %v129, %v739
  %v741 = vpop.f32.mrf.mxu0
  %v742 = vadd.f32 %v133, %v741
  %v743 = vpop.f32.mrf.mxu0
  %v744 = vadd.f32 %v129, %v743
  %v745 = vpop.f32.mrf.mxu0
  %v746 = vadd.f32 %v133, %v745
  %747 = vmatprep.mubr.bf16.mxu0 0
  %748 = vmatmul.mubr.bf16.gmra.mxu0 %v159
  %v749 = vpop.f32.mrf.mxu0
  %v750 = vadd.f32 %v129, %v749
  %v751 = vpop.f32.mrf.mxu0
  %v752 = vadd.f32 %v133, %v751
  %v753 = vpop.f32.mrf.mxu0
  %v754 = vadd.f32 %v129, %v753
  %v755 = vpop.f32.mrf.mxu0
  %v756 = vadd.f32 %v133, %v755
  %757 = vmatprep.mubr.bf16.mxu0 0
  %758 = vmatmul.mubr.bf16.gmra.mxu0 %v160
  %v759 = vpop.f32.mrf.mxu0
  %v760 = vadd.f32 %v129, %v759
  %v761 = vpop.f32.mrf.mxu0
  %v762 = vadd.f32 %v133, %v761
  %v763 = vpop.f32.mrf.mxu0
  %v764 = vadd.f32 %v129, %v763
  %v765 = vpop.f32.mrf.mxu0
  %v766 = vadd.f32 %v133, %v765
  %767 = vmatprep.mubr.bf16.mxu0 0
  %768 = vmatmul.mubr.bf16.gmra.mxu0 %v161
  %v769 = vpop.f32.mrf.mxu0
  %v770 = vadd.f32 %v129, %v769
  %v771 = vpop.f32.mrf.mxu0
  %v772 = vadd.f32 %v133, %v771
  %v773 = vpop.f32.mrf.mxu0
  %v774 = vadd.f32 %v129, %v773
  %v775 = vpop.f32.mrf.mxu0
  %v776 = vadd.f32 %v133, %v775
  %777 = vdwg.mxu0
  %v778 = vpack.c.bf16 %v525, %v521
  %v779 = vpack.c.bf16 %v527, %v523
  %v780 = vpack.c.bf16 %v598, %v594
  %v781 = vpack.c.bf16 %v600, %v596
  %v782 = vpack.c.bf16 %v671, %v667
  %v783 = vpack.c.bf16 %v673, %v669
  %v784 = vpack.c.bf16 %v744, %v740
  %v785 = vpack.c.bf16 %v746, %v742
  %v786 = vpack.c.bf16 %v535, %v531
  %v787 = vpack.c.bf16 %v537, %v533
  %v788 = vpack.c.bf16 %v608, %v604
  %v789 = vpack.c.bf16 %v610, %v606
  %v790 = vpack.c.bf16 %v681, %v677
  %v791 = vpack.c.bf16 %v683, %v679
  %v792 = vpack.c.bf16 %v754, %v750
  %v793 = vpack.c.bf16 %v756, %v752
  %v794 = vpack.c.bf16 %v545, %v541
  %v795 = vpack.c.bf16 %v547, %v543
  %v796 = vpack.c.bf16 %v618, %v614
  %v797 = vpack.c.bf16 %v620, %v616
  %v798 = vpack.c.bf16 %v691, %v687
  %v799 = vpack.c.bf16 %v693, %v689
  %v800 = vpack.c.bf16 %v764, %v760
  %v801 = vpack.c.bf16 %v766, %v762
  %v802 = vpack.c.bf16 %v555, %v551
  %v803 = vpack.c.bf16 %v557, %v553
  %v804 = vpack.c.bf16 %v628, %v624
  %v805 = vpack.c.bf16 %v630, %v626
  %v806 = vpack.c.bf16 %v701, %v697
  %v807 = vpack.c.bf16 %v703, %v699
  %v808 = vpack.c.bf16 %v774, %v770
  %v809 = vpack.c.bf16 %v776, %v772
  %v842 = vunpack.c.l.b16 %v778
  %v843 = vunpack.c.l.b16 %v779
  %v844 = vunpack.c.l.b16 %v780
  %v845 = vunpack.c.l.b16 %v781
  %v846 = vunpack.c.l.b16 %v782
  %v847 = vunpack.c.l.b16 %v783
  %v848 = vunpack.c.l.b16 %v784
  %v849 = vunpack.c.l.b16 %v785
  %v850 = vunpack.c.h.b16 %v778
  %v851 = vunpack.c.h.b16 %v779
  %v852 = vunpack.c.h.b16 %v780
  %v853 = vunpack.c.h.b16 %v781
  %v854 = vunpack.c.h.b16 %v782
  %v855 = vunpack.c.h.b16 %v783
  %v856 = vunpack.c.h.b16 %v784
  %v857 = vunpack.c.h.b16 %v785
  %v858 = vunpack.c.l.b16 %v786
  %v859 = vunpack.c.l.b16 %v787
  %v860 = vunpack.c.l.b16 %v788
  %v861 = vunpack.c.l.b16 %v789
  %v862 = vunpack.c.l.b16 %v790
  %v863 = vunpack.c.l.b16 %v791
  %v864 = vunpack.c.l.b16 %v792
  %v865 = vunpack.c.l.b16 %v793
  %v866 = vunpack.c.h.b16 %v786
  %v867 = vunpack.c.h.b16 %v787
  %v868 = vunpack.c.h.b16 %v788
  %v869 = vunpack.c.h.b16 %v789
  %v870 = vunpack.c.h.b16 %v790
  %v871 = vunpack.c.h.b16 %v791
  %v872 = vunpack.c.h.b16 %v792
  %v873 = vunpack.c.h.b16 %v793
  %v874 = vunpack.c.l.b16 %v794
  %v875 = vunpack.c.l.b16 %v795
  %v876 = vunpack.c.l.b16 %v796
  %v877 = vunpack.c.l.b16 %v797
  %v878 = vunpack.c.l.b16 %v798
  %v879 = vunpack.c.l.b16 %v799
  %v880 = vunpack.c.l.b16 %v800
  %v881 = vunpack.c.l.b16 %v801
  %v882 = vunpack.c.h.b16 %v794
  %v883 = vunpack.c.h.b16 %v795
  %v884 = vunpack.c.h.b16 %v796
  %v885 = vunpack.c.h.b16 %v797
  %v886 = vunpack.c.h.b16 %v798
  %v887 = vunpack.c.h.b16 %v799
  %v888 = vunpack.c.h.b16 %v800
  %v889 = vunpack.c.h.b16 %v801
  %v890 = vunpack.c.l.b16 %v802
  %v891 = vunpack.c.l.b16 %v803
  %v892 = vunpack.c.l.b16 %v804
  %v893 = vunpack.c.l.b16 %v805
  %v894 = vunpack.c.l.b16 %v806
  %v895 = vunpack.c.l.b16 %v807
  %v896 = vunpack.c.l.b16 %v808
  %v897 = vunpack.c.l.b16 %v809
  %v898 = vunpack.c.h.b16 %v802
  %v899 = vunpack.c.h.b16 %v803
  %v900 = vunpack.c.h.b16 %v804
  %v901 = vunpack.c.h.b16 %v805
  %v902 = vunpack.c.h.b16 %v806
  %v903 = vunpack.c.h.b16 %v807
  %v904 = vunpack.c.h.b16 %v808
  %v905 = vunpack.c.h.b16 %v809
  %v906 = vpack.c.b16 %v843, %v842
  %v907 = vpack.c.b16 %v845, %v844
  %v908 = vpack.c.b16 %v847, %v846
  %v909 = vpack.c.b16 %v849, %v848
  %v910 = vpack.c.b16 %v851, %v850
  %v911 = vpack.c.b16 %v853, %v852
  %v912 = vpack.c.b16 %v855, %v854
  %v913 = vpack.c.b16 %v857, %v856
  %v914 = vpack.c.b16 %v859, %v858
  %v915 = vpack.c.b16 %v861, %v860
  %v916 = vpack.c.b16 %v863, %v862
  %v917 = vpack.c.b16 %v865, %v864
  %v918 = vpack.c.b16 %v867, %v866
  %v919 = vpack.c.b16 %v869, %v868
  %v920 = vpack.c.b16 %v871, %v870
  %v921 = vpack.c.b16 %v873, %v872
  %v922 = vpack.c.b16 %v875, %v874
  %v923 = vpack.c.b16 %v877, %v876
  %v924 = vpack.c.b16 %v879, %v878
  %v925 = vpack.c.b16 %v881, %v880
  %v926 = vpack.c.b16 %v883, %v882
  %v927 = vpack.c.b16 %v885, %v884
  %v928 = vpack.c.b16 %v887, %v886
  %v929 = vpack.c.b16 %v889, %v888
  %v930 = vpack.c.b16 %v891, %v890
  %v931 = vpack.c.b16 %v893, %v892
  %v932 = vpack.c.b16 %v895, %v894
  %v933 = vpack.c.b16 %v897, %v896
  %v934 = vpack.c.b16 %v899, %v898
  %v935 = vpack.c.b16 %v901, %v900
  %v936 = vpack.c.b16 %v903, %v902
  %v937 = vpack.c.b16 %v905, %v904
  %970 = vst [vmem:[#allocation2] sm:$0xff] %v906
  %971 = vst [vmem:[#allocation2 + $0x8] sm:$0xff] %v907
  %972 = vst [vmem:[#allocation2 + $0x10] sm:$0xff] %v908
  %973 = vst [vmem:[#allocation2 + $0x18] sm:$0xff] %v909
  %974 = vst [vmem:[#allocation2 + $0x20] sm:$0xff] %v910
  %975 = vst [vmem:[#allocation2 + $0x28] sm:$0xff] %v911
  %976 = vst [vmem:[#allocation2 + $0x30] sm:$0xff] %v912
  %977 = vst [vmem:[#allocation2 + $0x38] sm:$0xff] %v913
  %978 = vst [vmem:[#allocation2 + $0x40] sm:$0xff] %v914
  %979 = vst [vmem:[#allocation2 + $0x48] sm:$0xff] %v915
  %980 = vst [vmem:[#allocation2 + $0x50] sm:$0xff] %v916
  %981 = vst [vmem:[#allocation2 + $0x58] sm:$0xff] %v917
  %982 = vst [vmem:[#allocation2 + $0x60] sm:$0xff] %v918
  %983 = vst [vmem:[#allocation2 + $0x68] sm:$0xff] %v919
  %984 = vst [vmem:[#allocation2 + $0x70] sm:$0xff] %v920
  %985 = vst [vmem:[#allocation2 + $0x78] sm:$0xff] %v921
  %986 = vst [vmem:[#allocation2 + $0x80] sm:$0xff] %v922
  %987 = vst [vmem:[#allocation2 + $0x88] sm:$0xff] %v923
  %988 = vst [vmem:[#allocation2 + $0x90] sm:$0xff] %v924
  %989 = vst [vmem:[#allocation2 + $0x98] sm:$0xff] %v925
  %990 = vst [vmem:[#allocation2 + $0xa0] sm:$0xff] %v926
  %991 = vst [vmem:[#allocation2 + $0xa8] sm:$0xff] %v927
  %992 = vst [vmem:[#allocation2 + $0xb0] sm:$0xff] %v928
  %993 = vst [vmem:[#allocation2 + $0xb8] sm:$0xff] %v929
  %994 = vst [vmem:[#allocation2 + $0xc0] sm:$0xff] %v930
  %995 = vst [vmem:[#allocation2 + $0xc8] sm:$0xff] %v931
  %996 = vst [vmem:[#allocation2 + $0xd0] sm:$0xff] %v932
  %997 = vst [vmem:[#allocation2 + $0xd8] sm:$0xff] %v933
  %998 = vst [vmem:[#allocation2 + $0xe0] sm:$0xff] %v934
  %999 = vst [vmem:[#allocation2 + $0xe8] sm:$0xff] %v935
  %1000 = vst [vmem:[#allocation2 + $0xf0] sm:$0xff] %v936
  %1001 = vst [vmem:[#allocation2 + $0xf8] sm:$0xff] %v937
  %v1002 = vpack.c.bf16 0.0, 0.0
  %v1003 = vld [vmem:[%s4] sm:$0xff]
  %v1004 = vld [vmem:[%s4 + $0x8] sm:$0xff]
  %v1005 = vld [vmem:[%s4 + $0x10] sm:$0xff]
  %v1006 = vld [vmem:[%s4 + $0x18] sm:$0xff]
  %v1007 = vld [vmem:[%s4 + $0x20] sm:$0xff]
  %v1008 = vld [vmem:[%s4 + $0x28] sm:$0xff]
  %v1009 = vld [vmem:[%s4 + $0x30] sm:$0xff]
  %v1010 = vld [vmem:[%s4 + $0x38] sm:$0xff]
  %v1011 = vld [vmem:[%s4 + $0x40] sm:$0xff]
  %v1012 = vld [vmem:[%s4 + $0x48] sm:$0xff]
  %v1013 = vld [vmem:[%s4 + $0x50] sm:$0xff]
  %v1014 = vld [vmem:[%s4 + $0x58] sm:$0xff]
  %v1015 = vld [vmem:[%s4 + $0x60] sm:$0xff]
  %v1016 = vld [vmem:[%s4 + $0x68] sm:$0xff]
  %v1017 = vld [vmem:[%s4 + $0x70] sm:$0xff]
  %v1018 = vld [vmem:[%s4 + $0x78] sm:$0xff]
  %v1019 = vld [vmem:[%s4 + $0x80] sm:$0xff]
  %v1020 = vld [vmem:[%s4 + $0x88] sm:$0xff]
  %v1021 = vld [vmem:[%s4 + $0x90] sm:$0xff]
  %v1022 = vld [vmem:[%s4 + $0x98] sm:$0xff]
  %v1023 = vld [vmem:[%s4 + $0xa0] sm:$0xff]
  %v1024 = vld [vmem:[%s4 + $0xa8] sm:$0xff]
  %v1025 = vld [vmem:[%s4 + $0xb0] sm:$0xff]
  %v1026 = vld [vmem:[%s4 + $0xb8] sm:$0xff]
  %v1027 = vld [vmem:[%s4 + $0xc0] sm:$0xff]
  %v1028 = vld [vmem:[%s4 + $0xc8] sm:$0xff]
  %v1029 = vld [vmem:[%s4 + $0xd0] sm:$0xff]
  %v1030 = vld [vmem:[%s4 + $0xd8] sm:$0xff]
  %v1031 = vld [vmem:[%s4 + $0xe0] sm:$0xff]
  %v1032 = vld [vmem:[%s4 + $0xe8] sm:$0xff]
  %v1033 = vld [vmem:[%s4 + $0xf0] sm:$0xff]
  %v1034 = vld [vmem:[%s4 + $0xf8] sm:$0xff]
  %v1035 = vld [vmem:[%s4 + $0x100] sm:$0xff]
  %v1036 = vld [vmem:[%s4 + $0x108] sm:$0xff]
  %v1037 = vld [vmem:[%s4 + $0x110] sm:$0xff]
  %v1038 = vld [vmem:[%s4 + $0x118] sm:$0xff]
  %v1039 = vld [vmem:[%s4 + $0x120] sm:$0xff]
  %v1040 = vld [vmem:[%s4 + $0x128] sm:$0xff]
  %v1041 = vld [vmem:[%s4 + $0x130] sm:$0xff]
  %v1042 = vld [vmem:[%s4 + $0x138] sm:$0xff]
  %v1043 = vld [vmem:[%s4 + $0x140] sm:$0xff]
  %v1044 = vld [vmem:[%s4 + $0x148] sm:$0xff]
  %v1045 = vld [vmem:[%s4 + $0x150] sm:$0xff]
  %v1046 = vld [vmem:[%s4 + $0x158] sm:$0xff]
  %v1047 = vld [vmem:[%s4 + $0x160] sm:$0xff]
  %v1048 = vld [vmem:[%s4 + $0x168] sm:$0xff]
  %v1049 = vld [vmem:[%s4 + $0x170] sm:$0xff]
  %v1050 = vld [vmem:[%s4 + $0x178] sm:$0xff]
  %v1051 = vld [vmem:[%s4 + $0x180] sm:$0xff]
  %v1052 = vld [vmem:[%s4 + $0x188] sm:$0xff]
  %v1053 = vld [vmem:[%s4 + $0x190] sm:$0xff]
  %v1054 = vld [vmem:[%s4 + $0x198] sm:$0xff]
  %v1055 = vld [vmem:[%s4 + $0x1a0] sm:$0xff]
  %v1056 = vld [vmem:[%s4 + $0x1a8] sm:$0xff]
  %v1057 = vld [vmem:[%s4 + $0x1b0] sm:$0xff]
  %v1058 = vld [vmem:[%s4 + $0x1b8] sm:$0xff]
  %v1059 = vld [vmem:[%s4 + $0x1c0] sm:$0xff]
  %v1060 = vld [vmem:[%s4 + $0x1c8] sm:$0xff]
  %v1061 = vld [vmem:[%s4 + $0x1d0] sm:$0xff]
  %v1062 = vld [vmem:[%s4 + $0x1d8] sm:$0xff]
  %v1063 = vld [vmem:[%s4 + $0x1e0] sm:$0xff]
  %v1064 = vld [vmem:[%s4 + $0x1e8] sm:$0xff]
  %v1065 = vld [vmem:[%s4 + $0x1f0] sm:$0xff]
  %v1066 = vld [vmem:[%s4 + $0x1f8] sm:$0xff]
  %v1067 = vld [vmem:[%s4 + $0x200] sm:$0xff]
  %v1068 = vld [vmem:[%s4 + $0x208] sm:$0xff]
  %v1069 = vld [vmem:[%s4 + $0x210] sm:$0xff]
  %v1070 = vld [vmem:[%s4 + $0x218] sm:$0xff]
  %v1071 = vld [vmem:[%s4 + $0x220] sm:$0xff]
  %v1072 = vld [vmem:[%s4 + $0x228] sm:$0xff]
  %v1073 = vld [vmem:[%s4 + $0x230] sm:$0xff]
  %v1074 = vld [vmem:[%s4 + $0x238] sm:$0xff]
  %v1075 = vld [vmem:[%s4 + $0x240] sm:$0xff]
  %v1076 = vld [vmem:[%s4 + $0x248] sm:$0xff]
  %v1077 = vld [vmem:[%s4 + $0x250] sm:$0xff]
  %v1078 = vld [vmem:[%s4 + $0x258] sm:$0xff]
  %v1079 = vld [vmem:[%s4 + $0x260] sm:$0xff]
  %v1080 = vld [vmem:[%s4 + $0x268] sm:$0xff]
  %v1081 = vld [vmem:[%s4 + $0x270] sm:$0xff]
  %v1082 = vld [vmem:[%s4 + $0x278] sm:$0xff]
  %v1083 = vld [vmem:[%s4 + $0x280] sm:$0xff]
  %v1084 = vld [vmem:[%s4 + $0x288] sm:$0xff]
  %v1085 = vld [vmem:[%s4 + $0x290] sm:$0xff]
  %v1086 = vld [vmem:[%s4 + $0x298] sm:$0xff]
  %v1087 = vld [vmem:[%s4 + $0x2a0] sm:$0xff]
  %v1088 = vld [vmem:[%s4 + $0x2a8] sm:$0xff]
  %v1089 = vld [vmem:[%s4 + $0x2b0] sm:$0xff]
  %v1090 = vld [vmem:[%s4 + $0x2b8] sm:$0xff]
  %v1091 = vld [vmem:[%s4 + $0x2c0] sm:$0xff]
  %v1092 = vld [vmem:[%s4 + $0x2c8] sm:$0xff]
  %v1093 = vld [vmem:[%s4 + $0x2d0] sm:$0xff]
  %v1094 = vld [vmem:[%s4 + $0x2d8] sm:$0xff]
  %v1095 = vld [vmem:[%s4 + $0x2e0] sm:$0xff]
  %v1096 = vld [vmem:[%s4 + $0x2e8] sm:$0xff]
  %v1097 = vld [vmem:[%s4 + $0x2f0] sm:$0xff]
  %v1098 = vld [vmem:[%s4 + $0x2f8] sm:$0xff]
  %v1099 = vld [vmem:[%s4 + $0x300] sm:$0xff]
  %v1100 = vld [vmem:[%s4 + $0x308] sm:$0xff]
  %v1101 = vld [vmem:[%s4 + $0x310] sm:$0xff]
  %v1102 = vld [vmem:[%s4 + $0x318] sm:$0xff]
  %v1103 = vld [vmem:[%s4 + $0x320] sm:$0xff]
  %v1104 = vld [vmem:[%s4 + $0x328] sm:$0xff]
  %v1105 = vld [vmem:[%s4 + $0x330] sm:$0xff]
  %v1106 = vld [vmem:[%s4 + $0x338] sm:$0xff]
  %v1107 = vld [vmem:[%s4 + $0x340] sm:$0xff]
  %v1108 = vld [vmem:[%s4 + $0x348] sm:$0xff]
  %v1109 = vld [vmem:[%s4 + $0x350] sm:$0xff]
  %v1110 = vld [vmem:[%s4 + $0x358] sm:$0xff]
  %v1111 = vld [vmem:[%s4 + $0x360] sm:$0xff]
  %v1112 = vld [vmem:[%s4 + $0x368] sm:$0xff]
  %v1113 = vld [vmem:[%s4 + $0x370] sm:$0xff]
  %v1114 = vld [vmem:[%s4 + $0x378] sm:$0xff]
  %v1115 = vld [vmem:[%s4 + $0x380] sm:$0xff]
  %v1116 = vld [vmem:[%s4 + $0x388] sm:$0xff]
  %v1117 = vld [vmem:[%s4 + $0x390] sm:$0xff]
  %v1118 = vld [vmem:[%s4 + $0x398] sm:$0xff]
  %v1119 = vld [vmem:[%s4 + $0x3a0] sm:$0xff]
  %v1120 = vld [vmem:[%s4 + $0x3a8] sm:$0xff]
  %v1121 = vld [vmem:[%s4 + $0x3b0] sm:$0xff]
  %v1122 = vld [vmem:[%s4 + $0x3b8] sm:$0xff]
  %v1123 = vld [vmem:[%s4 + $0x3c0] sm:$0xff]
  %v1124 = vld [vmem:[%s4 + $0x3c8] sm:$0xff]
  %v1125 = vld [vmem:[%s4 + $0x3d0] sm:$0xff]
  %v1126 = vld [vmem:[%s4 + $0x3d8] sm:$0xff]
  %v1127 = vld [vmem:[%s4 + $0x3e0] sm:$0xff]
  %v1128 = vld [vmem:[%s4 + $0x3e8] sm:$0xff]
  %v1129 = vld [vmem:[%s4 + $0x3f0] sm:$0xff]
  %v1130 = vld [vmem:[%s4 + $0x3f8] sm:$0xff]
  %v1259 = vunpack.c.l.b16 %v1003
  %v1260 = vunpack.c.h.b16 %v1003
  %v1261 = vunpack.c.l.b16 %v1004
  %v1262 = vunpack.c.h.b16 %v1004
  %v1263 = vunpack.c.l.b16 %v1005
  %v1264 = vunpack.c.h.b16 %v1005
  %v1265 = vunpack.c.l.b16 %v1006
  %v1266 = vunpack.c.h.b16 %v1006
  %v1267 = vunpack.c.l.b16 %v1007
  %v1268 = vunpack.c.h.b16 %v1007
  %v1269 = vunpack.c.l.b16 %v1008
  %v1270 = vunpack.c.h.b16 %v1008
  %v1271 = vunpack.c.l.b16 %v1009
  %v1272 = vunpack.c.h.b16 %v1009
  %v1273 = vunpack.c.l.b16 %v1010
  %v1274 = vunpack.c.h.b16 %v1010
  %v1275 = vunpack.c.l.b16 %v1011
  %v1276 = vunpack.c.h.b16 %v1011
  %v1277 = vunpack.c.l.b16 %v1012
  %v1278 = vunpack.c.h.b16 %v1012
  %v1279 = vunpack.c.l.b16 %v1013
  %v1280 = vunpack.c.h.b16 %v1013
  %v1281 = vunpack.c.l.b16 %v1014
  %v1282 = vunpack.c.h.b16 %v1014
  %v1283 = vunpack.c.l.b16 %v1015
  %v1284 = vunpack.c.h.b16 %v1015
  %v1285 = vunpack.c.l.b16 %v1016
  %v1286 = vunpack.c.h.b16 %v1016
  %v1287 = vunpack.c.l.b16 %v1017
  %v1288 = vunpack.c.h.b16 %v1017
  %v1289 = vunpack.c.l.b16 %v1018
  %v1290 = vunpack.c.h.b16 %v1018
  %v1291 = vunpack.c.l.b16 %v1019
  %v1292 = vunpack.c.h.b16 %v1019
  %v1293 = vunpack.c.l.b16 %v1020
  %v1294 = vunpack.c.h.b16 %v1020
  %v1295 = vunpack.c.l.b16 %v1021
  %v1296 = vunpack.c.h.b16 %v1021
  %v1297 = vunpack.c.l.b16 %v1022
  %v1298 = vunpack.c.h.b16 %v1022
  %v1299 = vunpack.c.l.b16 %v1023
  %v1300 = vunpack.c.h.b16 %v1023
  %v1301 = vunpack.c.l.b16 %v1024
  %v1302 = vunpack.c.h.b16 %v1024
  %v1303 = vunpack.c.l.b16 %v1025
  %v1304 = vunpack.c.h.b16 %v1025
  %v1305 = vunpack.c.l.b16 %v1026
  %v1306 = vunpack.c.h.b16 %v1026
  %v1307 = vunpack.c.l.b16 %v1027
  %v1308 = vunpack.c.h.b16 %v1027
  %v1309 = vunpack.c.l.b16 %v1028
  %v1310 = vunpack.c.h.b16 %v1028
  %v1311 = vunpack.c.l.b16 %v1029
  %v1312 = vunpack.c.h.b16 %v1029
  %v1313 = vunpack.c.l.b16 %v1030
  %v1314 = vunpack.c.h.b16 %v1030
  %v1315 = vunpack.c.l.b16 %v1031
  %v1316 = vunpack.c.h.b16 %v1031
  %v1317 = vunpack.c.l.b16 %v1032
  %v1318 = vunpack.c.h.b16 %v1032
  %v1319 = vunpack.c.l.b16 %v1033
  %v1320 = vunpack.c.h.b16 %v1033
  %v1321 = vunpack.c.l.b16 %v1034
  %v1322 = vunpack.c.h.b16 %v1034
  %v1323 = vunpack.c.l.b16 %v1035
  %v1324 = vunpack.c.h.b16 %v1035
  %v1325 = vunpack.c.l.b16 %v1036
  %v1326 = vunpack.c.h.b16 %v1036
  %v1327 = vunpack.c.l.b16 %v1037
  %v1328 = vunpack.c.h.b16 %v1037
  %v1329 = vunpack.c.l.b16 %v1038
  %v1330 = vunpack.c.h.b16 %v1038
  %v1331 = vunpack.c.l.b16 %v1039
  %v1332 = vunpack.c.h.b16 %v1039
  %v1333 = vunpack.c.l.b16 %v1040
  %v1334 = vunpack.c.h.b16 %v1040
  %v1335 = vunpack.c.l.b16 %v1041
  %v1336 = vunpack.c.h.b16 %v1041
  %v1337 = vunpack.c.l.b16 %v1042
  %v1338 = vunpack.c.h.b16 %v1042
  %v1339 = vunpack.c.l.b16 %v1043
  %v1340 = vunpack.c.h.b16 %v1043
  %v1341 = vunpack.c.l.b16 %v1044
  %v1342 = vunpack.c.h.b16 %v1044
  %v1343 = vunpack.c.l.b16 %v1045
  %v1344 = vunpack.c.h.b16 %v1045
  %v1345 = vunpack.c.l.b16 %v1046
  %v1346 = vunpack.c.h.b16 %v1046
  %v1347 = vunpack.c.l.b16 %v1047
  %v1348 = vunpack.c.h.b16 %v1047
  %v1349 = vunpack.c.l.b16 %v1048
  %v1350 = vunpack.c.h.b16 %v1048
  %v1351 = vunpack.c.l.b16 %v1049
  %v1352 = vunpack.c.h.b16 %v1049
  %v1353 = vunpack.c.l.b16 %v1050
  %v1354 = vunpack.c.h.b16 %v1050
  %v1355 = vunpack.c.l.b16 %v1051
  %v1356 = vunpack.c.h.b16 %v1051
  %v1357 = vunpack.c.l.b16 %v1052
  %v1358 = vunpack.c.h.b16 %v1052
  %v1359 = vunpack.c.l.b16 %v1053
  %v1360 = vunpack.c.h.b16 %v1053
  %v1361 = vunpack.c.l.b16 %v1054
  %v1362 = vunpack.c.h.b16 %v1054
  %v1363 = vunpack.c.l.b16 %v1055
  %v1364 = vunpack.c.h.b16 %v1055
  %v1365 = vunpack.c.l.b16 %v1056
  %v1366 = vunpack.c.h.b16 %v1056
  %v1367 = vunpack.c.l.b16 %v1057
  %v1368 = vunpack.c.h.b16 %v1057
  %v1369 = vunpack.c.l.b16 %v1058
  %v1370 = vunpack.c.h.b16 %v1058
  %v1371 = vunpack.c.l.b16 %v1059
  %v1372 = vunpack.c.h.b16 %v1059
  %v1373 = vunpack.c.l.b16 %v1060
  %v1374 = vunpack.c.h.b16 %v1060
  %v1375 = vunpack.c.l.b16 %v1061
  %v1376 = vunpack.c.h.b16 %v1061
  %v1377 = vunpack.c.l.b16 %v1062
  %v1378 = vunpack.c.h.b16 %v1062
  %v1379 = vunpack.c.l.b16 %v1063
  %v1380 = vunpack.c.h.b16 %v1063
  %v1381 = vunpack.c.l.b16 %v1064
  %v1382 = vunpack.c.h.b16 %v1064
  %v1383 = vunpack.c.l.b16 %v1065
  %v1384 = vunpack.c.h.b16 %v1065
  %v1385 = vunpack.c.l.b16 %v1066
  %v1386 = vunpack.c.h.b16 %v1066
  %v1387 = vunpack.c.l.b16 %v1067
  %v1388 = vunpack.c.h.b16 %v1067
  %v1389 = vunpack.c.l.b16 %v1068
  %v1390 = vunpack.c.h.b16 %v1068
  %v1391 = vunpack.c.l.b16 %v1069
  %v1392 = vunpack.c.h.b16 %v1069
  %v1393 = vunpack.c.l.b16 %v1070
  %v1394 = vunpack.c.h.b16 %v1070
  %v1395 = vunpack.c.l.b16 %v1071
  %v1396 = vunpack.c.h.b16 %v1071
  %v1397 = vunpack.c.l.b16 %v1072
  %v1398 = vunpack.c.h.b16 %v1072
  %v1399 = vunpack.c.l.b16 %v1073
  %v1400 = vunpack.c.h.b16 %v1073
  %v1401 = vunpack.c.l.b16 %v1074
  %v1402 = vunpack.c.h.b16 %v1074
  %v1403 = vunpack.c.l.b16 %v1075
  %v1404 = vunpack.c.h.b16 %v1075
  %v1405 = vunpack.c.l.b16 %v1076
  %v1406 = vunpack.c.h.b16 %v1076
  %v1407 = vunpack.c.l.b16 %v1077
  %v1408 = vunpack.c.h.b16 %v1077
  %v1409 = vunpack.c.l.b16 %v1078
  %v1410 = vunpack.c.h.b16 %v1078
  %v1411 = vunpack.c.l.b16 %v1079
  %v1412 = vunpack.c.h.b16 %v1079
  %v1413 = vunpack.c.l.b16 %v1080
  %v1414 = vunpack.c.h.b16 %v1080
  %v1415 = vunpack.c.l.b16 %v1081
  %v1416 = vunpack.c.h.b16 %v1081
  %v1417 = vunpack.c.l.b16 %v1082
  %v1418 = vunpack.c.h.b16 %v1082
  %v1419 = vunpack.c.l.b16 %v1083
  %v1420 = vunpack.c.h.b16 %v1083
  %v1421 = vunpack.c.l.b16 %v1084
  %v1422 = vunpack.c.h.b16 %v1084
  %v1423 = vunpack.c.l.b16 %v1085
  %v1424 = vunpack.c.h.b16 %v1085
  %v1425 = vunpack.c.l.b16 %v1086
  %v1426 = vunpack.c.h.b16 %v1086
  %v1427 = vunpack.c.l.b16 %v1087
  %v1428 = vunpack.c.h.b16 %v1087
  %v1429 = vunpack.c.l.b16 %v1088
  %v1430 = vunpack.c.h.b16 %v1088
  %v1431 = vunpack.c.l.b16 %v1089
  %v1432 = vunpack.c.h.b16 %v1089
  %v1433 = vunpack.c.l.b16 %v1090
  %v1434 = vunpack.c.h.b16 %v1090
  %v1435 = vunpack.c.l.b16 %v1091
  %v1436 = vunpack.c.h.b16 %v1091
  %v1437 = vunpack.c.l.b16 %v1092
  %v1438 = vunpack.c.h.b16 %v1092
  %v1439 = vunpack.c.l.b16 %v1093
  %v1440 = vunpack.c.h.b16 %v1093
  %v1441 = vunpack.c.l.b16 %v1094
  %v1442 = vunpack.c.h.b16 %v1094
  %v1443 = vunpack.c.l.b16 %v1095
  %v1444 = vunpack.c.h.b16 %v1095
  %v1445 = vunpack.c.l.b16 %v1096
  %v1446 = vunpack.c.h.b16 %v1096
  %v1447 = vunpack.c.l.b16 %v1097
  %v1448 = vunpack.c.h.b16 %v1097
  %v1449 = vunpack.c.l.b16 %v1098
  %v1450 = vunpack.c.h.b16 %v1098
  %v1451 = vunpack.c.l.b16 %v1099
  %v1452 = vunpack.c.h.b16 %v1099
  %v1453 = vunpack.c.l.b16 %v1100
  %v1454 = vunpack.c.h.b16 %v1100
  %v1455 = vunpack.c.l.b16 %v1101
  %v1456 = vunpack.c.h.b16 %v1101
  %v1457 = vunpack.c.l.b16 %v1102
  %v1458 = vunpack.c.h.b16 %v1102
  %v1459 = vunpack.c.l.b16 %v1103
  %v1460 = vunpack.c.h.b16 %v1103
  %v1461 = vunpack.c.l.b16 %v1104
  %v1462 = vunpack.c.h.b16 %v1104
  %v1463 = vunpack.c.l.b16 %v1105
  %v1464 = vunpack.c.h.b16 %v1105
  %v1465 = vunpack.c.l.b16 %v1106
  %v1466 = vunpack.c.h.b16 %v1106
  %v1467 = vunpack.c.l.b16 %v1107
  %v1468 = vunpack.c.h.b16 %v1107
  %v1469 = vunpack.c.l.b16 %v1108
  %v1470 = vunpack.c.h.b16 %v1108
  %v1471 = vunpack.c.l.b16 %v1109
  %v1472 = vunpack.c.h.b16 %v1109
  %v1473 = vunpack.c.l.b16 %v1110
  %v1474 = vunpack.c.h.b16 %v1110
  %v1475 = vunpack.c.l.b16 %v1111
  %v1476 = vunpack.c.h.b16 %v1111
  %v1477 = vunpack.c.l.b16 %v1112
  %v1478 = vunpack.c.h.b16 %v1112
  %v1479 = vunpack.c.l.b16 %v1113
  %v1480 = vunpack.c.h.b16 %v1113
  %v1481 = vunpack.c.l.b16 %v1114
  %v1482 = vunpack.c.h.b16 %v1114
  %v1483 = vunpack.c.l.b16 %v1115
  %v1484 = vunpack.c.h.b16 %v1115
  %v1485 = vunpack.c.l.b16 %v1116
  %v1486 = vunpack.c.h.b16 %v1116
  %v1487 = vunpack.c.l.b16 %v1117
  %v1488 = vunpack.c.h.b16 %v1117
  %v1489 = vunpack.c.l.b16 %v1118
  %v1490 = vunpack.c.h.b16 %v1118
  %v1491 = vunpack.c.l.b16 %v1119
  %v1492 = vunpack.c.h.b16 %v1119
  %v1493 = vunpack.c.l.b16 %v1120
  %v1494 = vunpack.c.h.b16 %v1120
  %v1495 = vunpack.c.l.b16 %v1121
  %v1496 = vunpack.c.h.b16 %v1121
  %v1497 = vunpack.c.l.b16 %v1122
  %v1498 = vunpack.c.h.b16 %v1122
  %v1499 = vunpack.c.l.b16 %v1123
  %v1500 = vunpack.c.h.b16 %v1123
  %v1501 = vunpack.c.l.b16 %v1124
  %v1502 = vunpack.c.h.b16 %v1124
  %v1503 = vunpack.c.l.b16 %v1125
  %v1504 = vunpack.c.h.b16 %v1125
  %v1505 = vunpack.c.l.b16 %v1126
  %v1506 = vunpack.c.h.b16 %v1126
  %v1507 = vunpack.c.l.b16 %v1127
  %v1508 = vunpack.c.h.b16 %v1127
  %v1509 = vunpack.c.l.b16 %v1128
  %v1510 = vunpack.c.h.b16 %v1128
  %v1511 = vunpack.c.l.b16 %v1129
  %v1512 = vunpack.c.h.b16 %v1129
  %v1513 = vunpack.c.l.b16 %v1130
  %v1514 = vunpack.c.h.b16 %v1130
  %v1515 = vpack.c.b16 %v1267, %v1259
  %v1516 = vpack.c.b16 %v1268, %v1260
  %v1517 = vpack.c.b16 %v1269, %v1261
  %v1518 = vpack.c.b16 %v1270, %v1262
  %v1519 = vpack.c.b16 %v1271, %v1263
  %v1520 = vpack.c.b16 %v1272, %v1264
  %v1521 = vpack.c.b16 %v1273, %v1265
  %v1522 = vpack.c.b16 %v1274, %v1266
  %v1523 = vpack.c.b16 %v1283, %v1275
  %v1524 = vpack.c.b16 %v1284, %v1276
  %v1525 = vpack.c.b16 %v1285, %v1277
  %v1526 = vpack.c.b16 %v1286, %v1278
  %v1527 = vpack.c.b16 %v1287, %v1279
  %v1528 = vpack.c.b16 %v1288, %v1280
  %v1529 = vpack.c.b16 %v1289, %v1281
  %v1530 = vpack.c.b16 %v1290, %v1282
  %v1531 = vpack.c.b16 %v1299, %v1291
  %v1532 = vpack.c.b16 %v1300, %v1292
  %v1533 = vpack.c.b16 %v1301, %v1293
  %v1534 = vpack.c.b16 %v1302, %v1294
  %v1535 = vpack.c.b16 %v1303, %v1295
  %v1536 = vpack.c.b16 %v1304, %v1296
  %v1537 = vpack.c.b16 %v1305, %v1297
  %v1538 = vpack.c.b16 %v1306, %v1298
  %v1539 = vpack.c.b16 %v1315, %v1307
  %v1540 = vpack.c.b16 %v1316, %v1308
  %v1541 = vpack.c.b16 %v1317, %v1309
  %v1542 = vpack.c.b16 %v1318, %v1310
  %v1543 = vpack.c.b16 %v1319, %v1311
  %v1544 = vpack.c.b16 %v1320, %v1312
  %v1545 = vpack.c.b16 %v1321, %v1313
  %v1546 = vpack.c.b16 %v1322, %v1314
  %v1547 = vpack.c.b16 %v1331, %v1323
  %v1548 = vpack.c.b16 %v1332, %v1324
  %v1549 = vpack.c.b16 %v1333, %v1325
  %v1550 = vpack.c.b16 %v1334, %v1326
  %v1551 = vpack.c.b16 %v1335, %v1327
  %v1552 = vpack.c.b16 %v1336, %v1328
  %v1553 = vpack.c.b16 %v1337, %v1329
  %v1554 = vpack.c.b16 %v1338, %v1330
  %v1555 = vpack.c.b16 %v1347, %v1339
  %v1556 = vpack.c.b16 %v1348, %v1340
  %v1557 = vpack.c.b16 %v1349, %v1341
  %v1558 = vpack.c.b16 %v1350, %v1342
  %v1559 = vpack.c.b16 %v1351, %v1343
  %v1560 = vpack.c.b16 %v1352, %v1344
  %v1561 = vpack.c.b16 %v1353, %v1345
  %v1562 = vpack.c.b16 %v1354, %v1346
  %v1563 = vpack.c.b16 %v1363, %v1355
  %v1564 = vpack.c.b16 %v1364, %v1356
  %v1565 = vpack.c.b16 %v1365, %v1357
  %v1566 = vpack.c.b16 %v1366, %v1358
  %v1567 = vpack.c.b16 %v1367, %v1359
  %v1568 = vpack.c.b16 %v1368, %v1360
  %v1569 = vpack.c.b16 %v1369, %v1361
  %v1570 = vpack.c.b16 %v1370, %v1362
  %v1571 = vpack.c.b16 %v1379, %v1371
  %v1572 = vpack.c.b16 %v1380, %v1372
  %v1573 = vpack.c.b16 %v1381, %v1373
  %v1574 = vpack.c.b16 %v1382, %v1374
  %v1575 = vpack.c.b16 %v1383, %v1375
  %v1576 = vpack.c.b16 %v1384, %v1376
  %v1577 = vpack.c.b16 %v1385, %v1377
  %v1578 = vpack.c.b16 %v1386, %v1378
  %v1579 = vpack.c.b16 %v1395, %v1387
  %v1580 = vpack.c.b16 %v1396, %v1388
  %v1581 = vpack.c.b16 %v1397, %v1389
  %v1582 = vpack.c.b16 %v1398, %v1390
  %v1583 = vpack.c.b16 %v1399, %v1391
  %v1584 = vpack.c.b16 %v1400, %v1392
  %v1585 = vpack.c.b16 %v1401, %v1393
  %v1586 = vpack.c.b16 %v1402, %v1394
  %v1587 = vpack.c.b16 %v1411, %v1403
  %v1588 = vpack.c.b16 %v1412, %v1404
  %v1589 = vpack.c.b16 %v1413, %v1405
  %v1590 = vpack.c.b16 %v1414, %v1406
  %v1591 = vpack.c.b16 %v1415, %v1407
  %v1592 = vpack.c.b16 %v1416, %v1408
  %v1593 = vpack.c.b16 %v1417, %v1409
  %v1594 = vpack.c.b16 %v1418, %v1410
  %v1595 = vpack.c.b16 %v1427, %v1419
  %v1596 = vpack.c.b16 %v1428, %v1420
  %v1597 = vpack.c.b16 %v1429, %v1421
  %v1598 = vpack.c.b16 %v1430, %v1422
  %v1599 = vpack.c.b16 %v1431, %v1423
  %v1600 = vpack.c.b16 %v1432, %v1424
  %v1601 = vpack.c.b16 %v1433, %v1425
  %v1602 = vpack.c.b16 %v1434, %v1426
  %v1603 = vpack.c.b16 %v1443, %v1435
  %v1604 = vpack.c.b16 %v1444, %v1436
  %v1605 = vpack.c.b16 %v1445, %v1437
  %v1606 = vpack.c.b16 %v1446, %v1438
  %v1607 = vpack.c.b16 %v1447, %v1439
  %v1608 = vpack.c.b16 %v1448, %v1440
  %v1609 = vpack.c.b16 %v1449, %v1441
  %v1610 = vpack.c.b16 %v1450, %v1442
  %v1611 = vpack.c.b16 %v1459, %v1451
  %v1612 = vpack.c.b16 %v1460, %v1452
  %v1613 = vpack.c.b16 %v1461, %v1453
  %v1614 = vpack.c.b16 %v1462, %v1454
  %v1615 = vpack.c.b16 %v1463, %v1455
  %v1616 = vpack.c.b16 %v1464, %v1456
  %v1617 = vpack.c.b16 %v1465, %v1457
  %v1618 = vpack.c.b16 %v1466, %v1458
  %v1619 = vpack.c.b16 %v1475, %v1467
  %v1620 = vpack.c.b16 %v1476, %v1468
  %v1621 = vpack.c.b16 %v1477, %v1469
  %v1622 = vpack.c.b16 %v1478, %v1470
  %v1623 = vpack.c.b16 %v1479, %v1471
  %v1624 = vpack.c.b16 %v1480, %v1472
  %v1625 = vpack.c.b16 %v1481, %v1473
  %v1626 = vpack.c.b16 %v1482, %v1474
  %v1627 = vpack.c.b16 %v1491, %v1483
  %v1628 = vpack.c.b16 %v1492, %v1484
  %v1629 = vpack.c.b16 %v1493, %v1485
  %v1630 = vpack.c.b16 %v1494, %v1486
  %v1631 = vpack.c.b16 %v1495, %v1487
  %v1632 = vpack.c.b16 %v1496, %v1488
  %v1633 = vpack.c.b16 %v1497, %v1489
  %v1634 = vpack.c.b16 %v1498, %v1490
  %v1635 = vpack.c.b16 %v1507, %v1499
  %v1636 = vpack.c.b16 %v1508, %v1500
  %v1637 = vpack.c.b16 %v1509, %v1501
  %v1638 = vpack.c.b16 %v1510, %v1502
  %v1639 = vpack.c.b16 %v1511, %v1503
  %v1640 = vpack.c.b16 %v1512, %v1504
  %v1641 = vpack.c.b16 %v1513, %v1505
  %v1642 = vpack.c.b16 %v1514, %v1506
  %1771 = vmatprep.subr.bf16.mxu0 %v1572
  %1772 = vmatpush1.bf16.msra.mxu0 %v1571
  %1773 = vmatprep.subr.bf16.mxu0 %v1564
  %1774 = vmatpush1.bf16.msra.mxu0 %v1563
  %1775 = vmatprep.subr.bf16.mxu0 %v1556
  %1776 = vmatpush1.bf16.msra.mxu0 %v1555
  %1777 = vmatprep.subr.bf16.mxu0 %v1548
  %1778 = vmatpush1.bf16.msra.mxu0 %v1547
  %1779 = vmatprep.subr.bf16.mxu0 %v1540
  %1780 = vmatpush1.bf16.msra.mxu0 %v1539
  %1781 = vmatprep.subr.bf16.mxu0 %v1532
  %1782 = vmatpush1.bf16.msra.mxu0 %v1531
  %1783 = vmatprep.subr.bf16.mxu0 %v1524
  %1784 = vmatpush1.bf16.msra.mxu0 %v1523
  %1785 = vmatprep.subr.bf16.mxu0 %v1516
  %1786 = vmatpush1.bf16.msra.mxu0 %v1515
  %1787 = vmatprep.subr.bf16.mxu0 %v1636
  %1788 = vmatpush2.bf16.msra.mxu0 %v1635
  %1789 = vmatprep.subr.bf16.mxu0 %v1628
  %1790 = vmatpush2.bf16.msra.mxu0 %v1627
  %1791 = vmatprep.subr.bf16.mxu0 %v1620
  %1792 = vmatpush2.bf16.msra.mxu0 %v1619
  %1793 = vmatprep.subr.bf16.mxu0 %v1612
  %1794 = vmatpush2.bf16.msra.mxu0 %v1611
  %1795 = vmatprep.subr.bf16.mxu0 %v1604
  %1796 = vmatpush2.bf16.msra.mxu0 %v1603
  %1797 = vmatprep.subr.bf16.mxu0 %v1596
  %1798 = vmatpush2.bf16.msra.mxu0 %v1595
  %1799 = vmatprep.subr.bf16.mxu0 %v1588
  %1800 = vmatpush2.bf16.msra.mxu0 %v1587
  %1801 = vmatprep.subr.bf16.mxu0 %v1580
  %1802 = vmatpush2.bf16.msra.mxu0 %v1579
  %1803 = vmatprep.mubr.bf16.mxu0 %v1002
  %1804 = vmatmul.mubr.bf16.gmra.mxu0 %v1002
  %v1805 = vpop.f32.mrf.mxu0
  %v1806 = vadd.f32 0.0, %v1805
  %v1807 = vpop.f32.mrf.mxu0
  %v1808 = vadd.f32 0.0, %v1807
  %v1809 = vpop.f32.mrf.mxu0
  %v1810 = vpop.f32.mrf.mxu0
  %1811 = vdwg.mxu0
  %1812 = vmatprep.subr.bf16.mxu0 %v1574
  %1813 = vmatpush1.bf16.msra.mxu0 %v1573
  %1814 = vmatprep.subr.bf16.mxu0 %v1566
  %1815 = vmatpush1.bf16.msra.mxu0 %v1565
  %1816 = vmatprep.subr.bf16.mxu0 %v1558
  %1817 = vmatpush1.bf16.msra.mxu0 %v1557
  %1818 = vmatprep.subr.bf16.mxu0 %v1550
  %1819 = vmatpush1.bf16.msra.mxu0 %v1549
  %1820 = vmatprep.subr.bf16.mxu0 %v1542
  %1821 = vmatpush1.bf16.msra.mxu0 %v1541
  %1822 = vmatprep.subr.bf16.mxu0 %v1534
  %1823 = vmatpush1.bf16.msra.mxu0 %v1533
  %1824 = vmatprep.subr.bf16.mxu0 %v1526
  %1825 = vmatpush1.bf16.msra.mxu0 %v1525
  %1826 = vmatprep.subr.bf16.mxu0 %v1518
  %1827 = vmatpush1.bf16.msra.mxu0 %v1517
  %1828 = vmatprep.subr.bf16.mxu0 %v1638
  %1829 = vmatpush2.bf16.msra.mxu0 %v1637
  %1830 = vmatprep.subr.bf16.mxu0 %v1630
  %1831 = vmatpush2.bf16.msra.mxu0 %v1629
  %1832 = vmatprep.subr.bf16.mxu0 %v1622
  %1833 = vmatpush2.bf16.msra.mxu0 %v1621
  %1834 = vmatprep.subr.bf16.mxu0 %v1614
  %1835 = vmatpush2.bf16.msra.mxu0 %v1613
  %1836 = vmatprep.subr.bf16.mxu0 %v1606
  %1837 = vmatpush2.bf16.msra.mxu0 %v1605
  %1838 = vmatprep.subr.bf16.mxu0 %v1598
  %1839 = vmatpush2.bf16.msra.mxu0 %v1597
  %1840 = vmatprep.subr.bf16.mxu0 %v1590
  %1841 = vmatpush2.bf16.msra.mxu0 %v1589
  %1842 = vmatprep.subr.bf16.mxu0 %v1582
  %1843 = vmatpush2.bf16.msra.mxu0 %v1581
  %1844 = vmatprep.mubr.bf16.mxu0 %v1002
  %1845 = vmatmul.mubr.bf16.gmra.mxu0 %v1002
  %v1846 = vpop.f32.mrf.mxu0
  %v1847 = vadd.f32 0.0, %v1846
  %v1848 = vpop.f32.mrf.mxu0
  %v1849 = vadd.f32 0.0, %v1848
  %v1850 = vpop.f32.mrf.mxu0
  %v1851 = vpop.f32.mrf.mxu0
  %1852 = vdwg.mxu0
  %1853 = vmatprep.subr.bf16.mxu0 %v1576
  %1854 = vmatpush1.bf16.msra.mxu0 %v1575
  %1855 = vmatprep.subr.bf16.mxu0 %v1568
  %1856 = vmatpush1.bf16.msra.mxu0 %v1567
  %1857 = vmatprep.subr.bf16.mxu0 %v1560
  %1858 = vmatpush1.bf16.msra.mxu0 %v1559
  %1859 = vmatprep.subr.bf16.mxu0 %v1552
  %1860 = vmatpush1.bf16.msra.mxu0 %v1551
  %1861 = vmatprep.subr.bf16.mxu0 %v1544
  %1862 = vmatpush1.bf16.msra.mxu0 %v1543
  %1863 = vmatprep.subr.bf16.mxu0 %v1536
  %1864 = vmatpush1.bf16.msra.mxu0 %v1535
  %1865 = vmatprep.subr.bf16.mxu0 %v1528
  %1866 = vmatpush1.bf16.msra.mxu0 %v1527
  %1867 = vmatprep.subr.bf16.mxu0 %v1520
  %1868 = vmatpush1.bf16.msra.mxu0 %v1519
  %1869 = vmatprep.subr.bf16.mxu0 %v1640
  %1870 = vmatpush2.bf16.msra.mxu0 %v1639
  %1871 = vmatprep.subr.bf16.mxu0 %v1632
  %1872 = vmatpush2.bf16.msra.mxu0 %v1631
  %1873 = vmatprep.subr.bf16.mxu0 %v1624
  %1874 = vmatpush2.bf16.msra.mxu0 %v1623
  %1875 = vmatprep.subr.bf16.mxu0 %v1616
  %1876 = vmatpush2.bf16.msra.mxu0 %v1615
  %1877 = vmatprep.subr.bf16.mxu0 %v1608
  %1878 = vmatpush2.bf16.msra.mxu0 %v1607
  %1879 = vmatprep.subr.bf16.mxu0 %v1600
  %1880 = vmatpush2.bf16.msra.mxu0 %v1599
  %1881 = vmatprep.subr.bf16.mxu0 %v1592
  %1882 = vmatpush2.bf16.msra.mxu0 %v1591
  %1883 = vmatprep.subr.bf16.mxu0 %v1584
  %1884 = vmatpush2.bf16.msra.mxu0 %v1583
  %1885 = vmatprep.mubr.bf16.mxu0 %v1002
  %1886 = vmatmul.mubr.bf16.gmra.mxu0 %v1002
  %v1887 = vpop.f32.mrf.mxu0
  %v1888 = vadd.f32 0.0, %v1887
  %v1889 = vpop.f32.mrf.mxu0
  %v1890 = vadd.f32 0.0, %v1889
  %v1891 = vpop.f32.mrf.mxu0
  %v1892 = vpop.f32.mrf.mxu0
  %1893 = vdwg.mxu0
  %1894 = vmatprep.subr.bf16.mxu0 %v1578
  %1895 = vmatpush1.bf16.msra.mxu0 %v1577
  %1896 = vmatprep.subr.bf16.mxu0 %v1570
  %1897 = vmatpush1.bf16.msra.mxu0 %v1569
  %1898 = vmatprep.subr.bf16.mxu0 %v1562
  %1899 = vmatpush1.bf16.msra.mxu0 %v1561
  %1900 = vmatprep.subr.bf16.mxu0 %v1554
  %1901 = vmatpush1.bf16.msra.mxu0 %v1553
  %1902 = vmatprep.subr.bf16.mxu0 %v1546
  %1903 = vmatpush1.bf16.msra.mxu0 %v1545
  %1904 = vmatprep.subr.bf16.mxu0 %v1538
  %1905 = vmatpush1.bf16.msra.mxu0 %v1537
  %1906 = vmatprep.subr.bf16.mxu0 %v1530
  %1907 = vmatpush1.bf16.msra.mxu0 %v1529
  %1908 = vmatprep.subr.bf16.mxu0 %v1522
  %1909 = vmatpush1.bf16.msra.mxu0 %v1521
  %1910 = vmatprep.subr.bf16.mxu0 %v1642
  %1911 = vmatpush2.bf16.msra.mxu0 %v1641
  %1912 = vmatprep.subr.bf16.mxu0 %v1634
  %1913 = vmatpush2.bf16.msra.mxu0 %v1633
  %1914 = vmatprep.subr.bf16.mxu0 %v1626
  %1915 = vmatpush2.bf16.msra.mxu0 %v1625
  %1916 = vmatprep.subr.bf16.mxu0 %v1618
  %1917 = vmatpush2.bf16.msra.mxu0 %v1617
  %1918 = vmatprep.subr.bf16.mxu0 %v1610
  %1919 = vmatpush2.bf16.msra.mxu0 %v1609
  %1920 = vmatprep.subr.bf16.mxu0 %v1602
  %1921 = vmatpush2.bf16.msra.mxu0 %v1601
  %1922 = vmatprep.subr.bf16.mxu0 %v1594
  %1923 = vmatpush2.bf16.msra.mxu0 %v1593
  %1924 = vmatprep.subr.bf16.mxu0 %v1586
  %1925 = vmatpush2.bf16.msra.mxu0 %v1585
  %1926 = vmatprep.mubr.bf16.mxu0 %v1002
  %1927 = vmatmul.mubr.bf16.gmra.mxu0 %v1002
  %v1928 = vpop.f32.mrf.mxu0
  %v1929 = vadd.f32 0.0, %v1928
  %v1930 = vpop.f32.mrf.mxu0
  %v1931 = vadd.f32 0.0, %v1930
  %v1932 = vpop.f32.mrf.mxu0
  %v1933 = vpop.f32.mrf.mxu0
  %1934 = vdwg.mxu0
  %v1935 = vld [vmem:[#allocation2] sm:$0xff]
  %v1936 = vld [vmem:[#allocation2 + $0x8] sm:$0xff]
  %v1937 = vunpack.c.l.bf16 %v1935
  %v1938 = vunpack.c.h.bf16 %v1935
  %v1939 = vunpack.c.l.bf16 %v1936
  %v1940 = vunpack.c.h.bf16 %v1936
  %v1941 = vadd.f32 %v1937, %v1806
  %v1942 = vadd.f32 %v1938, %v1808
  %v1943 = vadd.f32 %v1939, %v1847
  %v1944 = vadd.f32 %v1940, %v1849
  %s1945 = scalar_lea.vmem [#allocation2], 224
  %v1946 = vld [vmem:[%s1945 + $0x10] sm:$0xff]
  %v1947 = vld [vmem:[%s1945 + $0x18] sm:$0xff]
  %v1948 = vunpack.c.l.bf16 %v1946
  %v1949 = vunpack.c.h.bf16 %v1946
  %v1950 = vunpack.c.l.bf16 %v1947
  %v1951 = vunpack.c.h.bf16 %v1947
  %v1952 = vadd.f32 %v1948, %v1888
  %v1953 = vadd.f32 %v1949, %v1890
  %v1954 = vadd.f32 %v1950, %v1929
  %v1955 = vadd.f32 %v1951, %v1931
  %vm1956 = vcmp.gt.s32.totalorder %v27, 0
  %vm1957 = vcmp.gt.s32.totalorder %v27, 7
  %v1958 = vxor.u32 %v1941, 2147483648
  %v1959 = vmul.f32 %v1958, 1.442695
  %v1960 = vpow.pop %v1959
  %v1961 = vadd.f32 %v1960, 1.0
  %v1962 = vrcp.pop %v1961
  %v1963 = vmul.f32 1.0, %v1962
  %v1964 = vxor.u32 %v1942, 2147483648
  %v1965 = vmul.f32 %v1964, 1.442695
  %v1966 = vpow.pop %v1965
  %v1967 = vadd.f32 %v1966, 1.0
  %v1968 = vrcp.pop %v1967
  %v1969 = vmul.f32 1.0, %v1968
  %v1970 = vtanh.pop %v1943
  %v1971 = vxor.u32 %v1944, 2147483648
  %v1972 = vmul.f32 %v1971, 1.442695
  %v1973 = vpow.pop %v1972
  %v1974 = vadd.f32 %v1973, 1.0
  %v1975 = vrcp.pop %v1974
  %v1976 = vmul.f32 1.0, %v1975
  %v1977 = vmul.f32 %v1969, 0.0
  %v1978 = vmul.f32 %v1963, %v1970
  %v1979 = vadd.f32 %v1977, %v1978
  %v1980 = vtanh.pop %v1979
  %v1981 = vmul.f32 %v1976, %v1980
  %v1982 = vsel %vm1956, %v1981, 0.0
  %v1983 = vsel %vm1956, %v1979, 0.0
  %v1984 = vxor.u32 %v1952, 2147483648
  %v1985 = vmul.f32 %v1984, 1.442695
  %v1986 = vpow.pop %v1985
  %v1987 = vadd.f32 %v1986, 1.0
  %v1988 = vrcp.pop %v1987
  %v1989 = vmul.f32 1.0, %v1988
  %v1990 = vxor.u32 %v1953, 2147483648
  %v1991 = vmul.f32 %v1990, 1.442695
  %v1992 = vpow.pop %v1991
  %v1993 = vadd.f32 %v1992, 1.0
  %v1994 = vrcp.pop %v1993
  %v1995 = vmul.f32 1.0, %v1994
  %v1996 = vtanh.pop %v1954
  %v1997 = vxor.u32 %v1955, 2147483648
  %v1998 = vmul.f32 %v1997, 1.442695
  %v1999 = vpow.pop %v1998
  %v2000 = vadd.f32 %v1999, 1.0
  %v2001 = vrcp.pop %v2000
  %v2002 = vmul.f32 1.0, %v2001
  %v2003 = vmul.f32 %v1995, 0.0
  %v2004 = vmul.f32 %v1989, %v1996
  %v2005 = vadd.f32 %v2003, %v2004
  %v2006 = vtanh.pop %v2005
  %v2007 = vmul.f32 %v2002, %v2006
  %v2008 = vsel %vm1957, %v2007, 0.0
  %v2009 = vsel %vm1957, %v2005, 0.0
  %v2010 = vpack.c.bf16 %v1982, %v1982
  %2011 = vst [vmem:[#allocation3] sm:$0xf] %v2010
  %v2012 = vpack.c.bf16 %v2008, %v2008
  %s2013 = scalar_lea.vmem [#allocation3], 56
  %2014 = vst [vmem:[%s2013 + $0x4] sm:$0xf] %v2012
  %v2015 = vld [vmem:[%s4] sm:$0xff]
  %v2016 = vld [vmem:[%s4 + $0x8] sm:$0xff]
  %v2017 = vld [vmem:[%s4 + $0x10] sm:$0xff]
  %v2018 = vld [vmem:[%s4 + $0x18] sm:$0xff]
  %v2019 = vld [vmem:[%s4 + $0x20] sm:$0xff]
  %v2020 = vld [vmem:[%s4 + $0x28] sm:$0xff]
  %v2021 = vld [vmem:[%s4 + $0x30] sm:$0xff]
  %v2022 = vld [vmem:[%s4 + $0x38] sm:$0xff]
  %v2023 = vld [vmem:[%s4 + $0x40] sm:$0xff]
  %v2024 = vld [vmem:[%s4 + $0x48] sm:$0xff]
  %v2025 = vld [vmem:[%s4 + $0x50] sm:$0xff]
  %v2026 = vld [vmem:[%s4 + $0x58] sm:$0xff]
  %v2027 = vld [vmem:[%s4 + $0x60] sm:$0xff]
  %v2028 = vld [vmem:[%s4 + $0x68] sm:$0xff]
  %v2029 = vld [vmem:[%s4 + $0x70] sm:$0xff]
  %v2030 = vld [vmem:[%s4 + $0x78] sm:$0xff]
  %v2031 = vld [vmem:[%s4 + $0x80] sm:$0xff]
  %v2032 = vld [vmem:[%s4 + $0x88] sm:$0xff]
  %v2033 = vld [vmem:[%s4 + $0x90] sm:$0xff]
  %v2034 = vld [vmem:[%s4 + $0x98] sm:$0xff]
  %v2035 = vld [vmem:[%s4 + $0xa0] sm:$0xff]
  %v2036 = vld [vmem:[%s4 + $0xa8] sm:$0xff]
  %v2037 = vld [vmem:[%s4 + $0xb0] sm:$0xff]
  %v2038 = vld [vmem:[%s4 + $0xb8] sm:$0xff]
  %v2039 = vld [vmem:[%s4 + $0xc0] sm:$0xff]
  %v2040 = vld [vmem:[%s4 + $0xc8] sm:$0xff]
  %v2041 = vld [vmem:[%s4 + $0xd0] sm:$0xff]
  %v2042 = vld [vmem:[%s4 + $0xd8] sm:$0xff]
  %v2043 = vld [vmem:[%s4 + $0xe0] sm:$0xff]
  %v2044 = vld [vmem:[%s4 + $0xe8] sm:$0xff]
  %v2045 = vld [vmem:[%s4 + $0xf0] sm:$0xff]
  %v2046 = vld [vmem:[%s4 + $0xf8] sm:$0xff]
  %v2047 = vld [vmem:[%s4 + $0x100] sm:$0xff]
  %v2048 = vld [vmem:[%s4 + $0x108] sm:$0xff]
  %v2049 = vld [vmem:[%s4 + $0x110] sm:$0xff]
  %v2050 = vld [vmem:[%s4 + $0x118] sm:$0xff]
  %v2051 = vld [vmem:[%s4 + $0x120] sm:$0xff]
  %v2052 = vld [vmem:[%s4 + $0x128] sm:$0xff]
  %v2053 = vld [vmem:[%s4 + $0x130] sm:$0xff]
  %v2054 = vld [vmem:[%s4 + $0x138] sm:$0xff]
  %v2055 = vld [vmem:[%s4 + $0x140] sm:$0xff]
  %v2056 = vld [vmem:[%s4 + $0x148] sm:$0xff]
  %v2057 = vld [vmem:[%s4 + $0x150] sm:$0xff]
  %v2058 = vld [vmem:[%s4 + $0x158] sm:$0xff]
  %v2059 = vld [vmem:[%s4 + $0x160] sm:$0xff]
  %v2060 = vld [vmem:[%s4 + $0x168] sm:$0xff]
  %v2061 = vld [vmem:[%s4 + $0x170] sm:$0xff]
  %v2062 = vld [vmem:[%s4 + $0x178] sm:$0xff]
  %v2063 = vld [vmem:[%s4 + $0x180] sm:$0xff]
  %v2064 = vld [vmem:[%s4 + $0x188] sm:$0xff]
  %v2065 = vld [vmem:[%s4 + $0x190] sm:$0xff]
  %v2066 = vld [vmem:[%s4 + $0x198] sm:$0xff]
  %v2067 = vld [vmem:[%s4 + $0x1a0] sm:$0xff]
  %v2068 = vld [vmem:[%s4 + $0x1a8] sm:$0xff]
  %v2069 = vld [vmem:[%s4 + $0x1b0] sm:$0xff]
  %v2070 = vld [vmem:[%s4 + $0x1b8] sm:$0xff]
  %v2071 = vld [vmem:[%s4 + $0x1c0] sm:$0xff]
  %v2072 = vld [vmem:[%s4 + $0x1c8] sm:$0xff]
  %v2073 = vld [vmem:[%s4 + $0x1d0] sm:$0xff]
  %v2074 = vld [vmem:[%s4 + $0x1d8] sm:$0xff]
  %v2075 = vld [vmem:[%s4 + $0x1e0] sm:$0xff]
  %v2076 = vld [vmem:[%s4 + $0x1e8] sm:$0xff]
  %v2077 = vld [vmem:[%s4 + $0x1f0] sm:$0xff]
  %v2078 = vld [vmem:[%s4 + $0x1f8] sm:$0xff]
  %v2079 = vld [vmem:[%s4 + $0x200] sm:$0xff]
  %v2080 = vld [vmem:[%s4 + $0x208] sm:$0xff]
  %v2081 = vld [vmem:[%s4 + $0x210] sm:$0xff]
  %v2082 = vld [vmem:[%s4 + $0x218] sm:$0xff]
  %v2083 = vld [vmem:[%s4 + $0x220] sm:$0xff]
  %v2084 = vld [vmem:[%s4 + $0x228] sm:$0xff]
  %v2085 = vld [vmem:[%s4 + $0x230] sm:$0xff]
  %v2086 = vld [vmem:[%s4 + $0x238] sm:$0xff]
  %v2087 = vld [vmem:[%s4 + $0x240] sm:$0xff]
  %v2088 = vld [vmem:[%s4 + $0x248] sm:$0xff]
  %v2089 = vld [vmem:[%s4 + $0x250] sm:$0xff]
  %v2090 = vld [vmem:[%s4 + $0x258] sm:$0xff]
  %v2091 = vld [vmem:[%s4 + $0x260] sm:$0xff]
  %v2092 = vld [vmem:[%s4 + $0x268] sm:$0xff]
  %v2093 = vld [vmem:[%s4 + $0x270] sm:$0xff]
  %v2094 = vld [vmem:[%s4 + $0x278] sm:$0xff]
  %v2095 = vld [vmem:[%s4 + $0x280] sm:$0xff]
  %v2096 = vld [vmem:[%s4 + $0x288] sm:$0xff]
  %v2097 = vld [vmem:[%s4 + $0x290] sm:$0xff]
  %v2098 = vld [vmem:[%s4 + $0x298] sm:$0xff]
  %v2099 = vld [vmem:[%s4 + $0x2a0] sm:$0xff]
  %v2100 = vld [vmem:[%s4 + $0x2a8] sm:$0xff]
  %v2101 = vld [vmem:[%s4 + $0x2b0] sm:$0xff]
  %v2102 = vld [vmem:[%s4 + $0x2b8] sm:$0xff]
  %v2103 = vld [vmem:[%s4 + $0x2c0] sm:$0xff]
  %v2104 = vld [vmem:[%s4 + $0x2c8] sm:$0xff]
  %v2105 = vld [vmem:[%s4 + $0x2d0] sm:$0xff]
  %v2106 = vld [vmem:[%s4 + $0x2d8] sm:$0xff]
  %v2107 = vld [vmem:[%s4 + $0x2e0] sm:$0xff]
  %v2108 = vld [vmem:[%s4 + $0x2e8] sm:$0xff]
  %v2109 = vld [vmem:[%s4 + $0x2f0] sm:$0xff]
  %v2110 = vld [vmem:[%s4 + $0x2f8] sm:$0xff]
  %v2111 = vld [vmem:[%s4 + $0x300] sm:$0xff]
  %v2112 = vld [vmem:[%s4 + $0x308] sm:$0xff]
  %v2113 = vld [vmem:[%s4 + $0x310] sm:$0xff]
  %v2114 = vld [vmem:[%s4 + $0x318] sm:$0xff]
  %v2115 = vld [vmem:[%s4 + $0x320] sm:$0xff]
  %v2116 = vld [vmem:[%s4 + $0x328] sm:$0xff]
  %v2117 = vld [vmem:[%s4 + $0x330] sm:$0xff]
  %v2118 = vld [vmem:[%s4 + $0x338] sm:$0xff]
  %v2119 = vld [vmem:[%s4 + $0x340] sm:$0xff]
  %v2120 = vld [vmem:[%s4 + $0x348] sm:$0xff]
  %v2121 = vld [vmem:[%s4 + $0x350] sm:$0xff]
  %v2122 = vld [vmem:[%s4 + $0x358] sm:$0xff]
  %v2123 = vld [vmem:[%s4 + $0x360] sm:$0xff]
  %v2124 = vld [vmem:[%s4 + $0x368] sm:$0xff]
  %v2125 = vld [vmem:[%s4 + $0x370] sm:$0xff]
  %v2126 = vld [vmem:[%s4 + $0x378] sm:$0xff]
  %v2127 = vld [vmem:[%s4 + $0x380] sm:$0xff]
  %v2128 = vld [vmem:[%s4 + $0x388] sm:$0xff]
  %v2129 = vld [vmem:[%s4 + $0x390] sm:$0xff]
  %v2130 = vld [vmem:[%s4 + $0x398] sm:$0xff]
  %v2131 = vld [vmem:[%s4 + $0x3a0] sm:$0xff]
  %v2132 = vld [vmem:[%s4 + $0x3a8] sm:$0xff]
  %v2133 = vld [vmem:[%s4 + $0x3b0] sm:$0xff]
  %v2134 = vld [vmem:[%s4 + $0x3b8] sm:$0xff]
  %v2135 = vld [vmem:[%s4 + $0x3c0] sm:$0xff]
  %v2136 = vld [vmem:[%s4 + $0x3c8] sm:$0xff]
  %v2137 = vld [vmem:[%s4 + $0x3d0] sm:$0xff]
  %v2138 = vld [vmem:[%s4 + $0x3d8] sm:$0xff]
  %v2139 = vld [vmem:[%s4 + $0x3e0] sm:$0xff]
  %v2140 = vld [vmem:[%s4 + $0x3e8] sm:$0xff]
  %v2141 = vld [vmem:[%s4 + $0x3f0] sm:$0xff]
  %v2142 = vld [vmem:[%s4 + $0x3f8] sm:$0xff]
  %v2271 = vunpack.c.l.b16 %v2015
  %v2272 = vunpack.c.h.b16 %v2015
  %v2273 = vunpack.c.l.b16 %v2016
  %v2274 = vunpack.c.h.b16 %v2016
  %v2275 = vunpack.c.l.b16 %v2017
  %v2276 = vunpack.c.h.b16 %v2017
  %v2277 = vunpack.c.l.b16 %v2018
  %v2278 = vunpack.c.h.b16 %v2018
  %v2279 = vunpack.c.l.b16 %v2019
  %v2280 = vunpack.c.h.b16 %v2019
  %v2281 = vunpack.c.l.b16 %v2020
  %v2282 = vunpack.c.h.b16 %v2020
  %v2283 = vunpack.c.l.b16 %v2021
  %v2284 = vunpack.c.h.b16 %v2021
  %v2285 = vunpack.c.l.b16 %v2022
  %v2286 = vunpack.c.h.b16 %v2022
  %v2287 = vunpack.c.l.b16 %v2023
  %v2288 = vunpack.c.h.b16 %v2023
  %v2289 = vunpack.c.l.b16 %v2024
  %v2290 = vunpack.c.h.b16 %v2024
  %v2291 = vunpack.c.l.b16 %v2025
  %v2292 = vunpack.c.h.b16 %v2025
  %v2293 = vunpack.c.l.b16 %v2026
  %v2294 = vunpack.c.h.b16 %v2026
  %v2295 = vunpack.c.l.b16 %v2027
  %v2296 = vunpack.c.h.b16 %v2027
  %v2297 = vunpack.c.l.b16 %v2028
  %v2298 = vunpack.c.h.b16 %v2028
  %v2299 = vunpack.c.l.b16 %v2029
  %v2300 = vunpack.c.h.b16 %v2029
  %v2301 = vunpack.c.l.b16 %v2030
  %v2302 = vunpack.c.h.b16 %v2030
  %v2303 = vunpack.c.l.b16 %v2031
  %v2304 = vunpack.c.h.b16 %v2031
  %v2305 = vunpack.c.l.b16 %v2032
  %v2306 = vunpack.c.h.b16 %v2032
  %v2307 = vunpack.c.l.b16 %v2033
  %v2308 = vunpack.c.h.b16 %v2033
  %v2309 = vunpack.c.l.b16 %v2034
  %v2310 = vunpack.c.h.b16 %v2034
  %v2311 = vunpack.c.l.b16 %v2035
  %v2312 = vunpack.c.h.b16 %v2035
  %v2313 = vunpack.c.l.b16 %v2036
  %v2314 = vunpack.c.h.b16 %v2036
  %v2315 = vunpack.c.l.b16 %v2037
  %v2316 = vunpack.c.h.b16 %v2037
  %v2317 = vunpack.c.l.b16 %v2038
  %v2318 = vunpack.c.h.b16 %v2038
  %v2319 = vunpack.c.l.b16 %v2039
  %v2320 = vunpack.c.h.b16 %v2039
  %v2321 = vunpack.c.l.b16 %v2040
  %v2322 = vunpack.c.h.b16 %v2040
  %v2323 = vunpack.c.l.b16 %v2041
  %v2324 = vunpack.c.h.b16 %v2041
  %v2325 = vunpack.c.l.b16 %v2042
  %v2326 = vunpack.c.h.b16 %v2042
  %v2327 = vunpack.c.l.b16 %v2043
  %v2328 = vunpack.c.h.b16 %v2043
  %v2329 = vunpack.c.l.b16 %v2044
  %v2330 = vunpack.c.h.b16 %v2044
  %v2331 = vunpack.c.l.b16 %v2045
  %v2332 = vunpack.c.h.b16 %v2045
  %v2333 = vunpack.c.l.b16 %v2046
  %v2334 = vunpack.c.h.b16 %v2046
  %v2335 = vunpack.c.l.b16 %v2047
  %v2336 = vunpack.c.h.b16 %v2047
  %v2337 = vunpack.c.l.b16 %v2048
  %v2338 = vunpack.c.h.b16 %v2048
  %v2339 = vunpack.c.l.b16 %v2049
  %v2340 = vunpack.c.h.b16 %v2049
  %v2341 = vunpack.c.l.b16 %v2050
  %v2342 = vunpack.c.h.b16 %v2050
  %v2343 = vunpack.c.l.b16 %v2051
  %v2344 = vunpack.c.h.b16 %v2051
  %v2345 = vunpack.c.l.b16 %v2052
  %v2346 = vunpack.c.h.b16 %v2052
  %v2347 = vunpack.c.l.b16 %v2053
  %v2348 = vunpack.c.h.b16 %v2053
  %v2349 = vunpack.c.l.b16 %v2054
  %v2350 = vunpack.c.h.b16 %v2054
  %v2351 = vunpack.c.l.b16 %v2055
  %v2352 = vunpack.c.h.b16 %v2055
  %v2353 = vunpack.c.l.b16 %v2056
  %v2354 = vunpack.c.h.b16 %v2056
  %v2355 = vunpack.c.l.b16 %v2057
  %v2356 = vunpack.c.h.b16 %v2057
  %v2357 = vunpack.c.l.b16 %v2058
  %v2358 = vunpack.c.h.b16 %v2058
  %v2359 = vunpack.c.l.b16 %v2059
  %v2360 = vunpack.c.h.b16 %v2059
  %v2361 = vunpack.c.l.b16 %v2060
  %v2362 = vunpack.c.h.b16 %v2060
  %v2363 = vunpack.c.l.b16 %v2061
  %v2364 = vunpack.c.h.b16 %v2061
  %v2365 = vunpack.c.l.b16 %v2062
  %v2366 = vunpack.c.h.b16 %v2062
  %v2367 = vunpack.c.l.b16 %v2063
  %v2368 = vunpack.c.h.b16 %v2063
  %v2369 = vunpack.c.l.b16 %v2064
  %v2370 = vunpack.c.h.b16 %v2064
  %v2371 = vunpack.c.l.b16 %v2065
  %v2372 = vunpack.c.h.b16 %v2065
  %v2373 = vunpack.c.l.b16 %v2066
  %v2374 = vunpack.c.h.b16 %v2066
  %v2375 = vunpack.c.l.b16 %v2067
  %v2376 = vunpack.c.h.b16 %v2067
  %v2377 = vunpack.c.l.b16 %v2068
  %v2378 = vunpack.c.h.b16 %v2068
  %v2379 = vunpack.c.l.b16 %v2069
  %v2380 = vunpack.c.h.b16 %v2069
  %v2381 = vunpack.c.l.b16 %v2070
  %v2382 = vunpack.c.h.b16 %v2070
  %v2383 = vunpack.c.l.b16 %v2071
  %v2384 = vunpack.c.h.b16 %v2071
  %v2385 = vunpack.c.l.b16 %v2072
  %v2386 = vunpack.c.h.b16 %v2072
  %v2387 = vunpack.c.l.b16 %v2073
  %v2388 = vunpack.c.h.b16 %v2073
  %v2389 = vunpack.c.l.b16 %v2074
  %v2390 = vunpack.c.h.b16 %v2074
  %v2391 = vunpack.c.l.b16 %v2075
  %v2392 = vunpack.c.h.b16 %v2075
  %v2393 = vunpack.c.l.b16 %v2076
  %v2394 = vunpack.c.h.b16 %v2076
  %v2395 = vunpack.c.l.b16 %v2077
  %v2396 = vunpack.c.h.b16 %v2077
  %v2397 = vunpack.c.l.b16 %v2078
  %v2398 = vunpack.c.h.b16 %v2078
  %v2399 = vunpack.c.l.b16 %v2079
  %v2400 = vunpack.c.h.b16 %v2079
  %v2401 = vunpack.c.l.b16 %v2080
  %v2402 = vunpack.c.h.b16 %v2080
  %v2403 = vunpack.c.l.b16 %v2081
  %v2404 = vunpack.c.h.b16 %v2081
  %v2405 = vunpack.c.l.b16 %v2082
  %v2406 = vunpack.c.h.b16 %v2082
  %v2407 = vunpack.c.l.b16 %v2083
  %v2408 = vunpack.c.h.b16 %v2083
  %v2409 = vunpack.c.l.b16 %v2084
  %v2410 = vunpack.c.h.b16 %v2084
  %v2411 = vunpack.c.l.b16 %v2085
  %v2412 = vunpack.c.h.b16 %v2085
  %v2413 = vunpack.c.l.b16 %v2086
  %v2414 = vunpack.c.h.b16 %v2086
  %v2415 = vunpack.c.l.b16 %v2087
  %v2416 = vunpack.c.h.b16 %v2087
  %v2417 = vunpack.c.l.b16 %v2088
  %v2418 = vunpack.c.h.b16 %v2088
  %v2419 = vunpack.c.l.b16 %v2089
  %v2420 = vunpack.c.h.b16 %v2089
  %v2421 = vunpack.c.l.b16 %v2090
  %v2422 = vunpack.c.h.b16 %v2090
  %v2423 = vunpack.c.l.b16 %v2091
  %v2424 = vunpack.c.h.b16 %v2091
  %v2425 = vunpack.c.l.b16 %v2092
  %v2426 = vunpack.c.h.b16 %v2092
  %v2427 = vunpack.c.l.b16 %v2093
  %v2428 = vunpack.c.h.b16 %v2093
  %v2429 = vunpack.c.l.b16 %v2094
  %v2430 = vunpack.c.h.b16 %v2094
  %v2431 = vunpack.c.l.b16 %v2095
  %v2432 = vunpack.c.h.b16 %v2095
  %v2433 = vunpack.c.l.b16 %v2096
  %v2434 = vunpack.c.h.b16 %v2096
  %v2435 = vunpack.c.l.b16 %v2097
  %v2436 = vunpack.c.h.b16 %v2097
  %v2437 = vunpack.c.l.b16 %v2098
  %v2438 = vunpack.c.h.b16 %v2098
  %v2439 = vunpack.c.l.b16 %v2099
  %v2440 = vunpack.c.h.b16 %v2099
  %v2441 = vunpack.c.l.b16 %v2100
  %v2442 = vunpack.c.h.b16 %v2100
  %v2443 = vunpack.c.l.b16 %v2101
  %v2444 = vunpack.c.h.b16 %v2101
  %v2445 = vunpack.c.l.b16 %v2102
  %v2446 = vunpack.c.h.b16 %v2102
  %v2447 = vunpack.c.l.b16 %v2103
  %v2448 = vunpack.c.h.b16 %v2103
  %v2449 = vunpack.c.l.b16 %v2104
  %v2450 = vunpack.c.h.b16 %v2104
  %v2451 = vunpack.c.l.b16 %v2105
  %v2452 = vunpack.c.h.b16 %v2105
  %v2453 = vunpack.c.l.b16 %v2106
  %v2454 = vunpack.c.h.b16 %v2106
  %v2455 = vunpack.c.l.b16 %v2107
  %v2456 = vunpack.c.h.b16 %v2107
  %v2457 = vunpack.c.l.b16 %v2108
  %v2458 = vunpack.c.h.b16 %v2108
  %v2459 = vunpack.c.l.b16 %v2109
  %v2460 = vunpack.c.h.b16 %v2109
  %v2461 = vunpack.c.l.b16 %v2110
  %v2462 = vunpack.c.h.b16 %v2110
  %v2463 = vunpack.c.l.b16 %v2111
  %v2464 = vunpack.c.h.b16 %v2111
  %v2465 = vunpack.c.l.b16 %v2112
  %v2466 = vunpack.c.h.b16 %v2112
  %v2467 = vunpack.c.l.b16 %v2113
  %v2468 = vunpack.c.h.b16 %v2113
  %v2469 = vunpack.c.l.b16 %v2114
  %v2470 = vunpack.c.h.b16 %v2114
  %v2471 = vunpack.c.l.b16 %v2115
  %v2472 = vunpack.c.h.b16 %v2115
  %v2473 = vunpack.c.l.b16 %v2116
  %v2474 = vunpack.c.h.b16 %v2116
  %v2475 = vunpack.c.l.b16 %v2117
  %v2476 = vunpack.c.h.b16 %v2117
  %v2477 = vunpack.c.l.b16 %v2118
  %v2478 = vunpack.c.h.b16 %v2118
  %v2479 = vunpack.c.l.b16 %v2119
  %v2480 = vunpack.c.h.b16 %v2119
  %v2481 = vunpack.c.l.b16 %v2120
  %v2482 = vunpack.c.h.b16 %v2120
  %v2483 = vunpack.c.l.b16 %v2121
  %v2484 = vunpack.c.h.b16 %v2121
  %v2485 = vunpack.c.l.b16 %v2122
  %v2486 = vunpack.c.h.b16 %v2122
  %v2487 = vunpack.c.l.b16 %v2123
  %v2488 = vunpack.c.h.b16 %v2123
  %v2489 = vunpack.c.l.b16 %v2124
  %v2490 = vunpack.c.h.b16 %v2124
  %v2491 = vunpack.c.l.b16 %v2125
  %v2492 = vunpack.c.h.b16 %v2125
  %v2493 = vunpack.c.l.b16 %v2126
  %v2494 = vunpack.c.h.b16 %v2126
  %v2495 = vunpack.c.l.b16 %v2127
  %v2496 = vunpack.c.h.b16 %v2127
  %v2497 = vunpack.c.l.b16 %v2128
  %v2498 = vunpack.c.h.b16 %v2128
  %v2499 = vunpack.c.l.b16 %v2129
  %v2500 = vunpack.c.h.b16 %v2129
  %v2501 = vunpack.c.l.b16 %v2130
  %v2502 = vunpack.c.h.b16 %v2130
  %v2503 = vunpack.c.l.b16 %v2131
  %v2504 = vunpack.c.h.b16 %v2131
  %v2505 = vunpack.c.l.b16 %v2132
  %v2506 = vunpack.c.h.b16 %v2132
  %v2507 = vunpack.c.l.b16 %v2133
  %v2508 = vunpack.c.h.b16 %v2133
  %v2509 = vunpack.c.l.b16 %v2134
  %v2510 = vunpack.c.h.b16 %v2134
  %v2511 = vunpack.c.l.b16 %v2135
  %v2512 = vunpack.c.h.b16 %v2135
  %v2513 = vunpack.c.l.b16 %v2136
  %v2514 = vunpack.c.h.b16 %v2136
  %v2515 = vunpack.c.l.b16 %v2137
  %v2516 = vunpack.c.h.b16 %v2137
  %v2517 = vunpack.c.l.b16 %v2138
  %v2518 = vunpack.c.h.b16 %v2138
  %v2519 = vunpack.c.l.b16 %v2139
  %v2520 = vunpack.c.h.b16 %v2139
  %v2521 = vunpack.c.l.b16 %v2140
  %v2522 = vunpack.c.h.b16 %v2140
  %v2523 = vunpack.c.l.b16 %v2141
  %v2524 = vunpack.c.h.b16 %v2141
  %v2525 = vunpack.c.l.b16 %v2142
  %v2526 = vunpack.c.h.b16 %v2142
  %v2527 = vpack.c.b16 %v2279, %v2271
  %v2528 = vpack.c.b16 %v2280, %v2272
  %v2529 = vpack.c.b16 %v2281, %v2273
  %v2530 = vpack.c.b16 %v2282, %v2274
  %v2531 = vpack.c.b16 %v2283, %v2275
  %v2532 = vpack.c.b16 %v2284, %v2276
  %v2533 = vpack.c.b16 %v2285, %v2277
  %v2534 = vpack.c.b16 %v2286, %v2278
  %v2535 = vpack.c.b16 %v2295, %v2287
  %v2536 = vpack.c.b16 %v2296, %v2288
  %v2537 = vpack.c.b16 %v2297, %v2289
  %v2538 = vpack.c.b16 %v2298, %v2290
  %v2539 = vpack.c.b16 %v2299, %v2291
  %v2540 = vpack.c.b16 %v2300, %v2292
  %v2541 = vpack.c.b16 %v2301, %v2293
  %v2542 = vpack.c.b16 %v2302, %v2294
  %v2543 = vpack.c.b16 %v2311, %v2303
  %v2544 = vpack.c.b16 %v2312, %v2304
  %v2545 = vpack.c.b16 %v2313, %v2305
  %v2546 = vpack.c.b16 %v2314, %v2306
  %v2547 = vpack.c.b16 %v2315, %v2307
  %v2548 = vpack.c.b16 %v2316, %v2308
  %v2549 = vpack.c.b16 %v2317, %v2309
  %v2550 = vpack.c.b16 %v2318, %v2310
  %v2551 = vpack.c.b16 %v2327, %v2319
  %v2552 = vpack.c.b16 %v2328, %v2320
  %v2553 = vpack.c.b16 %v2329, %v2321
  %v2554 = vpack.c.b16 %v2330, %v2322
  %v2555 = vpack.c.b16 %v2331, %v2323
  %v2556 = vpack.c.b16 %v2332, %v2324
  %v2557 = vpack.c.b16 %v2333, %v2325
  %v2558 = vpack.c.b16 %v2334, %v2326
  %v2559 = vpack.c.b16 %v2343, %v2335
  %v2560 = vpack.c.b16 %v2344, %v2336
  %v2561 = vpack.c.b16 %v2345, %v2337
  %v2562 = vpack.c.b16 %v2346, %v2338
  %v2563 = vpack.c.b16 %v2347, %v2339
  %v2564 = vpack.c.b16 %v2348, %v2340
  %v2565 = vpack.c.b16 %v2349, %v2341
  %v2566 = vpack.c.b16 %v2350, %v2342
  %v2567 = vpack.c.b16 %v2359, %v2351
  %v2568 = vpack.c.b16 %v2360, %v2352
  %v2569 = vpack.c.b16 %v2361, %v2353
  %v2570 = vpack.c.b16 %v2362, %v2354
  %v2571 = vpack.c.b16 %v2363, %v2355
  %v2572 = vpack.c.b16 %v2364, %v2356
  %v2573 = vpack.c.b16 %v2365, %v2357
  %v2574 = vpack.c.b16 %v2366, %v2358
  %v2575 = vpack.c.b16 %v2375, %v2367
  %v2576 = vpack.c.b16 %v2376, %v2368
  %v2577 = vpack.c.b16 %v2377, %v2369
  %v2578 = vpack.c.b16 %v2378, %v2370
  %v2579 = vpack.c.b16 %v2379, %v2371
  %v2580 = vpack.c.b16 %v2380, %v2372
  %v2581 = vpack.c.b16 %v2381, %v2373
  %v2582 = vpack.c.b16 %v2382, %v2374
  %v2583 = vpack.c.b16 %v2391, %v2383
  %v2584 = vpack.c.b16 %v2392, %v2384
  %v2585 = vpack.c.b16 %v2393, %v2385
  %v2586 = vpack.c.b16 %v2394, %v2386
  %v2587 = vpack.c.b16 %v2395, %v2387
  %v2588 = vpack.c.b16 %v2396, %v2388
  %v2589 = vpack.c.b16 %v2397, %v2389
  %v2590 = vpack.c.b16 %v2398, %v2390
  %v2591 = vpack.c.b16 %v2407, %v2399
  %v2592 = vpack.c.b16 %v2408, %v2400
  %v2593 = vpack.c.b16 %v2409, %v2401
  %v2594 = vpack.c.b16 %v2410, %v2402
  %v2595 = vpack.c.b16 %v2411, %v2403
  %v2596 = vpack.c.b16 %v2412, %v2404
  %v2597 = vpack.c.b16 %v2413, %v2405
  %v2598 = vpack.c.b16 %v2414, %v2406
  %v2599 = vpack.c.b16 %v2423, %v2415
  %v2600 = vpack.c.b16 %v2424, %v2416
  %v2601 = vpack.c.b16 %v2425, %v2417
  %v2602 = vpack.c.b16 %v2426, %v2418
  %v2603 = vpack.c.b16 %v2427, %v2419
  %v2604 = vpack.c.b16 %v2428, %v2420
  %v2605 = vpack.c.b16 %v2429, %v2421
  %v2606 = vpack.c.b16 %v2430, %v2422
  %v2607 = vpack.c.b16 %v2439, %v2431
  %v2608 = vpack.c.b16 %v2440, %v2432
  %v2609 = vpack.c.b16 %v2441, %v2433
  %v2610 = vpack.c.b16 %v2442, %v2434
  %v2611 = vpack.c.b16 %v2443, %v2435
  %v2612 = vpack.c.b16 %v2444, %v2436
  %v2613 = vpack.c.b16 %v2445, %v2437
  %v2614 = vpack.c.b16 %v2446, %v2438
  %v2615 = vpack.c.b16 %v2455, %v2447
  %v2616 = vpack.c.b16 %v2456, %v2448
  %v2617 = vpack.c.b16 %v2457, %v2449
  %v2618 = vpack.c.b16 %v2458, %v2450
  %v2619 = vpack.c.b16 %v2459, %v2451
  %v2620 = vpack.c.b16 %v2460, %v2452
  %v2621 = vpack.c.b16 %v2461, %v2453
  %v2622 = vpack.c.b16 %v2462, %v2454
  %v2623 = vpack.c.b16 %v2471, %v2463
  %v2624 = vpack.c.b16 %v2472, %v2464
  %v2625 = vpack.c.b16 %v2473, %v2465
  %v2626 = vpack.c.b16 %v2474, %v2466
  %v2627 = vpack.c.b16 %v2475, %v2467
  %v2628 = vpack.c.b16 %v2476, %v2468
  %v2629 = vpack.c.b16 %v2477, %v2469
  %v2630 = vpack.c.b16 %v2478, %v2470
  %v2631 = vpack.c.b16 %v2487, %v2479
  %v2632 = vpack.c.b16 %v2488, %v2480
  %v2633 = vpack.c.b16 %v2489, %v2481
  %v2634 = vpack.c.b16 %v2490, %v2482
  %v2635 = vpack.c.b16 %v2491, %v2483
  %v2636 = vpack.c.b16 %v2492, %v2484
  %v2637 = vpack.c.b16 %v2493, %v2485
  %v2638 = vpack.c.b16 %v2494, %v2486
  %v2639 = vpack.c.b16 %v2503, %v2495
  %v2640 = vpack.c.b16 %v2504, %v2496
  %v2641 = vpack.c.b16 %v2505, %v2497
  %v2642 = vpack.c.b16 %v2506, %v2498
  %v2643 = vpack.c.b16 %v2507, %v2499
  %v2644 = vpack.c.b16 %v2508, %v2500
  %v2645 = vpack.c.b16 %v2509, %v2501
  %v2646 = vpack.c.b16 %v2510, %v2502
  %v2647 = vpack.c.b16 %v2519, %v2511
  %v2648 = vpack.c.b16 %v2520, %v2512
  %v2649 = vpack.c.b16 %v2521, %v2513
  %v2650 = vpack.c.b16 %v2522, %v2514
  %v2651 = vpack.c.b16 %v2523, %v2515
  %v2652 = vpack.c.b16 %v2524, %v2516
  %v2653 = vpack.c.b16 %v2525, %v2517
  %v2654 = vpack.c.b16 %v2526, %v2518
  %2783 = vmatprep.subr.bf16.mxu0 %v2584
  %2784 = vmatpush1.bf16.msra.mxu0 %v2583
  %2785 = vmatprep.subr.bf16.mxu0 %v2576
  %2786 = vmatpush1.bf16.msra.mxu0 %v2575
  %2787 = vmatprep.subr.bf16.mxu0 %v2568
  %2788 = vmatpush1.bf16.msra.mxu0 %v2567
  %2789 = vmatprep.subr.bf16.mxu0 %v2560
  %2790 = vmatpush1.bf16.msra.mxu0 %v2559
  %2791 = vmatprep.subr.bf16.mxu0 %v2552
  %2792 = vmatpush1.bf16.msra.mxu0 %v2551
  %2793 = vmatprep.subr.bf16.mxu0 %v2544
  %2794 = vmatpush1.bf16.msra.mxu0 %v2543
  %2795 = vmatprep.subr.bf16.mxu0 %v2536
  %2796 = vmatpush1.bf16.msra.mxu0 %v2535
  %2797 = vmatprep.subr.bf16.mxu0 %v2528
  %2798 = vmatpush1.bf16.msra.mxu0 %v2527
  %2799 = vmatprep.subr.bf16.mxu0 %v2648
  %2800 = vmatpush2.bf16.msra.mxu0 %v2647
  %2801 = vmatprep.subr.bf16.mxu0 %v2640
  %2802 = vmatpush2.bf16.msra.mxu0 %v2639
  %2803 = vmatprep.subr.bf16.mxu0 %v2632
  %2804 = vmatpush2.bf16.msra.mxu0 %v2631
  %2805 = vmatprep.subr.bf16.mxu0 %v2624
  %2806 = vmatpush2.bf16.msra.mxu0 %v2623
  %2807 = vmatprep.subr.bf16.mxu0 %v2616
  %2808 = vmatpush2.bf16.msra.mxu0 %v2615
  %2809 = vmatprep.subr.bf16.mxu0 %v2608
  %2810 = vmatpush2.bf16.msra.mxu0 %v2607
  %2811 = vmatprep.subr.bf16.mxu0 %v2600
  %2812 = vmatpush2.bf16.msra.mxu0 %v2599
  %2813 = vmatprep.subr.bf16.mxu0 %v2592
  %2814 = vmatpush2.bf16.msra.mxu0 %v2591
  %2815 = vmatprep.mubr.bf16.mxu0 %v2012
  %2816 = vmatmul.mubr.bf16.gmra.mxu0 %v2010
  %v2817 = vpop.f32.mrf.mxu0
  %v2818 = vadd.f32 0.0, %v2817
  %v2819 = vpop.f32.mrf.mxu0
  %v2820 = vadd.f32 0.0, %v2819
  %v2821 = vpop.f32.mrf.mxu0
  %v2822 = vpop.f32.mrf.mxu0
  %2823 = vdwg.mxu0
  %2824 = vmatprep.subr.bf16.mxu0 %v2586
  %2825 = vmatpush1.bf16.msra.mxu0 %v2585
  %2826 = vmatprep.subr.bf16.mxu0 %v2578
  %2827 = vmatpush1.bf16.msra.mxu0 %v2577
  %2828 = vmatprep.subr.bf16.mxu0 %v2570
  %2829 = vmatpush1.bf16.msra.mxu0 %v2569
  %2830 = vmatprep.subr.bf16.mxu0 %v2562
  %2831 = vmatpush1.bf16.msra.mxu0 %v2561
  %2832 = vmatprep.subr.bf16.mxu0 %v2554
  %2833 = vmatpush1.bf16.msra.mxu0 %v2553
  %2834 = vmatprep.subr.bf16.mxu0 %v2546
  %2835 = vmatpush1.bf16.msra.mxu0 %v2545
  %2836 = vmatprep.subr.bf16.mxu0 %v2538
  %2837 = vmatpush1.bf16.msra.mxu0 %v2537
  %2838 = vmatprep.subr.bf16.mxu0 %v2530
  %2839 = vmatpush1.bf16.msra.mxu0 %v2529
  %2840 = vmatprep.subr.bf16.mxu0 %v2650
  %2841 = vmatpush2.bf16.msra.mxu0 %v2649
  %2842 = vmatprep.subr.bf16.mxu0 %v2642
  %2843 = vmatpush2.bf16.msra.mxu0 %v2641
  %2844 = vmatprep.subr.bf16.mxu0 %v2634
  %2845 = vmatpush2.bf16.msra.mxu0 %v2633
  %2846 = vmatprep.subr.bf16.mxu0 %v2626
  %2847 = vmatpush2.bf16.msra.mxu0 %v2625
  %2848 = vmatprep.subr.bf16.mxu0 %v2618
  %2849 = vmatpush2.bf16.msra.mxu0 %v2617
  %2850 = vmatprep.subr.bf16.mxu0 %v2610
  %2851 = vmatpush2.bf16.msra.mxu0 %v2609
  %2852 = vmatprep.subr.bf16.mxu0 %v2602
  %2853 = vmatpush2.bf16.msra.mxu0 %v2601
  %2854 = vmatprep.subr.bf16.mxu0 %v2594
  %2855 = vmatpush2.bf16.msra.mxu0 %v2593
  %2856 = vmatprep.mubr.bf16.mxu0 %v2012
  %2857 = vmatmul.mubr.bf16.gmra.mxu0 %v2010
  %v2858 = vpop.f32.mrf.mxu0
  %v2859 = vadd.f32 0.0, %v2858
  %v2860 = vpop.f32.mrf.mxu0
  %v2861 = vadd.f32 0.0, %v2860
  %v2862 = vpop.f32.mrf.mxu0
  %v2863 = vpop.f32.mrf.mxu0
  %2864 = vdwg.mxu0
  %2865 = vmatprep.subr.bf16.mxu0 %v2588
  %2866 = vmatpush1.bf16.msra.mxu0 %v2587
  %2867 = vmatprep.subr.bf16.mxu0 %v2580
  %2868 = vmatpush1.bf16.msra.mxu0 %v2579
  %2869 = vmatprep.subr.bf16.mxu0 %v2572
  %2870 = vmatpush1.bf16.msra.mxu0 %v2571
  %2871 = vmatprep.subr.bf16.mxu0 %v2564
  %2872 = vmatpush1.bf16.msra.mxu0 %v2563
  %2873 = vmatprep.subr.bf16.mxu0 %v2556
  %2874 = vmatpush1.bf16.msra.mxu0 %v2555
  %2875 = vmatprep.subr.bf16.mxu0 %v2548
  %2876 = vmatpush1.bf16.msra.mxu0 %v2547
  %2877 = vmatprep.subr.bf16.mxu0 %v2540
  %2878 = vmatpush1.bf16.msra.mxu0 %v2539
  %2879 = vmatprep.subr.bf16.mxu0 %v2532
  %2880 = vmatpush1.bf16.msra.mxu0 %v2531
  %2881 = vmatprep.subr.bf16.mxu0 %v2652
  %2882 = vmatpush2.bf16.msra.mxu0 %v2651
  %2883 = vmatprep.subr.bf16.mxu0 %v2644
  %2884 = vmatpush2.bf16.msra.mxu0 %v2643
  %2885 = vmatprep.subr.bf16.mxu0 %v2636
  %2886 = vmatpush2.bf16.msra.mxu0 %v2635
  %2887 = vmatprep.subr.bf16.mxu0 %v2628
  %2888 = vmatpush2.bf16.msra.mxu0 %v2627
  %2889 = vmatprep.subr.bf16.mxu0 %v2620
  %2890 = vmatpush2.bf16.msra.mxu0 %v2619
  %2891 = vmatprep.subr.bf16.mxu0 %v2612
  %2892 = vmatpush2.bf16.msra.mxu0 %v2611
  %2893 = vmatprep.subr.bf16.mxu0 %v2604
  %2894 = vmatpush2.bf16.msra.mxu0 %v2603
  %2895 = vmatprep.subr.bf16.mxu0 %v2596
  %2896 = vmatpush2.bf16.msra.mxu0 %v2595
  %2897 = vmatprep.mubr.bf16.mxu0 %v2012
  %2898 = vmatmul.mubr.bf16.gmra.mxu0 %v2010
  %v2899 = vpop.f32.mrf.mxu0
  %v2900 = vadd.f32 0.0, %v2899
  %v2901 = vpop.f32.mrf.mxu0
  %v2902 = vadd.f32 0.0, %v2901
  %v2903 = vpop.f32.mrf.mxu0
  %v2904 = vpop.f32.mrf.mxu0
  %2905 = vdwg.mxu0
  %2906 = vmatprep.subr.bf16.mxu0 %v2590
  %2907 = vmatpush1.bf16.msra.mxu0 %v2589
  %2908 = vmatprep.subr.bf16.mxu0 %v2582
  %2909 = vmatpush1.bf16.msra.mxu0 %v2581
  %2910 = vmatprep.subr.bf16.mxu0 %v2574
  %2911 = vmatpush1.bf16.msra.mxu0 %v2573
  %2912 = vmatprep.subr.bf16.mxu0 %v2566
  %2913 = vmatpush1.bf16.msra.mxu0 %v2565
  %2914 = vmatprep.subr.bf16.mxu0 %v2558
  %2915 = vmatpush1.bf16.msra.mxu0 %v2557
  %2916 = vmatprep.subr.bf16.mxu0 %v2550
  %2917 = vmatpush1.bf16.msra.mxu0 %v2549
  %2918 = vmatprep.subr.bf16.mxu0 %v2542
  %2919 = vmatpush1.bf16.msra.mxu0 %v2541
  %2920 = vmatprep.subr.bf16.mxu0 %v2534
  %2921 = vmatpush1.bf16.msra.mxu0 %v2533
  %2922 = vmatprep.subr.bf16.mxu0 %v2654
  %2923 = vmatpush2.bf16.msra.mxu0 %v2653
  %2924 = vmatprep.subr.bf16.mxu0 %v2646
  %2925 = vmatpush2.bf16.msra.mxu0 %v2645
  %2926 = vmatprep.subr.bf16.mxu0 %v2638
  %2927 = vmatpush2.bf16.msra.mxu0 %v2637
  %2928 = vmatprep.subr.bf16.mxu0 %v2630
  %2929 = vmatpush2.bf16.msra.mxu0 %v2629
  %2930 = vmatprep.subr.bf16.mxu0 %v2622
  %2931 = vmatpush2.bf16.msra.mxu0 %v2621
  %2932 = vmatprep.subr.bf16.mxu0 %v2614
  %2933 = vmatpush2.bf16.msra.mxu0 %v2613
  %2934 = vmatprep.subr.bf16.mxu0 %v2606
  %2935 = vmatpush2.bf16.msra.mxu0 %v2605
  %2936 = vmatprep.subr.bf16.mxu0 %v2598
  %2937 = vmatpush2.bf16.msra.mxu0 %v2597
  %2938 = vmatprep.mubr.bf16.mxu0 %v2012
  %2939 = vmatmul.mubr.bf16.gmra.mxu0 %v2010
  %v2940 = vpop.f32.mrf.mxu0
  %v2941 = vadd.f32 0.0, %v2940
  %v2942 = vpop.f32.mrf.mxu0
  %v2943 = vadd.f32 0.0, %v2942
  %v2944 = vpop.f32.mrf.mxu0
  %v2945 = vpop.f32.mrf.mxu0
  %2946 = vdwg.mxu0
  %s2947 = scalar_lea.vmem [#allocation2], 32
  %v2948 = vld [vmem:[%s2947] sm:$0xff]
  %v2949 = vld [vmem:[%s2947 + $0x8] sm:$0xff]
  %v2950 = vunpack.c.l.bf16 %v2948
  %v2951 = vunpack.c.h.bf16 %v2948
  %v2952 = vunpack.c.l.bf16 %v2949
  %v2953 = vunpack.c.h.bf16 %v2949
  %v2954 = vadd.f32 %v2950, %v2818
  %v2955 = vadd.f32 %v2951, %v2820
  %v2956 = vadd.f32 %v2952, %v2859
  %v2957 = vadd.f32 %v2953, %v2861
  %s2958 = scalar_lea.vmem [#allocation2], 192
  %v2959 = vld [vmem:[%s2958 + $0x10] sm:$0xff]
  %v2960 = vld [vmem:[%s2958 + $0x18] sm:$0xff]
  %v2961 = vunpack.c.l.bf16 %v2959
  %v2962 = vunpack.c.h.bf16 %v2959
  %v2963 = vunpack.c.l.bf16 %v2960
  %v2964 = vunpack.c.h.bf16 %v2960
  %v2965 = vadd.f32 %v2961, %v2900
  %v2966 = vadd.f32 %v2962, %v2902
  %v2967 = vadd.f32 %v2963, %v2941
  %v2968 = vadd.f32 %v2964, %v2943
  %vm2969 = vcmp.gt.s32.totalorder %v27, 1
  %vm2970 = vcmp.gt.s32.totalorder %v27, 6
  %v2971 = vxor.u32 %v2954, 2147483648
  %v2972 = vmul.f32 %v2971, 1.442695
  %v2973 = vpow.pop %v2972
  %v2974 = vadd.f32 %v2973, 1.0
  %v2975 = vrcp.pop %v2974
  %v2976 = vmul.f32 1.0, %v2975
  %v2977 = vxor.u32 %v2955, 2147483648
  %v2978 = vmul.f32 %v2977, 1.442695
  %v2979 = vpow.pop %v2978
  %v2980 = vadd.f32 %v2979, 1.0
  %v2981 = vrcp.pop %v2980
  %v2982 = vmul.f32 1.0, %v2981
  %v2983 = vtanh.pop %v2956
  %v2984 = vxor.u32 %v2957, 2147483648
  %v2985 = vmul.f32 %v2984, 1.442695
  %v2986 = vpow.pop %v2985
  %v2987 = vadd.f32 %v2986, 1.0
  %v2988 = vrcp.pop %v2987
  %v2989 = vmul.f32 1.0, %v2988
  %v2990 = vmul.f32 %v2982, %v1983
  %v2991 = vmul.f32 %v2976, %v2983
  %v2992 = vadd.f32 %v2990, %v2991
  %v2993 = vtanh.pop %v2992
  %v2994 = vmul.f32 %v2989, %v2993
  %v2995 = vsel %vm2969, %v2994, %v1982
  %v2996 = vsel %vm2969, %v2992, %v1983
  %v2997 = vxor.u32 %v2965, 2147483648
  %v2998 = vmul.f32 %v2997, 1.442695
  %v2999 = vpow.pop %v2998
  %v3000 = vadd.f32 %v2999, 1.0
  %v3001 = vrcp.pop %v3000
  %v3002 = vmul.f32 1.0, %v3001
  %v3003 = vxor.u32 %v2966, 2147483648
  %v3004 = vmul.f32 %v3003, 1.442695
  %v3005 = vpow.pop %v3004
  %v3006 = vadd.f32 %v3005, 1.0
  %v3007 = vrcp.pop %v3006
  %v3008 = vmul.f32 1.0, %v3007
  %v3009 = vtanh.pop %v2967
  %v3010 = vxor.u32 %v2968, 2147483648
  %v3011 = vmul.f32 %v3010, 1.442695
  %v3012 = vpow.pop %v3011
  %v3013 = vadd.f32 %v3012, 1.0
  %v3014 = vrcp.pop %v3013
  %v3015 = vmul.f32 1.0, %v3014
  %v3016 = vmul.f32 %v3008, %v2009
  %v3017 = vmul.f32 %v3002, %v3009
  %v3018 = vadd.f32 %v3016, %v3017
  %v3019 = vtanh.pop %v3018
  %v3020 = vmul.f32 %v3015, %v3019
  %v3021 = vsel %vm2970, %v3020, %v2008
  %v3022 = vsel %vm2970, %v3018, %v2009
  %v3023 = vsel %vm2969, %v2994, 0.0
  %v3024 = vpack.c.bf16 %v3023, %v3023
  %s3025 = scalar_lea.vmem [#allocation3], 8
  %3026 = vst [vmem:[%s3025] sm:$0xf] %v3024
  %v3027 = vsel %vm2970, %v3020, 0.0
  %v3028 = vpack.c.bf16 %v3027, %v3027
  %s3029 = scalar_lea.vmem [#allocation3], 48
  %3030 = vst [vmem:[%s3029 + $0x4] sm:$0xf] %v3028
  %v3031 = vpack.c.bf16 %v2995, %v2995
  %v3032 = vpack.c.bf16 %v3021, %v3021
  %v3033 = vld [vmem:[%s4] sm:$0xff]
  %v3034 = vld [vmem:[%s4 + $0x8] sm:$0xff]
  %v3035 = vld [vmem:[%s4 + $0x10] sm:$0xff]
  %v3036 = vld [vmem:[%s4 + $0x18] sm:$0xff]
  %v3037 = vld [vmem:[%s4 + $0x20] sm:$0xff]
  %v3038 = vld [vmem:[%s4 + $0x28] sm:$0xff]
  %v3039 = vld [vmem:[%s4 + $0x30] sm:$0xff]
  %v3040 = vld [vmem:[%s4 + $0x38] sm:$0xff]
  %v3041 = vld [vmem:[%s4 + $0x40] sm:$0xff]
  %v3042 = vld [vmem:[%s4 + $0x48] sm:$0xff]
  %v3043 = vld [vmem:[%s4 + $0x50] sm:$0xff]
  %v3044 = vld [vmem:[%s4 + $0x58] sm:$0xff]
  %v3045 = vld [vmem:[%s4 + $0x60] sm:$0xff]
  %v3046 = vld [vmem:[%s4 + $0x68] sm:$0xff]
  %v3047 = vld [vmem:[%s4 + $0x70] sm:$0xff]
  %v3048 = vld [vmem:[%s4 + $0x78] sm:$0xff]
  %v3049 = vld [vmem:[%s4 + $0x80] sm:$0xff]
  %v3050 = vld [vmem:[%s4 + $0x88] sm:$0xff]
  %v3051 = vld [vmem:[%s4 + $0x90] sm:$0xff]
  %v3052 = vld [vmem:[%s4 + $0x98] sm:$0xff]
  %v3053 = vld [vmem:[%s4 + $0xa0] sm:$0xff]
  %v3054 = vld [vmem:[%s4 + $0xa8] sm:$0xff]
  %v3055 = vld [vmem:[%s4 + $0xb0] sm:$0xff]
  %v3056 = vld [vmem:[%s4 + $0xb8] sm:$0xff]
  %v3057 = vld [vmem:[%s4 + $0xc0] sm:$0xff]
  %v3058 = vld [vmem:[%s4 + $0xc8] sm:$0xff]
  %v3059 = vld [vmem:[%s4 + $0xd0] sm:$0xff]
  %v3060 = vld [vmem:[%s4 + $0xd8] sm:$0xff]
  %v3061 = vld [vmem:[%s4 + $0xe0] sm:$0xff]
  %v3062 = vld [vmem:[%s4 + $0xe8] sm:$0xff]
  %v3063 = vld [vmem:[%s4 + $0xf0] sm:$0xff]
  %v3064 = vld [vmem:[%s4 + $0xf8] sm:$0xff]
  %v3065 = vld [vmem:[%s4 + $0x100] sm:$0xff]
  %v3066 = vld [vmem:[%s4 + $0x108] sm:$0xff]
  %v3067 = vld [vmem:[%s4 + $0x110] sm:$0xff]
  %v3068 = vld [vmem:[%s4 + $0x118] sm:$0xff]
  %v3069 = vld [vmem:[%s4 + $0x120] sm:$0xff]
  %v3070 = vld [vmem:[%s4 + $0x128] sm:$0xff]
  %v3071 = vld [vmem:[%s4 + $0x130] sm:$0xff]
  %v3072 = vld [vmem:[%s4 + $0x138] sm:$0xff]
  %v3073 = vld [vmem:[%s4 + $0x140] sm:$0xff]
  %v3074 = vld [vmem:[%s4 + $0x148] sm:$0xff]
  %v3075 = vld [vmem:[%s4 + $0x150] sm:$0xff]
  %v3076 = vld [vmem:[%s4 + $0x158] sm:$0xff]
  %v3077 = vld [vmem:[%s4 + $0x160] sm:$0xff]
  %v3078 = vld [vmem:[%s4 + $0x168] sm:$0xff]
  %v3079 = vld [vmem:[%s4 + $0x170] sm:$0xff]
  %v3080 = vld [vmem:[%s4 + $0x178] sm:$0xff]
  %v3081 = vld [vmem:[%s4 + $0x180] sm:$0xff]
  %v3082 = vld [vmem:[%s4 + $0x188] sm:$0xff]
  %v3083 = vld [vmem:[%s4 + $0x190] sm:$0xff]
  %v3084 = vld [vmem:[%s4 + $0x198] sm:$0xff]
  %v3085 = vld [vmem:[%s4 + $0x1a0] sm:$0xff]
  %v3086 = vld [vmem:[%s4 + $0x1a8] sm:$0xff]
  %v3087 = vld [vmem:[%s4 + $0x1b0] sm:$0xff]
  %v3088 = vld [vmem:[%s4 + $0x1b8] sm:$0xff]
  %v3089 = vld [vmem:[%s4 + $0x1c0] sm:$0xff]
  %v3090 = vld [vmem:[%s4 + $0x1c8] sm:$0xff]
  %v3091 = vld [vmem:[%s4 + $0x1d0] sm:$0xff]
  %v3092 = vld [vmem:[%s4 + $0x1d8] sm:$0xff]
  %v3093 = vld [vmem:[%s4 + $0x1e0] sm:$0xff]
  %v3094 = vld [vmem:[%s4 + $0x1e8] sm:$0xff]
  %v3095 = vld [vmem:[%s4 + $0x1f0] sm:$0xff]
  %v3096 = vld [vmem:[%s4 + $0x1f8] sm:$0xff]
  %v3097 = vld [vmem:[%s4 + $0x200] sm:$0xff]
  %v3098 = vld [vmem:[%s4 + $0x208] sm:$0xff]
  %v3099 = vld [vmem:[%s4 + $0x210] sm:$0xff]
  %v3100 = vld [vmem:[%s4 + $0x218] sm:$0xff]
  %v3101 = vld [vmem:[%s4 + $0x220] sm:$0xff]
  %v3102 = vld [vmem:[%s4 + $0x228] sm:$0xff]
  %v3103 = vld [vmem:[%s4 + $0x230] sm:$0xff]
  %v3104 = vld [vmem:[%s4 + $0x238] sm:$0xff]
  %v3105 = vld [vmem:[%s4 + $0x240] sm:$0xff]
  %v3106 = vld [vmem:[%s4 + $0x248] sm:$0xff]
  %v3107 = vld [vmem:[%s4 + $0x250] sm:$0xff]
  %v3108 = vld [vmem:[%s4 + $0x258] sm:$0xff]
  %v3109 = vld [vmem:[%s4 + $0x260] sm:$0xff]
  %v3110 = vld [vmem:[%s4 + $0x268] sm:$0xff]
  %v3111 = vld [vmem:[%s4 + $0x270] sm:$0xff]
  %v3112 = vld [vmem:[%s4 + $0x278] sm:$0xff]
  %v3113 = vld [vmem:[%s4 + $0x280] sm:$0xff]
  %v3114 = vld [vmem:[%s4 + $0x288] sm:$0xff]
  %v3115 = vld [vmem:[%s4 + $0x290] sm:$0xff]
  %v3116 = vld [vmem:[%s4 + $0x298] sm:$0xff]
  %v3117 = vld [vmem:[%s4 + $0x2a0] sm:$0xff]
  %v3118 = vld [vmem:[%s4 + $0x2a8] sm:$0xff]
  %v3119 = vld [vmem:[%s4 + $0x2b0] sm:$0xff]
  %v3120 = vld [vmem:[%s4 + $0x2b8] sm:$0xff]
  %v3121 = vld [vmem:[%s4 + $0x2c0] sm:$0xff]
  %v3122 = vld [vmem:[%s4 + $0x2c8] sm:$0xff]
  %v3123 = vld [vmem:[%s4 + $0x2d0] sm:$0xff]
  %v3124 = vld [vmem:[%s4 + $0x2d8] sm:$0xff]
  %v3125 = vld [vmem:[%s4 + $0x2e0] sm:$0xff]
  %v3126 = vld [vmem:[%s4 + $0x2e8] sm:$0xff]
  %v3127 = vld [vmem:[%s4 + $0x2f0] sm:$0xff]
  %v3128 = vld [vmem:[%s4 + $0x2f8] sm:$0xff]
  %v3129 = vld [vmem:[%s4 + $0x300] sm:$0xff]
  %v3130 = vld [vmem:[%s4 + $0x308] sm:$0xff]
  %v3131 = vld [vmem:[%s4 + $0x310] sm:$0xff]
  %v3132 = vld [vmem:[%s4 + $0x318] sm:$0xff]
  %v3133 = vld [vmem:[%s4 + $0x320] sm:$0xff]
  %v3134 = vld [vmem:[%s4 + $0x328] sm:$0xff]
  %v3135 = vld [vmem:[%s4 + $0x330] sm:$0xff]
  %v3136 = vld [vmem:[%s4 + $0x338] sm:$0xff]
  %v3137 = vld [vmem:[%s4 + $0x340] sm:$0xff]
  %v3138 = vld [vmem:[%s4 + $0x348] sm:$0xff]
  %v3139 = vld [vmem:[%s4 + $0x350] sm:$0xff]
  %v3140 = vld [vmem:[%s4 + $0x358] sm:$0xff]
  %v3141 = vld [vmem:[%s4 + $0x360] sm:$0xff]
  %v3142 = vld [vmem:[%s4 + $0x368] sm:$0xff]
  %v3143 = vld [vmem:[%s4 + $0x370] sm:$0xff]
  %v3144 = vld [vmem:[%s4 + $0x378] sm:$0xff]
  %v3145 = vld [vmem:[%s4 + $0x380] sm:$0xff]
  %v3146 = vld [vmem:[%s4 + $0x388] sm:$0xff]
  %v3147 = vld [vmem:[%s4 + $0x390] sm:$0xff]
  %v3148 = vld [vmem:[%s4 + $0x398] sm:$0xff]
  %v3149 = vld [vmem:[%s4 + $0x3a0] sm:$0xff]
  %v3150 = vld [vmem:[%s4 + $0x3a8] sm:$0xff]
  %v3151 = vld [vmem:[%s4 + $0x3b0] sm:$0xff]
  %v3152 = vld [vmem:[%s4 + $0x3b8] sm:$0xff]
  %v3153 = vld [vmem:[%s4 + $0x3c0] sm:$0xff]
  %v3154 = vld [vmem:[%s4 + $0x3c8] sm:$0xff]
  %v3155 = vld [vmem:[%s4 + $0x3d0] sm:$0xff]
  %v3156 = vld [vmem:[%s4 + $0x3d8] sm:$0xff]
  %v3157 = vld [vmem:[%s4 + $0x3e0] sm:$0xff]
  %v3158 = vld [vmem:[%s4 + $0x3e8] sm:$0xff]
  %v3159 = vld [vmem:[%s4 + $0x3f0] sm:$0xff]
  %v3160 = vld [vmem:[%s4 + $0x3f8] sm:$0xff]
  %v3289 = vunpack.c.l.b16 %v3033
  %v3290 = vunpack.c.h.b16 %v3033
  %v3291 = vunpack.c.l.b16 %v3034
  %v3292 = vunpack.c.h.b16 %v3034
  %v3293 = vunpack.c.l.b16 %v3035
  %v3294 = vunpack.c.h.b16 %v3035
  %v3295 = vunpack.c.l.b16 %v3036
  %v3296 = vunpack.c.h.b16 %v3036
  %v3297 = vunpack.c.l.b16 %v3037
  %v3298 = vunpack.c.h.b16 %v3037
  %v3299 = vunpack.c.l.b16 %v3038
  %v3300 = vunpack.c.h.b16 %v3038
  %v3301 = vunpack.c.l.b16 %v3039
  %v3302 = vunpack.c.h.b16 %v3039
  %v3303 = vunpack.c.l.b16 %v3040
  %v3304 = vunpack.c.h.b16 %v3040
  %v3305 = vunpack.c.l.b16 %v3041
  %v3306 = vunpack.c.h.b16 %v3041
  %v3307 = vunpack.c.l.b16 %v3042
  %v3308 = vunpack.c.h.b16 %v3042
  %v3309 = vunpack.c.l.b16 %v3043
  %v3310 = vunpack.c.h.b16 %v3043
  %v3311 = vunpack.c.l.b16 %v3044
  %v3312 = vunpack.c.h.b16 %v3044
  %v3313 = vunpack.c.l.b16 %v3045
  %v3314 = vunpack.c.h.b16 %v3045
  %v3315 = vunpack.c.l.b16 %v3046
  %v3316 = vunpack.c.h.b16 %v3046
  %v3317 = vunpack.c.l.b16 %v3047
  %v3318 = vunpack.c.h.b16 %v3047
  %v3319 = vunpack.c.l.b16 %v3048
  %v3320 = vunpack.c.h.b16 %v3048
  %v3321 = vunpack.c.l.b16 %v3049
  %v3322 = vunpack.c.h.b16 %v3049
  %v3323 = vunpack.c.l.b16 %v3050
  %v3324 = vunpack.c.h.b16 %v3050
  %v3325 = vunpack.c.l.b16 %v3051
  %v3326 = vunpack.c.h.b16 %v3051
  %v3327 = vunpack.c.l.b16 %v3052
  %v3328 = vunpack.c.h.b16 %v3052
  %v3329 = vunpack.c.l.b16 %v3053
  %v3330 = vunpack.c.h.b16 %v3053
  %v3331 = vunpack.c.l.b16 %v3054
  %v3332 = vunpack.c.h.b16 %v3054
  %v3333 = vunpack.c.l.b16 %v3055
  %v3334 = vunpack.c.h.b16 %v3055
  %v3335 = vunpack.c.l.b16 %v3056
  %v3336 = vunpack.c.h.b16 %v3056
  %v3337 = vunpack.c.l.b16 %v3057
  %v3338 = vunpack.c.h.b16 %v3057
  %v3339 = vunpack.c.l.b16 %v3058
  %v3340 = vunpack.c.h.b16 %v3058
  %v3341 = vunpack.c.l.b16 %v3059
  %v3342 = vunpack.c.h.b16 %v3059
  %v3343 = vunpack.c.l.b16 %v3060
  %v3344 = vunpack.c.h.b16 %v3060
  %v3345 = vunpack.c.l.b16 %v3061
  %v3346 = vunpack.c.h.b16 %v3061
  %v3347 = vunpack.c.l.b16 %v3062
  %v3348 = vunpack.c.h.b16 %v3062
  %v3349 = vunpack.c.l.b16 %v3063
  %v3350 = vunpack.c.h.b16 %v3063
  %v3351 = vunpack.c.l.b16 %v3064
  %v3352 = vunpack.c.h.b16 %v3064
  %v3353 = vunpack.c.l.b16 %v3065
  %v3354 = vunpack.c.h.b16 %v3065
  %v3355 = vunpack.c.l.b16 %v3066
  %v3356 = vunpack.c.h.b16 %v3066
  %v3357 = vunpack.c.l.b16 %v3067
  %v3358 = vunpack.c.h.b16 %v3067
  %v3359 = vunpack.c.l.b16 %v3068
  %v3360 = vunpack.c.h.b16 %v3068
  %v3361 = vunpack.c.l.b16 %v3069
  %v3362 = vunpack.c.h.b16 %v3069
  %v3363 = vunpack.c.l.b16 %v3070
  %v3364 = vunpack.c.h.b16 %v3070
  %v3365 = vunpack.c.l.b16 %v3071
  %v3366 = vunpack.c.h.b16 %v3071
  %v3367 = vunpack.c.l.b16 %v3072
  %v3368 = vunpack.c.h.b16 %v3072
  %v3369 = vunpack.c.l.b16 %v3073
  %v3370 = vunpack.c.h.b16 %v3073
  %v3371 = vunpack.c.l.b16 %v3074
  %v3372 = vunpack.c.h.b16 %v3074
  %v3373 = vunpack.c.l.b16 %v3075
  %v3374 = vunpack.c.h.b16 %v3075
  %v3375 = vunpack.c.l.b16 %v3076
  %v3376 = vunpack.c.h.b16 %v3076
  %v3377 = vunpack.c.l.b16 %v3077
  %v3378 = vunpack.c.h.b16 %v3077
  %v3379 = vunpack.c.l.b16 %v3078
  %v3380 = vunpack.c.h.b16 %v3078
  %v3381 = vunpack.c.l.b16 %v3079
  %v3382 = vunpack.c.h.b16 %v3079
  %v3383 = vunpack.c.l.b16 %v3080
  %v3384 = vunpack.c.h.b16 %v3080
  %v3385 = vunpack.c.l.b16 %v3081
  %v3386 = vunpack.c.h.b16 %v3081
  %v3387 = vunpack.c.l.b16 %v3082
  %v3388 = vunpack.c.h.b16 %v3082
  %v3389 = vunpack.c.l.b16 %v3083
  %v3390 = vunpack.c.h.b16 %v3083
  %v3391 = vunpack.c.l.b16 %v3084
  %v3392 = vunpack.c.h.b16 %v3084
  %v3393 = vunpack.c.l.b16 %v3085
  %v3394 = vunpack.c.h.b16 %v3085
  %v3395 = vunpack.c.l.b16 %v3086
  %v3396 = vunpack.c.h.b16 %v3086
  %v3397 = vunpack.c.l.b16 %v3087
  %v3398 = vunpack.c.h.b16 %v3087
  %v3399 = vunpack.c.l.b16 %v3088
  %v3400 = vunpack.c.h.b16 %v3088
  %v3401 = vunpack.c.l.b16 %v3089
  %v3402 = vunpack.c.h.b16 %v3089
  %v3403 = vunpack.c.l.b16 %v3090
  %v3404 = vunpack.c.h.b16 %v3090
  %v3405 = vunpack.c.l.b16 %v3091
  %v3406 = vunpack.c.h.b16 %v3091
  %v3407 = vunpack.c.l.b16 %v3092
  %v3408 = vunpack.c.h.b16 %v3092
  %v3409 = vunpack.c.l.b16 %v3093
  %v3410 = vunpack.c.h.b16 %v3093
  %v3411 = vunpack.c.l.b16 %v3094
  %v3412 = vunpack.c.h.b16 %v3094
  %v3413 = vunpack.c.l.b16 %v3095
  %v3414 = vunpack.c.h.b16 %v3095
  %v3415 = vunpack.c.l.b16 %v3096
  %v3416 = vunpack.c.h.b16 %v3096
  %v3417 = vunpack.c.l.b16 %v3097
  %v3418 = vunpack.c.h.b16 %v3097
  %v3419 = vunpack.c.l.b16 %v3098
  %v3420 = vunpack.c.h.b16 %v3098
  %v3421 = vunpack.c.l.b16 %v3099
  %v3422 = vunpack.c.h.b16 %v3099
  %v3423 = vunpack.c.l.b16 %v3100
  %v3424 = vunpack.c.h.b16 %v3100
  %v3425 = vunpack.c.l.b16 %v3101
  %v3426 = vunpack.c.h.b16 %v3101
  %v3427 = vunpack.c.l.b16 %v3102
  %v3428 = vunpack.c.h.b16 %v3102
  %v3429 = vunpack.c.l.b16 %v3103
  %v3430 = vunpack.c.h.b16 %v3103
  %v3431 = vunpack.c.l.b16 %v3104
  %v3432 = vunpack.c.h.b16 %v3104
  %v3433 = vunpack.c.l.b16 %v3105
  %v3434 = vunpack.c.h.b16 %v3105
  %v3435 = vunpack.c.l.b16 %v3106
  %v3436 = vunpack.c.h.b16 %v3106
  %v3437 = vunpack.c.l.b16 %v3107
  %v3438 = vunpack.c.h.b16 %v3107
  %v3439 = vunpack.c.l.b16 %v3108
  %v3440 = vunpack.c.h.b16 %v3108
  %v3441 = vunpack.c.l.b16 %v3109
  %v3442 = vunpack.c.h.b16 %v3109
  %v3443 = vunpack.c.l.b16 %v3110
  %v3444 = vunpack.c.h.b16 %v3110
  %v3445 = vunpack.c.l.b16 %v3111
  %v3446 = vunpack.c.h.b16 %v3111
  %v3447 = vunpack.c.l.b16 %v3112
  %v3448 = vunpack.c.h.b16 %v3112
  %v3449 = vunpack.c.l.b16 %v3113
  %v3450 = vunpack.c.h.b16 %v3113
  %v3451 = vunpack.c.l.b16 %v3114
  %v3452 = vunpack.c.h.b16 %v3114
  %v3453 = vunpack.c.l.b16 %v3115
  %v3454 = vunpack.c.h.b16 %v3115
  %v3455 = vunpack.c.l.b16 %v3116
  %v3456 = vunpack.c.h.b16 %v3116
  %v3457 = vunpack.c.l.b16 %v3117
  %v3458 = vunpack.c.h.b16 %v3117
  %v3459 = vunpack.c.l.b16 %v3118
  %v3460 = vunpack.c.h.b16 %v3118
  %v3461 = vunpack.c.l.b16 %v3119
  %v3462 = vunpack.c.h.b16 %v3119
  %v3463 = vunpack.c.l.b16 %v3120
  %v3464 = vunpack.c.h.b16 %v3120
  %v3465 = vunpack.c.l.b16 %v3121
  %v3466 = vunpack.c.h.b16 %v3121
  %v3467 = vunpack.c.l.b16 %v3122
  %v3468 = vunpack.c.h.b16 %v3122
  %v3469 = vunpack.c.l.b16 %v3123
  %v3470 = vunpack.c.h.b16 %v3123
  %v3471 = vunpack.c.l.b16 %v3124
  %v3472 = vunpack.c.h.b16 %v3124
  %v3473 = vunpack.c.l.b16 %v3125
  %v3474 = vunpack.c.h.b16 %v3125
  %v3475 = vunpack.c.l.b16 %v3126
  %v3476 = vunpack.c.h.b16 %v3126
  %v3477 = vunpack.c.l.b16 %v3127
  %v3478 = vunpack.c.h.b16 %v3127
  %v3479 = vunpack.c.l.b16 %v3128
  %v3480 = vunpack.c.h.b16 %v3128
  %v3481 = vunpack.c.l.b16 %v3129
  %v3482 = vunpack.c.h.b16 %v3129
  %v3483 = vunpack.c.l.b16 %v3130
  %v3484 = vunpack.c.h.b16 %v3130
  %v3485 = vunpack.c.l.b16 %v3131
  %v3486 = vunpack.c.h.b16 %v3131
  %v3487 = vunpack.c.l.b16 %v3132
  %v3488 = vunpack.c.h.b16 %v3132
  %v3489 = vunpack.c.l.b16 %v3133
  %v3490 = vunpack.c.h.b16 %v3133
  %v3491 = vunpack.c.l.b16 %v3134
  %v3492 = vunpack.c.h.b16 %v3134
  %v3493 = vunpack.c.l.b16 %v3135
  %v3494 = vunpack.c.h.b16 %v3135
  %v3495 = vunpack.c.l.b16 %v3136
  %v3496 = vunpack.c.h.b16 %v3136
  %v3497 = vunpack.c.l.b16 %v3137
  %v3498 = vunpack.c.h.b16 %v3137
  %v3499 = vunpack.c.l.b16 %v3138
  %v3500 = vunpack.c.h.b16 %v3138
  %v3501 = vunpack.c.l.b16 %v3139
  %v3502 = vunpack.c.h.b16 %v3139
  %v3503 = vunpack.c.l.b16 %v3140
  %v3504 = vunpack.c.h.b16 %v3140
  %v3505 = vunpack.c.l.b16 %v3141
  %v3506 = vunpack.c.h.b16 %v3141
  %v3507 = vunpack.c.l.b16 %v3142
  %v3508 = vunpack.c.h.b16 %v3142
  %v3509 = vunpack.c.l.b16 %v3143
  %v3510 = vunpack.c.h.b16 %v3143
  %v3511 = vunpack.c.l.b16 %v3144
  %v3512 = vunpack.c.h.b16 %v3144
  %v3513 = vunpack.c.l.b16 %v3145
  %v3514 = vunpack.c.h.b16 %v3145
  %v3515 = vunpack.c.l.b16 %v3146
  %v3516 = vunpack.c.h.b16 %v3146
  %v3517 = vunpack.c.l.b16 %v3147
  %v3518 = vunpack.c.h.b16 %v3147
  %v3519 = vunpack.c.l.b16 %v3148
  %v3520 = vunpack.c.h.b16 %v3148
  %v3521 = vunpack.c.l.b16 %v3149
  %v3522 = vunpack.c.h.b16 %v3149
  %v3523 = vunpack.c.l.b16 %v3150
  %v3524 = vunpack.c.h.b16 %v3150
  %v3525 = vunpack.c.l.b16 %v3151
  %v3526 = vunpack.c.h.b16 %v3151
  %v3527 = vunpack.c.l.b16 %v3152
  %v3528 = vunpack.c.h.b16 %v3152
  %v3529 = vunpack.c.l.b16 %v3153
  %v3530 = vunpack.c.h.b16 %v3153
  %v3531 = vunpack.c.l.b16 %v3154
  %v3532 = vunpack.c.h.b16 %v3154
  %v3533 = vunpack.c.l.b16 %v3155
  %v3534 = vunpack.c.h.b16 %v3155
  %v3535 = vunpack.c.l.b16 %v3156
  %v3536 = vunpack.c.h.b16 %v3156
  %v3537 = vunpack.c.l.b16 %v3157
  %v3538 = vunpack.c.h.b16 %v3157
  %v3539 = vunpack.c.l.b16 %v3158
  %v3540 = vunpack.c.h.b16 %v3158
  %v3541 = vunpack.c.l.b16 %v3159
  %v3542 = vunpack.c.h.b16 %v3159
  %v3543 = vunpack.c.l.b16 %v3160
  %v3544 = vunpack.c.h.b16 %v3160
  %v3545 = vpack.c.b16 %v3297, %v3289
  %v3546 = vpack.c.b16 %v3298, %v3290
  %v3547 = vpack.c.b16 %v3299, %v3291
  %v3548 = vpack.c.b16 %v3300, %v3292
  %v3549 = vpack.c.b16 %v3301, %v3293
  %v3550 = vpack.c.b16 %v3302, %v3294
  %v3551 = vpack.c.b16 %v3303, %v3295
  %v3552 = vpack.c.b16 %v3304, %v3296
  %v3553 = vpack.c.b16 %v3313, %v3305
  %v3554 = vpack.c.b16 %v3314, %v3306
  %v3555 = vpack.c.b16 %v3315, %v3307
  %v3556 = vpack.c.b16 %v3316, %v3308
  %v3557 = vpack.c.b16 %v3317, %v3309
  %v3558 = vpack.c.b16 %v3318, %v3310
  %v3559 = vpack.c.b16 %v3319, %v3311
  %v3560 = vpack.c.b16 %v3320, %v3312
  %v3561 = vpack.c.b16 %v3329, %v3321
  %v3562 = vpack.c.b16 %v3330, %v3322
  %v3563 = vpack.c.b16 %v3331, %v3323
  %v3564 = vpack.c.b16 %v3332, %v3324
  %v3565 = vpack.c.b16 %v3333, %v3325
  %v3566 = vpack.c.b16 %v3334, %v3326
  %v3567 = vpack.c.b16 %v3335, %v3327
  %v3568 = vpack.c.b16 %v3336, %v3328
  %v3569 = vpack.c.b16 %v3345, %v3337
  %v3570 = vpack.c.b16 %v3346, %v3338
  %v3571 = vpack.c.b16 %v3347, %v3339
  %v3572 = vpack.c.b16 %v3348, %v3340
  %v3573 = vpack.c.b16 %v3349, %v3341
  %v3574 = vpack.c.b16 %v3350, %v3342
  %v3575 = vpack.c.b16 %v3351, %v3343
  %v3576 = vpack.c.b16 %v3352, %v3344
  %v3577 = vpack.c.b16 %v3361, %v3353
  %v3578 = vpack.c.b16 %v3362, %v3354
  %v3579 = vpack.c.b16 %v3363, %v3355
  %v3580 = vpack.c.b16 %v3364, %v3356
  %v3581 = vpack.c.b16 %v3365, %v3357
  %v3582 = vpack.c.b16 %v3366, %v3358
  %v3583 = vpack.c.b16 %v3367, %v3359
  %v3584 = vpack.c.b16 %v3368, %v3360
  %v3585 = vpack.c.b16 %v3377, %v3369
  %v3586 = vpack.c.b16 %v3378, %v3370
  %v3587 = vpack.c.b16 %v3379, %v3371
  %v3588 = vpack.c.b16 %v3380, %v3372
  %v3589 = vpack.c.b16 %v3381, %v3373
  %v3590 = vpack.c.b16 %v3382, %v3374
  %v3591 = vpack.c.b16 %v3383, %v3375
  %v3592 = vpack.c.b16 %v3384, %v3376
  %v3593 = vpack.c.b16 %v3393, %v3385
  %v3594 = vpack.c.b16 %v3394, %v3386
  %v3595 = vpack.c.b16 %v3395, %v3387
  %v3596 = vpack.c.b16 %v3396, %v3388
  %v3597 = vpack.c.b16 %v3397, %v3389
  %v3598 = vpack.c.b16 %v3398, %v3390
  %v3599 = vpack.c.b16 %v3399, %v3391
  %v3600 = vpack.c.b16 %v3400, %v3392
  %v3601 = vpack.c.b16 %v3409, %v3401
  %v3602 = vpack.c.b16 %v3410, %v3402
  %v3603 = vpack.c.b16 %v3411, %v3403
  %v3604 = vpack.c.b16 %v3412, %v3404
  %v3605 = vpack.c.b16 %v3413, %v3405
  %v3606 = vpack.c.b16 %v3414, %v3406
  %v3607 = vpack.c.b16 %v3415, %v3407
  %v3608 = vpack.c.b16 %v3416, %v3408
  %v3609 = vpack.c.b16 %v3425, %v3417
  %v3610 = vpack.c.b16 %v3426, %v3418
  %v3611 = vpack.c.b16 %v3427, %v3419
  %v3612 = vpack.c.b16 %v3428, %v3420
  %v3613 = vpack.c.b16 %v3429, %v3421
  %v3614 = vpack.c.b16 %v3430, %v3422
  %v3615 = vpack.c.b16 %v3431, %v3423
  %v3616 = vpack.c.b16 %v3432, %v3424
  %v3617 = vpack.c.b16 %v3441, %v3433
  %v3618 = vpack.c.b16 %v3442, %v3434
  %v3619 = vpack.c.b16 %v3443, %v3435
  %v3620 = vpack.c.b16 %v3444, %v3436
  %v3621 = vpack.c.b16 %v3445, %v3437
  %v3622 = vpack.c.b16 %v3446, %v3438
  %v3623 = vpack.c.b16 %v3447, %v3439
  %v3624 = vpack.c.b16 %v3448, %v3440
  %v3625 = vpack.c.b16 %v3457, %v3449
  %v3626 = vpack.c.b16 %v3458, %v3450
  %v3627 = vpack.c.b16 %v3459, %v3451
  %v3628 = vpack.c.b16 %v3460, %v3452
  %v3629 = vpack.c.b16 %v3461, %v3453
  %v3630 = vpack.c.b16 %v3462, %v3454
  %v3631 = vpack.c.b16 %v3463, %v3455
  %v3632 = vpack.c.b16 %v3464, %v3456
  %v3633 = vpack.c.b16 %v3473, %v3465
  %v3634 = vpack.c.b16 %v3474, %v3466
  %v3635 = vpack.c.b16 %v3475, %v3467
  %v3636 = vpack.c.b16 %v3476, %v3468
  %v3637 = vpack.c.b16 %v3477, %v3469
  %v3638 = vpack.c.b16 %v3478, %v3470
  %v3639 = vpack.c.b16 %v3479, %v3471
  %v3640 = vpack.c.b16 %v3480, %v3472
  %v3641 = vpack.c.b16 %v3489, %v3481
  %v3642 = vpack.c.b16 %v3490, %v3482
  %v3643 = vpack.c.b16 %v3491, %v3483
  %v3644 = vpack.c.b16 %v3492, %v3484
  %v3645 = vpack.c.b16 %v3493, %v3485
  %v3646 = vpack.c.b16 %v3494, %v3486
  %v3647 = vpack.c.b16 %v3495, %v3487
  %v3648 = vpack.c.b16 %v3496, %v3488
  %v3649 = vpack.c.b16 %v3505, %v3497
  %v3650 = vpack.c.b16 %v3506, %v3498
  %v3651 = vpack.c.b16 %v3507, %v3499
  %v3652 = vpack.c.b16 %v3508, %v3500
  %v3653 = vpack.c.b16 %v3509, %v3501
  %v3654 = vpack.c.b16 %v3510, %v3502
  %v3655 = vpack.c.b16 %v3511, %v3503
  %v3656 = vpack.c.b16 %v3512, %v3504
  %v3657 = vpack.c.b16 %v3521, %v3513
  %v3658 = vpack.c.b16 %v3522, %v3514
  %v3659 = vpack.c.b16 %v3523, %v3515
  %v3660 = vpack.c.b16 %v3524, %v3516
  %v3661 = vpack.c.b16 %v3525, %v3517
  %v3662 = vpack.c.b16 %v3526, %v3518
  %v3663 = vpack.c.b16 %v3527, %v3519
  %v3664 = vpack.c.b16 %v3528, %v3520
  %v3665 = vpack.c.b16 %v3537, %v3529
  %v3666 = vpack.c.b16 %v3538, %v3530
  %v3667 = vpack.c.b16 %v3539, %v3531
  %v3668 = vpack.c.b16 %v3540, %v3532
  %v3669 = vpack.c.b16 %v3541, %v3533
  %v3670 = vpack.c.b16 %v3542, %v3534
  %v3671 = vpack.c.b16 %v3543, %v3535
  %v3672 = vpack.c.b16 %v3544, %v3536
  %3801 = vmatprep.subr.bf16.mxu0 %v3602
  %3802 = vmatpush1.bf16.msra.mxu0 %v3601
  %3803 = vmatprep.subr.bf16.mxu0 %v3594
  %3804 = vmatpush1.bf16.msra.mxu0 %v3593
  %3805 = vmatprep.subr.bf16.mxu0 %v3586
  %3806 = vmatpush1.bf16.msra.mxu0 %v3585
  %3807 = vmatprep.subr.bf16.mxu0 %v3578
  %3808 = vmatpush1.bf16.msra.mxu0 %v3577
  %3809 = vmatprep.subr.bf16.mxu0 %v3570
  %3810 = vmatpush1.bf16.msra.mxu0 %v3569
  %3811 = vmatprep.subr.bf16.mxu0 %v3562
  %3812 = vmatpush1.bf16.msra.mxu0 %v3561
  %3813 = vmatprep.subr.bf16.mxu0 %v3554
  %3814 = vmatpush1.bf16.msra.mxu0 %v3553
  %3815 = vmatprep.subr.bf16.mxu0 %v3546
  %3816 = vmatpush1.bf16.msra.mxu0 %v3545
  %3817 = vmatprep.subr.bf16.mxu0 %v3666
  %3818 = vmatpush2.bf16.msra.mxu0 %v3665
  %3819 = vmatprep.subr.bf16.mxu0 %v3658
  %3820 = vmatpush2.bf16.msra.mxu0 %v3657
  %3821 = vmatprep.subr.bf16.mxu0 %v3650
  %3822 = vmatpush2.bf16.msra.mxu0 %v3649
  %3823 = vmatprep.subr.bf16.mxu0 %v3642
  %3824 = vmatpush2.bf16.msra.mxu0 %v3641
  %3825 = vmatprep.subr.bf16.mxu0 %v3634
  %3826 = vmatpush2.bf16.msra.mxu0 %v3633
  %3827 = vmatprep.subr.bf16.mxu0 %v3626
  %3828 = vmatpush2.bf16.msra.mxu0 %v3625
  %3829 = vmatprep.subr.bf16.mxu0 %v3618
  %3830 = vmatpush2.bf16.msra.mxu0 %v3617
  %3831 = vmatprep.subr.bf16.mxu0 %v3610
  %3832 = vmatpush2.bf16.msra.mxu0 %v3609
  %3833 = vmatprep.mubr.bf16.mxu0 %v3032
  %3834 = vmatmul.mubr.bf16.gmra.mxu0 %v3031
  %v3835 = vpop.f32.mrf.mxu0
  %v3836 = vadd.f32 0.0, %v3835
  %v3837 = vpop.f32.mrf.mxu0
  %v3838 = vadd.f32 0.0, %v3837
  %v3839 = vpop.f32.mrf.mxu0
  %v3840 = vpop.f32.mrf.mxu0
  %3841 = vdwg.mxu0
  %3842 = vmatprep.subr.bf16.mxu0 %v3604
  %3843 = vmatpush1.bf16.msra.mxu0 %v3603
  %3844 = vmatprep.subr.bf16.mxu0 %v3596
  %3845 = vmatpush1.bf16.msra.mxu0 %v3595
  %3846 = vmatprep.subr.bf16.mxu0 %v3588
  %3847 = vmatpush1.bf16.msra.mxu0 %v3587
  %3848 = vmatprep.subr.bf16.mxu0 %v3580
  %3849 = vmatpush1.bf16.msra.mxu0 %v3579
  %3850 = vmatprep.subr.bf16.mxu0 %v3572
  %3851 = vmatpush1.bf16.msra.mxu0 %v3571
  %3852 = vmatprep.subr.bf16.mxu0 %v3564
  %3853 = vmatpush1.bf16.msra.mxu0 %v3563
  %3854 = vmatprep.subr.bf16.mxu0 %v3556
  %3855 = vmatpush1.bf16.msra.mxu0 %v3555
  %3856 = vmatprep.subr.bf16.mxu0 %v3548
  %3857 = vmatpush1.bf16.msra.mxu0 %v3547
  %3858 = vmatprep.subr.bf16.mxu0 %v3668
  %3859 = vmatpush2.bf16.msra.mxu0 %v3667
  %3860 = vmatprep.subr.bf16.mxu0 %v3660
  %3861 = vmatpush2.bf16.msra.mxu0 %v3659
  %3862 = vmatprep.subr.bf16.mxu0 %v3652
  %3863 = vmatpush2.bf16.msra.mxu0 %v3651
  %3864 = vmatprep.subr.bf16.mxu0 %v3644
  %3865 = vmatpush2.bf16.msra.mxu0 %v3643
  %3866 = vmatprep.subr.bf16.mxu0 %v3636
  %3867 = vmatpush2.bf16.msra.mxu0 %v3635
  %3868 = vmatprep.subr.bf16.mxu0 %v3628
  %3869 = vmatpush2.bf16.msra.mxu0 %v3627
  %3870 = vmatprep.subr.bf16.mxu0 %v3620
  %3871 = vmatpush2.bf16.msra.mxu0 %v3619
  %3872 = vmatprep.subr.bf16.mxu0 %v3612
  %3873 = vmatpush2.bf16.msra.mxu0 %v3611
  %3874 = vmatprep.mubr.bf16.mxu0 %v3032
  %3875 = vmatmul.mubr.bf16.gmra.mxu0 %v3031
  %v3876 = vpop.f32.mrf.mxu0
  %v3877 = vadd.f32 0.0, %v3876
  %v3878 = vpop.f32.mrf.mxu0
  %v3879 = vadd.f32 0.0, %v3878
  %v3880 = vpop.f32.mrf.mxu0
  %v3881 = vpop.f32.mrf.mxu0
  %3882 = vdwg.mxu0
  %3883 = vmatprep.subr.bf16.mxu0 %v3606
  %3884 = vmatpush1.bf16.msra.mxu0 %v3605
  %3885 = vmatprep.subr.bf16.mxu0 %v3598
  %3886 = vmatpush1.bf16.msra.mxu0 %v3597
  %3887 = vmatprep.subr.bf16.mxu0 %v3590
  %3888 = vmatpush1.bf16.msra.mxu0 %v3589
  %3889 = vmatprep.subr.bf16.mxu0 %v3582
  %3890 = vmatpush1.bf16.msra.mxu0 %v3581
  %3891 = vmatprep.subr.bf16.mxu0 %v3574
  %3892 = vmatpush1.bf16.msra.mxu0 %v3573
  %3893 = vmatprep.subr.bf16.mxu0 %v3566
  %3894 = vmatpush1.bf16.msra.mxu0 %v3565
  %3895 = vmatprep.subr.bf16.mxu0 %v3558
  %3896 = vmatpush1.bf16.msra.mxu0 %v3557
  %3897 = vmatprep.subr.bf16.mxu0 %v3550
  %3898 = vmatpush1.bf16.msra.mxu0 %v3549
  %3899 = vmatprep.subr.bf16.mxu0 %v3670
  %3900 = vmatpush2.bf16.msra.mxu0 %v3669
  %3901 = vmatprep.subr.bf16.mxu0 %v3662
  %3902 = vmatpush2.bf16.msra.mxu0 %v3661
  %3903 = vmatprep.subr.bf16.mxu0 %v3654
  %3904 = vmatpush2.bf16.msra.mxu0 %v3653
  %3905 = vmatprep.subr.bf16.mxu0 %v3646
  %3906 = vmatpush2.bf16.msra.mxu0 %v3645
  %3907 = vmatprep.subr.bf16.mxu0 %v3638
  %3908 = vmatpush2.bf16.msra.mxu0 %v3637
  %3909 = vmatprep.subr.bf16.mxu0 %v3630
  %3910 = vmatpush2.bf16.msra.mxu0 %v3629
  %3911 = vmatprep.subr.bf16.mxu0 %v3622
  %3912 = vmatpush2.bf16.msra.mxu0 %v3621
  %3913 = vmatprep.subr.bf16.mxu0 %v3614
  %3914 = vmatpush2.bf16.msra.mxu0 %v3613
  %3915 = vmatprep.mubr.bf16.mxu0 %v3032
  %3916 = vmatmul.mubr.bf16.gmra.mxu0 %v3031
  %v3917 = vpop.f32.mrf.mxu0
  %v3918 = vadd.f32 0.0, %v3917
  %v3919 = vpop.f32.mrf.mxu0
  %v3920 = vadd.f32 0.0, %v3919
  %v3921 = vpop.f32.mrf.mxu0
  %v3922 = vpop.f32.mrf.mxu0
  %3923 = vdwg.mxu0
  %3924 = vmatprep.subr.bf16.mxu0 %v3608
  %3925 = vmatpush1.bf16.msra.mxu0 %v3607
  %3926 = vmatprep.subr.bf16.mxu0 %v3600
  %3927 = vmatpush1.bf16.msra.mxu0 %v3599
  %3928 = vmatprep.subr.bf16.mxu0 %v3592
  %3929 = vmatpush1.bf16.msra.mxu0 %v3591
  %3930 = vmatprep.subr.bf16.mxu0 %v3584
  %3931 = vmatpush1.bf16.msra.mxu0 %v3583
  %3932 = vmatprep.subr.bf16.mxu0 %v3576
  %3933 = vmatpush1.bf16.msra.mxu0 %v3575
  %3934 = vmatprep.subr.bf16.mxu0 %v3568
  %3935 = vmatpush1.bf16.msra.mxu0 %v3567
  %3936 = vmatprep.subr.bf16.mxu0 %v3560
  %3937 = vmatpush1.bf16.msra.mxu0 %v3559
  %3938 = vmatprep.subr.bf16.mxu0 %v3552
  %3939 = vmatpush1.bf16.msra.mxu0 %v3551
  %3940 = vmatprep.subr.bf16.mxu0 %v3672
  %3941 = vmatpush2.bf16.msra.mxu0 %v3671
  %3942 = vmatprep.subr.bf16.mxu0 %v3664
  %3943 = vmatpush2.bf16.msra.mxu0 %v3663
  %3944 = vmatprep.subr.bf16.mxu0 %v3656
  %3945 = vmatpush2.bf16.msra.mxu0 %v3655
  %3946 = vmatprep.subr.bf16.mxu0 %v3648
  %3947 = vmatpush2.bf16.msra.mxu0 %v3647
  %3948 = vmatprep.subr.bf16.mxu0 %v3640
  %3949 = vmatpush2.bf16.msra.mxu0 %v3639
  %3950 = vmatprep.subr.bf16.mxu0 %v3632
  %3951 = vmatpush2.bf16.msra.mxu0 %v3631
  %3952 = vmatprep.subr.bf16.mxu0 %v3624
  %3953 = vmatpush2.bf16.msra.mxu0 %v3623
  %3954 = vmatprep.subr.bf16.mxu0 %v3616
  %3955 = vmatpush2.bf16.msra.mxu0 %v3615
  %3956 = vmatprep.mubr.bf16.mxu0 %v3032
  %3957 = vmatmul.mubr.bf16.gmra.mxu0 %v3031
  %v3958 = vpop.f32.mrf.mxu0
  %v3959 = vadd.f32 0.0, %v3958
  %v3960 = vpop.f32.mrf.mxu0
  %v3961 = vadd.f32 0.0, %v3960
  %v3962 = vpop.f32.mrf.mxu0
  %v3963 = vpop.f32.mrf.mxu0
  %3964 = vdwg.mxu0
  %s3965 = scalar_lea.vmem [#allocation2], 64
  %v3966 = vld [vmem:[%s3965] sm:$0xff]
  %v3967 = vld [vmem:[%s3965 + $0x8] sm:$0xff]
  %v3968 = vunpack.c.l.bf16 %v3966
  %v3969 = vunpack.c.h.bf16 %v3966
  %v3970 = vunpack.c.l.bf16 %v3967
  %v3971 = vunpack.c.h.bf16 %v3967
  %v3972 = vadd.f32 %v3968, %v3836
  %v3973 = vadd.f32 %v3969, %v3838
  %v3974 = vadd.f32 %v3970, %v3877
  %v3975 = vadd.f32 %v3971, %v3879
  %s3976 = scalar_lea.vmem [#allocation2], 160
  %v3977 = vld [vmem:[%s3976 + $0x10] sm:$0xff]
  %v3978 = vld [vmem:[%s3976 + $0x18] sm:$0xff]
  %v3979 = vunpack.c.l.bf16 %v3977
  %v3980 = vunpack.c.h.bf16 %v3977
  %v3981 = vunpack.c.l.bf16 %v3978
  %v3982 = vunpack.c.h.bf16 %v3978
  %v3983 = vadd.f32 %v3979, %v3918
  %v3984 = vadd.f32 %v3980, %v3920
  %v3985 = vadd.f32 %v3981, %v3959
  %v3986 = vadd.f32 %v3982, %v3961
  %vm3987 = vcmp.gt.s32.totalorder %v27, 2
  %vm3988 = vcmp.gt.s32.totalorder %v27, 5
  %v3989 = vxor.u32 %v3972, 2147483648
  %v3990 = vmul.f32 %v3989, 1.442695
  %v3991 = vpow.pop %v3990
  %v3992 = vadd.f32 %v3991, 1.0
  %v3993 = vrcp.pop %v3992
  %v3994 = vmul.f32 1.0, %v3993
  %v3995 = vxor.u32 %v3973, 2147483648
  %v3996 = vmul.f32 %v3995, 1.442695
  %v3997 = vpow.pop %v3996
  %v3998 = vadd.f32 %v3997, 1.0
  %v3999 = vrcp.pop %v3998
  %v4000 = vmul.f32 1.0, %v3999
  %v4001 = vtanh.pop %v3974
  %v4002 = vxor.u32 %v3975, 2147483648
  %v4003 = vmul.f32 %v4002, 1.442695
  %v4004 = vpow.pop %v4003
  %v4005 = vadd.f32 %v4004, 1.0
  %v4006 = vrcp.pop %v4005
  %v4007 = vmul.f32 1.0, %v4006
  %v4008 = vmul.f32 %v4000, %v2996
  %v4009 = vmul.f32 %v3994, %v4001
  %v4010 = vadd.f32 %v4008, %v4009
  %v4011 = vtanh.pop %v4010
  %v4012 = vmul.f32 %v4007, %v4011
  %v4013 = vsel %vm3987, %v4012, %v2995
  %v4014 = vsel %vm3987, %v4010, %v2996
  %v4015 = vxor.u32 %v3983, 2147483648
  %v4016 = vmul.f32 %v4015, 1.442695
  %v4017 = vpow.pop %v4016
  %v4018 = vadd.f32 %v4017, 1.0
  %v4019 = vrcp.pop %v4018
  %v4020 = vmul.f32 1.0, %v4019
  %v4021 = vxor.u32 %v3984, 2147483648
  %v4022 = vmul.f32 %v4021, 1.442695
  %v4023 = vpow.pop %v4022
  %v4024 = vadd.f32 %v4023, 1.0
  %v4025 = vrcp.pop %v4024
  %v4026 = vmul.f32 1.0, %v4025
  %v4027 = vtanh.pop %v3985
  %v4028 = vxor.u32 %v3986, 2147483648
  %v4029 = vmul.f32 %v4028, 1.442695
  %v4030 = vpow.pop %v4029
  %v4031 = vadd.f32 %v4030, 1.0
  %v4032 = vrcp.pop %v4031
  %v4033 = vmul.f32 1.0, %v4032
  %v4034 = vmul.f32 %v4026, %v3022
  %v4035 = vmul.f32 %v4020, %v4027
  %v4036 = vadd.f32 %v4034, %v4035
  %v4037 = vtanh.pop %v4036
  %v4038 = vmul.f32 %v4033, %v4037
  %v4039 = vsel %vm3988, %v4038, %v3021
  %v4040 = vsel %vm3988, %v4036, %v3022
  %v4041 = vsel %vm3987, %v4012, 0.0
  %v4042 = vpack.c.bf16 %v4041, %v4041
  %s4043 = scalar_lea.vmem [#allocation3], 16
  %4044 = vst [vmem:[%s4043] sm:$0xf] %v4042
  %v4045 = vsel %vm3988, %v4038, 0.0
  %v4046 = vpack.c.bf16 %v4045, %v4045
  %s4047 = scalar_lea.vmem [#allocation3], 40
  %4048 = vst [vmem:[%s4047 + $0x4] sm:$0xf] %v4046
  %v4049 = vpack.c.bf16 %v4013, %v4013
  %v4050 = vpack.c.bf16 %v4039, %v4039
  %v4051 = vld [vmem:[%s4] sm:$0xff]
  %v4052 = vld [vmem:[%s4 + $0x8] sm:$0xff]
  %v4053 = vld [vmem:[%s4 + $0x10] sm:$0xff]
  %v4054 = vld [vmem:[%s4 + $0x18] sm:$0xff]
  %v4055 = vld [vmem:[%s4 + $0x20] sm:$0xff]
  %v4056 = vld [vmem:[%s4 + $0x28] sm:$0xff]
  %v4057 = vld [vmem:[%s4 + $0x30] sm:$0xff]
  %v4058 = vld [vmem:[%s4 + $0x38] sm:$0xff]
  %v4059 = vld [vmem:[%s4 + $0x40] sm:$0xff]
  %v4060 = vld [vmem:[%s4 + $0x48] sm:$0xff]
  %v4061 = vld [vmem:[%s4 + $0x50] sm:$0xff]
  %v4062 = vld [vmem:[%s4 + $0x58] sm:$0xff]
  %v4063 = vld [vmem:[%s4 + $0x60] sm:$0xff]
  %v4064 = vld [vmem:[%s4 + $0x68] sm:$0xff]
  %v4065 = vld [vmem:[%s4 + $0x70] sm:$0xff]
  %v4066 = vld [vmem:[%s4 + $0x78] sm:$0xff]
  %v4067 = vld [vmem:[%s4 + $0x80] sm:$0xff]
  %v4068 = vld [vmem:[%s4 + $0x88] sm:$0xff]
  %v4069 = vld [vmem:[%s4 + $0x90] sm:$0xff]
  %v4070 = vld [vmem:[%s4 + $0x98] sm:$0xff]
  %v4071 = vld [vmem:[%s4 + $0xa0] sm:$0xff]
  %v4072 = vld [vmem:[%s4 + $0xa8] sm:$0xff]
  %v4073 = vld [vmem:[%s4 + $0xb0] sm:$0xff]
  %v4074 = vld [vmem:[%s4 + $0xb8] sm:$0xff]
  %v4075 = vld [vmem:[%s4 + $0xc0] sm:$0xff]
  %v4076 = vld [vmem:[%s4 + $0xc8] sm:$0xff]
  %v4077 = vld [vmem:[%s4 + $0xd0] sm:$0xff]
  %v4078 = vld [vmem:[%s4 + $0xd8] sm:$0xff]
  %v4079 = vld [vmem:[%s4 + $0xe0] sm:$0xff]
  %v4080 = vld [vmem:[%s4 + $0xe8] sm:$0xff]
  %v4081 = vld [vmem:[%s4 + $0xf0] sm:$0xff]
  %v4082 = vld [vmem:[%s4 + $0xf8] sm:$0xff]
  %v4083 = vld [vmem:[%s4 + $0x100] sm:$0xff]
  %v4084 = vld [vmem:[%s4 + $0x108] sm:$0xff]
  %v4085 = vld [vmem:[%s4 + $0x110] sm:$0xff]
  %v4086 = vld [vmem:[%s4 + $0x118] sm:$0xff]
  %v4087 = vld [vmem:[%s4 + $0x120] sm:$0xff]
  %v4088 = vld [vmem:[%s4 + $0x128] sm:$0xff]
  %v4089 = vld [vmem:[%s4 + $0x130] sm:$0xff]
  %v4090 = vld [vmem:[%s4 + $0x138] sm:$0xff]
  %v4091 = vld [vmem:[%s4 + $0x140] sm:$0xff]
  %v4092 = vld [vmem:[%s4 + $0x148] sm:$0xff]
  %v4093 = vld [vmem:[%s4 + $0x150] sm:$0xff]
  %v4094 = vld [vmem:[%s4 + $0x158] sm:$0xff]
  %v4095 = vld [vmem:[%s4 + $0x160] sm:$0xff]
  %v4096 = vld [vmem:[%s4 + $0x168] sm:$0xff]
  %v4097 = vld [vmem:[%s4 + $0x170] sm:$0xff]
  %v4098 = vld [vmem:[%s4 + $0x178] sm:$0xff]
  %v4099 = vld [vmem:[%s4 + $0x180] sm:$0xff]
  %v4100 = vld [vmem:[%s4 + $0x188] sm:$0xff]
  %v4101 = vld [vmem:[%s4 + $0x190] sm:$0xff]
  %v4102 = vld [vmem:[%s4 + $0x198] sm:$0xff]
  %v4103 = vld [vmem:[%s4 + $0x1a0] sm:$0xff]
  %v4104 = vld [vmem:[%s4 + $0x1a8] sm:$0xff]
  %v4105 = vld [vmem:[%s4 + $0x1b0] sm:$0xff]
  %v4106 = vld [vmem:[%s4 + $0x1b8] sm:$0xff]
  %v4107 = vld [vmem:[%s4 + $0x1c0] sm:$0xff]
  %v4108 = vld [vmem:[%s4 + $0x1c8] sm:$0xff]
  %v4109 = vld [vmem:[%s4 + $0x1d0] sm:$0xff]
  %v4110 = vld [vmem:[%s4 + $0x1d8] sm:$0xff]
  %v4111 = vld [vmem:[%s4 + $0x1e0] sm:$0xff]
  %v4112 = vld [vmem:[%s4 + $0x1e8] sm:$0xff]
  %v4113 = vld [vmem:[%s4 + $0x1f0] sm:$0xff]
  %v4114 = vld [vmem:[%s4 + $0x1f8] sm:$0xff]
  %v4115 = vld [vmem:[%s4 + $0x200] sm:$0xff]
  %v4116 = vld [vmem:[%s4 + $0x208] sm:$0xff]
  %v4117 = vld [vmem:[%s4 + $0x210] sm:$0xff]
  %v4118 = vld [vmem:[%s4 + $0x218] sm:$0xff]
  %v4119 = vld [vmem:[%s4 + $0x220] sm:$0xff]
  %v4120 = vld [vmem:[%s4 + $0x228] sm:$0xff]
  %v4121 = vld [vmem:[%s4 + $0x230] sm:$0xff]
  %v4122 = vld [vmem:[%s4 + $0x238] sm:$0xff]
  %v4123 = vld [vmem:[%s4 + $0x240] sm:$0xff]
  %v4124 = vld [vmem:[%s4 + $0x248] sm:$0xff]
  %v4125 = vld [vmem:[%s4 + $0x250] sm:$0xff]
  %v4126 = vld [vmem:[%s4 + $0x258] sm:$0xff]
  %v4127 = vld [vmem:[%s4 + $0x260] sm:$0xff]
  %v4128 = vld [vmem:[%s4 + $0x268] sm:$0xff]
  %v4129 = vld [vmem:[%s4 + $0x270] sm:$0xff]
  %v4130 = vld [vmem:[%s4 + $0x278] sm:$0xff]
  %v4131 = vld [vmem:[%s4 + $0x280] sm:$0xff]
  %v4132 = vld [vmem:[%s4 + $0x288] sm:$0xff]
  %v4133 = vld [vmem:[%s4 + $0x290] sm:$0xff]
  %v4134 = vld [vmem:[%s4 + $0x298] sm:$0xff]
  %v4135 = vld [vmem:[%s4 + $0x2a0] sm:$0xff]
  %v4136 = vld [vmem:[%s4 + $0x2a8] sm:$0xff]
  %v4137 = vld [vmem:[%s4 + $0x2b0] sm:$0xff]
  %v4138 = vld [vmem:[%s4 + $0x2b8] sm:$0xff]
  %v4139 = vld [vmem:[%s4 + $0x2c0] sm:$0xff]
  %v4140 = vld [vmem:[%s4 + $0x2c8] sm:$0xff]
  %v4141 = vld [vmem:[%s4 + $0x2d0] sm:$0xff]
  %v4142 = vld [vmem:[%s4 + $0x2d8] sm:$0xff]
  %v4143 = vld [vmem:[%s4 + $0x2e0] sm:$0xff]
  %v4144 = vld [vmem:[%s4 + $0x2e8] sm:$0xff]
  %v4145 = vld [vmem:[%s4 + $0x2f0] sm:$0xff]
  %v4146 = vld [vmem:[%s4 + $0x2f8] sm:$0xff]
  %v4147 = vld [vmem:[%s4 + $0x300] sm:$0xff]
  %v4148 = vld [vmem:[%s4 + $0x308] sm:$0xff]
  %v4149 = vld [vmem:[%s4 + $0x310] sm:$0xff]
  %v4150 = vld [vmem:[%s4 + $0x318] sm:$0xff]
  %v4151 = vld [vmem:[%s4 + $0x320] sm:$0xff]
  %v4152 = vld [vmem:[%s4 + $0x328] sm:$0xff]
  %v4153 = vld [vmem:[%s4 + $0x330] sm:$0xff]
  %v4154 = vld [vmem:[%s4 + $0x338] sm:$0xff]
  %v4155 = vld [vmem:[%s4 + $0x340] sm:$0xff]
  %v4156 = vld [vmem:[%s4 + $0x348] sm:$0xff]
  %v4157 = vld [vmem:[%s4 + $0x350] sm:$0xff]
  %v4158 = vld [vmem:[%s4 + $0x358] sm:$0xff]
  %v4159 = vld [vmem:[%s4 + $0x360] sm:$0xff]
  %v4160 = vld [vmem:[%s4 + $0x368] sm:$0xff]
  %v4161 = vld [vmem:[%s4 + $0x370] sm:$0xff]
  %v4162 = vld [vmem:[%s4 + $0x378] sm:$0xff]
  %v4163 = vld [vmem:[%s4 + $0x380] sm:$0xff]
  %v4164 = vld [vmem:[%s4 + $0x388] sm:$0xff]
  %v4165 = vld [vmem:[%s4 + $0x390] sm:$0xff]
  %v4166 = vld [vmem:[%s4 + $0x398] sm:$0xff]
  %v4167 = vld [vmem:[%s4 + $0x3a0] sm:$0xff]
  %v4168 = vld [vmem:[%s4 + $0x3a8] sm:$0xff]
  %v4169 = vld [vmem:[%s4 + $0x3b0] sm:$0xff]
  %v4170 = vld [vmem:[%s4 + $0x3b8] sm:$0xff]
  %v4171 = vld [vmem:[%s4 + $0x3c0] sm:$0xff]
  %v4172 = vld [vmem:[%s4 + $0x3c8] sm:$0xff]
  %v4173 = vld [vmem:[%s4 + $0x3d0] sm:$0xff]
  %v4174 = vld [vmem:[%s4 + $0x3d8] sm:$0xff]
  %v4175 = vld [vmem:[%s4 + $0x3e0] sm:$0xff]
  %v4176 = vld [vmem:[%s4 + $0x3e8] sm:$0xff]
  %v4177 = vld [vmem:[%s4 + $0x3f0] sm:$0xff]
  %v4178 = vld [vmem:[%s4 + $0x3f8] sm:$0xff]
  %v4307 = vunpack.c.l.b16 %v4051
  %v4308 = vunpack.c.h.b16 %v4051
  %v4309 = vunpack.c.l.b16 %v4052
  %v4310 = vunpack.c.h.b16 %v4052
  %v4311 = vunpack.c.l.b16 %v4053
  %v4312 = vunpack.c.h.b16 %v4053
  %v4313 = vunpack.c.l.b16 %v4054
  %v4314 = vunpack.c.h.b16 %v4054
  %v4315 = vunpack.c.l.b16 %v4055
  %v4316 = vunpack.c.h.b16 %v4055
  %v4317 = vunpack.c.l.b16 %v4056
  %v4318 = vunpack.c.h.b16 %v4056
  %v4319 = vunpack.c.l.b16 %v4057
  %v4320 = vunpack.c.h.b16 %v4057
  %v4321 = vunpack.c.l.b16 %v4058
  %v4322 = vunpack.c.h.b16 %v4058
  %v4323 = vunpack.c.l.b16 %v4059
  %v4324 = vunpack.c.h.b16 %v4059
  %v4325 = vunpack.c.l.b16 %v4060
  %v4326 = vunpack.c.h.b16 %v4060
  %v4327 = vunpack.c.l.b16 %v4061
  %v4328 = vunpack.c.h.b16 %v4061
  %v4329 = vunpack.c.l.b16 %v4062
  %v4330 = vunpack.c.h.b16 %v4062
  %v4331 = vunpack.c.l.b16 %v4063
  %v4332 = vunpack.c.h.b16 %v4063
  %v4333 = vunpack.c.l.b16 %v4064
  %v4334 = vunpack.c.h.b16 %v4064
  %v4335 = vunpack.c.l.b16 %v4065
  %v4336 = vunpack.c.h.b16 %v4065
  %v4337 = vunpack.c.l.b16 %v4066
  %v4338 = vunpack.c.h.b16 %v4066
  %v4339 = vunpack.c.l.b16 %v4067
  %v4340 = vunpack.c.h.b16 %v4067
  %v4341 = vunpack.c.l.b16 %v4068
  %v4342 = vunpack.c.h.b16 %v4068
  %v4343 = vunpack.c.l.b16 %v4069
  %v4344 = vunpack.c.h.b16 %v4069
  %v4345 = vunpack.c.l.b16 %v4070
  %v4346 = vunpack.c.h.b16 %v4070
  %v4347 = vunpack.c.l.b16 %v4071
  %v4348 = vunpack.c.h.b16 %v4071
  %v4349 = vunpack.c.l.b16 %v4072
  %v4350 = vunpack.c.h.b16 %v4072
  %v4351 = vunpack.c.l.b16 %v4073
  %v4352 = vunpack.c.h.b16 %v4073
  %v4353 = vunpack.c.l.b16 %v4074
  %v4354 = vunpack.c.h.b16 %v4074
  %v4355 = vunpack.c.l.b16 %v4075
  %v4356 = vunpack.c.h.b16 %v4075
  %v4357 = vunpack.c.l.b16 %v4076
  %v4358 = vunpack.c.h.b16 %v4076
  %v4359 = vunpack.c.l.b16 %v4077
  %v4360 = vunpack.c.h.b16 %v4077
  %v4361 = vunpack.c.l.b16 %v4078
  %v4362 = vunpack.c.h.b16 %v4078
  %v4363 = vunpack.c.l.b16 %v4079
  %v4364 = vunpack.c.h.b16 %v4079
  %v4365 = vunpack.c.l.b16 %v4080
  %v4366 = vunpack.c.h.b16 %v4080
  %v4367 = vunpack.c.l.b16 %v4081
  %v4368 = vunpack.c.h.b16 %v4081
  %v4369 = vunpack.c.l.b16 %v4082
  %v4370 = vunpack.c.h.b16 %v4082
  %v4371 = vunpack.c.l.b16 %v4083
  %v4372 = vunpack.c.h.b16 %v4083
  %v4373 = vunpack.c.l.b16 %v4084
  %v4374 = vunpack.c.h.b16 %v4084
  %v4375 = vunpack.c.l.b16 %v4085
  %v4376 = vunpack.c.h.b16 %v4085
  %v4377 = vunpack.c.l.b16 %v4086
  %v4378 = vunpack.c.h.b16 %v4086
  %v4379 = vunpack.c.l.b16 %v4087
  %v4380 = vunpack.c.h.b16 %v4087
  %v4381 = vunpack.c.l.b16 %v4088
  %v4382 = vunpack.c.h.b16 %v4088
  %v4383 = vunpack.c.l.b16 %v4089
  %v4384 = vunpack.c.h.b16 %v4089
  %v4385 = vunpack.c.l.b16 %v4090
  %v4386 = vunpack.c.h.b16 %v4090
  %v4387 = vunpack.c.l.b16 %v4091
  %v4388 = vunpack.c.h.b16 %v4091
  %v4389 = vunpack.c.l.b16 %v4092
  %v4390 = vunpack.c.h.b16 %v4092
  %v4391 = vunpack.c.l.b16 %v4093
  %v4392 = vunpack.c.h.b16 %v4093
  %v4393 = vunpack.c.l.b16 %v4094
  %v4394 = vunpack.c.h.b16 %v4094
  %v4395 = vunpack.c.l.b16 %v4095
  %v4396 = vunpack.c.h.b16 %v4095
  %v4397 = vunpack.c.l.b16 %v4096
  %v4398 = vunpack.c.h.b16 %v4096
  %v4399 = vunpack.c.l.b16 %v4097
  %v4400 = vunpack.c.h.b16 %v4097
  %v4401 = vunpack.c.l.b16 %v4098
  %v4402 = vunpack.c.h.b16 %v4098
  %v4403 = vunpack.c.l.b16 %v4099
  %v4404 = vunpack.c.h.b16 %v4099
  %v4405 = vunpack.c.l.b16 %v4100
  %v4406 = vunpack.c.h.b16 %v4100
  %v4407 = vunpack.c.l.b16 %v4101
  %v4408 = vunpack.c.h.b16 %v4101
  %v4409 = vunpack.c.l.b16 %v4102
  %v4410 = vunpack.c.h.b16 %v4102
  %v4411 = vunpack.c.l.b16 %v4103
  %v4412 = vunpack.c.h.b16 %v4103
  %v4413 = vunpack.c.l.b16 %v4104
  %v4414 = vunpack.c.h.b16 %v4104
  %v4415 = vunpack.c.l.b16 %v4105
  %v4416 = vunpack.c.h.b16 %v4105
  %v4417 = vunpack.c.l.b16 %v4106
  %v4418 = vunpack.c.h.b16 %v4106
  %v4419 = vunpack.c.l.b16 %v4107
  %v4420 = vunpack.c.h.b16 %v4107
  %v4421 = vunpack.c.l.b16 %v4108
  %v4422 = vunpack.c.h.b16 %v4108
  %v4423 = vunpack.c.l.b16 %v4109
  %v4424 = vunpack.c.h.b16 %v4109
  %v4425 = vunpack.c.l.b16 %v4110
  %v4426 = vunpack.c.h.b16 %v4110
  %v4427 = vunpack.c.l.b16 %v4111
  %v4428 = vunpack.c.h.b16 %v4111
  %v4429 = vunpack.c.l.b16 %v4112
  %v4430 = vunpack.c.h.b16 %v4112
  %v4431 = vunpack.c.l.b16 %v4113
  %v4432 = vunpack.c.h.b16 %v4113
  %v4433 = vunpack.c.l.b16 %v4114
  %v4434 = vunpack.c.h.b16 %v4114
  %v4435 = vunpack.c.l.b16 %v4115
  %v4436 = vunpack.c.h.b16 %v4115
  %v4437 = vunpack.c.l.b16 %v4116
  %v4438 = vunpack.c.h.b16 %v4116
  %v4439 = vunpack.c.l.b16 %v4117
  %v4440 = vunpack.c.h.b16 %v4117
  %v4441 = vunpack.c.l.b16 %v4118
  %v4442 = vunpack.c.h.b16 %v4118
  %v4443 = vunpack.c.l.b16 %v4119
  %v4444 = vunpack.c.h.b16 %v4119
  %v4445 = vunpack.c.l.b16 %v4120
  %v4446 = vunpack.c.h.b16 %v4120
  %v4447 = vunpack.c.l.b16 %v4121
  %v4448 = vunpack.c.h.b16 %v4121
  %v4449 = vunpack.c.l.b16 %v4122
  %v4450 = vunpack.c.h.b16 %v4122
  %v4451 = vunpack.c.l.b16 %v4123
  %v4452 = vunpack.c.h.b16 %v4123
  %v4453 = vunpack.c.l.b16 %v4124
  %v4454 = vunpack.c.h.b16 %v4124
  %v4455 = vunpack.c.l.b16 %v4125
  %v4456 = vunpack.c.h.b16 %v4125
  %v4457 = vunpack.c.l.b16 %v4126
  %v4458 = vunpack.c.h.b16 %v4126
  %v4459 = vunpack.c.l.b16 %v4127
  %v4460 = vunpack.c.h.b16 %v4127
  %v4461 = vunpack.c.l.b16 %v4128
  %v4462 = vunpack.c.h.b16 %v4128
  %v4463 = vunpack.c.l.b16 %v4129
  %v4464 = vunpack.c.h.b16 %v4129
  %v4465 = vunpack.c.l.b16 %v4130
  %v4466 = vunpack.c.h.b16 %v4130
  %v4467 = vunpack.c.l.b16 %v4131
  %v4468 = vunpack.c.h.b16 %v4131
  %v4469 = vunpack.c.l.b16 %v4132
  %v4470 = vunpack.c.h.b16 %v4132
  %v4471 = vunpack.c.l.b16 %v4133
  %v4472 = vunpack.c.h.b16 %v4133
  %v4473 = vunpack.c.l.b16 %v4134
  %v4474 = vunpack.c.h.b16 %v4134
  %v4475 = vunpack.c.l.b16 %v4135
  %v4476 = vunpack.c.h.b16 %v4135
  %v4477 = vunpack.c.l.b16 %v4136
  %v4478 = vunpack.c.h.b16 %v4136
  %v4479 = vunpack.c.l.b16 %v4137
  %v4480 = vunpack.c.h.b16 %v4137
  %v4481 = vunpack.c.l.b16 %v4138
  %v4482 = vunpack.c.h.b16 %v4138
  %v4483 = vunpack.c.l.b16 %v4139
  %v4484 = vunpack.c.h.b16 %v4139
  %v4485 = vunpack.c.l.b16 %v4140
  %v4486 = vunpack.c.h.b16 %v4140
  %v4487 = vunpack.c.l.b16 %v4141
  %v4488 = vunpack.c.h.b16 %v4141
  %v4489 = vunpack.c.l.b16 %v4142
  %v4490 = vunpack.c.h.b16 %v4142
  %v4491 = vunpack.c.l.b16 %v4143
  %v4492 = vunpack.c.h.b16 %v4143
  %v4493 = vunpack.c.l.b16 %v4144
  %v4494 = vunpack.c.h.b16 %v4144
  %v4495 = vunpack.c.l.b16 %v4145
  %v4496 = vunpack.c.h.b16 %v4145
  %v4497 = vunpack.c.l.b16 %v4146
  %v4498 = vunpack.c.h.b16 %v4146
  %v4499 = vunpack.c.l.b16 %v4147
  %v4500 = vunpack.c.h.b16 %v4147
  %v4501 = vunpack.c.l.b16 %v4148
  %v4502 = vunpack.c.h.b16 %v4148
  %v4503 = vunpack.c.l.b16 %v4149
  %v4504 = vunpack.c.h.b16 %v4149
  %v4505 = vunpack.c.l.b16 %v4150
  %v4506 = vunpack.c.h.b16 %v4150
  %v4507 = vunpack.c.l.b16 %v4151
  %v4508 = vunpack.c.h.b16 %v4151
  %v4509 = vunpack.c.l.b16 %v4152
  %v4510 = vunpack.c.h.b16 %v4152
  %v4511 = vunpack.c.l.b16 %v4153
  %v4512 = vunpack.c.h.b16 %v4153
  %v4513 = vunpack.c.l.b16 %v4154
  %v4514 = vunpack.c.h.b16 %v4154
  %v4515 = vunpack.c.l.b16 %v4155
  %v4516 = vunpack.c.h.b16 %v4155
  %v4517 = vunpack.c.l.b16 %v4156
  %v4518 = vunpack.c.h.b16 %v4156
  %v4519 = vunpack.c.l.b16 %v4157
  %v4520 = vunpack.c.h.b16 %v4157
  %v4521 = vunpack.c.l.b16 %v4158
  %v4522 = vunpack.c.h.b16 %v4158
  %v4523 = vunpack.c.l.b16 %v4159
  %v4524 = vunpack.c.h.b16 %v4159
  %v4525 = vunpack.c.l.b16 %v4160
  %v4526 = vunpack.c.h.b16 %v4160
  %v4527 = vunpack.c.l.b16 %v4161
  %v4528 = vunpack.c.h.b16 %v4161
  %v4529 = vunpack.c.l.b16 %v4162
  %v4530 = vunpack.c.h.b16 %v4162
  %v4531 = vunpack.c.l.b16 %v4163
  %v4532 = vunpack.c.h.b16 %v4163
  %v4533 = vunpack.c.l.b16 %v4164
  %v4534 = vunpack.c.h.b16 %v4164
  %v4535 = vunpack.c.l.b16 %v4165
  %v4536 = vunpack.c.h.b16 %v4165
  %v4537 = vunpack.c.l.b16 %v4166
  %v4538 = vunpack.c.h.b16 %v4166
  %v4539 = vunpack.c.l.b16 %v4167
  %v4540 = vunpack.c.h.b16 %v4167
  %v4541 = vunpack.c.l.b16 %v4168
  %v4542 = vunpack.c.h.b16 %v4168
  %v4543 = vunpack.c.l.b16 %v4169
  %v4544 = vunpack.c.h.b16 %v4169
  %v4545 = vunpack.c.l.b16 %v4170
  %v4546 = vunpack.c.h.b16 %v4170
  %v4547 = vunpack.c.l.b16 %v4171
  %v4548 = vunpack.c.h.b16 %v4171
  %v4549 = vunpack.c.l.b16 %v4172
  %v4550 = vunpack.c.h.b16 %v4172
  %v4551 = vunpack.c.l.b16 %v4173
  %v4552 = vunpack.c.h.b16 %v4173
  %v4553 = vunpack.c.l.b16 %v4174
  %v4554 = vunpack.c.h.b16 %v4174
  %v4555 = vunpack.c.l.b16 %v4175
  %v4556 = vunpack.c.h.b16 %v4175
  %v4557 = vunpack.c.l.b16 %v4176
  %v4558 = vunpack.c.h.b16 %v4176
  %v4559 = vunpack.c.l.b16 %v4177
  %v4560 = vunpack.c.h.b16 %v4177
  %v4561 = vunpack.c.l.b16 %v4178
  %v4562 = vunpack.c.h.b16 %v4178
  %v4563 = vpack.c.b16 %v4315, %v4307
  %v4564 = vpack.c.b16 %v4316, %v4308
  %v4565 = vpack.c.b16 %v4317, %v4309
  %v4566 = vpack.c.b16 %v4318, %v4310
  %v4567 = vpack.c.b16 %v4319, %v4311
  %v4568 = vpack.c.b16 %v4320, %v4312
  %v4569 = vpack.c.b16 %v4321, %v4313
  %v4570 = vpack.c.b16 %v4322, %v4314
  %v4571 = vpack.c.b16 %v4331, %v4323
  %v4572 = vpack.c.b16 %v4332, %v4324
  %v4573 = vpack.c.b16 %v4333, %v4325
  %v4574 = vpack.c.b16 %v4334, %v4326
  %v4575 = vpack.c.b16 %v4335, %v4327
  %v4576 = vpack.c.b16 %v4336, %v4328
  %v4577 = vpack.c.b16 %v4337, %v4329
  %v4578 = vpack.c.b16 %v4338, %v4330
  %v4579 = vpack.c.b16 %v4347, %v4339
  %v4580 = vpack.c.b16 %v4348, %v4340
  %v4581 = vpack.c.b16 %v4349, %v4341
  %v4582 = vpack.c.b16 %v4350, %v4342
  %v4583 = vpack.c.b16 %v4351, %v4343
  %v4584 = vpack.c.b16 %v4352, %v4344
  %v4585 = vpack.c.b16 %v4353, %v4345
  %v4586 = vpack.c.b16 %v4354, %v4346
  %v4587 = vpack.c.b16 %v4363, %v4355
  %v4588 = vpack.c.b16 %v4364, %v4356
  %v4589 = vpack.c.b16 %v4365, %v4357
  %v4590 = vpack.c.b16 %v4366, %v4358
  %v4591 = vpack.c.b16 %v4367, %v4359
  %v4592 = vpack.c.b16 %v4368, %v4360
  %v4593 = vpack.c.b16 %v4369, %v4361
  %v4594 = vpack.c.b16 %v4370, %v4362
  %v4595 = vpack.c.b16 %v4379, %v4371
  %v4596 = vpack.c.b16 %v4380, %v4372
  %v4597 = vpack.c.b16 %v4381, %v4373
  %v4598 = vpack.c.b16 %v4382, %v4374
  %v4599 = vpack.c.b16 %v4383, %v4375
  %v4600 = vpack.c.b16 %v4384, %v4376
  %v4601 = vpack.c.b16 %v4385, %v4377
  %v4602 = vpack.c.b16 %v4386, %v4378
  %v4603 = vpack.c.b16 %v4395, %v4387
  %v4604 = vpack.c.b16 %v4396, %v4388
  %v4605 = vpack.c.b16 %v4397, %v4389
  %v4606 = vpack.c.b16 %v4398, %v4390
  %v4607 = vpack.c.b16 %v4399, %v4391
  %v4608 = vpack.c.b16 %v4400, %v4392
  %v4609 = vpack.c.b16 %v4401, %v4393
  %v4610 = vpack.c.b16 %v4402, %v4394
  %v4611 = vpack.c.b16 %v4411, %v4403
  %v4612 = vpack.c.b16 %v4412, %v4404
  %v4613 = vpack.c.b16 %v4413, %v4405
  %v4614 = vpack.c.b16 %v4414, %v4406
  %v4615 = vpack.c.b16 %v4415, %v4407
  %v4616 = vpack.c.b16 %v4416, %v4408
  %v4617 = vpack.c.b16 %v4417, %v4409
  %v4618 = vpack.c.b16 %v4418, %v4410
  %v4619 = vpack.c.b16 %v4427, %v4419
  %v4620 = vpack.c.b16 %v4428, %v4420
  %v4621 = vpack.c.b16 %v4429, %v4421
  %v4622 = vpack.c.b16 %v4430, %v4422
  %v4623 = vpack.c.b16 %v4431, %v4423
  %v4624 = vpack.c.b16 %v4432, %v4424
  %v4625 = vpack.c.b16 %v4433, %v4425
  %v4626 = vpack.c.b16 %v4434, %v4426
  %v4627 = vpack.c.b16 %v4443, %v4435
  %v4628 = vpack.c.b16 %v4444, %v4436
  %v4629 = vpack.c.b16 %v4445, %v4437
  %v4630 = vpack.c.b16 %v4446, %v4438
  %v4631 = vpack.c.b16 %v4447, %v4439
  %v4632 = vpack.c.b16 %v4448, %v4440
  %v4633 = vpack.c.b16 %v4449, %v4441
  %v4634 = vpack.c.b16 %v4450, %v4442
  %v4635 = vpack.c.b16 %v4459, %v4451
  %v4636 = vpack.c.b16 %v4460, %v4452
  %v4637 = vpack.c.b16 %v4461, %v4453
  %v4638 = vpack.c.b16 %v4462, %v4454
  %v4639 = vpack.c.b16 %v4463, %v4455
  %v4640 = vpack.c.b16 %v4464, %v4456
  %v4641 = vpack.c.b16 %v4465, %v4457
  %v4642 = vpack.c.b16 %v4466, %v4458
  %v4643 = vpack.c.b16 %v4475, %v4467
  %v4644 = vpack.c.b16 %v4476, %v4468
  %v4645 = vpack.c.b16 %v4477, %v4469
  %v4646 = vpack.c.b16 %v4478, %v4470
  %v4647 = vpack.c.b16 %v4479, %v4471
  %v4648 = vpack.c.b16 %v4480, %v4472
  %v4649 = vpack.c.b16 %v4481, %v4473
  %v4650 = vpack.c.b16 %v4482, %v4474
  %v4651 = vpack.c.b16 %v4491, %v4483
  %v4652 = vpack.c.b16 %v4492, %v4484
  %v4653 = vpack.c.b16 %v4493, %v4485
  %v4654 = vpack.c.b16 %v4494, %v4486
  %v4655 = vpack.c.b16 %v4495, %v4487
  %v4656 = vpack.c.b16 %v4496, %v4488
  %v4657 = vpack.c.b16 %v4497, %v4489
  %v4658 = vpack.c.b16 %v4498, %v4490
  %v4659 = vpack.c.b16 %v4507, %v4499
  %v4660 = vpack.c.b16 %v4508, %v4500
  %v4661 = vpack.c.b16 %v4509, %v4501
  %v4662 = vpack.c.b16 %v4510, %v4502
  %v4663 = vpack.c.b16 %v4511, %v4503
  %v4664 = vpack.c.b16 %v4512, %v4504
  %v4665 = vpack.c.b16 %v4513, %v4505
  %v4666 = vpack.c.b16 %v4514, %v4506
  %v4667 = vpack.c.b16 %v4523, %v4515
  %v4668 = vpack.c.b16 %v4524, %v4516
  %v4669 = vpack.c.b16 %v4525, %v4517
  %v4670 = vpack.c.b16 %v4526, %v4518
  %v4671 = vpack.c.b16 %v4527, %v4519
  %v4672 = vpack.c.b16 %v4528, %v4520
  %v4673 = vpack.c.b16 %v4529, %v4521
  %v4674 = vpack.c.b16 %v4530, %v4522
  %v4675 = vpack.c.b16 %v4539, %v4531
  %v4676 = vpack.c.b16 %v4540, %v4532
  %v4677 = vpack.c.b16 %v4541, %v4533
  %v4678 = vpack.c.b16 %v4542, %v4534
  %v4679 = vpack.c.b16 %v4543, %v4535
  %v4680 = vpack.c.b16 %v4544, %v4536
  %v4681 = vpack.c.b16 %v4545, %v4537
  %v4682 = vpack.c.b16 %v4546, %v4538
  %v4683 = vpack.c.b16 %v4555, %v4547
  %v4684 = vpack.c.b16 %v4556, %v4548
  %v4685 = vpack.c.b16 %v4557, %v4549
  %v4686 = vpack.c.b16 %v4558, %v4550
  %v4687 = vpack.c.b16 %v4559, %v4551
  %v4688 = vpack.c.b16 %v4560, %v4552
  %v4689 = vpack.c.b16 %v4561, %v4553
  %v4690 = vpack.c.b16 %v4562, %v4554
  %4819 = vmatprep.subr.bf16.mxu0 %v4620
  %4820 = vmatpush1.bf16.msra.mxu0 %v4619
  %4821 = vmatprep.subr.bf16.mxu0 %v4612
  %4822 = vmatpush1.bf16.msra.mxu0 %v4611
  %4823 = vmatprep.subr.bf16.mxu0 %v4604
  %4824 = vmatpush1.bf16.msra.mxu0 %v4603
  %4825 = vmatprep.subr.bf16.mxu0 %v4596
  %4826 = vmatpush1.bf16.msra.mxu0 %v4595
  %4827 = vmatprep.subr.bf16.mxu0 %v4588
  %4828 = vmatpush1.bf16.msra.mxu0 %v4587
  %4829 = vmatprep.subr.bf16.mxu0 %v4580
  %4830 = vmatpush1.bf16.msra.mxu0 %v4579
  %4831 = vmatprep.subr.bf16.mxu0 %v4572
  %4832 = vmatpush1.bf16.msra.mxu0 %v4571
  %4833 = vmatprep.subr.bf16.mxu0 %v4564
  %4834 = vmatpush1.bf16.msra.mxu0 %v4563
  %4835 = vmatprep.subr.bf16.mxu0 %v4684
  %4836 = vmatpush2.bf16.msra.mxu0 %v4683
  %4837 = vmatprep.subr.bf16.mxu0 %v4676
  %4838 = vmatpush2.bf16.msra.mxu0 %v4675
  %4839 = vmatprep.subr.bf16.mxu0 %v4668
  %4840 = vmatpush2.bf16.msra.mxu0 %v4667
  %4841 = vmatprep.subr.bf16.mxu0 %v4660
  %4842 = vmatpush2.bf16.msra.mxu0 %v4659
  %4843 = vmatprep.subr.bf16.mxu0 %v4652
  %4844 = vmatpush2.bf16.msra.mxu0 %v4651
  %4845 = vmatprep.subr.bf16.mxu0 %v4644
  %4846 = vmatpush2.bf16.msra.mxu0 %v4643
  %4847 = vmatprep.subr.bf16.mxu0 %v4636
  %4848 = vmatpush2.bf16.msra.mxu0 %v4635
  %4849 = vmatprep.subr.bf16.mxu0 %v4628
  %4850 = vmatpush2.bf16.msra.mxu0 %v4627
  %4851 = vmatprep.mubr.bf16.mxu0 %v4050
  %4852 = vmatmul.mubr.bf16.gmra.mxu0 %v4049
  %v4853 = vpop.f32.mrf.mxu0
  %v4854 = vadd.f32 0.0, %v4853
  %v4855 = vpop.f32.mrf.mxu0
  %v4856 = vadd.f32 0.0, %v4855
  %v4857 = vpop.f32.mrf.mxu0
  %v4858 = vpop.f32.mrf.mxu0
  %4859 = vdwg.mxu0
  %4860 = vmatprep.subr.bf16.mxu0 %v4622
  %4861 = vmatpush1.bf16.msra.mxu0 %v4621
  %4862 = vmatprep.subr.bf16.mxu0 %v4614
  %4863 = vmatpush1.bf16.msra.mxu0 %v4613
  %4864 = vmatprep.subr.bf16.mxu0 %v4606
  %4865 = vmatpush1.bf16.msra.mxu0 %v4605
  %4866 = vmatprep.subr.bf16.mxu0 %v4598
  %4867 = vmatpush1.bf16.msra.mxu0 %v4597
  %4868 = vmatprep.subr.bf16.mxu0 %v4590
  %4869 = vmatpush1.bf16.msra.mxu0 %v4589
  %4870 = vmatprep.subr.bf16.mxu0 %v4582
  %4871 = vmatpush1.bf16.msra.mxu0 %v4581
  %4872 = vmatprep.subr.bf16.mxu0 %v4574
  %4873 = vmatpush1.bf16.msra.mxu0 %v4573
  %4874 = vmatprep.subr.bf16.mxu0 %v4566
  %4875 = vmatpush1.bf16.msra.mxu0 %v4565
  %4876 = vmatprep.subr.bf16.mxu0 %v4686
  %4877 = vmatpush2.bf16.msra.mxu0 %v4685
  %4878 = vmatprep.subr.bf16.mxu0 %v4678
  %4879 = vmatpush2.bf16.msra.mxu0 %v4677
  %4880 = vmatprep.subr.bf16.mxu0 %v4670
  %4881 = vmatpush2.bf16.msra.mxu0 %v4669
  %4882 = vmatprep.subr.bf16.mxu0 %v4662
  %4883 = vmatpush2.bf16.msra.mxu0 %v4661
  %4884 = vmatprep.subr.bf16.mxu0 %v4654
  %4885 = vmatpush2.bf16.msra.mxu0 %v4653
  %4886 = vmatprep.subr.bf16.mxu0 %v4646
  %4887 = vmatpush2.bf16.msra.mxu0 %v4645
  %4888 = vmatprep.subr.bf16.mxu0 %v4638
  %4889 = vmatpush2.bf16.msra.mxu0 %v4637
  %4890 = vmatprep.subr.bf16.mxu0 %v4630
  %4891 = vmatpush2.bf16.msra.mxu0 %v4629
  %4892 = vmatprep.mubr.bf16.mxu0 %v4050
  %4893 = vmatmul.mubr.bf16.gmra.mxu0 %v4049
  %v4894 = vpop.f32.mrf.mxu0
  %v4895 = vadd.f32 0.0, %v4894
  %v4896 = vpop.f32.mrf.mxu0
  %v4897 = vadd.f32 0.0, %v4896
  %v4898 = vpop.f32.mrf.mxu0
  %v4899 = vpop.f32.mrf.mxu0
  %4900 = vdwg.mxu0
  %4901 = vmatprep.subr.bf16.mxu0 %v4624
  %4902 = vmatpush1.bf16.msra.mxu0 %v4623
  %4903 = vmatprep.subr.bf16.mxu0 %v4616
  %4904 = vmatpush1.bf16.msra.mxu0 %v4615
  %4905 = vmatprep.subr.bf16.mxu0 %v4608
  %4906 = vmatpush1.bf16.msra.mxu0 %v4607
  %4907 = vmatprep.subr.bf16.mxu0 %v4600
  %4908 = vmatpush1.bf16.msra.mxu0 %v4599
  %4909 = vmatprep.subr.bf16.mxu0 %v4592
  %4910 = vmatpush1.bf16.msra.mxu0 %v4591
  %4911 = vmatprep.subr.bf16.mxu0 %v4584
  %4912 = vmatpush1.bf16.msra.mxu0 %v4583
  %4913 = vmatprep.subr.bf16.mxu0 %v4576
  %4914 = vmatpush1.bf16.msra.mxu0 %v4575
  %4915 = vmatprep.subr.bf16.mxu0 %v4568
  %4916 = vmatpush1.bf16.msra.mxu0 %v4567
  %4917 = vmatprep.subr.bf16.mxu0 %v4688
  %4918 = vmatpush2.bf16.msra.mxu0 %v4687
  %4919 = vmatprep.subr.bf16.mxu0 %v4680
  %4920 = vmatpush2.bf16.msra.mxu0 %v4679
  %4921 = vmatprep.subr.bf16.mxu0 %v4672
  %4922 = vmatpush2.bf16.msra.mxu0 %v4671
  %4923 = vmatprep.subr.bf16.mxu0 %v4664
  %4924 = vmatpush2.bf16.msra.mxu0 %v4663
  %4925 = vmatprep.subr.bf16.mxu0 %v4656
  %4926 = vmatpush2.bf16.msra.mxu0 %v4655
  %4927 = vmatprep.subr.bf16.mxu0 %v4648
  %4928 = vmatpush2.bf16.msra.mxu0 %v4647
  %4929 = vmatprep.subr.bf16.mxu0 %v4640
  %4930 = vmatpush2.bf16.msra.mxu0 %v4639
  %4931 = vmatprep.subr.bf16.mxu0 %v4632
  %4932 = vmatpush2.bf16.msra.mxu0 %v4631
  %4933 = vmatprep.mubr.bf16.mxu0 %v4050
  %4934 = vmatmul.mubr.bf16.gmra.mxu0 %v4049
  %v4935 = vpop.f32.mrf.mxu0
  %v4936 = vadd.f32 0.0, %v4935
  %v4937 = vpop.f32.mrf.mxu0
  %v4938 = vadd.f32 0.0, %v4937
  %v4939 = vpop.f32.mrf.mxu0
  %v4940 = vpop.f32.mrf.mxu0
  %4941 = vdwg.mxu0
  %4942 = vmatprep.subr.bf16.mxu0 %v4626
  %4943 = vmatpush1.bf16.msra.mxu0 %v4625
  %4944 = vmatprep.subr.bf16.mxu0 %v4618
  %4945 = vmatpush1.bf16.msra.mxu0 %v4617
  %4946 = vmatprep.subr.bf16.mxu0 %v4610
  %4947 = vmatpush1.bf16.msra.mxu0 %v4609
  %4948 = vmatprep.subr.bf16.mxu0 %v4602
  %4949 = vmatpush1.bf16.msra.mxu0 %v4601
  %4950 = vmatprep.subr.bf16.mxu0 %v4594
  %4951 = vmatpush1.bf16.msra.mxu0 %v4593
  %4952 = vmatprep.subr.bf16.mxu0 %v4586
  %4953 = vmatpush1.bf16.msra.mxu0 %v4585
  %4954 = vmatprep.subr.bf16.mxu0 %v4578
  %4955 = vmatpush1.bf16.msra.mxu0 %v4577
  %4956 = vmatprep.subr.bf16.mxu0 %v4570
  %4957 = vmatpush1.bf16.msra.mxu0 %v4569
  %4958 = vmatprep.subr.bf16.mxu0 %v4690
  %4959 = vmatpush2.bf16.msra.mxu0 %v4689
  %4960 = vmatprep.subr.bf16.mxu0 %v4682
  %4961 = vmatpush2.bf16.msra.mxu0 %v4681
  %4962 = vmatprep.subr.bf16.mxu0 %v4674
  %4963 = vmatpush2.bf16.msra.mxu0 %v4673
  %4964 = vmatprep.subr.bf16.mxu0 %v4666
  %4965 = vmatpush2.bf16.msra.mxu0 %v4665
  %4966 = vmatprep.subr.bf16.mxu0 %v4658
  %4967 = vmatpush2.bf16.msra.mxu0 %v4657
  %4968 = vmatprep.subr.bf16.mxu0 %v4650
  %4969 = vmatpush2.bf16.msra.mxu0 %v4649
  %4970 = vmatprep.subr.bf16.mxu0 %v4642
  %4971 = vmatpush2.bf16.msra.mxu0 %v4641
  %4972 = vmatprep.subr.bf16.mxu0 %v4634
  %4973 = vmatpush2.bf16.msra.mxu0 %v4633
  %4974 = vmatprep.mubr.bf16.mxu0 %v4050
  %4975 = vmatmul.mubr.bf16.gmra.mxu0 %v4049
  %v4976 = vpop.f32.mrf.mxu0
  %v4977 = vadd.f32 0.0, %v4976
  %v4978 = vpop.f32.mrf.mxu0
  %v4979 = vadd.f32 0.0, %v4978
  %v4980 = vpop.f32.mrf.mxu0
  %v4981 = vpop.f32.mrf.mxu0
  %4982 = vdwg.mxu0
  %s4983 = scalar_lea.vmem [#allocation2], 96
  %v4984 = vld [vmem:[%s4983] sm:$0xff]
  %v4985 = vld [vmem:[%s4983 + $0x8] sm:$0xff]
  %v4986 = vunpack.c.l.bf16 %v4984
  %v4987 = vunpack.c.h.bf16 %v4984
  %v4988 = vunpack.c.l.bf16 %v4985
  %v4989 = vunpack.c.h.bf16 %v4985
  %v4990 = vadd.f32 %v4986, %v4854
  %v4991 = vadd.f32 %v4987, %v4856
  %v4992 = vadd.f32 %v4988, %v4895
  %v4993 = vadd.f32 %v4989, %v4897
  %s4994 = scalar_lea.vmem [#allocation2], 128
  %v4995 = vld [vmem:[%s4994 + $0x10] sm:$0xff]
  %v4996 = vld [vmem:[%s4994 + $0x18] sm:$0xff]
  %v4997 = vunpack.c.l.bf16 %v4995
  %v4998 = vunpack.c.h.bf16 %v4995
  %v4999 = vunpack.c.l.bf16 %v4996
  %v5000 = vunpack.c.h.bf16 %v4996
  %v5001 = vadd.f32 %v4997, %v4936
  %v5002 = vadd.f32 %v4998, %v4938
  %v5003 = vadd.f32 %v4999, %v4977
  %v5004 = vadd.f32 %v5000, %v4979
  %vm5005 = vcmp.gt.s32.totalorder %v27, 3
  %vm5006 = vcmp.gt.s32.totalorder %v27, 4
  %v5007 = vxor.u32 %v4990, 2147483648
  %v5008 = vmul.f32 %v5007, 1.442695
  %v5009 = vpow.pop %v5008
  %v5010 = vadd.f32 %v5009, 1.0
  %v5011 = vrcp.pop %v5010
  %v5012 = vmul.f32 1.0, %v5011
  %v5013 = vxor.u32 %v4991, 2147483648
  %v5014 = vmul.f32 %v5013, 1.442695
  %v5015 = vpow.pop %v5014
  %v5016 = vadd.f32 %v5015, 1.0
  %v5017 = vrcp.pop %v5016
  %v5018 = vmul.f32 1.0, %v5017
  %v5019 = vtanh.pop %v4992
  %v5020 = vxor.u32 %v4993, 2147483648
  %v5021 = vmul.f32 %v5020, 1.442695
  %v5022 = vpow.pop %v5021
  %v5023 = vadd.f32 %v5022, 1.0
  %v5024 = vrcp.pop %v5023
  %v5025 = vmul.f32 1.0, %v5024
  %v5026 = vmul.f32 %v5018, %v4014
  %v5027 = vmul.f32 %v5012, %v5019
  %v5028 = vadd.f32 %v5026, %v5027
  %v5029 = vtanh.pop %v5028
  %v5030 = vmul.f32 %v5025, %v5029
  %v5031 = vsel %vm5005, %v5030, %v4013
  %v5032 = vsel %vm5005, %v5028, %v4014
  %v5033 = vxor.u32 %v5001, 2147483648
  %v5034 = vmul.f32 %v5033, 1.442695
  %v5035 = vpow.pop %v5034
  %v5036 = vadd.f32 %v5035, 1.0
  %v5037 = vrcp.pop %v5036
  %v5038 = vmul.f32 1.0, %v5037
  %v5039 = vxor.u32 %v5002, 2147483648
  %v5040 = vmul.f32 %v5039, 1.442695
  %v5041 = vpow.pop %v5040
  %v5042 = vadd.f32 %v5041, 1.0
  %v5043 = vrcp.pop %v5042
  %v5044 = vmul.f32 1.0, %v5043
  %v5045 = vtanh.pop %v5003
  %v5046 = vxor.u32 %v5004, 2147483648
  %v5047 = vmul.f32 %v5046, 1.442695
  %v5048 = vpow.pop %v5047
  %v5049 = vadd.f32 %v5048, 1.0
  %v5050 = vrcp.pop %v5049
  %v5051 = vmul.f32 1.0, %v5050
  %v5052 = vmul.f32 %v5044, %v4040
  %v5053 = vmul.f32 %v5038, %v5045
  %v5054 = vadd.f32 %v5052, %v5053
  %v5055 = vtanh.pop %v5054
  %v5056 = vmul.f32 %v5051, %v5055
  %v5057 = vsel %vm5006, %v5056, %v4039
  %v5058 = vsel %vm5006, %v5054, %v4040
  %v5059 = vsel %vm5005, %v5030, 0.0
  %v5060 = vpack.c.bf16 %v5059, %v5059
  %s5061 = scalar_lea.vmem [#allocation3], 24
  %5062 = vst [vmem:[%s5061] sm:$0xf] %v5060
  %v5063 = vsel %vm5006, %v5056, 0.0
  %v5064 = vpack.c.bf16 %v5063, %v5063
  %s5065 = scalar_lea.vmem [#allocation3], 32
  %5066 = vst [vmem:[%s5065 + $0x4] sm:$0xf] %v5064
  %v5067 = vpack.c.bf16 %v5031, %v5031
  %v5068 = vpack.c.bf16 %v5057, %v5057
  %v5069 = vld [vmem:[%s4] sm:$0xff]
  %v5070 = vld [vmem:[%s4 + $0x8] sm:$0xff]
  %v5071 = vld [vmem:[%s4 + $0x10] sm:$0xff]
  %v5072 = vld [vmem:[%s4 + $0x18] sm:$0xff]
  %v5073 = vld [vmem:[%s4 + $0x20] sm:$0xff]
  %v5074 = vld [vmem:[%s4 + $0x28] sm:$0xff]
  %v5075 = vld [vmem:[%s4 + $0x30] sm:$0xff]
  %v5076 = vld [vmem:[%s4 + $0x38] sm:$0xff]
  %v5077 = vld [vmem:[%s4 + $0x40] sm:$0xff]
  %v5078 = vld [vmem:[%s4 + $0x48] sm:$0xff]
  %v5079 = vld [vmem:[%s4 + $0x50] sm:$0xff]
  %v5080 = vld [vmem:[%s4 + $0x58] sm:$0xff]
  %v5081 = vld [vmem:[%s4 + $0x60] sm:$0xff]
  %v5082 = vld [vmem:[%s4 + $0x68] sm:$0xff]
  %v5083 = vld [vmem:[%s4 + $0x70] sm:$0xff]
  %v5084 = vld [vmem:[%s4 + $0x78] sm:$0xff]
  %v5085 = vld [vmem:[%s4 + $0x80] sm:$0xff]
  %v5086 = vld [vmem:[%s4 + $0x88] sm:$0xff]
  %v5087 = vld [vmem:[%s4 + $0x90] sm:$0xff]
  %v5088 = vld [vmem:[%s4 + $0x98] sm:$0xff]
  %v5089 = vld [vmem:[%s4 + $0xa0] sm:$0xff]
  %v5090 = vld [vmem:[%s4 + $0xa8] sm:$0xff]
  %v5091 = vld [vmem:[%s4 + $0xb0] sm:$0xff]
  %v5092 = vld [vmem:[%s4 + $0xb8] sm:$0xff]
  %v5093 = vld [vmem:[%s4 + $0xc0] sm:$0xff]
  %v5094 = vld [vmem:[%s4 + $0xc8] sm:$0xff]
  %v5095 = vld [vmem:[%s4 + $0xd0] sm:$0xff]
  %v5096 = vld [vmem:[%s4 + $0xd8] sm:$0xff]
  %v5097 = vld [vmem:[%s4 + $0xe0] sm:$0xff]
  %v5098 = vld [vmem:[%s4 + $0xe8] sm:$0xff]
  %v5099 = vld [vmem:[%s4 + $0xf0] sm:$0xff]
  %v5100 = vld [vmem:[%s4 + $0xf8] sm:$0xff]
  %v5101 = vld [vmem:[%s4 + $0x100] sm:$0xff]
  %v5102 = vld [vmem:[%s4 + $0x108] sm:$0xff]
  %v5103 = vld [vmem:[%s4 + $0x110] sm:$0xff]
  %v5104 = vld [vmem:[%s4 + $0x118] sm:$0xff]
  %v5105 = vld [vmem:[%s4 + $0x120] sm:$0xff]
  %v5106 = vld [vmem:[%s4 + $0x128] sm:$0xff]
  %v5107 = vld [vmem:[%s4 + $0x130] sm:$0xff]
  %v5108 = vld [vmem:[%s4 + $0x138] sm:$0xff]
  %v5109 = vld [vmem:[%s4 + $0x140] sm:$0xff]
  %v5110 = vld [vmem:[%s4 + $0x148] sm:$0xff]
  %v5111 = vld [vmem:[%s4 + $0x150] sm:$0xff]
  %v5112 = vld [vmem:[%s4 + $0x158] sm:$0xff]
  %v5113 = vld [vmem:[%s4 + $0x160] sm:$0xff]
  %v5114 = vld [vmem:[%s4 + $0x168] sm:$0xff]
  %v5115 = vld [vmem:[%s4 + $0x170] sm:$0xff]
  %v5116 = vld [vmem:[%s4 + $0x178] sm:$0xff]
  %v5117 = vld [vmem:[%s4 + $0x180] sm:$0xff]
  %v5118 = vld [vmem:[%s4 + $0x188] sm:$0xff]
  %v5119 = vld [vmem:[%s4 + $0x190] sm:$0xff]
  %v5120 = vld [vmem:[%s4 + $0x198] sm:$0xff]
  %v5121 = vld [vmem:[%s4 + $0x1a0] sm:$0xff]
  %v5122 = vld [vmem:[%s4 + $0x1a8] sm:$0xff]
  %v5123 = vld [vmem:[%s4 + $0x1b0] sm:$0xff]
  %v5124 = vld [vmem:[%s4 + $0x1b8] sm:$0xff]
  %v5125 = vld [vmem:[%s4 + $0x1c0] sm:$0xff]
  %v5126 = vld [vmem:[%s4 + $0x1c8] sm:$0xff]
  %v5127 = vld [vmem:[%s4 + $0x1d0] sm:$0xff]
  %v5128 = vld [vmem:[%s4 + $0x1d8] sm:$0xff]
  %v5129 = vld [vmem:[%s4 + $0x1e0] sm:$0xff]
  %v5130 = vld [vmem:[%s4 + $0x1e8] sm:$0xff]
  %v5131 = vld [vmem:[%s4 + $0x1f0] sm:$0xff]
  %v5132 = vld [vmem:[%s4 + $0x1f8] sm:$0xff]
  %v5133 = vld [vmem:[%s4 + $0x200] sm:$0xff]
  %v5134 = vld [vmem:[%s4 + $0x208] sm:$0xff]
  %v5135 = vld [vmem:[%s4 + $0x210] sm:$0xff]
  %v5136 = vld [vmem:[%s4 + $0x218] sm:$0xff]
  %v5137 = vld [vmem:[%s4 + $0x220] sm:$0xff]
  %v5138 = vld [vmem:[%s4 + $0x228] sm:$0xff]
  %v5139 = vld [vmem:[%s4 + $0x230] sm:$0xff]
  %v5140 = vld [vmem:[%s4 + $0x238] sm:$0xff]
  %v5141 = vld [vmem:[%s4 + $0x240] sm:$0xff]
  %v5142 = vld [vmem:[%s4 + $0x248] sm:$0xff]
  %v5143 = vld [vmem:[%s4 + $0x250] sm:$0xff]
  %v5144 = vld [vmem:[%s4 + $0x258] sm:$0xff]
  %v5145 = vld [vmem:[%s4 + $0x260] sm:$0xff]
  %v5146 = vld [vmem:[%s4 + $0x268] sm:$0xff]
  %v5147 = vld [vmem:[%s4 + $0x270] sm:$0xff]
  %v5148 = vld [vmem:[%s4 + $0x278] sm:$0xff]
  %v5149 = vld [vmem:[%s4 + $0x280] sm:$0xff]
  %v5150 = vld [vmem:[%s4 + $0x288] sm:$0xff]
  %v5151 = vld [vmem:[%s4 + $0x290] sm:$0xff]
  %v5152 = vld [vmem:[%s4 + $0x298] sm:$0xff]
  %v5153 = vld [vmem:[%s4 + $0x2a0] sm:$0xff]
  %v5154 = vld [vmem:[%s4 + $0x2a8] sm:$0xff]
  %v5155 = vld [vmem:[%s4 + $0x2b0] sm:$0xff]
  %v5156 = vld [vmem:[%s4 + $0x2b8] sm:$0xff]
  %v5157 = vld [vmem:[%s4 + $0x2c0] sm:$0xff]
  %v5158 = vld [vmem:[%s4 + $0x2c8] sm:$0xff]
  %v5159 = vld [vmem:[%s4 + $0x2d0] sm:$0xff]
  %v5160 = vld [vmem:[%s4 + $0x2d8] sm:$0xff]
  %v5161 = vld [vmem:[%s4 + $0x2e0] sm:$0xff]
  %v5162 = vld [vmem:[%s4 + $0x2e8] sm:$0xff]
  %v5163 = vld [vmem:[%s4 + $0x2f0] sm:$0xff]
  %v5164 = vld [vmem:[%s4 + $0x2f8] sm:$0xff]
  %v5165 = vld [vmem:[%s4 + $0x300] sm:$0xff]
  %v5166 = vld [vmem:[%s4 + $0x308] sm:$0xff]
  %v5167 = vld [vmem:[%s4 + $0x310] sm:$0xff]
  %v5168 = vld [vmem:[%s4 + $0x318] sm:$0xff]
  %v5169 = vld [vmem:[%s4 + $0x320] sm:$0xff]
  %v5170 = vld [vmem:[%s4 + $0x328] sm:$0xff]
  %v5171 = vld [vmem:[%s4 + $0x330] sm:$0xff]
  %v5172 = vld [vmem:[%s4 + $0x338] sm:$0xff]
  %v5173 = vld [vmem:[%s4 + $0x340] sm:$0xff]
  %v5174 = vld [vmem:[%s4 + $0x348] sm:$0xff]
  %v5175 = vld [vmem:[%s4 + $0x350] sm:$0xff]
  %v5176 = vld [vmem:[%s4 + $0x358] sm:$0xff]
  %v5177 = vld [vmem:[%s4 + $0x360] sm:$0xff]
  %v5178 = vld [vmem:[%s4 + $0x368] sm:$0xff]
  %v5179 = vld [vmem:[%s4 + $0x370] sm:$0xff]
  %v5180 = vld [vmem:[%s4 + $0x378] sm:$0xff]
  %v5181 = vld [vmem:[%s4 + $0x380] sm:$0xff]
  %v5182 = vld [vmem:[%s4 + $0x388] sm:$0xff]
  %v5183 = vld [vmem:[%s4 + $0x390] sm:$0xff]
  %v5184 = vld [vmem:[%s4 + $0x398] sm:$0xff]
  %v5185 = vld [vmem:[%s4 + $0x3a0] sm:$0xff]
  %v5186 = vld [vmem:[%s4 + $0x3a8] sm:$0xff]
  %v5187 = vld [vmem:[%s4 + $0x3b0] sm:$0xff]
  %v5188 = vld [vmem:[%s4 + $0x3b8] sm:$0xff]
  %v5189 = vld [vmem:[%s4 + $0x3c0] sm:$0xff]
  %v5190 = vld [vmem:[%s4 + $0x3c8] sm:$0xff]
  %v5191 = vld [vmem:[%s4 + $0x3d0] sm:$0xff]
  %v5192 = vld [vmem:[%s4 + $0x3d8] sm:$0xff]
  %v5193 = vld [vmem:[%s4 + $0x3e0] sm:$0xff]
  %v5194 = vld [vmem:[%s4 + $0x3e8] sm:$0xff]
  %v5195 = vld [vmem:[%s4 + $0x3f0] sm:$0xff]
  %v5196 = vld [vmem:[%s4 + $0x3f8] sm:$0xff]
  %v5325 = vunpack.c.l.b16 %v5069
  %v5326 = vunpack.c.h.b16 %v5069
  %v5327 = vunpack.c.l.b16 %v5070
  %v5328 = vunpack.c.h.b16 %v5070
  %v5329 = vunpack.c.l.b16 %v5071
  %v5330 = vunpack.c.h.b16 %v5071
  %v5331 = vunpack.c.l.b16 %v5072
  %v5332 = vunpack.c.h.b16 %v5072
  %v5333 = vunpack.c.l.b16 %v5073
  %v5334 = vunpack.c.h.b16 %v5073
  %v5335 = vunpack.c.l.b16 %v5074
  %v5336 = vunpack.c.h.b16 %v5074
  %v5337 = vunpack.c.l.b16 %v5075
  %v5338 = vunpack.c.h.b16 %v5075
  %v5339 = vunpack.c.l.b16 %v5076
  %v5340 = vunpack.c.h.b16 %v5076
  %v5341 = vunpack.c.l.b16 %v5077
  %v5342 = vunpack.c.h.b16 %v5077
  %v5343 = vunpack.c.l.b16 %v5078
  %v5344 = vunpack.c.h.b16 %v5078
  %v5345 = vunpack.c.l.b16 %v5079
  %v5346 = vunpack.c.h.b16 %v5079
  %v5347 = vunpack.c.l.b16 %v5080
  %v5348 = vunpack.c.h.b16 %v5080
  %v5349 = vunpack.c.l.b16 %v5081
  %v5350 = vunpack.c.h.b16 %v5081
  %v5351 = vunpack.c.l.b16 %v5082
  %v5352 = vunpack.c.h.b16 %v5082
  %v5353 = vunpack.c.l.b16 %v5083
  %v5354 = vunpack.c.h.b16 %v5083
  %v5355 = vunpack.c.l.b16 %v5084
  %v5356 = vunpack.c.h.b16 %v5084
  %v5357 = vunpack.c.l.b16 %v5085
  %v5358 = vunpack.c.h.b16 %v5085
  %v5359 = vunpack.c.l.b16 %v5086
  %v5360 = vunpack.c.h.b16 %v5086
  %v5361 = vunpack.c.l.b16 %v5087
  %v5362 = vunpack.c.h.b16 %v5087
  %v5363 = vunpack.c.l.b16 %v5088
  %v5364 = vunpack.c.h.b16 %v5088
  %v5365 = vunpack.c.l.b16 %v5089
  %v5366 = vunpack.c.h.b16 %v5089
  %v5367 = vunpack.c.l.b16 %v5090
  %v5368 = vunpack.c.h.b16 %v5090
  %v5369 = vunpack.c.l.b16 %v5091
  %v5370 = vunpack.c.h.b16 %v5091
  %v5371 = vunpack.c.l.b16 %v5092
  %v5372 = vunpack.c.h.b16 %v5092
  %v5373 = vunpack.c.l.b16 %v5093
  %v5374 = vunpack.c.h.b16 %v5093
  %v5375 = vunpack.c.l.b16 %v5094
  %v5376 = vunpack.c.h.b16 %v5094
  %v5377 = vunpack.c.l.b16 %v5095
  %v5378 = vunpack.c.h.b16 %v5095
  %v5379 = vunpack.c.l.b16 %v5096
  %v5380 = vunpack.c.h.b16 %v5096
  %v5381 = vunpack.c.l.b16 %v5097
  %v5382 = vunpack.c.h.b16 %v5097
  %v5383 = vunpack.c.l.b16 %v5098
  %v5384 = vunpack.c.h.b16 %v5098
  %v5385 = vunpack.c.l.b16 %v5099
  %v5386 = vunpack.c.h.b16 %v5099
  %v5387 = vunpack.c.l.b16 %v5100
  %v5388 = vunpack.c.h.b16 %v5100
  %v5389 = vunpack.c.l.b16 %v5101
  %v5390 = vunpack.c.h.b16 %v5101
  %v5391 = vunpack.c.l.b16 %v5102
  %v5392 = vunpack.c.h.b16 %v5102
  %v5393 = vunpack.c.l.b16 %v5103
  %v5394 = vunpack.c.h.b16 %v5103
  %v5395 = vunpack.c.l.b16 %v5104
  %v5396 = vunpack.c.h.b16 %v5104
  %v5397 = vunpack.c.l.b16 %v5105
  %v5398 = vunpack.c.h.b16 %v5105
  %v5399 = vunpack.c.l.b16 %v5106
  %v5400 = vunpack.c.h.b16 %v5106
  %v5401 = vunpack.c.l.b16 %v5107
  %v5402 = vunpack.c.h.b16 %v5107
  %v5403 = vunpack.c.l.b16 %v5108
  %v5404 = vunpack.c.h.b16 %v5108
  %v5405 = vunpack.c.l.b16 %v5109
  %v5406 = vunpack.c.h.b16 %v5109
  %v5407 = vunpack.c.l.b16 %v5110
  %v5408 = vunpack.c.h.b16 %v5110
  %v5409 = vunpack.c.l.b16 %v5111
  %v5410 = vunpack.c.h.b16 %v5111
  %v5411 = vunpack.c.l.b16 %v5112
  %v5412 = vunpack.c.h.b16 %v5112
  %v5413 = vunpack.c.l.b16 %v5113
  %v5414 = vunpack.c.h.b16 %v5113
  %v5415 = vunpack.c.l.b16 %v5114
  %v5416 = vunpack.c.h.b16 %v5114
  %v5417 = vunpack.c.l.b16 %v5115
  %v5418 = vunpack.c.h.b16 %v5115
  %v5419 = vunpack.c.l.b16 %v5116
  %v5420 = vunpack.c.h.b16 %v5116
  %v5421 = vunpack.c.l.b16 %v5117
  %v5422 = vunpack.c.h.b16 %v5117
  %v5423 = vunpack.c.l.b16 %v5118
  %v5424 = vunpack.c.h.b16 %v5118
  %v5425 = vunpack.c.l.b16 %v5119
  %v5426 = vunpack.c.h.b16 %v5119
  %v5427 = vunpack.c.l.b16 %v5120
  %v5428 = vunpack.c.h.b16 %v5120
  %v5429 = vunpack.c.l.b16 %v5121
  %v5430 = vunpack.c.h.b16 %v5121
  %v5431 = vunpack.c.l.b16 %v5122
  %v5432 = vunpack.c.h.b16 %v5122
  %v5433 = vunpack.c.l.b16 %v5123
  %v5434 = vunpack.c.h.b16 %v5123
  %v5435 = vunpack.c.l.b16 %v5124
  %v5436 = vunpack.c.h.b16 %v5124
  %v5437 = vunpack.c.l.b16 %v5125
  %v5438 = vunpack.c.h.b16 %v5125
  %v5439 = vunpack.c.l.b16 %v5126
  %v5440 = vunpack.c.h.b16 %v5126
  %v5441 = vunpack.c.l.b16 %v5127
  %v5442 = vunpack.c.h.b16 %v5127
  %v5443 = vunpack.c.l.b16 %v5128
  %v5444 = vunpack.c.h.b16 %v5128
  %v5445 = vunpack.c.l.b16 %v5129
  %v5446 = vunpack.c.h.b16 %v5129
  %v5447 = vunpack.c.l.b16 %v5130
  %v5448 = vunpack.c.h.b16 %v5130
  %v5449 = vunpack.c.l.b16 %v5131
  %v5450 = vunpack.c.h.b16 %v5131
  %v5451 = vunpack.c.l.b16 %v5132
  %v5452 = vunpack.c.h.b16 %v5132
  %v5453 = vunpack.c.l.b16 %v5133
  %v5454 = vunpack.c.h.b16 %v5133
  %v5455 = vunpack.c.l.b16 %v5134
  %v5456 = vunpack.c.h.b16 %v5134
  %v5457 = vunpack.c.l.b16 %v5135
  %v5458 = vunpack.c.h.b16 %v5135
  %v5459 = vunpack.c.l.b16 %v5136
  %v5460 = vunpack.c.h.b16 %v5136
  %v5461 = vunpack.c.l.b16 %v5137
  %v5462 = vunpack.c.h.b16 %v5137
  %v5463 = vunpack.c.l.b16 %v5138
  %v5464 = vunpack.c.h.b16 %v5138
  %v5465 = vunpack.c.l.b16 %v5139
  %v5466 = vunpack.c.h.b16 %v5139
  %v5467 = vunpack.c.l.b16 %v5140
  %v5468 = vunpack.c.h.b16 %v5140
  %v5469 = vunpack.c.l.b16 %v5141
  %v5470 = vunpack.c.h.b16 %v5141
  %v5471 = vunpack.c.l.b16 %v5142
  %v5472 = vunpack.c.h.b16 %v5142
  %v5473 = vunpack.c.l.b16 %v5143
  %v5474 = vunpack.c.h.b16 %v5143
  %v5475 = vunpack.c.l.b16 %v5144
  %v5476 = vunpack.c.h.b16 %v5144
  %v5477 = vunpack.c.l.b16 %v5145
  %v5478 = vunpack.c.h.b16 %v5145
  %v5479 = vunpack.c.l.b16 %v5146
  %v5480 = vunpack.c.h.b16 %v5146
  %v5481 = vunpack.c.l.b16 %v5147
  %v5482 = vunpack.c.h.b16 %v5147
  %v5483 = vunpack.c.l.b16 %v5148
  %v5484 = vunpack.c.h.b16 %v5148
  %v5485 = vunpack.c.l.b16 %v5149
  %v5486 = vunpack.c.h.b16 %v5149
  %v5487 = vunpack.c.l.b16 %v5150
  %v5488 = vunpack.c.h.b16 %v5150
  %v5489 = vunpack.c.l.b16 %v5151
  %v5490 = vunpack.c.h.b16 %v5151
  %v5491 = vunpack.c.l.b16 %v5152
  %v5492 = vunpack.c.h.b16 %v5152
  %v5493 = vunpack.c.l.b16 %v5153
  %v5494 = vunpack.c.h.b16 %v5153
  %v5495 = vunpack.c.l.b16 %v5154
  %v5496 = vunpack.c.h.b16 %v5154
  %v5497 = vunpack.c.l.b16 %v5155
  %v5498 = vunpack.c.h.b16 %v5155
  %v5499 = vunpack.c.l.b16 %v5156
  %v5500 = vunpack.c.h.b16 %v5156
  %v5501 = vunpack.c.l.b16 %v5157
  %v5502 = vunpack.c.h.b16 %v5157
  %v5503 = vunpack.c.l.b16 %v5158
  %v5504 = vunpack.c.h.b16 %v5158
  %v5505 = vunpack.c.l.b16 %v5159
  %v5506 = vunpack.c.h.b16 %v5159
  %v5507 = vunpack.c.l.b16 %v5160
  %v5508 = vunpack.c.h.b16 %v5160
  %v5509 = vunpack.c.l.b16 %v5161
  %v5510 = vunpack.c.h.b16 %v5161
  %v5511 = vunpack.c.l.b16 %v5162
  %v5512 = vunpack.c.h.b16 %v5162
  %v5513 = vunpack.c.l.b16 %v5163
  %v5514 = vunpack.c.h.b16 %v5163
  %v5515 = vunpack.c.l.b16 %v5164
  %v5516 = vunpack.c.h.b16 %v5164
  %v5517 = vunpack.c.l.b16 %v5165
  %v5518 = vunpack.c.h.b16 %v5165
  %v5519 = vunpack.c.l.b16 %v5166
  %v5520 = vunpack.c.h.b16 %v5166
  %v5521 = vunpack.c.l.b16 %v5167
  %v5522 = vunpack.c.h.b16 %v5167
  %v5523 = vunpack.c.l.b16 %v5168
  %v5524 = vunpack.c.h.b16 %v5168
  %v5525 = vunpack.c.l.b16 %v5169
  %v5526 = vunpack.c.h.b16 %v5169
  %v5527 = vunpack.c.l.b16 %v5170
  %v5528 = vunpack.c.h.b16 %v5170
  %v5529 = vunpack.c.l.b16 %v5171
  %v5530 = vunpack.c.h.b16 %v5171
  %v5531 = vunpack.c.l.b16 %v5172
  %v5532 = vunpack.c.h.b16 %v5172
  %v5533 = vunpack.c.l.b16 %v5173
  %v5534 = vunpack.c.h.b16 %v5173
  %v5535 = vunpack.c.l.b16 %v5174
  %v5536 = vunpack.c.h.b16 %v5174
  %v5537 = vunpack.c.l.b16 %v5175
  %v5538 = vunpack.c.h.b16 %v5175
  %v5539 = vunpack.c.l.b16 %v5176
  %v5540 = vunpack.c.h.b16 %v5176
  %v5541 = vunpack.c.l.b16 %v5177
  %v5542 = vunpack.c.h.b16 %v5177
  %v5543 = vunpack.c.l.b16 %v5178
  %v5544 = vunpack.c.h.b16 %v5178
  %v5545 = vunpack.c.l.b16 %v5179
  %v5546 = vunpack.c.h.b16 %v5179
  %v5547 = vunpack.c.l.b16 %v5180
  %v5548 = vunpack.c.h.b16 %v5180
  %v5549 = vunpack.c.l.b16 %v5181
  %v5550 = vunpack.c.h.b16 %v5181
  %v5551 = vunpack.c.l.b16 %v5182
  %v5552 = vunpack.c.h.b16 %v5182
  %v5553 = vunpack.c.l.b16 %v5183
  %v5554 = vunpack.c.h.b16 %v5183
  %v5555 = vunpack.c.l.b16 %v5184
  %v5556 = vunpack.c.h.b16 %v5184
  %v5557 = vunpack.c.l.b16 %v5185
  %v5558 = vunpack.c.h.b16 %v5185
  %v5559 = vunpack.c.l.b16 %v5186
  %v5560 = vunpack.c.h.b16 %v5186
  %v5561 = vunpack.c.l.b16 %v5187
  %v5562 = vunpack.c.h.b16 %v5187
  %v5563 = vunpack.c.l.b16 %v5188
  %v5564 = vunpack.c.h.b16 %v5188
  %v5565 = vunpack.c.l.b16 %v5189
  %v5566 = vunpack.c.h.b16 %v5189
  %v5567 = vunpack.c.l.b16 %v5190
  %v5568 = vunpack.c.h.b16 %v5190
  %v5569 = vunpack.c.l.b16 %v5191
  %v5570 = vunpack.c.h.b16 %v5191
  %v5571 = vunpack.c.l.b16 %v5192
  %v5572 = vunpack.c.h.b16 %v5192
  %v5573 = vunpack.c.l.b16 %v5193
  %v5574 = vunpack.c.h.b16 %v5193
  %v5575 = vunpack.c.l.b16 %v5194
  %v5576 = vunpack.c.h.b16 %v5194
  %v5577 = vunpack.c.l.b16 %v5195
  %v5578 = vunpack.c.h.b16 %v5195
  %v5579 = vunpack.c.l.b16 %v5196
  %v5580 = vunpack.c.h.b16 %v5196
  %v5581 = vpack.c.b16 %v5333, %v5325
  %v5582 = vpack.c.b16 %v5334, %v5326
  %v5583 = vpack.c.b16 %v5335, %v5327
  %v5584 = vpack.c.b16 %v5336, %v5328
  %v5585 = vpack.c.b16 %v5337, %v5329
  %v5586 = vpack.c.b16 %v5338, %v5330
  %v5587 = vpack.c.b16 %v5339, %v5331
  %v5588 = vpack.c.b16 %v5340, %v5332
  %v5589 = vpack.c.b16 %v5349, %v5341
  %v5590 = vpack.c.b16 %v5350, %v5342
  %v5591 = vpack.c.b16 %v5351, %v5343
  %v5592 = vpack.c.b16 %v5352, %v5344
  %v5593 = vpack.c.b16 %v5353, %v5345
  %v5594 = vpack.c.b16 %v5354, %v5346
  %v5595 = vpack.c.b16 %v5355, %v5347
  %v5596 = vpack.c.b16 %v5356, %v5348
  %v5597 = vpack.c.b16 %v5365, %v5357
  %v5598 = vpack.c.b16 %v5366, %v5358
  %v5599 = vpack.c.b16 %v5367, %v5359
  %v5600 = vpack.c.b16 %v5368, %v5360
  %v5601 = vpack.c.b16 %v5369, %v5361
  %v5602 = vpack.c.b16 %v5370, %v5362
  %v5603 = vpack.c.b16 %v5371, %v5363
  %v5604 = vpack.c.b16 %v5372, %v5364
  %v5605 = vpack.c.b16 %v5381, %v5373
  %v5606 = vpack.c.b16 %v5382, %v5374
  %v5607 = vpack.c.b16 %v5383, %v5375
  %v5608 = vpack.c.b16 %v5384, %v5376
  %v5609 = vpack.c.b16 %v5385, %v5377
  %v5610 = vpack.c.b16 %v5386, %v5378
  %v5611 = vpack.c.b16 %v5387, %v5379
  %v5612 = vpack.c.b16 %v5388, %v5380
  %v5613 = vpack.c.b16 %v5397, %v5389
  %v5614 = vpack.c.b16 %v5398, %v5390
  %v5615 = vpack.c.b16 %v5399, %v5391
  %v5616 = vpack.c.b16 %v5400, %v5392
  %v5617 = vpack.c.b16 %v5401, %v5393
  %v5618 = vpack.c.b16 %v5402, %v5394
  %v5619 = vpack.c.b16 %v5403, %v5395
  %v5620 = vpack.c.b16 %v5404, %v5396
  %v5621 = vpack.c.b16 %v5413, %v5405
  %v5622 = vpack.c.b16 %v5414, %v5406
  %v5623 = vpack.c.b16 %v5415, %v5407
  %v5624 = vpack.c.b16 %v5416, %v5408
  %v5625 = vpack.c.b16 %v5417, %v5409
  %v5626 = vpack.c.b16 %v5418, %v5410
  %v5627 = vpack.c.b16 %v5419, %v5411
  %v5628 = vpack.c.b16 %v5420, %v5412
  %v5629 = vpack.c.b16 %v5429, %v5421
  %v5630 = vpack.c.b16 %v5430, %v5422
  %v5631 = vpack.c.b16 %v5431, %v5423
  %v5632 = vpack.c.b16 %v5432, %v5424
  %v5633 = vpack.c.b16 %v5433, %v5425
  %v5634 = vpack.c.b16 %v5434, %v5426
  %v5635 = vpack.c.b16 %v5435, %v5427
  %v5636 = vpack.c.b16 %v5436, %v5428
  %v5637 = vpack.c.b16 %v5445, %v5437
  %v5638 = vpack.c.b16 %v5446, %v5438
  %v5639 = vpack.c.b16 %v5447, %v5439
  %v5640 = vpack.c.b16 %v5448, %v5440
  %v5641 = vpack.c.b16 %v5449, %v5441
  %v5642 = vpack.c.b16 %v5450, %v5442
  %v5643 = vpack.c.b16 %v5451, %v5443
  %v5644 = vpack.c.b16 %v5452, %v5444
  %v5645 = vpack.c.b16 %v5461, %v5453
  %v5646 = vpack.c.b16 %v5462, %v5454
  %v5647 = vpack.c.b16 %v5463, %v5455
  %v5648 = vpack.c.b16 %v5464, %v5456
  %v5649 = vpack.c.b16 %v5465, %v5457
  %v5650 = vpack.c.b16 %v5466, %v5458
  %v5651 = vpack.c.b16 %v5467, %v5459
  %v5652 = vpack.c.b16 %v5468, %v5460
  %v5653 = vpack.c.b16 %v5477, %v5469
  %v5654 = vpack.c.b16 %v5478, %v5470
  %v5655 = vpack.c.b16 %v5479, %v5471
  %v5656 = vpack.c.b16 %v5480, %v5472
  %v5657 = vpack.c.b16 %v5481, %v5473
  %v5658 = vpack.c.b16 %v5482, %v5474
  %v5659 = vpack.c.b16 %v5483, %v5475
  %v5660 = vpack.c.b16 %v5484, %v5476
  %v5661 = vpack.c.b16 %v5493, %v5485
  %v5662 = vpack.c.b16 %v5494, %v5486
  %v5663 = vpack.c.b16 %v5495, %v5487
  %v5664 = vpack.c.b16 %v5496, %v5488
  %v5665 = vpack.c.b16 %v5497, %v5489
  %v5666 = vpack.c.b16 %v5498, %v5490
  %v5667 = vpack.c.b16 %v5499, %v5491
  %v5668 = vpack.c.b16 %v5500, %v5492
  %v5669 = vpack.c.b16 %v5509, %v5501
  %v5670 = vpack.c.b16 %v5510, %v5502
  %v5671 = vpack.c.b16 %v5511, %v5503
  %v5672 = vpack.c.b16 %v5512, %v5504
  %v5673 = vpack.c.b16 %v5513, %v5505
  %v5674 = vpack.c.b16 %v5514, %v5506
  %v5675 = vpack.c.b16 %v5515, %v5507
  %v5676 = vpack.c.b16 %v5516, %v5508
  %v5677 = vpack.c.b16 %v5525, %v5517
  %v5678 = vpack.c.b16 %v5526, %v5518
  %v5679 = vpack.c.b16 %v5527, %v5519
  %v5680 = vpack.c.b16 %v5528, %v5520
  %v5681 = vpack.c.b16 %v5529, %v5521
  %v5682 = vpack.c.b16 %v5530, %v5522
  %v5683 = vpack.c.b16 %v5531, %v5523
  %v5684 = vpack.c.b16 %v5532, %v5524
  %v5685 = vpack.c.b16 %v5541, %v5533
  %v5686 = vpack.c.b16 %v5542, %v5534
  %v5687 = vpack.c.b16 %v5543, %v5535
  %v5688 = vpack.c.b16 %v5544, %v5536
  %v5689 = vpack.c.b16 %v5545, %v5537
  %v5690 = vpack.c.b16 %v5546, %v5538
  %v5691 = vpack.c.b16 %v5547, %v5539
  %v5692 = vpack.c.b16 %v5548, %v5540
  %v5693 = vpack.c.b16 %v5557, %v5549
  %v5694 = vpack.c.b16 %v5558, %v5550
  %v5695 = vpack.c.b16 %v5559, %v5551
  %v5696 = vpack.c.b16 %v5560, %v5552
  %v5697 = vpack.c.b16 %v5561, %v5553
  %v5698 = vpack.c.b16 %v5562, %v5554
  %v5699 = vpack.c.b16 %v5563, %v5555
  %v5700 = vpack.c.b16 %v5564, %v5556
  %v5701 = vpack.c.b16 %v5573, %v5565
  %v5702 = vpack.c.b16 %v5574, %v5566
  %v5703 = vpack.c.b16 %v5575, %v5567
  %v5704 = vpack.c.b16 %v5576, %v5568
  %v5705 = vpack.c.b16 %v5577, %v5569
  %v5706 = vpack.c.b16 %v5578, %v5570
  %v5707 = vpack.c.b16 %v5579, %v5571
  %v5708 = vpack.c.b16 %v5580, %v5572
  %5837 = vmatprep.subr.bf16.mxu0 %v5638
  %5838 = vmatpush1.bf16.msra.mxu0 %v5637
  %5839 = vmatprep.subr.bf16.mxu0 %v5630
  %5840 = vmatpush1.bf16.msra.mxu0 %v5629
  %5841 = vmatprep.subr.bf16.mxu0 %v5622
  %5842 = vmatpush1.bf16.msra.mxu0 %v5621
  %5843 = vmatprep.subr.bf16.mxu0 %v5614
  %5844 = vmatpush1.bf16.msra.mxu0 %v5613
  %5845 = vmatprep.subr.bf16.mxu0 %v5606
  %5846 = vmatpush1.bf16.msra.mxu0 %v5605
  %5847 = vmatprep.subr.bf16.mxu0 %v5598
  %5848 = vmatpush1.bf16.msra.mxu0 %v5597
  %5849 = vmatprep.subr.bf16.mxu0 %v5590
  %5850 = vmatpush1.bf16.msra.mxu0 %v5589
  %5851 = vmatprep.subr.bf16.mxu0 %v5582
  %5852 = vmatpush1.bf16.msra.mxu0 %v5581
  %5853 = vmatprep.subr.bf16.mxu0 %v5702
  %5854 = vmatpush2.bf16.msra.mxu0 %v5701
  %5855 = vmatprep.subr.bf16.mxu0 %v5694
  %5856 = vmatpush2.bf16.msra.mxu0 %v5693
  %5857 = vmatprep.subr.bf16.mxu0 %v5686
  %5858 = vmatpush2.bf16.msra.mxu0 %v5685
  %5859 = vmatprep.subr.bf16.mxu0 %v5678
  %5860 = vmatpush2.bf16.msra.mxu0 %v5677
  %5861 = vmatprep.subr.bf16.mxu0 %v5670
  %5862 = vmatpush2.bf16.msra.mxu0 %v5669
  %5863 = vmatprep.subr.bf16.mxu0 %v5662
  %5864 = vmatpush2.bf16.msra.mxu0 %v5661
  %5865 = vmatprep.subr.bf16.mxu0 %v5654
  %5866 = vmatpush2.bf16.msra.mxu0 %v5653
  %5867 = vmatprep.subr.bf16.mxu0 %v5646
  %5868 = vmatpush2.bf16.msra.mxu0 %v5645
  %5869 = vmatprep.mubr.bf16.mxu0 %v5068
  %5870 = vmatmul.mubr.bf16.gmra.mxu0 %v5067
  %v5871 = vpop.f32.mrf.mxu0
  %v5872 = vadd.f32 0.0, %v5871
  %v5873 = vpop.f32.mrf.mxu0
  %v5874 = vadd.f32 0.0, %v5873
  %v5875 = vpop.f32.mrf.mxu0
  %v5876 = vpop.f32.mrf.mxu0
  %5877 = vdwg.mxu0
  %5878 = vmatprep.subr.bf16.mxu0 %v5640
  %5879 = vmatpush1.bf16.msra.mxu0 %v5639
  %5880 = vmatprep.subr.bf16.mxu0 %v5632
  %5881 = vmatpush1.bf16.msra.mxu0 %v5631
  %5882 = vmatprep.subr.bf16.mxu0 %v5624
  %5883 = vmatpush1.bf16.msra.mxu0 %v5623
  %5884 = vmatprep.subr.bf16.mxu0 %v5616
  %5885 = vmatpush1.bf16.msra.mxu0 %v5615
  %5886 = vmatprep.subr.bf16.mxu0 %v5608
  %5887 = vmatpush1.bf16.msra.mxu0 %v5607
  %5888 = vmatprep.subr.bf16.mxu0 %v5600
  %5889 = vmatpush1.bf16.msra.mxu0 %v5599
  %5890 = vmatprep.subr.bf16.mxu0 %v5592
  %5891 = vmatpush1.bf16.msra.mxu0 %v5591
  %5892 = vmatprep.subr.bf16.mxu0 %v5584
  %5893 = vmatpush1.bf16.msra.mxu0 %v5583
  %5894 = vmatprep.subr.bf16.mxu0 %v5704
  %5895 = vmatpush2.bf16.msra.mxu0 %v5703
  %5896 = vmatprep.subr.bf16.mxu0 %v5696
  %5897 = vmatpush2.bf16.msra.mxu0 %v5695
  %5898 = vmatprep.subr.bf16.mxu0 %v5688
  %5899 = vmatpush2.bf16.msra.mxu0 %v5687
  %5900 = vmatprep.subr.bf16.mxu0 %v5680
  %5901 = vmatpush2.bf16.msra.mxu0 %v5679
  %5902 = vmatprep.subr.bf16.mxu0 %v5672
  %5903 = vmatpush2.bf16.msra.mxu0 %v5671
  %5904 = vmatprep.subr.bf16.mxu0 %v5664
  %5905 = vmatpush2.bf16.msra.mxu0 %v5663
  %5906 = vmatprep.subr.bf16.mxu0 %v5656
  %5907 = vmatpush2.bf16.msra.mxu0 %v5655
  %5908 = vmatprep.subr.bf16.mxu0 %v5648
  %5909 = vmatpush2.bf16.msra.mxu0 %v5647
  %5910 = vmatprep.mubr.bf16.mxu0 %v5068
  %5911 = vmatmul.mubr.bf16.gmra.mxu0 %v5067
  %v5912 = vpop.f32.mrf.mxu0
  %v5913 = vadd.f32 0.0, %v5912
  %v5914 = vpop.f32.mrf.mxu0
  %v5915 = vadd.f32 0.0, %v5914
  %v5916 = vpop.f32.mrf.mxu0
  %v5917 = vpop.f32.mrf.mxu0
  %5918 = vdwg.mxu0
  %5919 = vmatprep.subr.bf16.mxu0 %v5642
  %5920 = vmatpush1.bf16.msra.mxu0 %v5641
  %5921 = vmatprep.subr.bf16.mxu0 %v5634
  %5922 = vmatpush1.bf16.msra.mxu0 %v5633
  %5923 = vmatprep.subr.bf16.mxu0 %v5626
  %5924 = vmatpush1.bf16.msra.mxu0 %v5625
  %5925 = vmatprep.subr.bf16.mxu0 %v5618
  %5926 = vmatpush1.bf16.msra.mxu0 %v5617
  %5927 = vmatprep.subr.bf16.mxu0 %v5610
  %5928 = vmatpush1.bf16.msra.mxu0 %v5609
  %5929 = vmatprep.subr.bf16.mxu0 %v5602
  %5930 = vmatpush1.bf16.msra.mxu0 %v5601
  %5931 = vmatprep.subr.bf16.mxu0 %v5594
  %5932 = vmatpush1.bf16.msra.mxu0 %v5593
  %5933 = vmatprep.subr.bf16.mxu0 %v5586
  %5934 = vmatpush1.bf16.msra.mxu0 %v5585
  %5935 = vmatprep.subr.bf16.mxu0 %v5706
  %5936 = vmatpush2.bf16.msra.mxu0 %v5705
  %5937 = vmatprep.subr.bf16.mxu0 %v5698
  %5938 = vmatpush2.bf16.msra.mxu0 %v5697
  %5939 = vmatprep.subr.bf16.mxu0 %v5690
  %5940 = vmatpush2.bf16.msra.mxu0 %v5689
  %5941 = vmatprep.subr.bf16.mxu0 %v5682
  %5942 = vmatpush2.bf16.msra.mxu0 %v5681
  %5943 = vmatprep.subr.bf16.mxu0 %v5674
  %5944 = vmatpush2.bf16.msra.mxu0 %v5673
  %5945 = vmatprep.subr.bf16.mxu0 %v5666
  %5946 = vmatpush2.bf16.msra.mxu0 %v5665
  %5947 = vmatprep.subr.bf16.mxu0 %v5658
  %5948 = vmatpush2.bf16.msra.mxu0 %v5657
  %5949 = vmatprep.subr.bf16.mxu0 %v5650
  %5950 = vmatpush2.bf16.msra.mxu0 %v5649
  %5951 = vmatprep.mubr.bf16.mxu0 %v5068
  %5952 = vmatmul.mubr.bf16.gmra.mxu0 %v5067
  %v5953 = vpop.f32.mrf.mxu0
  %v5954 = vadd.f32 0.0, %v5953
  %v5955 = vpop.f32.mrf.mxu0
  %v5956 = vadd.f32 0.0, %v5955
  %v5957 = vpop.f32.mrf.mxu0
  %v5958 = vpop.f32.mrf.mxu0
  %5959 = vdwg.mxu0
  %5960 = vmatprep.subr.bf16.mxu0 %v5644
  %5961 = vmatpush1.bf16.msra.mxu0 %v5643
  %5962 = vmatprep.subr.bf16.mxu0 %v5636
  %5963 = vmatpush1.bf16.msra.mxu0 %v5635
  %5964 = vmatprep.subr.bf16.mxu0 %v5628
  %5965 = vmatpush1.bf16.msra.mxu0 %v5627
  %5966 = vmatprep.subr.bf16.mxu0 %v5620
  %5967 = vmatpush1.bf16.msra.mxu0 %v5619
  %5968 = vmatprep.subr.bf16.mxu0 %v5612
  %5969 = vmatpush1.bf16.msra.mxu0 %v5611
  %5970 = vmatprep.subr.bf16.mxu0 %v5604
  %5971 = vmatpush1.bf16.msra.mxu0 %v5603
  %5972 = vmatprep.subr.bf16.mxu0 %v5596
  %5973 = vmatpush1.bf16.msra.mxu0 %v5595
  %5974 = vmatprep.subr.bf16.mxu0 %v5588
  %5975 = vmatpush1.bf16.msra.mxu0 %v5587
  %5976 = vmatprep.subr.bf16.mxu0 %v5708
  %5977 = vmatpush2.bf16.msra.mxu0 %v5707
  %5978 = vmatprep.subr.bf16.mxu0 %v5700
  %5979 = vmatpush2.bf16.msra.mxu0 %v5699
  %5980 = vmatprep.subr.bf16.mxu0 %v5692
  %5981 = vmatpush2.bf16.msra.mxu0 %v5691
  %5982 = vmatprep.subr.bf16.mxu0 %v5684
  %5983 = vmatpush2.bf16.msra.mxu0 %v5683
  %5984 = vmatprep.subr.bf16.mxu0 %v5676
  %5985 = vmatpush2.bf16.msra.mxu0 %v5675
  %5986 = vmatprep.subr.bf16.mxu0 %v5668
  %5987 = vmatpush2.bf16.msra.mxu0 %v5667
  %5988 = vmatprep.subr.bf16.mxu0 %v5660
  %5989 = vmatpush2.bf16.msra.mxu0 %v5659
  %5990 = vmatprep.subr.bf16.mxu0 %v5652
  %5991 = vmatpush2.bf16.msra.mxu0 %v5651
  %5992 = vmatprep.mubr.bf16.mxu0 %v5068
  %5993 = vmatmul.mubr.bf16.gmra.mxu0 %v5067
  %v5994 = vpop.f32.mrf.mxu0
  %v5995 = vadd.f32 0.0, %v5994
  %v5996 = vpop.f32.mrf.mxu0
  %v5997 = vadd.f32 0.0, %v5996
  %v5998 = vpop.f32.mrf.mxu0
  %v5999 = vpop.f32.mrf.mxu0
  %6000 = vdwg.mxu0
  %v6001 = vld [vmem:[%s4994] sm:$0xff]
  %v6002 = vld [vmem:[%s4994 + $0x8] sm:$0xff]
  %v6003 = vunpack.c.l.bf16 %v6001
  %v6004 = vunpack.c.h.bf16 %v6001
  %v6005 = vunpack.c.l.bf16 %v6002
  %v6006 = vunpack.c.h.bf16 %v6002
  %v6007 = vadd.f32 %v6003, %v5872
  %v6008 = vadd.f32 %v6004, %v5874
  %v6009 = vadd.f32 %v6005, %v5913
  %v6010 = vadd.f32 %v6006, %v5915
  %v6011 = vld [vmem:[%s4983 + $0x10] sm:$0xff]
  %v6012 = vld [vmem:[%s4983 + $0x18] sm:$0xff]
  %v6013 = vunpack.c.l.bf16 %v6011
  %v6014 = vunpack.c.h.bf16 %v6011
  %v6015 = vunpack.c.l.bf16 %v6012
  %v6016 = vunpack.c.h.bf16 %v6012
  %v6017 = vadd.f32 %v6013, %v5954
  %v6018 = vadd.f32 %v6014, %v5956
  %v6019 = vadd.f32 %v6015, %v5995
  %v6020 = vadd.f32 %v6016, %v5997
  %v6021 = vxor.u32 %v6007, 2147483648
  %v6022 = vmul.f32 %v6021, 1.442695
  %v6023 = vpow.pop %v6022
  %v6024 = vadd.f32 %v6023, 1.0
  %v6025 = vrcp.pop %v6024
  %v6026 = vmul.f32 1.0, %v6025
  %v6027 = vxor.u32 %v6008, 2147483648
  %v6028 = vmul.f32 %v6027, 1.442695
  %v6029 = vpow.pop %v6028
  %v6030 = vadd.f32 %v6029, 1.0
  %v6031 = vrcp.pop %v6030
  %v6032 = vmul.f32 1.0, %v6031
  %v6033 = vtanh.pop %v6009
  %v6034 = vxor.u32 %v6010, 2147483648
  %v6035 = vmul.f32 %v6034, 1.442695
  %v6036 = vpow.pop %v6035
  %v6037 = vadd.f32 %v6036, 1.0
  %v6038 = vrcp.pop %v6037
  %v6039 = vmul.f32 1.0, %v6038
  %v6040 = vmul.f32 %v6032, %v5032
  %v6041 = vmul.f32 %v6026, %v6033
  %v6042 = vadd.f32 %v6040, %v6041
  %v6043 = vtanh.pop %v6042
  %v6044 = vmul.f32 %v6039, %v6043
  %v6045 = vsel %vm5006, %v6044, %v5031
  %v6046 = vsel %vm5006, %v6042, %v5032
  %v6047 = vxor.u32 %v6017, 2147483648
  %v6048 = vmul.f32 %v6047, 1.442695
  %v6049 = vpow.pop %v6048
  %v6050 = vadd.f32 %v6049, 1.0
  %v6051 = vrcp.pop %v6050
  %v6052 = vmul.f32 1.0, %v6051
  %v6053 = vxor.u32 %v6018, 2147483648
  %v6054 = vmul.f32 %v6053, 1.442695
  %v6055 = vpow.pop %v6054
  %v6056 = vadd.f32 %v6055, 1.0
  %v6057 = vrcp.pop %v6056
  %v6058 = vmul.f32 1.0, %v6057
  %v6059 = vtanh.pop %v6019
  %v6060 = vxor.u32 %v6020, 2147483648
  %v6061 = vmul.f32 %v6060, 1.442695
  %v6062 = vpow.pop %v6061
  %v6063 = vadd.f32 %v6062, 1.0
  %v6064 = vrcp.pop %v6063
  %v6065 = vmul.f32 1.0, %v6064
  %v6066 = vmul.f32 %v6058, %v5058
  %v6067 = vmul.f32 %v6052, %v6059
  %v6068 = vadd.f32 %v6066, %v6067
  %v6069 = vtanh.pop %v6068
  %v6070 = vmul.f32 %v6065, %v6069
  %v6071 = vsel %vm5005, %v6070, %v5057
  %v6072 = vsel %vm5005, %v6068, %v5058
  %v6073 = vsel %vm5006, %v6044, 0.0
  %v6074 = vpack.c.bf16 %v6073, %v6073
  %6075 = vst [vmem:[%s5065] sm:$0xf] %v6074
  %v6076 = vsel %vm5005, %v6070, 0.0
  %v6077 = vpack.c.bf16 %v6076, %v6076
  %6078 = vst [vmem:[%s5061 + $0x4] sm:$0xf] %v6077
  %v6079 = vpack.c.bf16 %v6045, %v6045
  %v6080 = vpack.c.bf16 %v6071, %v6071
  %v6081 = vld [vmem:[%s4] sm:$0xff]
  %v6082 = vld [vmem:[%s4 + $0x8] sm:$0xff]
  %v6083 = vld [vmem:[%s4 + $0x10] sm:$0xff]
  %v6084 = vld [vmem:[%s4 + $0x18] sm:$0xff]
  %v6085 = vld [vmem:[%s4 + $0x20] sm:$0xff]
  %v6086 = vld [vmem:[%s4 + $0x28] sm:$0xff]
  %v6087 = vld [vmem:[%s4 + $0x30] sm:$0xff]
  %v6088 = vld [vmem:[%s4 + $0x38] sm:$0xff]
  %v6089 = vld [vmem:[%s4 + $0x40] sm:$0xff]
  %v6090 = vld [vmem:[%s4 + $0x48] sm:$0xff]
  %v6091 = vld [vmem:[%s4 + $0x50] sm:$0xff]
  %v6092 = vld [vmem:[%s4 + $0x58] sm:$0xff]
  %v6093 = vld [vmem:[%s4 + $0x60] sm:$0xff]
  %v6094 = vld [vmem:[%s4 + $0x68] sm:$0xff]
  %v6095 = vld [vmem:[%s4 + $0x70] sm:$0xff]
  %v6096 = vld [vmem:[%s4 + $0x78] sm:$0xff]
  %v6097 = vld [vmem:[%s4 + $0x80] sm:$0xff]
  %v6098 = vld [vmem:[%s4 + $0x88] sm:$0xff]
  %v6099 = vld [vmem:[%s4 + $0x90] sm:$0xff]
  %v6100 = vld [vmem:[%s4 + $0x98] sm:$0xff]
  %v6101 = vld [vmem:[%s4 + $0xa0] sm:$0xff]
  %v6102 = vld [vmem:[%s4 + $0xa8] sm:$0xff]
  %v6103 = vld [vmem:[%s4 + $0xb0] sm:$0xff]
  %v6104 = vld [vmem:[%s4 + $0xb8] sm:$0xff]
  %v6105 = vld [vmem:[%s4 + $0xc0] sm:$0xff]
  %v6106 = vld [vmem:[%s4 + $0xc8] sm:$0xff]
  %v6107 = vld [vmem:[%s4 + $0xd0] sm:$0xff]
  %v6108 = vld [vmem:[%s4 + $0xd8] sm:$0xff]
  %v6109 = vld [vmem:[%s4 + $0xe0] sm:$0xff]
  %v6110 = vld [vmem:[%s4 + $0xe8] sm:$0xff]
  %v6111 = vld [vmem:[%s4 + $0xf0] sm:$0xff]
  %v6112 = vld [vmem:[%s4 + $0xf8] sm:$0xff]
  %v6113 = vld [vmem:[%s4 + $0x100] sm:$0xff]
  %v6114 = vld [vmem:[%s4 + $0x108] sm:$0xff]
  %v6115 = vld [vmem:[%s4 + $0x110] sm:$0xff]
  %v6116 = vld [vmem:[%s4 + $0x118] sm:$0xff]
  %v6117 = vld [vmem:[%s4 + $0x120] sm:$0xff]
  %v6118 = vld [vmem:[%s4 + $0x128] sm:$0xff]
  %v6119 = vld [vmem:[%s4 + $0x130] sm:$0xff]
  %v6120 = vld [vmem:[%s4 + $0x138] sm:$0xff]
  %v6121 = vld [vmem:[%s4 + $0x140] sm:$0xff]
  %v6122 = vld [vmem:[%s4 + $0x148] sm:$0xff]
  %v6123 = vld [vmem:[%s4 + $0x150] sm:$0xff]
  %v6124 = vld [vmem:[%s4 + $0x158] sm:$0xff]
  %v6125 = vld [vmem:[%s4 + $0x160] sm:$0xff]
  %v6126 = vld [vmem:[%s4 + $0x168] sm:$0xff]
  %v6127 = vld [vmem:[%s4 + $0x170] sm:$0xff]
  %v6128 = vld [vmem:[%s4 + $0x178] sm:$0xff]
  %v6129 = vld [vmem:[%s4 + $0x180] sm:$0xff]
  %v6130 = vld [vmem:[%s4 + $0x188] sm:$0xff]
  %v6131 = vld [vmem:[%s4 + $0x190] sm:$0xff]
  %v6132 = vld [vmem:[%s4 + $0x198] sm:$0xff]
  %v6133 = vld [vmem:[%s4 + $0x1a0] sm:$0xff]
  %v6134 = vld [vmem:[%s4 + $0x1a8] sm:$0xff]
  %v6135 = vld [vmem:[%s4 + $0x1b0] sm:$0xff]
  %v6136 = vld [vmem:[%s4 + $0x1b8] sm:$0xff]
  %v6137 = vld [vmem:[%s4 + $0x1c0] sm:$0xff]
  %v6138 = vld [vmem:[%s4 + $0x1c8] sm:$0xff]
  %v6139 = vld [vmem:[%s4 + $0x1d0] sm:$0xff]
  %v6140 = vld [vmem:[%s4 + $0x1d8] sm:$0xff]
  %v6141 = vld [vmem:[%s4 + $0x1e0] sm:$0xff]
  %v6142 = vld [vmem:[%s4 + $0x1e8] sm:$0xff]
  %v6143 = vld [vmem:[%s4 + $0x1f0] sm:$0xff]
  %v6144 = vld [vmem:[%s4 + $0x1f8] sm:$0xff]
  %v6145 = vld [vmem:[%s4 + $0x200] sm:$0xff]
  %v6146 = vld [vmem:[%s4 + $0x208] sm:$0xff]
  %v6147 = vld [vmem:[%s4 + $0x210] sm:$0xff]
  %v6148 = vld [vmem:[%s4 + $0x218] sm:$0xff]
  %v6149 = vld [vmem:[%s4 + $0x220] sm:$0xff]
  %v6150 = vld [vmem:[%s4 + $0x228] sm:$0xff]
  %v6151 = vld [vmem:[%s4 + $0x230] sm:$0xff]
  %v6152 = vld [vmem:[%s4 + $0x238] sm:$0xff]
  %v6153 = vld [vmem:[%s4 + $0x240] sm:$0xff]
  %v6154 = vld [vmem:[%s4 + $0x248] sm:$0xff]
  %v6155 = vld [vmem:[%s4 + $0x250] sm:$0xff]
  %v6156 = vld [vmem:[%s4 + $0x258] sm:$0xff]
  %v6157 = vld [vmem:[%s4 + $0x260] sm:$0xff]
  %v6158 = vld [vmem:[%s4 + $0x268] sm:$0xff]
  %v6159 = vld [vmem:[%s4 + $0x270] sm:$0xff]
  %v6160 = vld [vmem:[%s4 + $0x278] sm:$0xff]
  %v6161 = vld [vmem:[%s4 + $0x280] sm:$0xff]
  %v6162 = vld [vmem:[%s4 + $0x288] sm:$0xff]
  %v6163 = vld [vmem:[%s4 + $0x290] sm:$0xff]
  %v6164 = vld [vmem:[%s4 + $0x298] sm:$0xff]
  %v6165 = vld [vmem:[%s4 + $0x2a0] sm:$0xff]
  %v6166 = vld [vmem:[%s4 + $0x2a8] sm:$0xff]
  %v6167 = vld [vmem:[%s4 + $0x2b0] sm:$0xff]
  %v6168 = vld [vmem:[%s4 + $0x2b8] sm:$0xff]
  %v6169 = vld [vmem:[%s4 + $0x2c0] sm:$0xff]
  %v6170 = vld [vmem:[%s4 + $0x2c8] sm:$0xff]
  %v6171 = vld [vmem:[%s4 + $0x2d0] sm:$0xff]
  %v6172 = vld [vmem:[%s4 + $0x2d8] sm:$0xff]
  %v6173 = vld [vmem:[%s4 + $0x2e0] sm:$0xff]
  %v6174 = vld [vmem:[%s4 + $0x2e8] sm:$0xff]
  %v6175 = vld [vmem:[%s4 + $0x2f0] sm:$0xff]
  %v6176 = vld [vmem:[%s4 + $0x2f8] sm:$0xff]
  %v6177 = vld [vmem:[%s4 + $0x300] sm:$0xff]
  %v6178 = vld [vmem:[%s4 + $0x308] sm:$0xff]
  %v6179 = vld [vmem:[%s4 + $0x310] sm:$0xff]
  %v6180 = vld [vmem:[%s4 + $0x318] sm:$0xff]
  %v6181 = vld [vmem:[%s4 + $0x320] sm:$0xff]
  %v6182 = vld [vmem:[%s4 + $0x328] sm:$0xff]
  %v6183 = vld [vmem:[%s4 + $0x330] sm:$0xff]
  %v6184 = vld [vmem:[%s4 + $0x338] sm:$0xff]
  %v6185 = vld [vmem:[%s4 + $0x340] sm:$0xff]
  %v6186 = vld [vmem:[%s4 + $0x348] sm:$0xff]
  %v6187 = vld [vmem:[%s4 + $0x350] sm:$0xff]
  %v6188 = vld [vmem:[%s4 + $0x358] sm:$0xff]
  %v6189 = vld [vmem:[%s4 + $0x360] sm:$0xff]
  %v6190 = vld [vmem:[%s4 + $0x368] sm:$0xff]
  %v6191 = vld [vmem:[%s4 + $0x370] sm:$0xff]
  %v6192 = vld [vmem:[%s4 + $0x378] sm:$0xff]
  %v6193 = vld [vmem:[%s4 + $0x380] sm:$0xff]
  %v6194 = vld [vmem:[%s4 + $0x388] sm:$0xff]
  %v6195 = vld [vmem:[%s4 + $0x390] sm:$0xff]
  %v6196 = vld [vmem:[%s4 + $0x398] sm:$0xff]
  %v6197 = vld [vmem:[%s4 + $0x3a0] sm:$0xff]
  %v6198 = vld [vmem:[%s4 + $0x3a8] sm:$0xff]
  %v6199 = vld [vmem:[%s4 + $0x3b0] sm:$0xff]
  %v6200 = vld [vmem:[%s4 + $0x3b8] sm:$0xff]
  %v6201 = vld [vmem:[%s4 + $0x3c0] sm:$0xff]
  %v6202 = vld [vmem:[%s4 + $0x3c8] sm:$0xff]
  %v6203 = vld [vmem:[%s4 + $0x3d0] sm:$0xff]
  %v6204 = vld [vmem:[%s4 + $0x3d8] sm:$0xff]
  %v6205 = vld [vmem:[%s4 + $0x3e0] sm:$0xff]
  %v6206 = vld [vmem:[%s4 + $0x3e8] sm:$0xff]
  %v6207 = vld [vmem:[%s4 + $0x3f0] sm:$0xff]
  %v6208 = vld [vmem:[%s4 + $0x3f8] sm:$0xff]
  %v6337 = vunpack.c.l.b16 %v6081
  %v6338 = vunpack.c.h.b16 %v6081
  %v6339 = vunpack.c.l.b16 %v6082
  %v6340 = vunpack.c.h.b16 %v6082
  %v6341 = vunpack.c.l.b16 %v6083
  %v6342 = vunpack.c.h.b16 %v6083
  %v6343 = vunpack.c.l.b16 %v6084
  %v6344 = vunpack.c.h.b16 %v6084
  %v6345 = vunpack.c.l.b16 %v6085
  %v6346 = vunpack.c.h.b16 %v6085
  %v6347 = vunpack.c.l.b16 %v6086
  %v6348 = vunpack.c.h.b16 %v6086
  %v6349 = vunpack.c.l.b16 %v6087
  %v6350 = vunpack.c.h.b16 %v6087
  %v6351 = vunpack.c.l.b16 %v6088
  %v6352 = vunpack.c.h.b16 %v6088
  %v6353 = vunpack.c.l.b16 %v6089
  %v6354 = vunpack.c.h.b16 %v6089
  %v6355 = vunpack.c.l.b16 %v6090
  %v6356 = vunpack.c.h.b16 %v6090
  %v6357 = vunpack.c.l.b16 %v6091
  %v6358 = vunpack.c.h.b16 %v6091
  %v6359 = vunpack.c.l.b16 %v6092
  %v6360 = vunpack.c.h.b16 %v6092
  %v6361 = vunpack.c.l.b16 %v6093
  %v6362 = vunpack.c.h.b16 %v6093
  %v6363 = vunpack.c.l.b16 %v6094
  %v6364 = vunpack.c.h.b16 %v6094
  %v6365 = vunpack.c.l.b16 %v6095
  %v6366 = vunpack.c.h.b16 %v6095
  %v6367 = vunpack.c.l.b16 %v6096
  %v6368 = vunpack.c.h.b16 %v6096
  %v6369 = vunpack.c.l.b16 %v6097
  %v6370 = vunpack.c.h.b16 %v6097
  %v6371 = vunpack.c.l.b16 %v6098
  %v6372 = vunpack.c.h.b16 %v6098
  %v6373 = vunpack.c.l.b16 %v6099
  %v6374 = vunpack.c.h.b16 %v6099
  %v6375 = vunpack.c.l.b16 %v6100
  %v6376 = vunpack.c.h.b16 %v6100
  %v6377 = vunpack.c.l.b16 %v6101
  %v6378 = vunpack.c.h.b16 %v6101
  %v6379 = vunpack.c.l.b16 %v6102
  %v6380 = vunpack.c.h.b16 %v6102
  %v6381 = vunpack.c.l.b16 %v6103
  %v6382 = vunpack.c.h.b16 %v6103
  %v6383 = vunpack.c.l.b16 %v6104
  %v6384 = vunpack.c.h.b16 %v6104
  %v6385 = vunpack.c.l.b16 %v6105
  %v6386 = vunpack.c.h.b16 %v6105
  %v6387 = vunpack.c.l.b16 %v6106
  %v6388 = vunpack.c.h.b16 %v6106
  %v6389 = vunpack.c.l.b16 %v6107
  %v6390 = vunpack.c.h.b16 %v6107
  %v6391 = vunpack.c.l.b16 %v6108
  %v6392 = vunpack.c.h.b16 %v6108
  %v6393 = vunpack.c.l.b16 %v6109
  %v6394 = vunpack.c.h.b16 %v6109
  %v6395 = vunpack.c.l.b16 %v6110
  %v6396 = vunpack.c.h.b16 %v6110
  %v6397 = vunpack.c.l.b16 %v6111
  %v6398 = vunpack.c.h.b16 %v6111
  %v6399 = vunpack.c.l.b16 %v6112
  %v6400 = vunpack.c.h.b16 %v6112
  %v6401 = vunpack.c.l.b16 %v6113
  %v6402 = vunpack.c.h.b16 %v6113
  %v6403 = vunpack.c.l.b16 %v6114
  %v6404 = vunpack.c.h.b16 %v6114
  %v6405 = vunpack.c.l.b16 %v6115
  %v6406 = vunpack.c.h.b16 %v6115
  %v6407 = vunpack.c.l.b16 %v6116
  %v6408 = vunpack.c.h.b16 %v6116
  %v6409 = vunpack.c.l.b16 %v6117
  %v6410 = vunpack.c.h.b16 %v6117
  %v6411 = vunpack.c.l.b16 %v6118
  %v6412 = vunpack.c.h.b16 %v6118
  %v6413 = vunpack.c.l.b16 %v6119
  %v6414 = vunpack.c.h.b16 %v6119
  %v6415 = vunpack.c.l.b16 %v6120
  %v6416 = vunpack.c.h.b16 %v6120
  %v6417 = vunpack.c.l.b16 %v6121
  %v6418 = vunpack.c.h.b16 %v6121
  %v6419 = vunpack.c.l.b16 %v6122
  %v6420 = vunpack.c.h.b16 %v6122
  %v6421 = vunpack.c.l.b16 %v6123
  %v6422 = vunpack.c.h.b16 %v6123
  %v6423 = vunpack.c.l.b16 %v6124
  %v6424 = vunpack.c.h.b16 %v6124
  %v6425 = vunpack.c.l.b16 %v6125
  %v6426 = vunpack.c.h.b16 %v6125
  %v6427 = vunpack.c.l.b16 %v6126
  %v6428 = vunpack.c.h.b16 %v6126
  %v6429 = vunpack.c.l.b16 %v6127
  %v6430 = vunpack.c.h.b16 %v6127
  %v6431 = vunpack.c.l.b16 %v6128
  %v6432 = vunpack.c.h.b16 %v6128
  %v6433 = vunpack.c.l.b16 %v6129
  %v6434 = vunpack.c.h.b16 %v6129
  %v6435 = vunpack.c.l.b16 %v6130
  %v6436 = vunpack.c.h.b16 %v6130
  %v6437 = vunpack.c.l.b16 %v6131
  %v6438 = vunpack.c.h.b16 %v6131
  %v6439 = vunpack.c.l.b16 %v6132
  %v6440 = vunpack.c.h.b16 %v6132
  %v6441 = vunpack.c.l.b16 %v6133
  %v6442 = vunpack.c.h.b16 %v6133
  %v6443 = vunpack.c.l.b16 %v6134
  %v6444 = vunpack.c.h.b16 %v6134
  %v6445 = vunpack.c.l.b16 %v6135
  %v6446 = vunpack.c.h.b16 %v6135
  %v6447 = vunpack.c.l.b16 %v6136
  %v6448 = vunpack.c.h.b16 %v6136
  %v6449 = vunpack.c.l.b16 %v6137
  %v6450 = vunpack.c.h.b16 %v6137
  %v6451 = vunpack.c.l.b16 %v6138
  %v6452 = vunpack.c.h.b16 %v6138
  %v6453 = vunpack.c.l.b16 %v6139
  %v6454 = vunpack.c.h.b16 %v6139
  %v6455 = vunpack.c.l.b16 %v6140
  %v6456 = vunpack.c.h.b16 %v6140
  %v6457 = vunpack.c.l.b16 %v6141
  %v6458 = vunpack.c.h.b16 %v6141
  %v6459 = vunpack.c.l.b16 %v6142
  %v6460 = vunpack.c.h.b16 %v6142
  %v6461 = vunpack.c.l.b16 %v6143
  %v6462 = vunpack.c.h.b16 %v6143
  %v6463 = vunpack.c.l.b16 %v6144
  %v6464 = vunpack.c.h.b16 %v6144
  %v6465 = vunpack.c.l.b16 %v6145
  %v6466 = vunpack.c.h.b16 %v6145
  %v6467 = vunpack.c.l.b16 %v6146
  %v6468 = vunpack.c.h.b16 %v6146
  %v6469 = vunpack.c.l.b16 %v6147
  %v6470 = vunpack.c.h.b16 %v6147
  %v6471 = vunpack.c.l.b16 %v6148
  %v6472 = vunpack.c.h.b16 %v6148
  %v6473 = vunpack.c.l.b16 %v6149
  %v6474 = vunpack.c.h.b16 %v6149
  %v6475 = vunpack.c.l.b16 %v6150
  %v6476 = vunpack.c.h.b16 %v6150
  %v6477 = vunpack.c.l.b16 %v6151
  %v6478 = vunpack.c.h.b16 %v6151
  %v6479 = vunpack.c.l.b16 %v6152
  %v6480 = vunpack.c.h.b16 %v6152
  %v6481 = vunpack.c.l.b16 %v6153
  %v6482 = vunpack.c.h.b16 %v6153
  %v6483 = vunpack.c.l.b16 %v6154
  %v6484 = vunpack.c.h.b16 %v6154
  %v6485 = vunpack.c.l.b16 %v6155
  %v6486 = vunpack.c.h.b16 %v6155
  %v6487 = vunpack.c.l.b16 %v6156
  %v6488 = vunpack.c.h.b16 %v6156
  %v6489 = vunpack.c.l.b16 %v6157
  %v6490 = vunpack.c.h.b16 %v6157
  %v6491 = vunpack.c.l.b16 %v6158
  %v6492 = vunpack.c.h.b16 %v6158
  %v6493 = vunpack.c.l.b16 %v6159
  %v6494 = vunpack.c.h.b16 %v6159
  %v6495 = vunpack.c.l.b16 %v6160
  %v6496 = vunpack.c.h.b16 %v6160
  %v6497 = vunpack.c.l.b16 %v6161
  %v6498 = vunpack.c.h.b16 %v6161
  %v6499 = vunpack.c.l.b16 %v6162
  %v6500 = vunpack.c.h.b16 %v6162
  %v6501 = vunpack.c.l.b16 %v6163
  %v6502 = vunpack.c.h.b16 %v6163
  %v6503 = vunpack.c.l.b16 %v6164
  %v6504 = vunpack.c.h.b16 %v6164
  %v6505 = vunpack.c.l.b16 %v6165
  %v6506 = vunpack.c.h.b16 %v6165
  %v6507 = vunpack.c.l.b16 %v6166
  %v6508 = vunpack.c.h.b16 %v6166
  %v6509 = vunpack.c.l.b16 %v6167
  %v6510 = vunpack.c.h.b16 %v6167
  %v6511 = vunpack.c.l.b16 %v6168
  %v6512 = vunpack.c.h.b16 %v6168
  %v6513 = vunpack.c.l.b16 %v6169
  %v6514 = vunpack.c.h.b16 %v6169
  %v6515 = vunpack.c.l.b16 %v6170
  %v6516 = vunpack.c.h.b16 %v6170
  %v6517 = vunpack.c.l.b16 %v6171
  %v6518 = vunpack.c.h.b16 %v6171
  %v6519 = vunpack.c.l.b16 %v6172
  %v6520 = vunpack.c.h.b16 %v6172
  %v6521 = vunpack.c.l.b16 %v6173
  %v6522 = vunpack.c.h.b16 %v6173
  %v6523 = vunpack.c.l.b16 %v6174
  %v6524 = vunpack.c.h.b16 %v6174
  %v6525 = vunpack.c.l.b16 %v6175
  %v6526 = vunpack.c.h.b16 %v6175
  %v6527 = vunpack.c.l.b16 %v6176
  %v6528 = vunpack.c.h.b16 %v6176
  %v6529 = vunpack.c.l.b16 %v6177
  %v6530 = vunpack.c.h.b16 %v6177
  %v6531 = vunpack.c.l.b16 %v6178
  %v6532 = vunpack.c.h.b16 %v6178
  %v6533 = vunpack.c.l.b16 %v6179
  %v6534 = vunpack.c.h.b16 %v6179
  %v6535 = vunpack.c.l.b16 %v6180
  %v6536 = vunpack.c.h.b16 %v6180
  %v6537 = vunpack.c.l.b16 %v6181
  %v6538 = vunpack.c.h.b16 %v6181
  %v6539 = vunpack.c.l.b16 %v6182
  %v6540 = vunpack.c.h.b16 %v6182
  %v6541 = vunpack.c.l.b16 %v6183
  %v6542 = vunpack.c.h.b16 %v6183
  %v6543 = vunpack.c.l.b16 %v6184
  %v6544 = vunpack.c.h.b16 %v6184
  %v6545 = vunpack.c.l.b16 %v6185
  %v6546 = vunpack.c.h.b16 %v6185
  %v6547 = vunpack.c.l.b16 %v6186
  %v6548 = vunpack.c.h.b16 %v6186
  %v6549 = vunpack.c.l.b16 %v6187
  %v6550 = vunpack.c.h.b16 %v6187
  %v6551 = vunpack.c.l.b16 %v6188
  %v6552 = vunpack.c.h.b16 %v6188
  %v6553 = vunpack.c.l.b16 %v6189
  %v6554 = vunpack.c.h.b16 %v6189
  %v6555 = vunpack.c.l.b16 %v6190
  %v6556 = vunpack.c.h.b16 %v6190
  %v6557 = vunpack.c.l.b16 %v6191
  %v6558 = vunpack.c.h.b16 %v6191
  %v6559 = vunpack.c.l.b16 %v6192
  %v6560 = vunpack.c.h.b16 %v6192
  %v6561 = vunpack.c.l.b16 %v6193
  %v6562 = vunpack.c.h.b16 %v6193
  %v6563 = vunpack.c.l.b16 %v6194
  %v6564 = vunpack.c.h.b16 %v6194
  %v6565 = vunpack.c.l.b16 %v6195
  %v6566 = vunpack.c.h.b16 %v6195
  %v6567 = vunpack.c.l.b16 %v6196
  %v6568 = vunpack.c.h.b16 %v6196
  %v6569 = vunpack.c.l.b16 %v6197
  %v6570 = vunpack.c.h.b16 %v6197
  %v6571 = vunpack.c.l.b16 %v6198
  %v6572 = vunpack.c.h.b16 %v6198
  %v6573 = vunpack.c.l.b16 %v6199
  %v6574 = vunpack.c.h.b16 %v6199
  %v6575 = vunpack.c.l.b16 %v6200
  %v6576 = vunpack.c.h.b16 %v6200
  %v6577 = vunpack.c.l.b16 %v6201
  %v6578 = vunpack.c.h.b16 %v6201
  %v6579 = vunpack.c.l.b16 %v6202
  %v6580 = vunpack.c.h.b16 %v6202
  %v6581 = vunpack.c.l.b16 %v6203
  %v6582 = vunpack.c.h.b16 %v6203
  %v6583 = vunpack.c.l.b16 %v6204
  %v6584 = vunpack.c.h.b16 %v6204
  %v6585 = vunpack.c.l.b16 %v6205
  %v6586 = vunpack.c.h.b16 %v6205
  %v6587 = vunpack.c.l.b16 %v6206
  %v6588 = vunpack.c.h.b16 %v6206
  %v6589 = vunpack.c.l.b16 %v6207
  %v6590 = vunpack.c.h.b16 %v6207
  %v6591 = vunpack.c.l.b16 %v6208
  %v6592 = vunpack.c.h.b16 %v6208
  %v6593 = vpack.c.b16 %v6345, %v6337
  %v6594 = vpack.c.b16 %v6346, %v6338
  %v6595 = vpack.c.b16 %v6347, %v6339
  %v6596 = vpack.c.b16 %v6348, %v6340
  %v6597 = vpack.c.b16 %v6349, %v6341
  %v6598 = vpack.c.b16 %v6350, %v6342
  %v6599 = vpack.c.b16 %v6351, %v6343
  %v6600 = vpack.c.b16 %v6352, %v6344
  %v6601 = vpack.c.b16 %v6361, %v6353
  %v6602 = vpack.c.b16 %v6362, %v6354
  %v6603 = vpack.c.b16 %v6363, %v6355
  %v6604 = vpack.c.b16 %v6364, %v6356
  %v6605 = vpack.c.b16 %v6365, %v6357
  %v6606 = vpack.c.b16 %v6366, %v6358
  %v6607 = vpack.c.b16 %v6367, %v6359
  %v6608 = vpack.c.b16 %v6368, %v6360
  %v6609 = vpack.c.b16 %v6377, %v6369
  %v6610 = vpack.c.b16 %v6378, %v6370
  %v6611 = vpack.c.b16 %v6379, %v6371
  %v6612 = vpack.c.b16 %v6380, %v6372
  %v6613 = vpack.c.b16 %v6381, %v6373
  %v6614 = vpack.c.b16 %v6382, %v6374
  %v6615 = vpack.c.b16 %v6383, %v6375
  %v6616 = vpack.c.b16 %v6384, %v6376
  %v6617 = vpack.c.b16 %v6393, %v6385
  %v6618 = vpack.c.b16 %v6394, %v6386
  %v6619 = vpack.c.b16 %v6395, %v6387
  %v6620 = vpack.c.b16 %v6396, %v6388
  %v6621 = vpack.c.b16 %v6397, %v6389
  %v6622 = vpack.c.b16 %v6398, %v6390
  %v6623 = vpack.c.b16 %v6399, %v6391
  %v6624 = vpack.c.b16 %v6400, %v6392
  %v6625 = vpack.c.b16 %v6409, %v6401
  %v6626 = vpack.c.b16 %v6410, %v6402
  %v6627 = vpack.c.b16 %v6411, %v6403
  %v6628 = vpack.c.b16 %v6412, %v6404
  %v6629 = vpack.c.b16 %v6413, %v6405
  %v6630 = vpack.c.b16 %v6414, %v6406
  %v6631 = vpack.c.b16 %v6415, %v6407
  %v6632 = vpack.c.b16 %v6416, %v6408
  %v6633 = vpack.c.b16 %v6425, %v6417
  %v6634 = vpack.c.b16 %v6426, %v6418
  %v6635 = vpack.c.b16 %v6427, %v6419
  %v6636 = vpack.c.b16 %v6428, %v6420
  %v6637 = vpack.c.b16 %v6429, %v6421
  %v6638 = vpack.c.b16 %v6430, %v6422
  %v6639 = vpack.c.b16 %v6431, %v6423
  %v6640 = vpack.c.b16 %v6432, %v6424
  %v6641 = vpack.c.b16 %v6441, %v6433
  %v6642 = vpack.c.b16 %v6442, %v6434
  %v6643 = vpack.c.b16 %v6443, %v6435
  %v6644 = vpack.c.b16 %v6444, %v6436
  %v6645 = vpack.c.b16 %v6445, %v6437
  %v6646 = vpack.c.b16 %v6446, %v6438
  %v6647 = vpack.c.b16 %v6447, %v6439
  %v6648 = vpack.c.b16 %v6448, %v6440
  %v6649 = vpack.c.b16 %v6457, %v6449
  %v6650 = vpack.c.b16 %v6458, %v6450
  %v6651 = vpack.c.b16 %v6459, %v6451
  %v6652 = vpack.c.b16 %v6460, %v6452
  %v6653 = vpack.c.b16 %v6461, %v6453
  %v6654 = vpack.c.b16 %v6462, %v6454
  %v6655 = vpack.c.b16 %v6463, %v6455
  %v6656 = vpack.c.b16 %v6464, %v6456
  %v6657 = vpack.c.b16 %v6473, %v6465
  %v6658 = vpack.c.b16 %v6474, %v6466
  %v6659 = vpack.c.b16 %v6475, %v6467
  %v6660 = vpack.c.b16 %v6476, %v6468
  %v6661 = vpack.c.b16 %v6477, %v6469
  %v6662 = vpack.c.b16 %v6478, %v6470
  %v6663 = vpack.c.b16 %v6479, %v6471
  %v6664 = vpack.c.b16 %v6480, %v6472
  %v6665 = vpack.c.b16 %v6489, %v6481
  %v6666 = vpack.c.b16 %v6490, %v6482
  %v6667 = vpack.c.b16 %v6491, %v6483
  %v6668 = vpack.c.b16 %v6492, %v6484
  %v6669 = vpack.c.b16 %v6493, %v6485
  %v6670 = vpack.c.b16 %v6494, %v6486
  %v6671 = vpack.c.b16 %v6495, %v6487
  %v6672 = vpack.c.b16 %v6496, %v6488
  %v6673 = vpack.c.b16 %v6505, %v6497
  %v6674 = vpack.c.b16 %v6506, %v6498
  %v6675 = vpack.c.b16 %v6507, %v6499
  %v6676 = vpack.c.b16 %v6508, %v6500
  %v6677 = vpack.c.b16 %v6509, %v6501
  %v6678 = vpack.c.b16 %v6510, %v6502
  %v6679 = vpack.c.b16 %v6511, %v6503
  %v6680 = vpack.c.b16 %v6512, %v6504
  %v6681 = vpack.c.b16 %v6521, %v6513
  %v6682 = vpack.c.b16 %v6522, %v6514
  %v6683 = vpack.c.b16 %v6523, %v6515
  %v6684 = vpack.c.b16 %v6524, %v6516
  %v6685 = vpack.c.b16 %v6525, %v6517
  %v6686 = vpack.c.b16 %v6526, %v6518
  %v6687 = vpack.c.b16 %v6527, %v6519
  %v6688 = vpack.c.b16 %v6528, %v6520
  %v6689 = vpack.c.b16 %v6537, %v6529
  %v6690 = vpack.c.b16 %v6538, %v6530
  %v6691 = vpack.c.b16 %v6539, %v6531
  %v6692 = vpack.c.b16 %v6540, %v6532
  %v6693 = vpack.c.b16 %v6541, %v6533
  %v6694 = vpack.c.b16 %v6542, %v6534
  %v6695 = vpack.c.b16 %v6543, %v6535
  %v6696 = vpack.c.b16 %v6544, %v6536
  %v6697 = vpack.c.b16 %v6553, %v6545
  %v6698 = vpack.c.b16 %v6554, %v6546
  %v6699 = vpack.c.b16 %v6555, %v6547
  %v6700 = vpack.c.b16 %v6556, %v6548
  %v6701 = vpack.c.b16 %v6557, %v6549
  %v6702 = vpack.c.b16 %v6558, %v6550
  %v6703 = vpack.c.b16 %v6559, %v6551
  %v6704 = vpack.c.b16 %v6560, %v6552
  %v6705 = vpack.c.b16 %v6569, %v6561
  %v6706 = vpack.c.b16 %v6570, %v6562
  %v6707 = vpack.c.b16 %v6571, %v6563
  %v6708 = vpack.c.b16 %v6572, %v6564
  %v6709 = vpack.c.b16 %v6573, %v6565
  %v6710 = vpack.c.b16 %v6574, %v6566
  %v6711 = vpack.c.b16 %v6575, %v6567
  %v6712 = vpack.c.b16 %v6576, %v6568
  %v6713 = vpack.c.b16 %v6585, %v6577
  %v6714 = vpack.c.b16 %v6586, %v6578
  %v6715 = vpack.c.b16 %v6587, %v6579
  %v6716 = vpack.c.b16 %v6588, %v6580
  %v6717 = vpack.c.b16 %v6589, %v6581
  %v6718 = vpack.c.b16 %v6590, %v6582
  %v6719 = vpack.c.b16 %v6591, %v6583
  %v6720 = vpack.c.b16 %v6592, %v6584
  %6849 = vmatprep.subr.bf16.mxu0 %v6650
  %6850 = vmatpush1.bf16.msra.mxu0 %v6649
  %6851 = vmatprep.subr.bf16.mxu0 %v6642
  %6852 = vmatpush1.bf16.msra.mxu0 %v6641
  %6853 = vmatprep.subr.bf16.mxu0 %v6634
  %6854 = vmatpush1.bf16.msra.mxu0 %v6633
  %6855 = vmatprep.subr.bf16.mxu0 %v6626
  %6856 = vmatpush1.bf16.msra.mxu0 %v6625
  %6857 = vmatprep.subr.bf16.mxu0 %v6618
  %6858 = vmatpush1.bf16.msra.mxu0 %v6617
  %6859 = vmatprep.subr.bf16.mxu0 %v6610
  %6860 = vmatpush1.bf16.msra.mxu0 %v6609
  %6861 = vmatprep.subr.bf16.mxu0 %v6602
  %6862 = vmatpush1.bf16.msra.mxu0 %v6601
  %6863 = vmatprep.subr.bf16.mxu0 %v6594
  %6864 = vmatpush1.bf16.msra.mxu0 %v6593
  %6865 = vmatprep.subr.bf16.mxu0 %v6714
  %6866 = vmatpush2.bf16.msra.mxu0 %v6713
  %6867 = vmatprep.subr.bf16.mxu0 %v6706
  %6868 = vmatpush2.bf16.msra.mxu0 %v6705
  %6869 = vmatprep.subr.bf16.mxu0 %v6698
  %6870 = vmatpush2.bf16.msra.mxu0 %v6697
  %6871 = vmatprep.subr.bf16.mxu0 %v6690
  %6872 = vmatpush2.bf16.msra.mxu0 %v6689
  %6873 = vmatprep.subr.bf16.mxu0 %v6682
  %6874 = vmatpush2.bf16.msra.mxu0 %v6681
  %6875 = vmatprep.subr.bf16.mxu0 %v6674
  %6876 = vmatpush2.bf16.msra.mxu0 %v6673
  %6877 = vmatprep.subr.bf16.mxu0 %v6666
  %6878 = vmatpush2.bf16.msra.mxu0 %v6665
  %6879 = vmatprep.subr.bf16.mxu0 %v6658
  %6880 = vmatpush2.bf16.msra.mxu0 %v6657
  %6881 = vmatprep.mubr.bf16.mxu0 %v6080
  %6882 = vmatmul.mubr.bf16.gmra.mxu0 %v6079
  %v6883 = vpop.f32.mrf.mxu0
  %v6884 = vadd.f32 0.0, %v6883
  %v6885 = vpop.f32.mrf.mxu0
  %v6886 = vadd.f32 0.0, %v6885
  %v6887 = vpop.f32.mrf.mxu0
  %v6888 = vpop.f32.mrf.mxu0
  %6889 = vdwg.mxu0
  %6890 = vmatprep.subr.bf16.mxu0 %v6652
  %6891 = vmatpush1.bf16.msra.mxu0 %v6651
  %6892 = vmatprep.subr.bf16.mxu0 %v6644
  %6893 = vmatpush1.bf16.msra.mxu0 %v6643
  %6894 = vmatprep.subr.bf16.mxu0 %v6636
  %6895 = vmatpush1.bf16.msra.mxu0 %v6635
  %6896 = vmatprep.subr.bf16.mxu0 %v6628
  %6897 = vmatpush1.bf16.msra.mxu0 %v6627
  %6898 = vmatprep.subr.bf16.mxu0 %v6620
  %6899 = vmatpush1.bf16.msra.mxu0 %v6619
  %6900 = vmatprep.subr.bf16.mxu0 %v6612
  %6901 = vmatpush1.bf16.msra.mxu0 %v6611
  %6902 = vmatprep.subr.bf16.mxu0 %v6604
  %6903 = vmatpush1.bf16.msra.mxu0 %v6603
  %6904 = vmatprep.subr.bf16.mxu0 %v6596
  %6905 = vmatpush1.bf16.msra.mxu0 %v6595
  %6906 = vmatprep.subr.bf16.mxu0 %v6716
  %6907 = vmatpush2.bf16.msra.mxu0 %v6715
  %6908 = vmatprep.subr.bf16.mxu0 %v6708
  %6909 = vmatpush2.bf16.msra.mxu0 %v6707
  %6910 = vmatprep.subr.bf16.mxu0 %v6700
  %6911 = vmatpush2.bf16.msra.mxu0 %v6699
  %6912 = vmatprep.subr.bf16.mxu0 %v6692
  %6913 = vmatpush2.bf16.msra.mxu0 %v6691
  %6914 = vmatprep.subr.bf16.mxu0 %v6684
  %6915 = vmatpush2.bf16.msra.mxu0 %v6683
  %6916 = vmatprep.subr.bf16.mxu0 %v6676
  %6917 = vmatpush2.bf16.msra.mxu0 %v6675
  %6918 = vmatprep.subr.bf16.mxu0 %v6668
  %6919 = vmatpush2.bf16.msra.mxu0 %v6667
  %6920 = vmatprep.subr.bf16.mxu0 %v6660
  %6921 = vmatpush2.bf16.msra.mxu0 %v6659
  %6922 = vmatprep.mubr.bf16.mxu0 %v6080
  %6923 = vmatmul.mubr.bf16.gmra.mxu0 %v6079
  %v6924 = vpop.f32.mrf.mxu0
  %v6925 = vadd.f32 0.0, %v6924
  %v6926 = vpop.f32.mrf.mxu0
  %v6927 = vadd.f32 0.0, %v6926
  %v6928 = vpop.f32.mrf.mxu0
  %v6929 = vpop.f32.mrf.mxu0
  %6930 = vdwg.mxu0
  %6931 = vmatprep.subr.bf16.mxu0 %v6654
  %6932 = vmatpush1.bf16.msra.mxu0 %v6653
  %6933 = vmatprep.subr.bf16.mxu0 %v6646
  %6934 = vmatpush1.bf16.msra.mxu0 %v6645
  %6935 = vmatprep.subr.bf16.mxu0 %v6638
  %6936 = vmatpush1.bf16.msra.mxu0 %v6637
  %6937 = vmatprep.subr.bf16.mxu0 %v6630
  %6938 = vmatpush1.bf16.msra.mxu0 %v6629
  %6939 = vmatprep.subr.bf16.mxu0 %v6622
  %6940 = vmatpush1.bf16.msra.mxu0 %v6621
  %6941 = vmatprep.subr.bf16.mxu0 %v6614
  %6942 = vmatpush1.bf16.msra.mxu0 %v6613
  %6943 = vmatprep.subr.bf16.mxu0 %v6606
  %6944 = vmatpush1.bf16.msra.mxu0 %v6605
  %6945 = vmatprep.subr.bf16.mxu0 %v6598
  %6946 = vmatpush1.bf16.msra.mxu0 %v6597
  %6947 = vmatprep.subr.bf16.mxu0 %v6718
  %6948 = vmatpush2.bf16.msra.mxu0 %v6717
  %6949 = vmatprep.subr.bf16.mxu0 %v6710
  %6950 = vmatpush2.bf16.msra.mxu0 %v6709
  %6951 = vmatprep.subr.bf16.mxu0 %v6702
  %6952 = vmatpush2.bf16.msra.mxu0 %v6701
  %6953 = vmatprep.subr.bf16.mxu0 %v6694
  %6954 = vmatpush2.bf16.msra.mxu0 %v6693
  %6955 = vmatprep.subr.bf16.mxu0 %v6686
  %6956 = vmatpush2.bf16.msra.mxu0 %v6685
  %6957 = vmatprep.subr.bf16.mxu0 %v6678
  %6958 = vmatpush2.bf16.msra.mxu0 %v6677
  %6959 = vmatprep.subr.bf16.mxu0 %v6670
  %6960 = vmatpush2.bf16.msra.mxu0 %v6669
  %6961 = vmatprep.subr.bf16.mxu0 %v6662
  %6962 = vmatpush2.bf16.msra.mxu0 %v6661
  %6963 = vmatprep.mubr.bf16.mxu0 %v6080
  %6964 = vmatmul.mubr.bf16.gmra.mxu0 %v6079
  %v6965 = vpop.f32.mrf.mxu0
  %v6966 = vadd.f32 0.0, %v6965
  %v6967 = vpop.f32.mrf.mxu0
  %v6968 = vadd.f32 0.0, %v6967
  %v6969 = vpop.f32.mrf.mxu0
  %v6970 = vpop.f32.mrf.mxu0
  %6971 = vdwg.mxu0
  %6972 = vmatprep.subr.bf16.mxu0 %v6656
  %6973 = vmatpush1.bf16.msra.mxu0 %v6655
  %6974 = vmatprep.subr.bf16.mxu0 %v6648
  %6975 = vmatpush1.bf16.msra.mxu0 %v6647
  %6976 = vmatprep.subr.bf16.mxu0 %v6640
  %6977 = vmatpush1.bf16.msra.mxu0 %v6639
  %6978 = vmatprep.subr.bf16.mxu0 %v6632
  %6979 = vmatpush1.bf16.msra.mxu0 %v6631
  %6980 = vmatprep.subr.bf16.mxu0 %v6624
  %6981 = vmatpush1.bf16.msra.mxu0 %v6623
  %6982 = vmatprep.subr.bf16.mxu0 %v6616
  %6983 = vmatpush1.bf16.msra.mxu0 %v6615
  %6984 = vmatprep.subr.bf16.mxu0 %v6608
  %6985 = vmatpush1.bf16.msra.mxu0 %v6607
  %6986 = vmatprep.subr.bf16.mxu0 %v6600
  %6987 = vmatpush1.bf16.msra.mxu0 %v6599
  %6988 = vmatprep.subr.bf16.mxu0 %v6720
  %6989 = vmatpush2.bf16.msra.mxu0 %v6719
  %6990 = vmatprep.subr.bf16.mxu0 %v6712
  %6991 = vmatpush2.bf16.msra.mxu0 %v6711
  %6992 = vmatprep.subr.bf16.mxu0 %v6704
  %6993 = vmatpush2.bf16.msra.mxu0 %v6703
  %6994 = vmatprep.subr.bf16.mxu0 %v6696
  %6995 = vmatpush2.bf16.msra.mxu0 %v6695
  %6996 = vmatprep.subr.bf16.mxu0 %v6688
  %6997 = vmatpush2.bf16.msra.mxu0 %v6687
  %6998 = vmatprep.subr.bf16.mxu0 %v6680
  %6999 = vmatpush2.bf16.msra.mxu0 %v6679
  %7000 = vmatprep.subr.bf16.mxu0 %v6672
  %7001 = vmatpush2.bf16.msra.mxu0 %v6671
  %7002 = vmatprep.subr.bf16.mxu0 %v6664
  %7003 = vmatpush2.bf16.msra.mxu0 %v6663
  %7004 = vmatprep.mubr.bf16.mxu0 %v6080
  %7005 = vmatmul.mubr.bf16.gmra.mxu0 %v6079
  %v7006 = vpop.f32.mrf.mxu0
  %v7007 = vadd.f32 0.0, %v7006
  %v7008 = vpop.f32.mrf.mxu0
  %v7009 = vadd.f32 0.0, %v7008
  %v7010 = vpop.f32.mrf.mxu0
  %v7011 = vpop.f32.mrf.mxu0
  %7012 = vdwg.mxu0
  %v7013 = vld [vmem:[%s3976] sm:$0xff]
  %v7014 = vld [vmem:[%s3976 + $0x8] sm:$0xff]
  %v7015 = vunpack.c.l.bf16 %v7013
  %v7016 = vunpack.c.h.bf16 %v7013
  %v7017 = vunpack.c.l.bf16 %v7014
  %v7018 = vunpack.c.h.bf16 %v7014
  %v7019 = vadd.f32 %v7015, %v6884
  %v7020 = vadd.f32 %v7016, %v6886
  %v7021 = vadd.f32 %v7017, %v6925
  %v7022 = vadd.f32 %v7018, %v6927
  %v7023 = vld [vmem:[%s3965 + $0x10] sm:$0xff]
  %v7024 = vld [vmem:[%s3965 + $0x18] sm:$0xff]
  %v7025 = vunpack.c.l.bf16 %v7023
  %v7026 = vunpack.c.h.bf16 %v7023
  %v7027 = vunpack.c.l.bf16 %v7024
  %v7028 = vunpack.c.h.bf16 %v7024
  %v7029 = vadd.f32 %v7025, %v6966
  %v7030 = vadd.f32 %v7026, %v6968
  %v7031 = vadd.f32 %v7027, %v7007
  %v7032 = vadd.f32 %v7028, %v7009
  %v7033 = vxor.u32 %v7019, 2147483648
  %v7034 = vmul.f32 %v7033, 1.442695
  %v7035 = vpow.pop %v7034
  %v7036 = vadd.f32 %v7035, 1.0
  %v7037 = vrcp.pop %v7036
  %v7038 = vmul.f32 1.0, %v7037
  %v7039 = vxor.u32 %v7020, 2147483648
  %v7040 = vmul.f32 %v7039, 1.442695
  %v7041 = vpow.pop %v7040
  %v7042 = vadd.f32 %v7041, 1.0
  %v7043 = vrcp.pop %v7042
  %v7044 = vmul.f32 1.0, %v7043
  %v7045 = vtanh.pop %v7021
  %v7046 = vxor.u32 %v7022, 2147483648
  %v7047 = vmul.f32 %v7046, 1.442695
  %v7048 = vpow.pop %v7047
  %v7049 = vadd.f32 %v7048, 1.0
  %v7050 = vrcp.pop %v7049
  %v7051 = vmul.f32 1.0, %v7050
  %v7052 = vmul.f32 %v7044, %v6046
  %v7053 = vmul.f32 %v7038, %v7045
  %v7054 = vadd.f32 %v7052, %v7053
  %v7055 = vtanh.pop %v7054
  %v7056 = vmul.f32 %v7051, %v7055
  %v7057 = vsel %vm3988, %v7056, %v6045
  %v7058 = vsel %vm3988, %v7054, %v6046
  %v7059 = vxor.u32 %v7029, 2147483648
  %v7060 = vmul.f32 %v7059, 1.442695
  %v7061 = vpow.pop %v7060
  %v7062 = vadd.f32 %v7061, 1.0
  %v7063 = vrcp.pop %v7062
  %v7064 = vmul.f32 1.0, %v7063
  %v7065 = vxor.u32 %v7030, 2147483648
  %v7066 = vmul.f32 %v7065, 1.442695
  %v7067 = vpow.pop %v7066
  %v7068 = vadd.f32 %v7067, 1.0
  %v7069 = vrcp.pop %v7068
  %v7070 = vmul.f32 1.0, %v7069
  %v7071 = vtanh.pop %v7031
  %v7072 = vxor.u32 %v7032, 2147483648
  %v7073 = vmul.f32 %v7072, 1.442695
  %v7074 = vpow.pop %v7073
  %v7075 = vadd.f32 %v7074, 1.0
  %v7076 = vrcp.pop %v7075
  %v7077 = vmul.f32 1.0, %v7076
  %v7078 = vmul.f32 %v7070, %v6072
  %v7079 = vmul.f32 %v7064, %v7071
  %v7080 = vadd.f32 %v7078, %v7079
  %v7081 = vtanh.pop %v7080
  %v7082 = vmul.f32 %v7077, %v7081
  %v7083 = vsel %vm3987, %v7082, %v6071
  %v7084 = vsel %vm3987, %v7080, %v6072
  %v7085 = vsel %vm3988, %v7056, 0.0
  %v7086 = vpack.c.bf16 %v7085, %v7085
  %7087 = vst [vmem:[%s4047] sm:$0xf] %v7086
  %v7088 = vsel %vm3987, %v7082, 0.0
  %v7089 = vpack.c.bf16 %v7088, %v7088
  %7090 = vst [vmem:[%s4043 + $0x4] sm:$0xf] %v7089
  %v7091 = vpack.c.bf16 %v7057, %v7057
  %v7092 = vpack.c.bf16 %v7083, %v7083
  %v7093 = vld [vmem:[%s4] sm:$0xff]
  %v7094 = vld [vmem:[%s4 + $0x8] sm:$0xff]
  %v7095 = vld [vmem:[%s4 + $0x10] sm:$0xff]
  %v7096 = vld [vmem:[%s4 + $0x18] sm:$0xff]
  %v7097 = vld [vmem:[%s4 + $0x20] sm:$0xff]
  %v7098 = vld [vmem:[%s4 + $0x28] sm:$0xff]
  %v7099 = vld [vmem:[%s4 + $0x30] sm:$0xff]
  %v7100 = vld [vmem:[%s4 + $0x38] sm:$0xff]
  %v7101 = vld [vmem:[%s4 + $0x40] sm:$0xff]
  %v7102 = vld [vmem:[%s4 + $0x48] sm:$0xff]
  %v7103 = vld [vmem:[%s4 + $0x50] sm:$0xff]
  %v7104 = vld [vmem:[%s4 + $0x58] sm:$0xff]
  %v7105 = vld [vmem:[%s4 + $0x60] sm:$0xff]
  %v7106 = vld [vmem:[%s4 + $0x68] sm:$0xff]
  %v7107 = vld [vmem:[%s4 + $0x70] sm:$0xff]
  %v7108 = vld [vmem:[%s4 + $0x78] sm:$0xff]
  %v7109 = vld [vmem:[%s4 + $0x80] sm:$0xff]
  %v7110 = vld [vmem:[%s4 + $0x88] sm:$0xff]
  %v7111 = vld [vmem:[%s4 + $0x90] sm:$0xff]
  %v7112 = vld [vmem:[%s4 + $0x98] sm:$0xff]
  %v7113 = vld [vmem:[%s4 + $0xa0] sm:$0xff]
  %v7114 = vld [vmem:[%s4 + $0xa8] sm:$0xff]
  %v7115 = vld [vmem:[%s4 + $0xb0] sm:$0xff]
  %v7116 = vld [vmem:[%s4 + $0xb8] sm:$0xff]
  %v7117 = vld [vmem:[%s4 + $0xc0] sm:$0xff]
  %v7118 = vld [vmem:[%s4 + $0xc8] sm:$0xff]
  %v7119 = vld [vmem:[%s4 + $0xd0] sm:$0xff]
  %v7120 = vld [vmem:[%s4 + $0xd8] sm:$0xff]
  %v7121 = vld [vmem:[%s4 + $0xe0] sm:$0xff]
  %v7122 = vld [vmem:[%s4 + $0xe8] sm:$0xff]
  %v7123 = vld [vmem:[%s4 + $0xf0] sm:$0xff]
  %v7124 = vld [vmem:[%s4 + $0xf8] sm:$0xff]
  %v7125 = vld [vmem:[%s4 + $0x100] sm:$0xff]
  %v7126 = vld [vmem:[%s4 + $0x108] sm:$0xff]
  %v7127 = vld [vmem:[%s4 + $0x110] sm:$0xff]
  %v7128 = vld [vmem:[%s4 + $0x118] sm:$0xff]
  %v7129 = vld [vmem:[%s4 + $0x120] sm:$0xff]
  %v7130 = vld [vmem:[%s4 + $0x128] sm:$0xff]
  %v7131 = vld [vmem:[%s4 + $0x130] sm:$0xff]
  %v7132 = vld [vmem:[%s4 + $0x138] sm:$0xff]
  %v7133 = vld [vmem:[%s4 + $0x140] sm:$0xff]
  %v7134 = vld [vmem:[%s4 + $0x148] sm:$0xff]
  %v7135 = vld [vmem:[%s4 + $0x150] sm:$0xff]
  %v7136 = vld [vmem:[%s4 + $0x158] sm:$0xff]
  %v7137 = vld [vmem:[%s4 + $0x160] sm:$0xff]
  %v7138 = vld [vmem:[%s4 + $0x168] sm:$0xff]
  %v7139 = vld [vmem:[%s4 + $0x170] sm:$0xff]
  %v7140 = vld [vmem:[%s4 + $0x178] sm:$0xff]
  %v7141 = vld [vmem:[%s4 + $0x180] sm:$0xff]
  %v7142 = vld [vmem:[%s4 + $0x188] sm:$0xff]
  %v7143 = vld [vmem:[%s4 + $0x190] sm:$0xff]
  %v7144 = vld [vmem:[%s4 + $0x198] sm:$0xff]
  %v7145 = vld [vmem:[%s4 + $0x1a0] sm:$0xff]
  %v7146 = vld [vmem:[%s4 + $0x1a8] sm:$0xff]
  %v7147 = vld [vmem:[%s4 + $0x1b0] sm:$0xff]
  %v7148 = vld [vmem:[%s4 + $0x1b8] sm:$0xff]
  %v7149 = vld [vmem:[%s4 + $0x1c0] sm:$0xff]
  %v7150 = vld [vmem:[%s4 + $0x1c8] sm:$0xff]
  %v7151 = vld [vmem:[%s4 + $0x1d0] sm:$0xff]
  %v7152 = vld [vmem:[%s4 + $0x1d8] sm:$0xff]
  %v7153 = vld [vmem:[%s4 + $0x1e0] sm:$0xff]
  %v7154 = vld [vmem:[%s4 + $0x1e8] sm:$0xff]
  %v7155 = vld [vmem:[%s4 + $0x1f0] sm:$0xff]
  %v7156 = vld [vmem:[%s4 + $0x1f8] sm:$0xff]
  %v7157 = vld [vmem:[%s4 + $0x200] sm:$0xff]
  %v7158 = vld [vmem:[%s4 + $0x208] sm:$0xff]
  %v7159 = vld [vmem:[%s4 + $0x210] sm:$0xff]
  %v7160 = vld [vmem:[%s4 + $0x218] sm:$0xff]
  %v7161 = vld [vmem:[%s4 + $0x220] sm:$0xff]
  %v7162 = vld [vmem:[%s4 + $0x228] sm:$0xff]
  %v7163 = vld [vmem:[%s4 + $0x230] sm:$0xff]
  %v7164 = vld [vmem:[%s4 + $0x238] sm:$0xff]
  %v7165 = vld [vmem:[%s4 + $0x240] sm:$0xff]
  %v7166 = vld [vmem:[%s4 + $0x248] sm:$0xff]
  %v7167 = vld [vmem:[%s4 + $0x250] sm:$0xff]
  %v7168 = vld [vmem:[%s4 + $0x258] sm:$0xff]
  %v7169 = vld [vmem:[%s4 + $0x260] sm:$0xff]
  %v7170 = vld [vmem:[%s4 + $0x268] sm:$0xff]
  %v7171 = vld [vmem:[%s4 + $0x270] sm:$0xff]
  %v7172 = vld [vmem:[%s4 + $0x278] sm:$0xff]
  %v7173 = vld [vmem:[%s4 + $0x280] sm:$0xff]
  %v7174 = vld [vmem:[%s4 + $0x288] sm:$0xff]
  %v7175 = vld [vmem:[%s4 + $0x290] sm:$0xff]
  %v7176 = vld [vmem:[%s4 + $0x298] sm:$0xff]
  %v7177 = vld [vmem:[%s4 + $0x2a0] sm:$0xff]
  %v7178 = vld [vmem:[%s4 + $0x2a8] sm:$0xff]
  %v7179 = vld [vmem:[%s4 + $0x2b0] sm:$0xff]
  %v7180 = vld [vmem:[%s4 + $0x2b8] sm:$0xff]
  %v7181 = vld [vmem:[%s4 + $0x2c0] sm:$0xff]
  %v7182 = vld [vmem:[%s4 + $0x2c8] sm:$0xff]
  %v7183 = vld [vmem:[%s4 + $0x2d0] sm:$0xff]
  %v7184 = vld [vmem:[%s4 + $0x2d8] sm:$0xff]
  %v7185 = vld [vmem:[%s4 + $0x2e0] sm:$0xff]
  %v7186 = vld [vmem:[%s4 + $0x2e8] sm:$0xff]
  %v7187 = vld [vmem:[%s4 + $0x2f0] sm:$0xff]
  %v7188 = vld [vmem:[%s4 + $0x2f8] sm:$0xff]
  %v7189 = vld [vmem:[%s4 + $0x300] sm:$0xff]
  %v7190 = vld [vmem:[%s4 + $0x308] sm:$0xff]
  %v7191 = vld [vmem:[%s4 + $0x310] sm:$0xff]
  %v7192 = vld [vmem:[%s4 + $0x318] sm:$0xff]
  %v7193 = vld [vmem:[%s4 + $0x320] sm:$0xff]
  %v7194 = vld [vmem:[%s4 + $0x328] sm:$0xff]
  %v7195 = vld [vmem:[%s4 + $0x330] sm:$0xff]
  %v7196 = vld [vmem:[%s4 + $0x338] sm:$0xff]
  %v7197 = vld [vmem:[%s4 + $0x340] sm:$0xff]
  %v7198 = vld [vmem:[%s4 + $0x348] sm:$0xff]
  %v7199 = vld [vmem:[%s4 + $0x350] sm:$0xff]
  %v7200 = vld [vmem:[%s4 + $0x358] sm:$0xff]
  %v7201 = vld [vmem:[%s4 + $0x360] sm:$0xff]
  %v7202 = vld [vmem:[%s4 + $0x368] sm:$0xff]
  %v7203 = vld [vmem:[%s4 + $0x370] sm:$0xff]
  %v7204 = vld [vmem:[%s4 + $0x378] sm:$0xff]
  %v7205 = vld [vmem:[%s4 + $0x380] sm:$0xff]
  %v7206 = vld [vmem:[%s4 + $0x388] sm:$0xff]
  %v7207 = vld [vmem:[%s4 + $0x390] sm:$0xff]
  %v7208 = vld [vmem:[%s4 + $0x398] sm:$0xff]
  %v7209 = vld [vmem:[%s4 + $0x3a0] sm:$0xff]
  %v7210 = vld [vmem:[%s4 + $0x3a8] sm:$0xff]
  %v7211 = vld [vmem:[%s4 + $0x3b0] sm:$0xff]
  %v7212 = vld [vmem:[%s4 + $0x3b8] sm:$0xff]
  %v7213 = vld [vmem:[%s4 + $0x3c0] sm:$0xff]
  %v7214 = vld [vmem:[%s4 + $0x3c8] sm:$0xff]
  %v7215 = vld [vmem:[%s4 + $0x3d0] sm:$0xff]
  %v7216 = vld [vmem:[%s4 + $0x3d8] sm:$0xff]
  %v7217 = vld [vmem:[%s4 + $0x3e0] sm:$0xff]
  %v7218 = vld [vmem:[%s4 + $0x3e8] sm:$0xff]
  %v7219 = vld [vmem:[%s4 + $0x3f0] sm:$0xff]
  %v7220 = vld [vmem:[%s4 + $0x3f8] sm:$0xff]
  %v7349 = vunpack.c.l.b16 %v7093
  %v7350 = vunpack.c.h.b16 %v7093
  %v7351 = vunpack.c.l.b16 %v7094
  %v7352 = vunpack.c.h.b16 %v7094
  %v7353 = vunpack.c.l.b16 %v7095
  %v7354 = vunpack.c.h.b16 %v7095
  %v7355 = vunpack.c.l.b16 %v7096
  %v7356 = vunpack.c.h.b16 %v7096
  %v7357 = vunpack.c.l.b16 %v7097
  %v7358 = vunpack.c.h.b16 %v7097
  %v7359 = vunpack.c.l.b16 %v7098
  %v7360 = vunpack.c.h.b16 %v7098
  %v7361 = vunpack.c.l.b16 %v7099
  %v7362 = vunpack.c.h.b16 %v7099
  %v7363 = vunpack.c.l.b16 %v7100
  %v7364 = vunpack.c.h.b16 %v7100
  %v7365 = vunpack.c.l.b16 %v7101
  %v7366 = vunpack.c.h.b16 %v7101
  %v7367 = vunpack.c.l.b16 %v7102
  %v7368 = vunpack.c.h.b16 %v7102
  %v7369 = vunpack.c.l.b16 %v7103
  %v7370 = vunpack.c.h.b16 %v7103
  %v7371 = vunpack.c.l.b16 %v7104
  %v7372 = vunpack.c.h.b16 %v7104
  %v7373 = vunpack.c.l.b16 %v7105
  %v7374 = vunpack.c.h.b16 %v7105
  %v7375 = vunpack.c.l.b16 %v7106
  %v7376 = vunpack.c.h.b16 %v7106
  %v7377 = vunpack.c.l.b16 %v7107
  %v7378 = vunpack.c.h.b16 %v7107
  %v7379 = vunpack.c.l.b16 %v7108
  %v7380 = vunpack.c.h.b16 %v7108
  %v7381 = vunpack.c.l.b16 %v7109
  %v7382 = vunpack.c.h.b16 %v7109
  %v7383 = vunpack.c.l.b16 %v7110
  %v7384 = vunpack.c.h.b16 %v7110
  %v7385 = vunpack.c.l.b16 %v7111
  %v7386 = vunpack.c.h.b16 %v7111
  %v7387 = vunpack.c.l.b16 %v7112
  %v7388 = vunpack.c.h.b16 %v7112
  %v7389 = vunpack.c.l.b16 %v7113
  %v7390 = vunpack.c.h.b16 %v7113
  %v7391 = vunpack.c.l.b16 %v7114
  %v7392 = vunpack.c.h.b16 %v7114
  %v7393 = vunpack.c.l.b16 %v7115
  %v7394 = vunpack.c.h.b16 %v7115
  %v7395 = vunpack.c.l.b16 %v7116
  %v7396 = vunpack.c.h.b16 %v7116
  %v7397 = vunpack.c.l.b16 %v7117
  %v7398 = vunpack.c.h.b16 %v7117
  %v7399 = vunpack.c.l.b16 %v7118
  %v7400 = vunpack.c.h.b16 %v7118
  %v7401 = vunpack.c.l.b16 %v7119
  %v7402 = vunpack.c.h.b16 %v7119
  %v7403 = vunpack.c.l.b16 %v7120
  %v7404 = vunpack.c.h.b16 %v7120
  %v7405 = vunpack.c.l.b16 %v7121
  %v7406 = vunpack.c.h.b16 %v7121
  %v7407 = vunpack.c.l.b16 %v7122
  %v7408 = vunpack.c.h.b16 %v7122
  %v7409 = vunpack.c.l.b16 %v7123
  %v7410 = vunpack.c.h.b16 %v7123
  %v7411 = vunpack.c.l.b16 %v7124
  %v7412 = vunpack.c.h.b16 %v7124
  %v7413 = vunpack.c.l.b16 %v7125
  %v7414 = vunpack.c.h.b16 %v7125
  %v7415 = vunpack.c.l.b16 %v7126
  %v7416 = vunpack.c.h.b16 %v7126
  %v7417 = vunpack.c.l.b16 %v7127
  %v7418 = vunpack.c.h.b16 %v7127
  %v7419 = vunpack.c.l.b16 %v7128
  %v7420 = vunpack.c.h.b16 %v7128
  %v7421 = vunpack.c.l.b16 %v7129
  %v7422 = vunpack.c.h.b16 %v7129
  %v7423 = vunpack.c.l.b16 %v7130
  %v7424 = vunpack.c.h.b16 %v7130
  %v7425 = vunpack.c.l.b16 %v7131
  %v7426 = vunpack.c.h.b16 %v7131
  %v7427 = vunpack.c.l.b16 %v7132
  %v7428 = vunpack.c.h.b16 %v7132
  %v7429 = vunpack.c.l.b16 %v7133
  %v7430 = vunpack.c.h.b16 %v7133
  %v7431 = vunpack.c.l.b16 %v7134
  %v7432 = vunpack.c.h.b16 %v7134
  %v7433 = vunpack.c.l.b16 %v7135
  %v7434 = vunpack.c.h.b16 %v7135
  %v7435 = vunpack.c.l.b16 %v7136
  %v7436 = vunpack.c.h.b16 %v7136
  %v7437 = vunpack.c.l.b16 %v7137
  %v7438 = vunpack.c.h.b16 %v7137
  %v7439 = vunpack.c.l.b16 %v7138
  %v7440 = vunpack.c.h.b16 %v7138
  %v7441 = vunpack.c.l.b16 %v7139
  %v7442 = vunpack.c.h.b16 %v7139
  %v7443 = vunpack.c.l.b16 %v7140
  %v7444 = vunpack.c.h.b16 %v7140
  %v7445 = vunpack.c.l.b16 %v7141
  %v7446 = vunpack.c.h.b16 %v7141
  %v7447 = vunpack.c.l.b16 %v7142
  %v7448 = vunpack.c.h.b16 %v7142
  %v7449 = vunpack.c.l.b16 %v7143
  %v7450 = vunpack.c.h.b16 %v7143
  %v7451 = vunpack.c.l.b16 %v7144
  %v7452 = vunpack.c.h.b16 %v7144
  %v7453 = vunpack.c.l.b16 %v7145
  %v7454 = vunpack.c.h.b16 %v7145
  %v7455 = vunpack.c.l.b16 %v7146
  %v7456 = vunpack.c.h.b16 %v7146
  %v7457 = vunpack.c.l.b16 %v7147
  %v7458 = vunpack.c.h.b16 %v7147
  %v7459 = vunpack.c.l.b16 %v7148
  %v7460 = vunpack.c.h.b16 %v7148
  %v7461 = vunpack.c.l.b16 %v7149
  %v7462 = vunpack.c.h.b16 %v7149
  %v7463 = vunpack.c.l.b16 %v7150
  %v7464 = vunpack.c.h.b16 %v7150
  %v7465 = vunpack.c.l.b16 %v7151
  %v7466 = vunpack.c.h.b16 %v7151
  %v7467 = vunpack.c.l.b16 %v7152
  %v7468 = vunpack.c.h.b16 %v7152
  %v7469 = vunpack.c.l.b16 %v7153
  %v7470 = vunpack.c.h.b16 %v7153
  %v7471 = vunpack.c.l.b16 %v7154
  %v7472 = vunpack.c.h.b16 %v7154
  %v7473 = vunpack.c.l.b16 %v7155
  %v7474 = vunpack.c.h.b16 %v7155
  %v7475 = vunpack.c.l.b16 %v7156
  %v7476 = vunpack.c.h.b16 %v7156
  %v7477 = vunpack.c.l.b16 %v7157
  %v7478 = vunpack.c.h.b16 %v7157
  %v7479 = vunpack.c.l.b16 %v7158
  %v7480 = vunpack.c.h.b16 %v7158
  %v7481 = vunpack.c.l.b16 %v7159
  %v7482 = vunpack.c.h.b16 %v7159
  %v7483 = vunpack.c.l.b16 %v7160
  %v7484 = vunpack.c.h.b16 %v7160
  %v7485 = vunpack.c.l.b16 %v7161
  %v7486 = vunpack.c.h.b16 %v7161
  %v7487 = vunpack.c.l.b16 %v7162
  %v7488 = vunpack.c.h.b16 %v7162
  %v7489 = vunpack.c.l.b16 %v7163
  %v7490 = vunpack.c.h.b16 %v7163
  %v7491 = vunpack.c.l.b16 %v7164
  %v7492 = vunpack.c.h.b16 %v7164
  %v7493 = vunpack.c.l.b16 %v7165
  %v7494 = vunpack.c.h.b16 %v7165
  %v7495 = vunpack.c.l.b16 %v7166
  %v7496 = vunpack.c.h.b16 %v7166
  %v7497 = vunpack.c.l.b16 %v7167
  %v7498 = vunpack.c.h.b16 %v7167
  %v7499 = vunpack.c.l.b16 %v7168
  %v7500 = vunpack.c.h.b16 %v7168
  %v7501 = vunpack.c.l.b16 %v7169
  %v7502 = vunpack.c.h.b16 %v7169
  %v7503 = vunpack.c.l.b16 %v7170
  %v7504 = vunpack.c.h.b16 %v7170
  %v7505 = vunpack.c.l.b16 %v7171
  %v7506 = vunpack.c.h.b16 %v7171
  %v7507 = vunpack.c.l.b16 %v7172
  %v7508 = vunpack.c.h.b16 %v7172
  %v7509 = vunpack.c.l.b16 %v7173
  %v7510 = vunpack.c.h.b16 %v7173
  %v7511 = vunpack.c.l.b16 %v7174
  %v7512 = vunpack.c.h.b16 %v7174
  %v7513 = vunpack.c.l.b16 %v7175
  %v7514 = vunpack.c.h.b16 %v7175
  %v7515 = vunpack.c.l.b16 %v7176
  %v7516 = vunpack.c.h.b16 %v7176
  %v7517 = vunpack.c.l.b16 %v7177
  %v7518 = vunpack.c.h.b16 %v7177
  %v7519 = vunpack.c.l.b16 %v7178
  %v7520 = vunpack.c.h.b16 %v7178
  %v7521 = vunpack.c.l.b16 %v7179
  %v7522 = vunpack.c.h.b16 %v7179
  %v7523 = vunpack.c.l.b16 %v7180
  %v7524 = vunpack.c.h.b16 %v7180
  %v7525 = vunpack.c.l.b16 %v7181
  %v7526 = vunpack.c.h.b16 %v7181
  %v7527 = vunpack.c.l.b16 %v7182
  %v7528 = vunpack.c.h.b16 %v7182
  %v7529 = vunpack.c.l.b16 %v7183
  %v7530 = vunpack.c.h.b16 %v7183
  %v7531 = vunpack.c.l.b16 %v7184
  %v7532 = vunpack.c.h.b16 %v7184
  %v7533 = vunpack.c.l.b16 %v7185
  %v7534 = vunpack.c.h.b16 %v7185
  %v7535 = vunpack.c.l.b16 %v7186
  %v7536 = vunpack.c.h.b16 %v7186
  %v7537 = vunpack.c.l.b16 %v7187
  %v7538 = vunpack.c.h.b16 %v7187
  %v7539 = vunpack.c.l.b16 %v7188
  %v7540 = vunpack.c.h.b16 %v7188
  %v7541 = vunpack.c.l.b16 %v7189
  %v7542 = vunpack.c.h.b16 %v7189
  %v7543 = vunpack.c.l.b16 %v7190
  %v7544 = vunpack.c.h.b16 %v7190
  %v7545 = vunpack.c.l.b16 %v7191
  %v7546 = vunpack.c.h.b16 %v7191
  %v7547 = vunpack.c.l.b16 %v7192
  %v7548 = vunpack.c.h.b16 %v7192
  %v7549 = vunpack.c.l.b16 %v7193
  %v7550 = vunpack.c.h.b16 %v7193
  %v7551 = vunpack.c.l.b16 %v7194
  %v7552 = vunpack.c.h.b16 %v7194
  %v7553 = vunpack.c.l.b16 %v7195
  %v7554 = vunpack.c.h.b16 %v7195
  %v7555 = vunpack.c.l.b16 %v7196
  %v7556 = vunpack.c.h.b16 %v7196
  %v7557 = vunpack.c.l.b16 %v7197
  %v7558 = vunpack.c.h.b16 %v7197
  %v7559 = vunpack.c.l.b16 %v7198
  %v7560 = vunpack.c.h.b16 %v7198
  %v7561 = vunpack.c.l.b16 %v7199
  %v7562 = vunpack.c.h.b16 %v7199
  %v7563 = vunpack.c.l.b16 %v7200
  %v7564 = vunpack.c.h.b16 %v7200
  %v7565 = vunpack.c.l.b16 %v7201
  %v7566 = vunpack.c.h.b16 %v7201
  %v7567 = vunpack.c.l.b16 %v7202
  %v7568 = vunpack.c.h.b16 %v7202
  %v7569 = vunpack.c.l.b16 %v7203
  %v7570 = vunpack.c.h.b16 %v7203
  %v7571 = vunpack.c.l.b16 %v7204
  %v7572 = vunpack.c.h.b16 %v7204
  %v7573 = vunpack.c.l.b16 %v7205
  %v7574 = vunpack.c.h.b16 %v7205
  %v7575 = vunpack.c.l.b16 %v7206
  %v7576 = vunpack.c.h.b16 %v7206
  %v7577 = vunpack.c.l.b16 %v7207
  %v7578 = vunpack.c.h.b16 %v7207
  %v7579 = vunpack.c.l.b16 %v7208
  %v7580 = vunpack.c.h.b16 %v7208
  %v7581 = vunpack.c.l.b16 %v7209
  %v7582 = vunpack.c.h.b16 %v7209
  %v7583 = vunpack.c.l.b16 %v7210
  %v7584 = vunpack.c.h.b16 %v7210
  %v7585 = vunpack.c.l.b16 %v7211
  %v7586 = vunpack.c.h.b16 %v7211
  %v7587 = vunpack.c.l.b16 %v7212
  %v7588 = vunpack.c.h.b16 %v7212
  %v7589 = vunpack.c.l.b16 %v7213
  %v7590 = vunpack.c.h.b16 %v7213
  %v7591 = vunpack.c.l.b16 %v7214
  %v7592 = vunpack.c.h.b16 %v7214
  %v7593 = vunpack.c.l.b16 %v7215
  %v7594 = vunpack.c.h.b16 %v7215
  %v7595 = vunpack.c.l.b16 %v7216
  %v7596 = vunpack.c.h.b16 %v7216
  %v7597 = vunpack.c.l.b16 %v7217
  %v7598 = vunpack.c.h.b16 %v7217
  %v7599 = vunpack.c.l.b16 %v7218
  %v7600 = vunpack.c.h.b16 %v7218
  %v7601 = vunpack.c.l.b16 %v7219
  %v7602 = vunpack.c.h.b16 %v7219
  %v7603 = vunpack.c.l.b16 %v7220
  %v7604 = vunpack.c.h.b16 %v7220
  %v7605 = vpack.c.b16 %v7357, %v7349
  %v7606 = vpack.c.b16 %v7358, %v7350
  %v7607 = vpack.c.b16 %v7359, %v7351
  %v7608 = vpack.c.b16 %v7360, %v7352
  %v7609 = vpack.c.b16 %v7361, %v7353
  %v7610 = vpack.c.b16 %v7362, %v7354
  %v7611 = vpack.c.b16 %v7363, %v7355
  %v7612 = vpack.c.b16 %v7364, %v7356
  %v7613 = vpack.c.b16 %v7373, %v7365
  %v7614 = vpack.c.b16 %v7374, %v7366
  %v7615 = vpack.c.b16 %v7375, %v7367
  %v7616 = vpack.c.b16 %v7376, %v7368
  %v7617 = vpack.c.b16 %v7377, %v7369
  %v7618 = vpack.c.b16 %v7378, %v7370
  %v7619 = vpack.c.b16 %v7379, %v7371
  %v7620 = vpack.c.b16 %v7380, %v7372
  %v7621 = vpack.c.b16 %v7389, %v7381
  %v7622 = vpack.c.b16 %v7390, %v7382
  %v7623 = vpack.c.b16 %v7391, %v7383
  %v7624 = vpack.c.b16 %v7392, %v7384
  %v7625 = vpack.c.b16 %v7393, %v7385
  %v7626 = vpack.c.b16 %v7394, %v7386
  %v7627 = vpack.c.b16 %v7395, %v7387
  %v7628 = vpack.c.b16 %v7396, %v7388
  %v7629 = vpack.c.b16 %v7405, %v7397
  %v7630 = vpack.c.b16 %v7406, %v7398
  %v7631 = vpack.c.b16 %v7407, %v7399
  %v7632 = vpack.c.b16 %v7408, %v7400
  %v7633 = vpack.c.b16 %v7409, %v7401
  %v7634 = vpack.c.b16 %v7410, %v7402
  %v7635 = vpack.c.b16 %v7411, %v7403
  %v7636 = vpack.c.b16 %v7412, %v7404
  %v7637 = vpack.c.b16 %v7421, %v7413
  %v7638 = vpack.c.b16 %v7422, %v7414
  %v7639 = vpack.c.b16 %v7423, %v7415
  %v7640 = vpack.c.b16 %v7424, %v7416
  %v7641 = vpack.c.b16 %v7425, %v7417
  %v7642 = vpack.c.b16 %v7426, %v7418
  %v7643 = vpack.c.b16 %v7427, %v7419
  %v7644 = vpack.c.b16 %v7428, %v7420
  %v7645 = vpack.c.b16 %v7437, %v7429
  %v7646 = vpack.c.b16 %v7438, %v7430
  %v7647 = vpack.c.b16 %v7439, %v7431
  %v7648 = vpack.c.b16 %v7440, %v7432
  %v7649 = vpack.c.b16 %v7441, %v7433
  %v7650 = vpack.c.b16 %v7442, %v7434
  %v7651 = vpack.c.b16 %v7443, %v7435
  %v7652 = vpack.c.b16 %v7444, %v7436
  %v7653 = vpack.c.b16 %v7453, %v7445
  %v7654 = vpack.c.b16 %v7454, %v7446
  %v7655 = vpack.c.b16 %v7455, %v7447
  %v7656 = vpack.c.b16 %v7456, %v7448
  %v7657 = vpack.c.b16 %v7457, %v7449
  %v7658 = vpack.c.b16 %v7458, %v7450
  %v7659 = vpack.c.b16 %v7459, %v7451
  %v7660 = vpack.c.b16 %v7460, %v7452
  %v7661 = vpack.c.b16 %v7469, %v7461
  %v7662 = vpack.c.b16 %v7470, %v7462
  %v7663 = vpack.c.b16 %v7471, %v7463
  %v7664 = vpack.c.b16 %v7472, %v7464
  %v7665 = vpack.c.b16 %v7473, %v7465
  %v7666 = vpack.c.b16 %v7474, %v7466
  %v7667 = vpack.c.b16 %v7475, %v7467
  %v7668 = vpack.c.b16 %v7476, %v7468
  %v7669 = vpack.c.b16 %v7485, %v7477
  %v7670 = vpack.c.b16 %v7486, %v7478
  %v7671 = vpack.c.b16 %v7487, %v7479
  %v7672 = vpack.c.b16 %v7488, %v7480
  %v7673 = vpack.c.b16 %v7489, %v7481
  %v7674 = vpack.c.b16 %v7490, %v7482
  %v7675 = vpack.c.b16 %v7491, %v7483
  %v7676 = vpack.c.b16 %v7492, %v7484
  %v7677 = vpack.c.b16 %v7501, %v7493
  %v7678 = vpack.c.b16 %v7502, %v7494
  %v7679 = vpack.c.b16 %v7503, %v7495
  %v7680 = vpack.c.b16 %v7504, %v7496
  %v7681 = vpack.c.b16 %v7505, %v7497
  %v7682 = vpack.c.b16 %v7506, %v7498
  %v7683 = vpack.c.b16 %v7507, %v7499
  %v7684 = vpack.c.b16 %v7508, %v7500
  %v7685 = vpack.c.b16 %v7517, %v7509
  %v7686 = vpack.c.b16 %v7518, %v7510
  %v7687 = vpack.c.b16 %v7519, %v7511
  %v7688 = vpack.c.b16 %v7520, %v7512
  %v7689 = vpack.c.b16 %v7521, %v7513
  %v7690 = vpack.c.b16 %v7522, %v7514
  %v7691 = vpack.c.b16 %v7523, %v7515
  %v7692 = vpack.c.b16 %v7524, %v7516
  %v7693 = vpack.c.b16 %v7533, %v7525
  %v7694 = vpack.c.b16 %v7534, %v7526
  %v7695 = vpack.c.b16 %v7535, %v7527
  %v7696 = vpack.c.b16 %v7536, %v7528
  %v7697 = vpack.c.b16 %v7537, %v7529
  %v7698 = vpack.c.b16 %v7538, %v7530
  %v7699 = vpack.c.b16 %v7539, %v7531
  %v7700 = vpack.c.b16 %v7540, %v7532
  %v7701 = vpack.c.b16 %v7549, %v7541
  %v7702 = vpack.c.b16 %v7550, %v7542
  %v7703 = vpack.c.b16 %v7551, %v7543
  %v7704 = vpack.c.b16 %v7552, %v7544
  %v7705 = vpack.c.b16 %v7553, %v7545
  %v7706 = vpack.c.b16 %v7554, %v7546
  %v7707 = vpack.c.b16 %v7555, %v7547
  %v7708 = vpack.c.b16 %v7556, %v7548
  %v7709 = vpack.c.b16 %v7565, %v7557
  %v7710 = vpack.c.b16 %v7566, %v7558
  %v7711 = vpack.c.b16 %v7567, %v7559
  %v7712 = vpack.c.b16 %v7568, %v7560
  %v7713 = vpack.c.b16 %v7569, %v7561
  %v7714 = vpack.c.b16 %v7570, %v7562
  %v7715 = vpack.c.b16 %v7571, %v7563
  %v7716 = vpack.c.b16 %v7572, %v7564
  %v7717 = vpack.c.b16 %v7581, %v7573
  %v7718 = vpack.c.b16 %v7582, %v7574
  %v7719 = vpack.c.b16 %v7583, %v7575
  %v7720 = vpack.c.b16 %v7584, %v7576
  %v7721 = vpack.c.b16 %v7585, %v7577
  %v7722 = vpack.c.b16 %v7586, %v7578
  %v7723 = vpack.c.b16 %v7587, %v7579
  %v7724 = vpack.c.b16 %v7588, %v7580
  %v7725 = vpack.c.b16 %v7597, %v7589
  %v7726 = vpack.c.b16 %v7598, %v7590
  %v7727 = vpack.c.b16 %v7599, %v7591
  %v7728 = vpack.c.b16 %v7600, %v7592
  %v7729 = vpack.c.b16 %v7601, %v7593
  %v7730 = vpack.c.b16 %v7602, %v7594
  %v7731 = vpack.c.b16 %v7603, %v7595
  %v7732 = vpack.c.b16 %v7604, %v7596
  %7861 = vmatprep.subr.bf16.mxu0 %v7662
  %7862 = vmatpush1.bf16.msra.mxu0 %v7661
  %7863 = vmatprep.subr.bf16.mxu0 %v7654
  %7864 = vmatpush1.bf16.msra.mxu0 %v7653
  %7865 = vmatprep.subr.bf16.mxu0 %v7646
  %7866 = vmatpush1.bf16.msra.mxu0 %v7645
  %7867 = vmatprep.subr.bf16.mxu0 %v7638
  %7868 = vmatpush1.bf16.msra.mxu0 %v7637
  %7869 = vmatprep.subr.bf16.mxu0 %v7630
  %7870 = vmatpush1.bf16.msra.mxu0 %v7629
  %7871 = vmatprep.subr.bf16.mxu0 %v7622
  %7872 = vmatpush1.bf16.msra.mxu0 %v7621
  %7873 = vmatprep.subr.bf16.mxu0 %v7614
  %7874 = vmatpush1.bf16.msra.mxu0 %v7613
  %7875 = vmatprep.subr.bf16.mxu0 %v7606
  %7876 = vmatpush1.bf16.msra.mxu0 %v7605
  %7877 = vmatprep.subr.bf16.mxu0 %v7726
  %7878 = vmatpush2.bf16.msra.mxu0 %v7725
  %7879 = vmatprep.subr.bf16.mxu0 %v7718
  %7880 = vmatpush2.bf16.msra.mxu0 %v7717
  %7881 = vmatprep.subr.bf16.mxu0 %v7710
  %7882 = vmatpush2.bf16.msra.mxu0 %v7709
  %7883 = vmatprep.subr.bf16.mxu0 %v7702
  %7884 = vmatpush2.bf16.msra.mxu0 %v7701
  %7885 = vmatprep.subr.bf16.mxu0 %v7694
  %7886 = vmatpush2.bf16.msra.mxu0 %v7693
  %7887 = vmatprep.subr.bf16.mxu0 %v7686
  %7888 = vmatpush2.bf16.msra.mxu0 %v7685
  %7889 = vmatprep.subr.bf16.mxu0 %v7678
  %7890 = vmatpush2.bf16.msra.mxu0 %v7677
  %7891 = vmatprep.subr.bf16.mxu0 %v7670
  %7892 = vmatpush2.bf16.msra.mxu0 %v7669
  %7893 = vmatprep.mubr.bf16.mxu0 %v7092
  %7894 = vmatmul.mubr.bf16.gmra.mxu0 %v7091
  %v7895 = vpop.f32.mrf.mxu0
  %v7896 = vadd.f32 0.0, %v7895
  %v7897 = vpop.f32.mrf.mxu0
  %v7898 = vadd.f32 0.0, %v7897
  %v7899 = vpop.f32.mrf.mxu0
  %v7900 = vpop.f32.mrf.mxu0
  %7901 = vdwg.mxu0
  %7902 = vmatprep.subr.bf16.mxu0 %v7664
  %7903 = vmatpush1.bf16.msra.mxu0 %v7663
  %7904 = vmatprep.subr.bf16.mxu0 %v7656
  %7905 = vmatpush1.bf16.msra.mxu0 %v7655
  %7906 = vmatprep.subr.bf16.mxu0 %v7648
  %7907 = vmatpush1.bf16.msra.mxu0 %v7647
  %7908 = vmatprep.subr.bf16.mxu0 %v7640
  %7909 = vmatpush1.bf16.msra.mxu0 %v7639
  %7910 = vmatprep.subr.bf16.mxu0 %v7632
  %7911 = vmatpush1.bf16.msra.mxu0 %v7631
  %7912 = vmatprep.subr.bf16.mxu0 %v7624
  %7913 = vmatpush1.bf16.msra.mxu0 %v7623
  %7914 = vmatprep.subr.bf16.mxu0 %v7616
  %7915 = vmatpush1.bf16.msra.mxu0 %v7615
  %7916 = vmatprep.subr.bf16.mxu0 %v7608
  %7917 = vmatpush1.bf16.msra.mxu0 %v7607
  %7918 = vmatprep.subr.bf16.mxu0 %v7728
  %7919 = vmatpush2.bf16.msra.mxu0 %v7727
  %7920 = vmatprep.subr.bf16.mxu0 %v7720
  %7921 = vmatpush2.bf16.msra.mxu0 %v7719
  %7922 = vmatprep.subr.bf16.mxu0 %v7712
  %7923 = vmatpush2.bf16.msra.mxu0 %v7711
  %7924 = vmatprep.subr.bf16.mxu0 %v7704
  %7925 = vmatpush2.bf16.msra.mxu0 %v7703
  %7926 = vmatprep.subr.bf16.mxu0 %v7696
  %7927 = vmatpush2.bf16.msra.mxu0 %v7695
  %7928 = vmatprep.subr.bf16.mxu0 %v7688
  %7929 = vmatpush2.bf16.msra.mxu0 %v7687
  %7930 = vmatprep.subr.bf16.mxu0 %v7680
  %7931 = vmatpush2.bf16.msra.mxu0 %v7679
  %7932 = vmatprep.subr.bf16.mxu0 %v7672
  %7933 = vmatpush2.bf16.msra.mxu0 %v7671
  %7934 = vmatprep.mubr.bf16.mxu0 %v7092
  %7935 = vmatmul.mubr.bf16.gmra.mxu0 %v7091
  %v7936 = vpop.f32.mrf.mxu0
  %v7937 = vadd.f32 0.0, %v7936
  %v7938 = vpop.f32.mrf.mxu0
  %v7939 = vadd.f32 0.0, %v7938
  %v7940 = vpop.f32.mrf.mxu0
  %v7941 = vpop.f32.mrf.mxu0
  %7942 = vdwg.mxu0
  %7943 = vmatprep.subr.bf16.mxu0 %v7666
  %7944 = vmatpush1.bf16.msra.mxu0 %v7665
  %7945 = vmatprep.subr.bf16.mxu0 %v7658
  %7946 = vmatpush1.bf16.msra.mxu0 %v7657
  %7947 = vmatprep.subr.bf16.mxu0 %v7650
  %7948 = vmatpush1.bf16.msra.mxu0 %v7649
  %7949 = vmatprep.subr.bf16.mxu0 %v7642
  %7950 = vmatpush1.bf16.msra.mxu0 %v7641
  %7951 = vmatprep.subr.bf16.mxu0 %v7634
  %7952 = vmatpush1.bf16.msra.mxu0 %v7633
  %7953 = vmatprep.subr.bf16.mxu0 %v7626
  %7954 = vmatpush1.bf16.msra.mxu0 %v7625
  %7955 = vmatprep.subr.bf16.mxu0 %v7618
  %7956 = vmatpush1.bf16.msra.mxu0 %v7617
  %7957 = vmatprep.subr.bf16.mxu0 %v7610
  %7958 = vmatpush1.bf16.msra.mxu0 %v7609
  %7959 = vmatprep.subr.bf16.mxu0 %v7730
  %7960 = vmatpush2.bf16.msra.mxu0 %v7729
  %7961 = vmatprep.subr.bf16.mxu0 %v7722
  %7962 = vmatpush2.bf16.msra.mxu0 %v7721
  %7963 = vmatprep.subr.bf16.mxu0 %v7714
  %7964 = vmatpush2.bf16.msra.mxu0 %v7713
  %7965 = vmatprep.subr.bf16.mxu0 %v7706
  %7966 = vmatpush2.bf16.msra.mxu0 %v7705
  %7967 = vmatprep.subr.bf16.mxu0 %v7698
  %7968 = vmatpush2.bf16.msra.mxu0 %v7697
  %7969 = vmatprep.subr.bf16.mxu0 %v7690
  %7970 = vmatpush2.bf16.msra.mxu0 %v7689
  %7971 = vmatprep.subr.bf16.mxu0 %v7682
  %7972 = vmatpush2.bf16.msra.mxu0 %v7681
  %7973 = vmatprep.subr.bf16.mxu0 %v7674
  %7974 = vmatpush2.bf16.msra.mxu0 %v7673
  %7975 = vmatprep.mubr.bf16.mxu0 %v7092
  %7976 = vmatmul.mubr.bf16.gmra.mxu0 %v7091
  %v7977 = vpop.f32.mrf.mxu0
  %v7978 = vadd.f32 0.0, %v7977
  %v7979 = vpop.f32.mrf.mxu0
  %v7980 = vadd.f32 0.0, %v7979
  %v7981 = vpop.f32.mrf.mxu0
  %v7982 = vpop.f32.mrf.mxu0
  %7983 = vdwg.mxu0
  %7984 = vmatprep.subr.bf16.mxu0 %v7668
  %7985 = vmatpush1.bf16.msra.mxu0 %v7667
  %7986 = vmatprep.subr.bf16.mxu0 %v7660
  %7987 = vmatpush1.bf16.msra.mxu0 %v7659
  %7988 = vmatprep.subr.bf16.mxu0 %v7652
  %7989 = vmatpush1.bf16.msra.mxu0 %v7651
  %7990 = vmatprep.subr.bf16.mxu0 %v7644
  %7991 = vmatpush1.bf16.msra.mxu0 %v7643
  %7992 = vmatprep.subr.bf16.mxu0 %v7636
  %7993 = vmatpush1.bf16.msra.mxu0 %v7635
  %7994 = vmatprep.subr.bf16.mxu0 %v7628
  %7995 = vmatpush1.bf16.msra.mxu0 %v7627
  %7996 = vmatprep.subr.bf16.mxu0 %v7620
  %7997 = vmatpush1.bf16.msra.mxu0 %v7619
  %7998 = vmatprep.subr.bf16.mxu0 %v7612
  %7999 = vmatpush1.bf16.msra.mxu0 %v7611
  %8000 = vmatprep.subr.bf16.mxu0 %v7732
  %8001 = vmatpush2.bf16.msra.mxu0 %v7731
  %8002 = vmatprep.subr.bf16.mxu0 %v7724
  %8003 = vmatpush2.bf16.msra.mxu0 %v7723
  %8004 = vmatprep.subr.bf16.mxu0 %v7716
  %8005 = vmatpush2.bf16.msra.mxu0 %v7715
  %8006 = vmatprep.subr.bf16.mxu0 %v7708
  %8007 = vmatpush2.bf16.msra.mxu0 %v7707
  %8008 = vmatprep.subr.bf16.mxu0 %v7700
  %8009 = vmatpush2.bf16.msra.mxu0 %v7699
  %8010 = vmatprep.subr.bf16.mxu0 %v7692
  %8011 = vmatpush2.bf16.msra.mxu0 %v7691
  %8012 = vmatprep.subr.bf16.mxu0 %v7684
  %8013 = vmatpush2.bf16.msra.mxu0 %v7683
  %8014 = vmatprep.subr.bf16.mxu0 %v7676
  %8015 = vmatpush2.bf16.msra.mxu0 %v7675
  %8016 = vmatprep.mubr.bf16.mxu0 %v7092
  %8017 = vmatmul.mubr.bf16.gmra.mxu0 %v7091
  %v8018 = vpop.f32.mrf.mxu0
  %v8019 = vadd.f32 0.0, %v8018
  %v8020 = vpop.f32.mrf.mxu0
  %v8021 = vadd.f32 0.0, %v8020
  %v8022 = vpop.f32.mrf.mxu0
  %v8023 = vpop.f32.mrf.mxu0
  %8024 = vdwg.mxu0
  %v8025 = vld [vmem:[%s2958] sm:$0xff]
  %v8026 = vld [vmem:[%s2958 + $0x8] sm:$0xff]
  %v8027 = vunpack.c.l.bf16 %v8025
  %v8028 = vunpack.c.h.bf16 %v8025
  %v8029 = vunpack.c.l.bf16 %v8026
  %v8030 = vunpack.c.h.bf16 %v8026
  %v8031 = vadd.f32 %v8027, %v7896
  %v8032 = vadd.f32 %v8028, %v7898
  %v8033 = vadd.f32 %v8029, %v7937
  %v8034 = vadd.f32 %v8030, %v7939
  %v8035 = vld [vmem:[%s2947 + $0x10] sm:$0xff]
  %v8036 = vld [vmem:[%s2947 + $0x18] sm:$0xff]
  %v8037 = vunpack.c.l.bf16 %v8035
  %v8038 = vunpack.c.h.bf16 %v8035
  %v8039 = vunpack.c.l.bf16 %v8036
  %v8040 = vunpack.c.h.bf16 %v8036
  %v8041 = vadd.f32 %v8037, %v7978
  %v8042 = vadd.f32 %v8038, %v7980
  %v8043 = vadd.f32 %v8039, %v8019
  %v8044 = vadd.f32 %v8040, %v8021
  %v8045 = vxor.u32 %v8031, 2147483648
  %v8046 = vmul.f32 %v8045, 1.442695
  %v8047 = vpow.pop %v8046
  %v8048 = vadd.f32 %v8047, 1.0
  %v8049 = vrcp.pop %v8048
  %v8050 = vmul.f32 1.0, %v8049
  %v8051 = vxor.u32 %v8032, 2147483648
  %v8052 = vmul.f32 %v8051, 1.442695
  %v8053 = vpow.pop %v8052
  %v8054 = vadd.f32 %v8053, 1.0
  %v8055 = vrcp.pop %v8054
  %v8056 = vmul.f32 1.0, %v8055
  %v8057 = vtanh.pop %v8033
  %v8058 = vxor.u32 %v8034, 2147483648
  %v8059 = vmul.f32 %v8058, 1.442695
  %v8060 = vpow.pop %v8059
  %v8061 = vadd.f32 %v8060, 1.0
  %v8062 = vrcp.pop %v8061
  %v8063 = vmul.f32 1.0, %v8062
  %v8064 = vmul.f32 %v8056, %v7058
  %v8065 = vmul.f32 %v8050, %v8057
  %v8066 = vadd.f32 %v8064, %v8065
  %v8067 = vtanh.pop %v8066
  %v8068 = vmul.f32 %v8063, %v8067
  %v8069 = vsel %vm2970, %v8068, %v7057
  %v8070 = vsel %vm2970, %v8066, %v7058
  %v8071 = vxor.u32 %v8041, 2147483648
  %v8072 = vmul.f32 %v8071, 1.442695
  %v8073 = vpow.pop %v8072
  %v8074 = vadd.f32 %v8073, 1.0
  %v8075 = vrcp.pop %v8074
  %v8076 = vmul.f32 1.0, %v8075
  %v8077 = vxor.u32 %v8042, 2147483648
  %v8078 = vmul.f32 %v8077, 1.442695
  %v8079 = vpow.pop %v8078
  %v8080 = vadd.f32 %v8079, 1.0
  %v8081 = vrcp.pop %v8080
  %v8082 = vmul.f32 1.0, %v8081
  %v8083 = vtanh.pop %v8043
  %v8084 = vxor.u32 %v8044, 2147483648
  %v8085 = vmul.f32 %v8084, 1.442695
  %v8086 = vpow.pop %v8085
  %v8087 = vadd.f32 %v8086, 1.0
  %v8088 = vrcp.pop %v8087
  %v8089 = vmul.f32 1.0, %v8088
  %v8090 = vmul.f32 %v8082, %v7084
  %v8091 = vmul.f32 %v8076, %v8083
  %v8092 = vadd.f32 %v8090, %v8091
  %v8093 = vtanh.pop %v8092
  %v8094 = vmul.f32 %v8089, %v8093
  %v8095 = vsel %vm2969, %v8094, %v7083
  %v8096 = vsel %vm2969, %v8092, %v7084
  %v8097 = vsel %vm2970, %v8068, 0.0
  %v8098 = vpack.c.bf16 %v8097, %v8097
  %8099 = vst [vmem:[%s3029] sm:$0xf] %v8098
  %v8100 = vsel %vm2969, %v8094, 0.0
  %v8101 = vpack.c.bf16 %v8100, %v8100
  %8102 = vst [vmem:[%s3025 + $0x4] sm:$0xf] %v8101
  %v8103 = vpack.c.bf16 %v8069, %v8069
  %v8104 = vpack.c.bf16 %v8095, %v8095
  %v8105 = vld [vmem:[%s4] sm:$0xff]
  %v8106 = vld [vmem:[%s4 + $0x8] sm:$0xff]
  %v8107 = vld [vmem:[%s4 + $0x10] sm:$0xff]
  %v8108 = vld [vmem:[%s4 + $0x18] sm:$0xff]
  %v8109 = vld [vmem:[%s4 + $0x20] sm:$0xff]
  %v8110 = vld [vmem:[%s4 + $0x28] sm:$0xff]
  %v8111 = vld [vmem:[%s4 + $0x30] sm:$0xff]
  %v8112 = vld [vmem:[%s4 + $0x38] sm:$0xff]
  %v8113 = vld [vmem:[%s4 + $0x40] sm:$0xff]
  %v8114 = vld [vmem:[%s4 + $0x48] sm:$0xff]
  %v8115 = vld [vmem:[%s4 + $0x50] sm:$0xff]
  %v8116 = vld [vmem:[%s4 + $0x58] sm:$0xff]
  %v8117 = vld [vmem:[%s4 + $0x60] sm:$0xff]
  %v8118 = vld [vmem:[%s4 + $0x68] sm:$0xff]
  %v8119 = vld [vmem:[%s4 + $0x70] sm:$0xff]
  %v8120 = vld [vmem:[%s4 + $0x78] sm:$0xff]
  %v8121 = vld [vmem:[%s4 + $0x80] sm:$0xff]
  %v8122 = vld [vmem:[%s4 + $0x88] sm:$0xff]
  %v8123 = vld [vmem:[%s4 + $0x90] sm:$0xff]
  %v8124 = vld [vmem:[%s4 + $0x98] sm:$0xff]
  %v8125 = vld [vmem:[%s4 + $0xa0] sm:$0xff]
  %v8126 = vld [vmem:[%s4 + $0xa8] sm:$0xff]
  %v8127 = vld [vmem:[%s4 + $0xb0] sm:$0xff]
  %v8128 = vld [vmem:[%s4 + $0xb8] sm:$0xff]
  %v8129 = vld [vmem:[%s4 + $0xc0] sm:$0xff]
  %v8130 = vld [vmem:[%s4 + $0xc8] sm:$0xff]
  %v8131 = vld [vmem:[%s4 + $0xd0] sm:$0xff]
  %v8132 = vld [vmem:[%s4 + $0xd8] sm:$0xff]
  %v8133 = vld [vmem:[%s4 + $0xe0] sm:$0xff]
  %v8134 = vld [vmem:[%s4 + $0xe8] sm:$0xff]
  %v8135 = vld [vmem:[%s4 + $0xf0] sm:$0xff]
  %v8136 = vld [vmem:[%s4 + $0xf8] sm:$0xff]
  %v8137 = vld [vmem:[%s4 + $0x100] sm:$0xff]
  %v8138 = vld [vmem:[%s4 + $0x108] sm:$0xff]
  %v8139 = vld [vmem:[%s4 + $0x110] sm:$0xff]
  %v8140 = vld [vmem:[%s4 + $0x118] sm:$0xff]
  %v8141 = vld [vmem:[%s4 + $0x120] sm:$0xff]
  %v8142 = vld [vmem:[%s4 + $0x128] sm:$0xff]
  %v8143 = vld [vmem:[%s4 + $0x130] sm:$0xff]
  %v8144 = vld [vmem:[%s4 + $0x138] sm:$0xff]
  %v8145 = vld [vmem:[%s4 + $0x140] sm:$0xff]
  %v8146 = vld [vmem:[%s4 + $0x148] sm:$0xff]
  %v8147 = vld [vmem:[%s4 + $0x150] sm:$0xff]
  %v8148 = vld [vmem:[%s4 + $0x158] sm:$0xff]
  %v8149 = vld [vmem:[%s4 + $0x160] sm:$0xff]
  %v8150 = vld [vmem:[%s4 + $0x168] sm:$0xff]
  %v8151 = vld [vmem:[%s4 + $0x170] sm:$0xff]
  %v8152 = vld [vmem:[%s4 + $0x178] sm:$0xff]
  %v8153 = vld [vmem:[%s4 + $0x180] sm:$0xff]
  %v8154 = vld [vmem:[%s4 + $0x188] sm:$0xff]
  %v8155 = vld [vmem:[%s4 + $0x190] sm:$0xff]
  %v8156 = vld [vmem:[%s4 + $0x198] sm:$0xff]
  %v8157 = vld [vmem:[%s4 + $0x1a0] sm:$0xff]
  %v8158 = vld [vmem:[%s4 + $0x1a8] sm:$0xff]
  %v8159 = vld [vmem:[%s4 + $0x1b0] sm:$0xff]
  %v8160 = vld [vmem:[%s4 + $0x1b8] sm:$0xff]
  %v8161 = vld [vmem:[%s4 + $0x1c0] sm:$0xff]
  %v8162 = vld [vmem:[%s4 + $0x1c8] sm:$0xff]
  %v8163 = vld [vmem:[%s4 + $0x1d0] sm:$0xff]
  %v8164 = vld [vmem:[%s4 + $0x1d8] sm:$0xff]
  %v8165 = vld [vmem:[%s4 + $0x1e0] sm:$0xff]
  %v8166 = vld [vmem:[%s4 + $0x1e8] sm:$0xff]
  %v8167 = vld [vmem:[%s4 + $0x1f0] sm:$0xff]
  %v8168 = vld [vmem:[%s4 + $0x1f8] sm:$0xff]
  %v8169 = vld [vmem:[%s4 + $0x200] sm:$0xff]
  %v8170 = vld [vmem:[%s4 + $0x208] sm:$0xff]
  %v8171 = vld [vmem:[%s4 + $0x210] sm:$0xff]
  %v8172 = vld [vmem:[%s4 + $0x218] sm:$0xff]
  %v8173 = vld [vmem:[%s4 + $0x220] sm:$0xff]
  %v8174 = vld [vmem:[%s4 + $0x228] sm:$0xff]
  %v8175 = vld [vmem:[%s4 + $0x230] sm:$0xff]
  %v8176 = vld [vmem:[%s4 + $0x238] sm:$0xff]
  %v8177 = vld [vmem:[%s4 + $0x240] sm:$0xff]
  %v8178 = vld [vmem:[%s4 + $0x248] sm:$0xff]
  %v8179 = vld [vmem:[%s4 + $0x250] sm:$0xff]
  %v8180 = vld [vmem:[%s4 + $0x258] sm:$0xff]
  %v8181 = vld [vmem:[%s4 + $0x260] sm:$0xff]
  %v8182 = vld [vmem:[%s4 + $0x268] sm:$0xff]
  %v8183 = vld [vmem:[%s4 + $0x270] sm:$0xff]
  %v8184 = vld [vmem:[%s4 + $0x278] sm:$0xff]
  %v8185 = vld [vmem:[%s4 + $0x280] sm:$0xff]
  %v8186 = vld [vmem:[%s4 + $0x288] sm:$0xff]
  %v8187 = vld [vmem:[%s4 + $0x290] sm:$0xff]
  %v8188 = vld [vmem:[%s4 + $0x298] sm:$0xff]
  %v8189 = vld [vmem:[%s4 + $0x2a0] sm:$0xff]
  %v8190 = vld [vmem:[%s4 + $0x2a8] sm:$0xff]
  %v8191 = vld [vmem:[%s4 + $0x2b0] sm:$0xff]
  %v8192 = vld [vmem:[%s4 + $0x2b8] sm:$0xff]
  %v8193 = vld [vmem:[%s4 + $0x2c0] sm:$0xff]
  %v8194 = vld [vmem:[%s4 + $0x2c8] sm:$0xff]
  %v8195 = vld [vmem:[%s4 + $0x2d0] sm:$0xff]
  %v8196 = vld [vmem:[%s4 + $0x2d8] sm:$0xff]
  %v8197 = vld [vmem:[%s4 + $0x2e0] sm:$0xff]
  %v8198 = vld [vmem:[%s4 + $0x2e8] sm:$0xff]
  %v8199 = vld [vmem:[%s4 + $0x2f0] sm:$0xff]
  %v8200 = vld [vmem:[%s4 + $0x2f8] sm:$0xff]
  %v8201 = vld [vmem:[%s4 + $0x300] sm:$0xff]
  %v8202 = vld [vmem:[%s4 + $0x308] sm:$0xff]
  %v8203 = vld [vmem:[%s4 + $0x310] sm:$0xff]
  %v8204 = vld [vmem:[%s4 + $0x318] sm:$0xff]
  %v8205 = vld [vmem:[%s4 + $0x320] sm:$0xff]
  %v8206 = vld [vmem:[%s4 + $0x328] sm:$0xff]
  %v8207 = vld [vmem:[%s4 + $0x330] sm:$0xff]
  %v8208 = vld [vmem:[%s4 + $0x338] sm:$0xff]
  %v8209 = vld [vmem:[%s4 + $0x340] sm:$0xff]
  %v8210 = vld [vmem:[%s4 + $0x348] sm:$0xff]
  %v8211 = vld [vmem:[%s4 + $0x350] sm:$0xff]
  %v8212 = vld [vmem:[%s4 + $0x358] sm:$0xff]
  %v8213 = vld [vmem:[%s4 + $0x360] sm:$0xff]
  %v8214 = vld [vmem:[%s4 + $0x368] sm:$0xff]
  %v8215 = vld [vmem:[%s4 + $0x370] sm:$0xff]
  %v8216 = vld [vmem:[%s4 + $0x378] sm:$0xff]
  %v8217 = vld [vmem:[%s4 + $0x380] sm:$0xff]
  %v8218 = vld [vmem:[%s4 + $0x388] sm:$0xff]
  %v8219 = vld [vmem:[%s4 + $0x390] sm:$0xff]
  %v8220 = vld [vmem:[%s4 + $0x398] sm:$0xff]
  %v8221 = vld [vmem:[%s4 + $0x3a0] sm:$0xff]
  %v8222 = vld [vmem:[%s4 + $0x3a8] sm:$0xff]
  %v8223 = vld [vmem:[%s4 + $0x3b0] sm:$0xff]
  %v8224 = vld [vmem:[%s4 + $0x3b8] sm:$0xff]
  %v8225 = vld [vmem:[%s4 + $0x3c0] sm:$0xff]
  %v8226 = vld [vmem:[%s4 + $0x3c8] sm:$0xff]
  %v8227 = vld [vmem:[%s4 + $0x3d0] sm:$0xff]
  %v8228 = vld [vmem:[%s4 + $0x3d8] sm:$0xff]
  %v8229 = vld [vmem:[%s4 + $0x3e0] sm:$0xff]
  %v8230 = vld [vmem:[%s4 + $0x3e8] sm:$0xff]
  %v8231 = vld [vmem:[%s4 + $0x3f0] sm:$0xff]
  %v8232 = vld [vmem:[%s4 + $0x3f8] sm:$0xff]
  %v8361 = vunpack.c.l.b16 %v8105
  %v8362 = vunpack.c.h.b16 %v8105
  %v8363 = vunpack.c.l.b16 %v8106
  %v8364 = vunpack.c.h.b16 %v8106
  %v8365 = vunpack.c.l.b16 %v8107
  %v8366 = vunpack.c.h.b16 %v8107
  %v8367 = vunpack.c.l.b16 %v8108
  %v8368 = vunpack.c.h.b16 %v8108
  %v8369 = vunpack.c.l.b16 %v8109
  %v8370 = vunpack.c.h.b16 %v8109
  %v8371 = vunpack.c.l.b16 %v8110
  %v8372 = vunpack.c.h.b16 %v8110
  %v8373 = vunpack.c.l.b16 %v8111
  %v8374 = vunpack.c.h.b16 %v8111
  %v8375 = vunpack.c.l.b16 %v8112
  %v8376 = vunpack.c.h.b16 %v8112
  %v8377 = vunpack.c.l.b16 %v8113
  %v8378 = vunpack.c.h.b16 %v8113
  %v8379 = vunpack.c.l.b16 %v8114
  %v8380 = vunpack.c.h.b16 %v8114
  %v8381 = vunpack.c.l.b16 %v8115
  %v8382 = vunpack.c.h.b16 %v8115
  %v8383 = vunpack.c.l.b16 %v8116
  %v8384 = vunpack.c.h.b16 %v8116
  %v8385 = vunpack.c.l.b16 %v8117
  %v8386 = vunpack.c.h.b16 %v8117
  %v8387 = vunpack.c.l.b16 %v8118
  %v8388 = vunpack.c.h.b16 %v8118
  %v8389 = vunpack.c.l.b16 %v8119
  %v8390 = vunpack.c.h.b16 %v8119
  %v8391 = vunpack.c.l.b16 %v8120
  %v8392 = vunpack.c.h.b16 %v8120
  %v8393 = vunpack.c.l.b16 %v8121
  %v8394 = vunpack.c.h.b16 %v8121
  %v8395 = vunpack.c.l.b16 %v8122
  %v8396 = vunpack.c.h.b16 %v8122
  %v8397 = vunpack.c.l.b16 %v8123
  %v8398 = vunpack.c.h.b16 %v8123
  %v8399 = vunpack.c.l.b16 %v8124
  %v8400 = vunpack.c.h.b16 %v8124
  %v8401 = vunpack.c.l.b16 %v8125
  %v8402 = vunpack.c.h.b16 %v8125
  %v8403 = vunpack.c.l.b16 %v8126
  %v8404 = vunpack.c.h.b16 %v8126
  %v8405 = vunpack.c.l.b16 %v8127
  %v8406 = vunpack.c.h.b16 %v8127
  %v8407 = vunpack.c.l.b16 %v8128
  %v8408 = vunpack.c.h.b16 %v8128
  %v8409 = vunpack.c.l.b16 %v8129
  %v8410 = vunpack.c.h.b16 %v8129
  %v8411 = vunpack.c.l.b16 %v8130
  %v8412 = vunpack.c.h.b16 %v8130
  %v8413 = vunpack.c.l.b16 %v8131
  %v8414 = vunpack.c.h.b16 %v8131
  %v8415 = vunpack.c.l.b16 %v8132
  %v8416 = vunpack.c.h.b16 %v8132
  %v8417 = vunpack.c.l.b16 %v8133
  %v8418 = vunpack.c.h.b16 %v8133
  %v8419 = vunpack.c.l.b16 %v8134
  %v8420 = vunpack.c.h.b16 %v8134
  %v8421 = vunpack.c.l.b16 %v8135
  %v8422 = vunpack.c.h.b16 %v8135
  %v8423 = vunpack.c.l.b16 %v8136
  %v8424 = vunpack.c.h.b16 %v8136
  %v8425 = vunpack.c.l.b16 %v8137
  %v8426 = vunpack.c.h.b16 %v8137
  %v8427 = vunpack.c.l.b16 %v8138
  %v8428 = vunpack.c.h.b16 %v8138
  %v8429 = vunpack.c.l.b16 %v8139
  %v8430 = vunpack.c.h.b16 %v8139
  %v8431 = vunpack.c.l.b16 %v8140
  %v8432 = vunpack.c.h.b16 %v8140
  %v8433 = vunpack.c.l.b16 %v8141
  %v8434 = vunpack.c.h.b16 %v8141
  %v8435 = vunpack.c.l.b16 %v8142
  %v8436 = vunpack.c.h.b16 %v8142
  %v8437 = vunpack.c.l.b16 %v8143
  %v8438 = vunpack.c.h.b16 %v8143
  %v8439 = vunpack.c.l.b16 %v8144
  %v8440 = vunpack.c.h.b16 %v8144
  %v8441 = vunpack.c.l.b16 %v8145
  %v8442 = vunpack.c.h.b16 %v8145
  %v8443 = vunpack.c.l.b16 %v8146
  %v8444 = vunpack.c.h.b16 %v8146
  %v8445 = vunpack.c.l.b16 %v8147
  %v8446 = vunpack.c.h.b16 %v8147
  %v8447 = vunpack.c.l.b16 %v8148
  %v8448 = vunpack.c.h.b16 %v8148
  %v8449 = vunpack.c.l.b16 %v8149
  %v8450 = vunpack.c.h.b16 %v8149
  %v8451 = vunpack.c.l.b16 %v8150
  %v8452 = vunpack.c.h.b16 %v8150
  %v8453 = vunpack.c.l.b16 %v8151
  %v8454 = vunpack.c.h.b16 %v8151
  %v8455 = vunpack.c.l.b16 %v8152
  %v8456 = vunpack.c.h.b16 %v8152
  %v8457 = vunpack.c.l.b16 %v8153
  %v8458 = vunpack.c.h.b16 %v8153
  %v8459 = vunpack.c.l.b16 %v8154
  %v8460 = vunpack.c.h.b16 %v8154
  %v8461 = vunpack.c.l.b16 %v8155
  %v8462 = vunpack.c.h.b16 %v8155
  %v8463 = vunpack.c.l.b16 %v8156
  %v8464 = vunpack.c.h.b16 %v8156
  %v8465 = vunpack.c.l.b16 %v8157
  %v8466 = vunpack.c.h.b16 %v8157
  %v8467 = vunpack.c.l.b16 %v8158
  %v8468 = vunpack.c.h.b16 %v8158
  %v8469 = vunpack.c.l.b16 %v8159
  %v8470 = vunpack.c.h.b16 %v8159
  %v8471 = vunpack.c.l.b16 %v8160
  %v8472 = vunpack.c.h.b16 %v8160
  %v8473 = vunpack.c.l.b16 %v8161
  %v8474 = vunpack.c.h.b16 %v8161
  %v8475 = vunpack.c.l.b16 %v8162
  %v8476 = vunpack.c.h.b16 %v8162
  %v8477 = vunpack.c.l.b16 %v8163
  %v8478 = vunpack.c.h.b16 %v8163
  %v8479 = vunpack.c.l.b16 %v8164
  %v8480 = vunpack.c.h.b16 %v8164
  %v8481 = vunpack.c.l.b16 %v8165
  %v8482 = vunpack.c.h.b16 %v8165
  %v8483 = vunpack.c.l.b16 %v8166
  %v8484 = vunpack.c.h.b16 %v8166
  %v8485 = vunpack.c.l.b16 %v8167
  %v8486 = vunpack.c.h.b16 %v8167
  %v8487 = vunpack.c.l.b16 %v8168
  %v8488 = vunpack.c.h.b16 %v8168
  %v8489 = vunpack.c.l.b16 %v8169
  %v8490 = vunpack.c.h.b16 %v8169
  %v8491 = vunpack.c.l.b16 %v8170
  %v8492 = vunpack.c.h.b16 %v8170
  %v8493 = vunpack.c.l.b16 %v8171
  %v8494 = vunpack.c.h.b16 %v8171
  %v8495 = vunpack.c.l.b16 %v8172
  %v8496 = vunpack.c.h.b16 %v8172
  %v8497 = vunpack.c.l.b16 %v8173
  %v8498 = vunpack.c.h.b16 %v8173
  %v8499 = vunpack.c.l.b16 %v8174
  %v8500 = vunpack.c.h.b16 %v8174
  %v8501 = vunpack.c.l.b16 %v8175
  %v8502 = vunpack.c.h.b16 %v8175
  %v8503 = vunpack.c.l.b16 %v8176
  %v8504 = vunpack.c.h.b16 %v8176
  %v8505 = vunpack.c.l.b16 %v8177
  %v8506 = vunpack.c.h.b16 %v8177
  %v8507 = vunpack.c.l.b16 %v8178
  %v8508 = vunpack.c.h.b16 %v8178
  %v8509 = vunpack.c.l.b16 %v8179
  %v8510 = vunpack.c.h.b16 %v8179
  %v8511 = vunpack.c.l.b16 %v8180
  %v8512 = vunpack.c.h.b16 %v8180
  %v8513 = vunpack.c.l.b16 %v8181
  %v8514 = vunpack.c.h.b16 %v8181
  %v8515 = vunpack.c.l.b16 %v8182
  %v8516 = vunpack.c.h.b16 %v8182
  %v8517 = vunpack.c.l.b16 %v8183
  %v8518 = vunpack.c.h.b16 %v8183
  %v8519 = vunpack.c.l.b16 %v8184
  %v8520 = vunpack.c.h.b16 %v8184
  %v8521 = vunpack.c.l.b16 %v8185
  %v8522 = vunpack.c.h.b16 %v8185
  %v8523 = vunpack.c.l.b16 %v8186
  %v8524 = vunpack.c.h.b16 %v8186
  %v8525 = vunpack.c.l.b16 %v8187
  %v8526 = vunpack.c.h.b16 %v8187
  %v8527 = vunpack.c.l.b16 %v8188
  %v8528 = vunpack.c.h.b16 %v8188
  %v8529 = vunpack.c.l.b16 %v8189
  %v8530 = vunpack.c.h.b16 %v8189
  %v8531 = vunpack.c.l.b16 %v8190
  %v8532 = vunpack.c.h.b16 %v8190
  %v8533 = vunpack.c.l.b16 %v8191
  %v8534 = vunpack.c.h.b16 %v8191
  %v8535 = vunpack.c.l.b16 %v8192
  %v8536 = vunpack.c.h.b16 %v8192
  %v8537 = vunpack.c.l.b16 %v8193
  %v8538 = vunpack.c.h.b16 %v8193
  %v8539 = vunpack.c.l.b16 %v8194
  %v8540 = vunpack.c.h.b16 %v8194
  %v8541 = vunpack.c.l.b16 %v8195
  %v8542 = vunpack.c.h.b16 %v8195
  %v8543 = vunpack.c.l.b16 %v8196
  %v8544 = vunpack.c.h.b16 %v8196
  %v8545 = vunpack.c.l.b16 %v8197
  %v8546 = vunpack.c.h.b16 %v8197
  %v8547 = vunpack.c.l.b16 %v8198
  %v8548 = vunpack.c.h.b16 %v8198
  %v8549 = vunpack.c.l.b16 %v8199
  %v8550 = vunpack.c.h.b16 %v8199
  %v8551 = vunpack.c.l.b16 %v8200
  %v8552 = vunpack.c.h.b16 %v8200
  %v8553 = vunpack.c.l.b16 %v8201
  %v8554 = vunpack.c.h.b16 %v8201
  %v8555 = vunpack.c.l.b16 %v8202
  %v8556 = vunpack.c.h.b16 %v8202
  %v8557 = vunpack.c.l.b16 %v8203
  %v8558 = vunpack.c.h.b16 %v8203
  %v8559 = vunpack.c.l.b16 %v8204
  %v8560 = vunpack.c.h.b16 %v8204
  %v8561 = vunpack.c.l.b16 %v8205
  %v8562 = vunpack.c.h.b16 %v8205
  %v8563 = vunpack.c.l.b16 %v8206
  %v8564 = vunpack.c.h.b16 %v8206
  %v8565 = vunpack.c.l.b16 %v8207
  %v8566 = vunpack.c.h.b16 %v8207
  %v8567 = vunpack.c.l.b16 %v8208
  %v8568 = vunpack.c.h.b16 %v8208
  %v8569 = vunpack.c.l.b16 %v8209
  %v8570 = vunpack.c.h.b16 %v8209
  %v8571 = vunpack.c.l.b16 %v8210
  %v8572 = vunpack.c.h.b16 %v8210
  %v8573 = vunpack.c.l.b16 %v8211
  %v8574 = vunpack.c.h.b16 %v8211
  %v8575 = vunpack.c.l.b16 %v8212
  %v8576 = vunpack.c.h.b16 %v8212
  %v8577 = vunpack.c.l.b16 %v8213
  %v8578 = vunpack.c.h.b16 %v8213
  %v8579 = vunpack.c.l.b16 %v8214
  %v8580 = vunpack.c.h.b16 %v8214
  %v8581 = vunpack.c.l.b16 %v8215
  %v8582 = vunpack.c.h.b16 %v8215
  %v8583 = vunpack.c.l.b16 %v8216
  %v8584 = vunpack.c.h.b16 %v8216
  %v8585 = vunpack.c.l.b16 %v8217
  %v8586 = vunpack.c.h.b16 %v8217
  %v8587 = vunpack.c.l.b16 %v8218
  %v8588 = vunpack.c.h.b16 %v8218
  %v8589 = vunpack.c.l.b16 %v8219
  %v8590 = vunpack.c.h.b16 %v8219
  %v8591 = vunpack.c.l.b16 %v8220
  %v8592 = vunpack.c.h.b16 %v8220
  %v8593 = vunpack.c.l.b16 %v8221
  %v8594 = vunpack.c.h.b16 %v8221
  %v8595 = vunpack.c.l.b16 %v8222
  %v8596 = vunpack.c.h.b16 %v8222
  %v8597 = vunpack.c.l.b16 %v8223
  %v8598 = vunpack.c.h.b16 %v8223
  %v8599 = vunpack.c.l.b16 %v8224
  %v8600 = vunpack.c.h.b16 %v8224
  %v8601 = vunpack.c.l.b16 %v8225
  %v8602 = vunpack.c.h.b16 %v8225
  %v8603 = vunpack.c.l.b16 %v8226
  %v8604 = vunpack.c.h.b16 %v8226
  %v8605 = vunpack.c.l.b16 %v8227
  %v8606 = vunpack.c.h.b16 %v8227
  %v8607 = vunpack.c.l.b16 %v8228
  %v8608 = vunpack.c.h.b16 %v8228
  %v8609 = vunpack.c.l.b16 %v8229
  %v8610 = vunpack.c.h.b16 %v8229
  %v8611 = vunpack.c.l.b16 %v8230
  %v8612 = vunpack.c.h.b16 %v8230
  %v8613 = vunpack.c.l.b16 %v8231
  %v8614 = vunpack.c.h.b16 %v8231
  %v8615 = vunpack.c.l.b16 %v8232
  %v8616 = vunpack.c.h.b16 %v8232
  %v8617 = vpack.c.b16 %v8369, %v8361
  %v8618 = vpack.c.b16 %v8370, %v8362
  %v8619 = vpack.c.b16 %v8371, %v8363
  %v8620 = vpack.c.b16 %v8372, %v8364
  %v8621 = vpack.c.b16 %v8373, %v8365
  %v8622 = vpack.c.b16 %v8374, %v8366
  %v8623 = vpack.c.b16 %v8375, %v8367
  %v8624 = vpack.c.b16 %v8376, %v8368
  %v8625 = vpack.c.b16 %v8385, %v8377
  %v8626 = vpack.c.b16 %v8386, %v8378
  %v8627 = vpack.c.b16 %v8387, %v8379
  %v8628 = vpack.c.b16 %v8388, %v8380
  %v8629 = vpack.c.b16 %v8389, %v8381
  %v8630 = vpack.c.b16 %v8390, %v8382
  %v8631 = vpack.c.b16 %v8391, %v8383
  %v8632 = vpack.c.b16 %v8392, %v8384
  %v8633 = vpack.c.b16 %v8401, %v8393
  %v8634 = vpack.c.b16 %v8402, %v8394
  %v8635 = vpack.c.b16 %v8403, %v8395
  %v8636 = vpack.c.b16 %v8404, %v8396
  %v8637 = vpack.c.b16 %v8405, %v8397
  %v8638 = vpack.c.b16 %v8406, %v8398
  %v8639 = vpack.c.b16 %v8407, %v8399
  %v8640 = vpack.c.b16 %v8408, %v8400
  %v8641 = vpack.c.b16 %v8417, %v8409
  %v8642 = vpack.c.b16 %v8418, %v8410
  %v8643 = vpack.c.b16 %v8419, %v8411
  %v8644 = vpack.c.b16 %v8420, %v8412
  %v8645 = vpack.c.b16 %v8421, %v8413
  %v8646 = vpack.c.b16 %v8422, %v8414
  %v8647 = vpack.c.b16 %v8423, %v8415
  %v8648 = vpack.c.b16 %v8424, %v8416
  %v8649 = vpack.c.b16 %v8433, %v8425
  %v8650 = vpack.c.b16 %v8434, %v8426
  %v8651 = vpack.c.b16 %v8435, %v8427
  %v8652 = vpack.c.b16 %v8436, %v8428
  %v8653 = vpack.c.b16 %v8437, %v8429
  %v8654 = vpack.c.b16 %v8438, %v8430
  %v8655 = vpack.c.b16 %v8439, %v8431
  %v8656 = vpack.c.b16 %v8440, %v8432
  %v8657 = vpack.c.b16 %v8449, %v8441
  %v8658 = vpack.c.b16 %v8450, %v8442
  %v8659 = vpack.c.b16 %v8451, %v8443
  %v8660 = vpack.c.b16 %v8452, %v8444
  %v8661 = vpack.c.b16 %v8453, %v8445
  %v8662 = vpack.c.b16 %v8454, %v8446
  %v8663 = vpack.c.b16 %v8455, %v8447
  %v8664 = vpack.c.b16 %v8456, %v8448
  %v8665 = vpack.c.b16 %v8465, %v8457
  %v8666 = vpack.c.b16 %v8466, %v8458
  %v8667 = vpack.c.b16 %v8467, %v8459
  %v8668 = vpack.c.b16 %v8468, %v8460
  %v8669 = vpack.c.b16 %v8469, %v8461
  %v8670 = vpack.c.b16 %v8470, %v8462
  %v8671 = vpack.c.b16 %v8471, %v8463
  %v8672 = vpack.c.b16 %v8472, %v8464
  %v8673 = vpack.c.b16 %v8481, %v8473
  %v8674 = vpack.c.b16 %v8482, %v8474
  %v8675 = vpack.c.b16 %v8483, %v8475
  %v8676 = vpack.c.b16 %v8484, %v8476
  %v8677 = vpack.c.b16 %v8485, %v8477
  %v8678 = vpack.c.b16 %v8486, %v8478
  %v8679 = vpack.c.b16 %v8487, %v8479
  %v8680 = vpack.c.b16 %v8488, %v8480
  %v8681 = vpack.c.b16 %v8497, %v8489
  %v8682 = vpack.c.b16 %v8498, %v8490
  %v8683 = vpack.c.b16 %v8499, %v8491
  %v8684 = vpack.c.b16 %v8500, %v8492
  %v8685 = vpack.c.b16 %v8501, %v8493
  %v8686 = vpack.c.b16 %v8502, %v8494
  %v8687 = vpack.c.b16 %v8503, %v8495
  %v8688 = vpack.c.b16 %v8504, %v8496
  %v8689 = vpack.c.b16 %v8513, %v8505
  %v8690 = vpack.c.b16 %v8514, %v8506
  %v8691 = vpack.c.b16 %v8515, %v8507
  %v8692 = vpack.c.b16 %v8516, %v8508
  %v8693 = vpack.c.b16 %v8517, %v8509
  %v8694 = vpack.c.b16 %v8518, %v8510
  %v8695 = vpack.c.b16 %v8519, %v8511
  %v8696 = vpack.c.b16 %v8520, %v8512
  %v8697 = vpack.c.b16 %v8529, %v8521
  %v8698 = vpack.c.b16 %v8530, %v8522
  %v8699 = vpack.c.b16 %v8531, %v8523
  %v8700 = vpack.c.b16 %v8532, %v8524
  %v8701 = vpack.c.b16 %v8533, %v8525
  %v8702 = vpack.c.b16 %v8534, %v8526
  %v8703 = vpack.c.b16 %v8535, %v8527
  %v8704 = vpack.c.b16 %v8536, %v8528
  %v8705 = vpack.c.b16 %v8545, %v8537
  %v8706 = vpack.c.b16 %v8546, %v8538
  %v8707 = vpack.c.b16 %v8547, %v8539
  %v8708 = vpack.c.b16 %v8548, %v8540
  %v8709 = vpack.c.b16 %v8549, %v8541
  %v8710 = vpack.c.b16 %v8550, %v8542
  %v8711 = vpack.c.b16 %v8551, %v8543
  %v8712 = vpack.c.b16 %v8552, %v8544
  %v8713 = vpack.c.b16 %v8561, %v8553
  %v8714 = vpack.c.b16 %v8562, %v8554
  %v8715 = vpack.c.b16 %v8563, %v8555
  %v8716 = vpack.c.b16 %v8564, %v8556
  %v8717 = vpack.c.b16 %v8565, %v8557
  %v8718 = vpack.c.b16 %v8566, %v8558
  %v8719 = vpack.c.b16 %v8567, %v8559
  %v8720 = vpack.c.b16 %v8568, %v8560
  %v8721 = vpack.c.b16 %v8577, %v8569
  %v8722 = vpack.c.b16 %v8578, %v8570
  %v8723 = vpack.c.b16 %v8579, %v8571
  %v8724 = vpack.c.b16 %v8580, %v8572
  %v8725 = vpack.c.b16 %v8581, %v8573
  %v8726 = vpack.c.b16 %v8582, %v8574
  %v8727 = vpack.c.b16 %v8583, %v8575
  %v8728 = vpack.c.b16 %v8584, %v8576
  %v8729 = vpack.c.b16 %v8593, %v8585
  %v8730 = vpack.c.b16 %v8594, %v8586
  %v8731 = vpack.c.b16 %v8595, %v8587
  %v8732 = vpack.c.b16 %v8596, %v8588
  %v8733 = vpack.c.b16 %v8597, %v8589
  %v8734 = vpack.c.b16 %v8598, %v8590
  %v8735 = vpack.c.b16 %v8599, %v8591
  %v8736 = vpack.c.b16 %v8600, %v8592
  %v8737 = vpack.c.b16 %v8609, %v8601
  %v8738 = vpack.c.b16 %v8610, %v8602
  %v8739 = vpack.c.b16 %v8611, %v8603
  %v8740 = vpack.c.b16 %v8612, %v8604
  %v8741 = vpack.c.b16 %v8613, %v8605
  %v8742 = vpack.c.b16 %v8614, %v8606
  %v8743 = vpack.c.b16 %v8615, %v8607
  %v8744 = vpack.c.b16 %v8616, %v8608
  %8873 = vmatprep.subr.bf16.mxu0 %v8674
  %8874 = vmatpush1.bf16.msra.mxu0 %v8673
  %8875 = vmatprep.subr.bf16.mxu0 %v8666
  %8876 = vmatpush1.bf16.msra.mxu0 %v8665
  %8877 = vmatprep.subr.bf16.mxu0 %v8658
  %8878 = vmatpush1.bf16.msra.mxu0 %v8657
  %8879 = vmatprep.subr.bf16.mxu0 %v8650
  %8880 = vmatpush1.bf16.msra.mxu0 %v8649
  %8881 = vmatprep.subr.bf16.mxu0 %v8642
  %8882 = vmatpush1.bf16.msra.mxu0 %v8641
  %8883 = vmatprep.subr.bf16.mxu0 %v8634
  %8884 = vmatpush1.bf16.msra.mxu0 %v8633
  %8885 = vmatprep.subr.bf16.mxu0 %v8626
  %8886 = vmatpush1.bf16.msra.mxu0 %v8625
  %8887 = vmatprep.subr.bf16.mxu0 %v8618
  %8888 = vmatpush1.bf16.msra.mxu0 %v8617
  %8889 = vmatprep.subr.bf16.mxu0 %v8738
  %8890 = vmatpush2.bf16.msra.mxu0 %v8737
  %8891 = vmatprep.subr.bf16.mxu0 %v8730
  %8892 = vmatpush2.bf16.msra.mxu0 %v8729
  %8893 = vmatprep.subr.bf16.mxu0 %v8722
  %8894 = vmatpush2.bf16.msra.mxu0 %v8721
  %8895 = vmatprep.subr.bf16.mxu0 %v8714
  %8896 = vmatpush2.bf16.msra.mxu0 %v8713
  %8897 = vmatprep.subr.bf16.mxu0 %v8706
  %8898 = vmatpush2.bf16.msra.mxu0 %v8705
  %8899 = vmatprep.subr.bf16.mxu0 %v8698
  %8900 = vmatpush2.bf16.msra.mxu0 %v8697
  %8901 = vmatprep.subr.bf16.mxu0 %v8690
  %8902 = vmatpush2.bf16.msra.mxu0 %v8689
  %8903 = vmatprep.subr.bf16.mxu0 %v8682
  %8904 = vmatpush2.bf16.msra.mxu0 %v8681
  %8905 = vmatprep.mubr.bf16.mxu0 %v8104
  %8906 = vmatmul.mubr.bf16.gmra.mxu0 %v8103
  %v8907 = vpop.f32.mrf.mxu0
  %v8908 = vadd.f32 0.0, %v8907
  %v8909 = vpop.f32.mrf.mxu0
  %v8910 = vadd.f32 0.0, %v8909
  %v8911 = vpop.f32.mrf.mxu0
  %v8912 = vpop.f32.mrf.mxu0
  %8913 = vdwg.mxu0
  %8914 = vmatprep.subr.bf16.mxu0 %v8676
  %8915 = vmatpush1.bf16.msra.mxu0 %v8675
  %8916 = vmatprep.subr.bf16.mxu0 %v8668
  %8917 = vmatpush1.bf16.msra.mxu0 %v8667
  %8918 = vmatprep.subr.bf16.mxu0 %v8660
  %8919 = vmatpush1.bf16.msra.mxu0 %v8659
  %8920 = vmatprep.subr.bf16.mxu0 %v8652
  %8921 = vmatpush1.bf16.msra.mxu0 %v8651
  %8922 = vmatprep.subr.bf16.mxu0 %v8644
  %8923 = vmatpush1.bf16.msra.mxu0 %v8643
  %8924 = vmatprep.subr.bf16.mxu0 %v8636
  %8925 = vmatpush1.bf16.msra.mxu0 %v8635
  %8926 = vmatprep.subr.bf16.mxu0 %v8628
  %8927 = vmatpush1.bf16.msra.mxu0 %v8627
  %8928 = vmatprep.subr.bf16.mxu0 %v8620
  %8929 = vmatpush1.bf16.msra.mxu0 %v8619
  %8930 = vmatprep.subr.bf16.mxu0 %v8740
  %8931 = vmatpush2.bf16.msra.mxu0 %v8739
  %8932 = vmatprep.subr.bf16.mxu0 %v8732
  %8933 = vmatpush2.bf16.msra.mxu0 %v8731
  %8934 = vmatprep.subr.bf16.mxu0 %v8724
  %8935 = vmatpush2.bf16.msra.mxu0 %v8723
  %8936 = vmatprep.subr.bf16.mxu0 %v8716
  %8937 = vmatpush2.bf16.msra.mxu0 %v8715
  %8938 = vmatprep.subr.bf16.mxu0 %v8708
  %8939 = vmatpush2.bf16.msra.mxu0 %v8707
  %8940 = vmatprep.subr.bf16.mxu0 %v8700
  %8941 = vmatpush2.bf16.msra.mxu0 %v8699
  %8942 = vmatprep.subr.bf16.mxu0 %v8692
  %8943 = vmatpush2.bf16.msra.mxu0 %v8691
  %8944 = vmatprep.subr.bf16.mxu0 %v8684
  %8945 = vmatpush2.bf16.msra.mxu0 %v8683
  %8946 = vmatprep.mubr.bf16.mxu0 %v8104
  %8947 = vmatmul.mubr.bf16.gmra.mxu0 %v8103
  %v8948 = vpop.f32.mrf.mxu0
  %v8949 = vadd.f32 0.0, %v8948
  %v8950 = vpop.f32.mrf.mxu0
  %v8951 = vadd.f32 0.0, %v8950
  %v8952 = vpop.f32.mrf.mxu0
  %v8953 = vpop.f32.mrf.mxu0
  %8954 = vdwg.mxu0
  %8955 = vmatprep.subr.bf16.mxu0 %v8678
  %8956 = vmatpush1.bf16.msra.mxu0 %v8677
  %8957 = vmatprep.subr.bf16.mxu0 %v8670
  %8958 = vmatpush1.bf16.msra.mxu0 %v8669
  %8959 = vmatprep.subr.bf16.mxu0 %v8662
  %8960 = vmatpush1.bf16.msra.mxu0 %v8661
  %8961 = vmatprep.subr.bf16.mxu0 %v8654
  %8962 = vmatpush1.bf16.msra.mxu0 %v8653
  %8963 = vmatprep.subr.bf16.mxu0 %v8646
  %8964 = vmatpush1.bf16.msra.mxu0 %v8645
  %8965 = vmatprep.subr.bf16.mxu0 %v8638
  %8966 = vmatpush1.bf16.msra.mxu0 %v8637
  %8967 = vmatprep.subr.bf16.mxu0 %v8630
  %8968 = vmatpush1.bf16.msra.mxu0 %v8629
  %8969 = vmatprep.subr.bf16.mxu0 %v8622
  %8970 = vmatpush1.bf16.msra.mxu0 %v8621
  %8971 = vmatprep.subr.bf16.mxu0 %v8742
  %8972 = vmatpush2.bf16.msra.mxu0 %v8741
  %8973 = vmatprep.subr.bf16.mxu0 %v8734
  %8974 = vmatpush2.bf16.msra.mxu0 %v8733
  %8975 = vmatprep.subr.bf16.mxu0 %v8726
  %8976 = vmatpush2.bf16.msra.mxu0 %v8725
  %8977 = vmatprep.subr.bf16.mxu0 %v8718
  %8978 = vmatpush2.bf16.msra.mxu0 %v8717
  %8979 = vmatprep.subr.bf16.mxu0 %v8710
  %8980 = vmatpush2.bf16.msra.mxu0 %v8709
  %8981 = vmatprep.subr.bf16.mxu0 %v8702
  %8982 = vmatpush2.bf16.msra.mxu0 %v8701
  %8983 = vmatprep.subr.bf16.mxu0 %v8694
  %8984 = vmatpush2.bf16.msra.mxu0 %v8693
  %8985 = vmatprep.subr.bf16.mxu0 %v8686
  %8986 = vmatpush2.bf16.msra.mxu0 %v8685
  %8987 = vmatprep.mubr.bf16.mxu0 %v8104
  %8988 = vmatmul.mubr.bf16.gmra.mxu0 %v8103
  %v8989 = vpop.f32.mrf.mxu0
  %v8990 = vadd.f32 0.0, %v8989
  %v8991 = vpop.f32.mrf.mxu0
  %v8992 = vadd.f32 0.0, %v8991
  %v8993 = vpop.f32.mrf.mxu0
  %v8994 = vpop.f32.mrf.mxu0
  %8995 = vdwg.mxu0
  %8996 = vmatprep.subr.bf16.mxu0 %v8680
  %8997 = vmatpush1.bf16.msra.mxu0 %v8679
  %8998 = vmatprep.subr.bf16.mxu0 %v8672
  %8999 = vmatpush1.bf16.msra.mxu0 %v8671
  %9000 = vmatprep.subr.bf16.mxu0 %v8664
  %9001 = vmatpush1.bf16.msra.mxu0 %v8663
  %9002 = vmatprep.subr.bf16.mxu0 %v8656
  %9003 = vmatpush1.bf16.msra.mxu0 %v8655
  %9004 = vmatprep.subr.bf16.mxu0 %v8648
  %9005 = vmatpush1.bf16.msra.mxu0 %v8647
  %9006 = vmatprep.subr.bf16.mxu0 %v8640
  %9007 = vmatpush1.bf16.msra.mxu0 %v8639
  %9008 = vmatprep.subr.bf16.mxu0 %v8632
  %9009 = vmatpush1.bf16.msra.mxu0 %v8631
  %9010 = vmatprep.subr.bf16.mxu0 %v8624
  %9011 = vmatpush1.bf16.msra.mxu0 %v8623
  %9012 = vmatprep.subr.bf16.mxu0 %v8744
  %9013 = vmatpush2.bf16.msra.mxu0 %v8743
  %9014 = vmatprep.subr.bf16.mxu0 %v8736
  %9015 = vmatpush2.bf16.msra.mxu0 %v8735
  %9016 = vmatprep.subr.bf16.mxu0 %v8728
  %9017 = vmatpush2.bf16.msra.mxu0 %v8727
  %9018 = vmatprep.subr.bf16.mxu0 %v8720
  %9019 = vmatpush2.bf16.msra.mxu0 %v8719
  %9020 = vmatprep.subr.bf16.mxu0 %v8712
  %9021 = vmatpush2.bf16.msra.mxu0 %v8711
  %9022 = vmatprep.subr.bf16.mxu0 %v8704
  %9023 = vmatpush2.bf16.msra.mxu0 %v8703
  %9024 = vmatprep.subr.bf16.mxu0 %v8696
  %9025 = vmatpush2.bf16.msra.mxu0 %v8695
  %9026 = vmatprep.subr.bf16.mxu0 %v8688
  %9027 = vmatpush2.bf16.msra.mxu0 %v8687
  %9028 = vmatprep.mubr.bf16.mxu0 %v8104
  %9029 = vmatmul.mubr.bf16.gmra.mxu0 %v8103
  %v9030 = vpop.f32.mrf.mxu0
  %v9031 = vadd.f32 0.0, %v9030
  %v9032 = vpop.f32.mrf.mxu0
  %v9033 = vadd.f32 0.0, %v9032
  %v9034 = vpop.f32.mrf.mxu0
  %v9035 = vpop.f32.mrf.mxu0
  %9036 = vdwg.mxu0
  %v9037 = vld [vmem:[%s1945] sm:$0xff]
  %v9038 = vld [vmem:[%s1945 + $0x8] sm:$0xff]
  %v9039 = vunpack.c.l.bf16 %v9037
  %v9040 = vunpack.c.h.bf16 %v9037
  %v9041 = vunpack.c.l.bf16 %v9038
  %v9042 = vunpack.c.h.bf16 %v9038
  %v9043 = vadd.f32 %v9039, %v8908
  %v9044 = vadd.f32 %v9040, %v8910
  %v9045 = vadd.f32 %v9041, %v8949
  %v9046 = vadd.f32 %v9042, %v8951
  %v9047 = vld [vmem:[#allocation2 + $0x10] sm:$0xff]
  %v9048 = vld [vmem:[#allocation2 + $0x18] sm:$0xff]
  %v9049 = vunpack.c.l.bf16 %v9047
  %v9050 = vunpack.c.h.bf16 %v9047
  %v9051 = vunpack.c.l.bf16 %v9048
  %v9052 = vunpack.c.h.bf16 %v9048
  %v9053 = vadd.f32 %v9049, %v8990
  %v9054 = vadd.f32 %v9050, %v8992
  %v9055 = vadd.f32 %v9051, %v9031
  %v9056 = vadd.f32 %v9052, %v9033
  %v9057 = vxor.u32 %v9043, 2147483648
  %v9058 = vmul.f32 %v9057, 1.442695
  %v9059 = vpow.pop %v9058
  %v9060 = vadd.f32 %v9059, 1.0
  %v9061 = vrcp.pop %v9060
  %v9062 = vmul.f32 1.0, %v9061
  %v9063 = vxor.u32 %v9044, 2147483648
  %v9064 = vmul.f32 %v9063, 1.442695
  %v9065 = vpow.pop %v9064
  %v9066 = vadd.f32 %v9065, 1.0
  %v9067 = vrcp.pop %v9066
  %v9068 = vmul.f32 1.0, %v9067
  %v9069 = vtanh.pop %v9045
  %v9070 = vxor.u32 %v9046, 2147483648
  %v9071 = vmul.f32 %v9070, 1.442695
  %v9072 = vpow.pop %v9071
  %v9073 = vadd.f32 %v9072, 1.0
  %v9074 = vrcp.pop %v9073
  %v9075 = vmul.f32 1.0, %v9074
  %v9076 = vmul.f32 %v9068, %v8070
  %v9077 = vmul.f32 %v9062, %v9069
  %v9078 = vadd.f32 %v9076, %v9077
  %v9079 = vtanh.pop %v9078
  %v9080 = vmul.f32 %v9075, %v9079
  %v9081 = vxor.u32 %v9053, 2147483648
  %v9082 = vmul.f32 %v9081, 1.442695
  %v9083 = vpow.pop %v9082
  %v9084 = vadd.f32 %v9083, 1.0
  %v9085 = vrcp.pop %v9084
  %v9086 = vmul.f32 1.0, %v9085
  %v9087 = vxor.u32 %v9054, 2147483648
  %v9088 = vmul.f32 %v9087, 1.442695
  %v9089 = vpow.pop %v9088
  %v9090 = vadd.f32 %v9089, 1.0
  %v9091 = vrcp.pop %v9090
  %v9092 = vmul.f32 1.0, %v9091
  %v9093 = vtanh.pop %v9055
  %v9094 = vxor.u32 %v9056, 2147483648
  %v9095 = vmul.f32 %v9094, 1.442695
  %v9096 = vpow.pop %v9095
  %v9097 = vadd.f32 %v9096, 1.0
  %v9098 = vrcp.pop %v9097
  %v9099 = vmul.f32 1.0, %v9098
  %v9100 = vmul.f32 %v9092, %v8096
  %v9101 = vmul.f32 %v9086, %v9093
  %v9102 = vadd.f32 %v9100, %v9101
  %v9103 = vtanh.pop %v9102
  %v9104 = vmul.f32 %v9099, %v9103
  %v9105 = vsel %vm1957, %v9080, 0.0
  %v9106 = vpack.c.bf16 %v9105, %v9105
  %9107 = vst [vmem:[%s2013] sm:$0xf] %v9106
  %v9108 = vsel %vm1956, %v9104, 0.0
  %v9109 = vpack.c.bf16 %v9108, %v9108
  %9110 = vst [vmem:[#allocation3 + $0x4] sm:$0xf] %v9109
  %v9111 = vld [vmem:[#allocation3] sm:$0xff]
  %v9112 = vld [vmem:[#allocation3 + $0x8] sm:$0xff]
  %v9113 = vld [vmem:[#allocation3 + $0x10] sm:$0xff]
  %v9114 = vld [vmem:[#allocation3 + $0x18] sm:$0xff]
  %v9115 = vld [vmem:[#allocation3 + $0x20] sm:$0xff]
  %v9116 = vld [vmem:[#allocation3 + $0x28] sm:$0xff]
  %v9117 = vld [vmem:[#allocation3 + $0x30] sm:$0xff]
  %v9118 = vld [vmem:[#allocation3 + $0x38] sm:$0xff]
  %v9119 = vld [vmem:[%s5] sm:$0xf]
  %v9120 = vld [vmem:[%s5 + $0x4] sm:$0xf]
  %v9121 = vld [vmem:[%s5 + $0x8] sm:$0xf]
  %v9122 = vld [vmem:[%s5 + $0xc] sm:$0xf]
  %v9123 = vld [vmem:[%s5 + $0x10] sm:$0xf]
  %v9124 = vld [vmem:[%s5 + $0x14] sm:$0xf]
  %v9125 = vld [vmem:[%s5 + $0x18] sm:$0xf]
  %v9126 = vld [vmem:[%s5 + $0x1c] sm:$0xf]
  %v9127 = vld [vmem:[%s5 + $0x20] sm:$0xf]
  %v9128 = vld [vmem:[%s5 + $0x24] sm:$0xf]
  %v9129 = vld [vmem:[%s5 + $0x28] sm:$0xf]
  %v9130 = vld [vmem:[%s5 + $0x2c] sm:$0xf]
  %v9131 = vld [vmem:[%s5 + $0x30] sm:$0xf]
  %v9132 = vld [vmem:[%s5 + $0x34] sm:$0xf]
  %v9133 = vld [vmem:[%s5 + $0x38] sm:$0xf]
  %v9134 = vld [vmem:[%s5 + $0x3c] sm:$0xf]
  %v9135 = vld [vmem:[%s5 + $0x40] sm:$0xf]
  %v9136 = vld [vmem:[%s5 + $0x44] sm:$0xf]
  %v9137 = vld [vmem:[%s5 + $0x48] sm:$0xf]
  %v9138 = vld [vmem:[%s5 + $0x4c] sm:$0xf]
  %v9139 = vld [vmem:[%s5 + $0x50] sm:$0xf]
  %v9140 = vld [vmem:[%s5 + $0x54] sm:$0xf]
  %v9141 = vld [vmem:[%s5 + $0x58] sm:$0xf]
  %v9142 = vld [vmem:[%s5 + $0x5c] sm:$0xf]
  %v9143 = vld [vmem:[%s5 + $0x60] sm:$0xf]
  %v9144 = vld [vmem:[%s5 + $0x64] sm:$0xf]
  %v9145 = vld [vmem:[%s5 + $0x68] sm:$0xf]
  %v9146 = vld [vmem:[%s5 + $0x6c] sm:$0xf]
  %v9147 = vld [vmem:[%s5 + $0x70] sm:$0xf]
  %v9148 = vld [vmem:[%s5 + $0x74] sm:$0xf]
  %v9149 = vld [vmem:[%s5 + $0x78] sm:$0xf]
  %v9150 = vld [vmem:[%s5 + $0x7c] sm:$0xf]
  %v9151 = vld [vmem:[%s6] sm:$0x1]
  %v9153 = vlaneseq
  %v9154 = vshrl.u32 %v9153, 7
  %v9155 = vsub.s32 0, %v9154
  %v9156 = vrot.slane %v9151, %v9155
  %v9166 = vunpack.c.l.b16 %v9111
  %v9167 = vunpack.c.h.b16 %v9111
  %v9168 = vunpack.c.l.b16 %v9112
  %v9169 = vunpack.c.h.b16 %v9112
  %v9170 = vunpack.c.l.b16 %v9113
  %v9171 = vunpack.c.h.b16 %v9113
  %v9172 = vunpack.c.l.b16 %v9114
  %v9173 = vunpack.c.h.b16 %v9114
  %v9174 = vunpack.c.l.b16 %v9115
  %v9175 = vunpack.c.h.b16 %v9115
  %v9176 = vunpack.c.l.b16 %v9116
  %v9177 = vunpack.c.h.b16 %v9116
  %v9178 = vunpack.c.l.b16 %v9117
  %v9179 = vunpack.c.h.b16 %v9117
  %v9180 = vunpack.c.l.b16 %v9118
  %v9181 = vunpack.c.h.b16 %v9118
  %v9182 = vpack.c.b16 %v9168, %v9166
  %v9183 = vpack.c.b16 %v9169, %v9167
  %v9184 = vpack.c.b16 %v9172, %v9170
  %v9185 = vpack.c.b16 %v9173, %v9171
  %v9186 = vpack.c.b16 %v9176, %v9174
  %v9187 = vpack.c.b16 %v9177, %v9175
  %v9188 = vpack.c.b16 %v9180, %v9178
  %v9189 = vpack.c.b16 %v9181, %v9179
  %v9230 = vunpack.c.l.b16 %v9119
  %v9231 = vunpack.c.l.b16 %v9120
  %v9232 = vunpack.c.l.b16 %v9121
  %v9233 = vunpack.c.l.b16 %v9122
  %v9234 = vunpack.c.l.b16 %v9123
  %v9235 = vunpack.c.l.b16 %v9124
  %v9236 = vunpack.c.l.b16 %v9125
  %v9237 = vunpack.c.l.b16 %v9126
  %v9238 = vunpack.c.l.b16 %v9127
  %v9239 = vunpack.c.l.b16 %v9128
  %v9240 = vunpack.c.l.b16 %v9129
  %v9241 = vunpack.c.l.b16 %v9130
  %v9242 = vunpack.c.l.b16 %v9131
  %v9243 = vunpack.c.l.b16 %v9132
  %v9244 = vunpack.c.l.b16 %v9133
  %v9245 = vunpack.c.l.b16 %v9134
  %v9246 = vunpack.c.l.b16 %v9135
  %v9247 = vunpack.c.l.b16 %v9136
  %v9248 = vunpack.c.l.b16 %v9137
  %v9249 = vunpack.c.l.b16 %v9138
  %v9250 = vunpack.c.l.b16 %v9139
  %v9251 = vunpack.c.l.b16 %v9140
  %v9252 = vunpack.c.l.b16 %v9141
  %v9253 = vunpack.c.l.b16 %v9142
  %v9254 = vunpack.c.l.b16 %v9143
  %v9255 = vunpack.c.l.b16 %v9144
  %v9256 = vunpack.c.l.b16 %v9145
  %v9257 = vunpack.c.l.b16 %v9146
  %v9258 = vunpack.c.l.b16 %v9147
  %v9259 = vunpack.c.l.b16 %v9148
  %v9260 = vunpack.c.l.b16 %v9149
  %v9261 = vunpack.c.l.b16 %v9150
  %v9262 = vpack.c.b16 %v9231, %v9230
  %v9263 = vpack.c.b16 %v9233, %v9232
  %v9264 = vpack.c.b16 %v9235, %v9234
  %v9265 = vpack.c.b16 %v9237, %v9236
  %v9266 = vpack.c.b16 %v9239, %v9238
  %v9267 = vpack.c.b16 %v9241, %v9240
  %v9268 = vpack.c.b16 %v9243, %v9242
  %v9269 = vpack.c.b16 %v9245, %v9244
  %v9270 = vpack.c.b16 %v9247, %v9246
  %v9271 = vpack.c.b16 %v9249, %v9248
  %v9272 = vpack.c.b16 %v9251, %v9250
  %v9273 = vpack.c.b16 %v9253, %v9252
  %v9274 = vpack.c.b16 %v9255, %v9254
  %v9275 = vpack.c.b16 %v9257, %v9256
  %v9276 = vpack.c.b16 %v9259, %v9258
  %v9277 = vpack.c.b16 %v9261, %v9260
  %9294 = vmatprep.subr.bf16.mxu0 0
  %9295 = vmatpush1.bf16.msra.mxu0 %v9269
  %9296 = vmatprep.subr.bf16.mxu0 0
  %9297 = vmatpush1.bf16.msra.mxu0 %v9268
  %9298 = vmatprep.subr.bf16.mxu0 0
  %9299 = vmatpush1.bf16.msra.mxu0 %v9267
  %9300 = vmatprep.subr.bf16.mxu0 0
  %9301 = vmatpush1.bf16.msra.mxu0 %v9266
  %9302 = vmatprep.subr.bf16.mxu0 0
  %9303 = vmatpush1.bf16.msra.mxu0 %v9265
  %9304 = vmatprep.subr.bf16.mxu0 0
  %9305 = vmatpush1.bf16.msra.mxu0 %v9264
  %9306 = vmatprep.subr.bf16.mxu0 0
  %9307 = vmatpush1.bf16.msra.mxu0 %v9263
  %9308 = vmatprep.subr.bf16.mxu0 0
  %9309 = vmatpush1.bf16.msra.mxu0 %v9262
  %9310 = vmatprep.subr.bf16.mxu0 0
  %9311 = vmatpush2.bf16.msra.mxu0 %v9277
  %9312 = vmatprep.subr.bf16.mxu0 0
  %9313 = vmatpush2.bf16.msra.mxu0 %v9276
  %9314 = vmatprep.subr.bf16.mxu0 0
  %9315 = vmatpush2.bf16.msra.mxu0 %v9275
  %9316 = vmatprep.subr.bf16.mxu0 0
  %9317 = vmatpush2.bf16.msra.mxu0 %v9274
  %9318 = vmatprep.subr.bf16.mxu0 0
  %9319 = vmatpush2.bf16.msra.mxu0 %v9273
  %9320 = vmatprep.subr.bf16.mxu0 0
  %9321 = vmatpush2.bf16.msra.mxu0 %v9272
  %9322 = vmatprep.subr.bf16.mxu0 0
  %9323 = vmatpush2.bf16.msra.mxu0 %v9271
  %9324 = vmatprep.subr.bf16.mxu0 0
  %9325 = vmatpush2.bf16.msra.mxu0 %v9270
  %9326 = vmatprep.mubr.bf16.mxu0 %v9183
  %9327 = vmatmul.mubr.bf16.gmra.mxu0 %v9182
  %v9328 = vpop.f32.mrf.mxu0
  %v9329 = vadd.f32 %v9156, %v9328
  %v9330 = vpop.f32.mrf.mxu0
  %v9331 = vpop.f32.mrf.mxu0
  %v9332 = vadd.f32 %v9156, %v9331
  %v9333 = vpop.f32.mrf.mxu0
  %9334 = vmatprep.mubr.bf16.mxu0 %v9185
  %9335 = vmatmul.mubr.bf16.gmra.mxu0 %v9184
  %v9336 = vpop.f32.mrf.mxu0
  %v9337 = vadd.f32 %v9156, %v9336
  %v9338 = vpop.f32.mrf.mxu0
  %v9339 = vpop.f32.mrf.mxu0
  %v9340 = vadd.f32 %v9156, %v9339
  %v9341 = vpop.f32.mrf.mxu0
  %9342 = vmatprep.mubr.bf16.mxu0 %v9187
  %9343 = vmatmul.mubr.bf16.gmra.mxu0 %v9186
  %v9344 = vpop.f32.mrf.mxu0
  %v9345 = vadd.f32 %v9156, %v9344
  %v9346 = vpop.f32.mrf.mxu0
  %v9347 = vpop.f32.mrf.mxu0
  %v9348 = vadd.f32 %v9156, %v9347
  %v9349 = vpop.f32.mrf.mxu0
  %9350 = vmatprep.mubr.bf16.mxu0 %v9189
  %9351 = vmatmul.mubr.bf16.gmra.mxu0 %v9188
  %v9352 = vpop.f32.mrf.mxu0
  %v9353 = vadd.f32 %v9156, %v9352
  %v9354 = vpop.f32.mrf.mxu0
  %v9355 = vpop.f32.mrf.mxu0
  %v9356 = vadd.f32 %v9156, %v9355
  %v9357 = vpop.f32.mrf.mxu0
  %9358 = vdwg.mxu0
  %9359 = vst [vmem:[%s7] sm:$0xff] %v9329
  %9360 = vst [vmem:[%s7 + $0x8] sm:$0xff] %v9332
  %9361 = vst [vmem:[%s7 + $0x10] sm:$0xff] %v9337
  %9362 = vst [vmem:[%s7 + $0x18] sm:$0xff] %v9340
  %9363 = vst [vmem:[%s7 + $0x20] sm:$0xff] %v9345
  %9364 = vst [vmem:[%s7 + $0x28] sm:$0xff] %v9348
  %9365 = vst [vmem:[%s7 + $0x30] sm:$0xff] %v9353
  %9366 = vst [vmem:[%s7 + $0x38] sm:$0xff] %v9356
  // Predicated region
  $region30: #{bilstm_encoder_forward.1} parent=0 // pred_check
    _
  $region31: #{bilstm_encoder_forward.1} parent=0 // pred_check_branch
    %9368 = sbr.rel (0) target = $region33
  $region32: #{bilstm_encoder_forward.1} parent=0 // pred_region
    _
  $region33: #{bilstm_encoder_forward.1} parent=0 // pred_fallthru
    _
  // Predicated region
  $region34: #{bilstm_encoder_forward.1} parent=0 // pred_check
    _
  $region35: #{bilstm_encoder_forward.1} parent=0 // pred_check_branch
    %9370 = sbr.rel (0) target = $region37
  $region36: #{bilstm_encoder_forward.1} parent=0 // pred_region
    _
  $region37: #{bilstm_encoder_forward.1} parent=0 // pred_fallthru
    _

</llo_original>
